<compile_context>
chip_gen: v5e
topology: v5e:2x2
jax: 0.10.0
libtpu: 0.0.40
codegen_flags: <defaults>
</compile_context>

<pallas_src>
import functools

import jax
import jax.numpy as jnp
from jax.experimental import pallas as pl
from jax.experimental.pallas import tpu as pltpu


def _round_up(v, m):
    return ((v + m - 1) // m) * m


def _fused_generator_kernel(*refs, k0, k0p, mid_ks, stride, hf, wf, cpad):
    """Entire Generator conv chain in a single kernel invocation (no grid).

    refs = (x_ref, w0_ref, *mid_w_refs, proj_ref, o_ref)
      x_ref         : (B, H, W)          f32 squeezed single-input-channel crop
      w0_ref        : (k0p, Cpad)        first-layer weight, tap-major, zero padded
      mid_w_refs[i] : (k, k*Cpad, Cpad)  per-dy im2col weight of mid conv i
      proj_ref      : (1, Cpad)          folded trailing-1x1 / final projection
      o_ref         : (B, hf, wf)        strided-subsampled single-channel output
    """
    n_mid = len(mid_ks)
    x_ref, w0_ref = refs[0], refs[1]
    mid_refs = refs[2:2 + n_mid]
    proj_ref, o_ref = refs[2 + n_mid], refs[3 + n_mid]

    x = x_ref[...]
    bsz, h, w = x_ref.shape

    # ---- layer 0: Cin=1 conv as ONE im2col matmul (K padded to mult. of 8) --
    ho, wo = h - k0 + 1, w - k0 + 1
    taps = [x[:, dy:dy + ho, dx:dx + wo] for dy in range(k0) for dx in range(k0)]
    taps += [jnp.zeros_like(taps[0])] * (k0p - k0 * k0)
    patches = jnp.stack(taps, axis=-1).reshape(bsz * ho * wo, k0p)
    act = jnp.dot(patches, w0_ref[...], preferred_element_type=jnp.float32)
    act = act.reshape(bsz, ho, wo, cpad)
    cur_h, cur_w = ho, wo

    # ---- mid convs: per-dy accumulation, K = k*Cpad (never the full k*k*C) ---
    for w_ref, k in zip(mid_refs, mid_ks):
        ho2, wo2 = cur_h - k + 1, cur_w - k + 1
        m2 = bsz * ho2 * wo2
        acc = None
        for dy in range(k):
            if k == 1:
                row = act.reshape(m2, cpad)
            else:
                row = jnp.concatenate(
                    [act[:, dy:dy + ho2, dx:dx + wo2, :] for dx in range(k)],
                    axis=-1).reshape(m2, k * cpad)
            part = jnp.dot(row, w_ref[dy], preferred_element_type=jnp.float32)
            acc = part if acc is None else acc + part
        act = acc.reshape(bsz, ho2, wo2, cpad)
        cur_h, cur_w = ho2, wo2

    # ---- folded 1x1 tail: ONE VPU multiply + lane reduction over channels ----
    dense = jnp.sum(act * proj_ref[...], axis=-1)          # (B, cur_h, cur_w)

    # ---- strided subsample: rows then columns (hf + wf contiguous slices) ----
    if stride > 1:
        dense = jnp.concatenate(
            [dense[:, yy * stride:yy * stride + 1, :] for yy in range(hf)], axis=1)
        dense = jnp.concatenate(
            [dense[:, :, xx * stride:xx * stride + 1] for xx in range(wf)], axis=2)
    o_ref[...] = dense.astype(o_ref.dtype)


def _estimate_vmem_bytes(b, h, w, k0, k0p, mid_ks, cpad, hf, wf):
    """Rough f32 VMEM peak of the fused chain (inputs + weights + live tensors)."""
    f32 = 4
    ho, wo = h - k0 + 1, w - k0 + 1
    weights = (k0p * cpad + sum(k * k * cpad * cpad for k in mid_ks) + cpad) * f32
    resident = (b * h * w + b * hf * wf) * f32 + weights
    peak = b * ho * wo * (k0p + cpad) * f32                 # layer-0 patches + out
    prev = b * ho * wo * cpad * f32
    cur_h, cur_w = ho, wo
    for k in mid_ks:
        ho2, wo2 = cur_h - k + 1, cur_w - k + 1
        live = prev + b * ho2 * wo2 * (k * cpad + cpad) * f32   # in + dy-row + acc
        peak = max(peak, live)
        prev = b * ho2 * wo2 * cpad * f32
        cur_h, cur_w = ho2, wo2
    peak = max(peak, prev + 2 * b * cur_h * cur_w * f32)        # projection tail
    return resident + peak


def generator_forward(x_nchw, first_w, feature_ws, final_w, *, struct, stride):
    """Fused Generator forward (trace under jax.jit). struct/stride are static."""
    k0, kf = struct[0], struct[-1]
    feat_ks = struct[1:-1]
    n_feat = len(feat_ks)
    chan = first_w.shape[-1]
    cpad = _round_up(chan, 128)          # lane-dense channel dimension
    k0p = _round_up(k0 * k0, 8)          # sublane-aligned layer-0 contraction

    # swap_axis: KernelGAN pushes each color channel through the 1-in-channel stack.
    x = jnp.swapaxes(x_nchw, 0, 1)                 # (B=colors, 1, H, W)
    b, _, h, w = x.shape
    x = x.reshape(b, h, w)                         # squeeze Cin=1 -> lane-dense input

    # -- trace-time weight prep (all zero padding is mathematically inert) -----
    w0 = jnp.pad(first_w.reshape(k0 * k0, chan),
                 ((0, k0p - k0 * k0), (0, cpad - chan)))

    # Fold the trailing run of 1x1 layers (incl. the 1x1 strided final layer):
    # the generator has no nonlinearities, so this is exact.
    if kf == 1:
        fold_from = n_feat
        while fold_from > 0 and feat_ks[fold_from - 1] == 1:
            fold_from -= 1
        proj = final_w.reshape(chan, 1)
        for i in range(n_feat - 1, fold_from - 1, -1):
            proj = feature_ws[i].reshape(chan, chan) @ proj
        proj_vec = jnp.pad(proj.T, ((0, 0), (0, cpad - chan)))          # (1, cpad)
        chain = [(feat_ks[i], feature_ws[i]) for i in range(fold_from)]
        extra = []
    else:
        # TODO(synk): kf>1 final layer runs at stride 1 inside the chain and is
        # then subsampled -> stride^2 redundant work on that (single) layer only.
        chain = [(feat_ks[i], feature_ws[i]) for i in range(n_feat)]
        extra = [(kf, jnp.pad(final_w, ((0, 0), (0, 0),
                                        (0, cpad - chan), (0, cpad - 1))))]
        proj_vec = jnp.pad(jnp.ones((1, 1), jnp.float32), ((0, 0), (0, cpad - 1)))

    mid_ks, mid_ws = [], []
    for k, wk in chain:
        wp = jnp.pad(wk, ((0, 0), (0, 0), (0, cpad - chan), (0, cpad - chan)))
        mid_ks.append(k)
        mid_ws.append(wp.reshape(k, k * cpad, cpad))
    for k, wp in extra:                            # already channel-padded
        mid_ks.append(k)
        mid_ws.append(wp.reshape(k, k * cpad, cpad))

    # -- static output geometry ------------------------------------------------
    r_chain = (k0 - 1) + sum(k - 1 for k in mid_ks)
    c_h, c_w = h - r_chain, w - r_chain
    assert c_h >= 1 and c_w >= 1, "input crop too small for G_structure"
    hf = -(-c_h // stride)                          # ceil division
    wf = -(-c_w // stride)

    # -- explicit VMEM budget (keeps the chain resident even on v7x's 64 MiB) --
    est = _estimate_vmem_bytes(b, h, w, k0, k0p, tuple(mid_ks), cpad, hf, wf)
    assert est <= 44 * 2 ** 20, (
        f"fused Generator needs ~{est / 2 ** 20:.1f} MiB VMEM; reduce "
        "input_crop_size / G_chan or tile the conv chain")
    vmem_limit = int(min(60 * 2 ** 20, max(32 * 2 ** 20, est + 12 * 2 ** 20)))

    kernel = functools.partial(
        _fused_generator_kernel,
        k0=k0, k0p=k0p, mid_ks=tuple(mid_ks), stride=stride,
        hf=hf, wf=wf, cpad=cpad)

    n_inputs = 3 + len(mid_ws)                     # x, w0, mid weights..., proj
    out3d = pl.pallas_call(
        kernel,
        out_shape=jax.ShapeDtypeStruct((b, hf, wf), jnp.float32),
        in_specs=[pl.BlockSpec(memory_space=pltpu.MemorySpace.VMEM)] * n_inputs,
        out_specs=pl.BlockSpec(memory_space=pltpu.MemorySpace.VMEM),
        compiler_params=pltpu.CompilerParams(vmem_limit_bytes=vmem_limit),
    )(x, w0, *mid_ws, proj_vec)

    out = out3d.reshape(b, 1, hf, wf)              # conv-stack output (Cout = 1)
    return jnp.swapaxes(out, 0, 1)                 # undo swap_axis


def swap_axis(x):
    return jnp.swapaxes(x, 0, 1)


class Generator:
    def __init__(self, conf, key):
        struct = tuple(int(k) for k in conf["G_structure"])
        chan = int(conf["G_chan"])
        keys = jax.random.split(key, len(struct))

        def init_w(k, ksz, cin, cout):
            # PyTorch Conv2d default init: U(-b, b), b = 1/sqrt(fan_in)
            fan_in = cin * ksz * ksz
            bound = 1.0 / (fan_in ** 0.5)
            return jax.random.uniform(k, (ksz, ksz, cin, cout),
                                      minval=-bound, maxval=bound, dtype=jnp.float32)

        self.first_w = init_w(keys[0], struct[0], 1, chan)
        self.feature_ws = [init_w(keys[i], struct[i], chan, chan)
                           for i in range(1, len(struct) - 1)]
        self.final_w = init_w(keys[-1], struct[-1], chan, 1)
        self.stride = int(1 / conf["scale_factor"])
        self.struct = struct
        self.chan = chan

        # One jitted executable: the transposes + the single fused pallas_call.
        self._jit_forward = jax.jit(functools.partial(
            generator_forward, struct=struct, stride=self.stride))

        # Mirror the PyTorch __init__ probe computing output_size / forward_shave.
        probe = jnp.ones(
            (1, 1, conf["input_crop_size"], conf["input_crop_size"]), jnp.float32)
        self.output_size = int(self.forward(probe).shape[-1])
        self.forward_shave = (
            int(conf["input_crop_size"] * conf["scale_factor"]) - self.output_size)

    def all_weights(self):
        return [self.first_w] + list(self.feature_ws) + [self.final_w]

    def forward(self, x_nchw):
        return self._jit_forward(
            x_nchw, self.first_w, tuple(self.feature_ws), self.final_w)


def reference_forward(x_nchw, weights_hwio, stride):
    """Pure-JAX per-layer reference matching the PyTorch module (unfolded weights)."""
    def conv(x, w_hwio, s=1):
        w_oihw = jnp.transpose(w_hwio, (3, 2, 0, 1))
        return jax.lax.conv_general_dilated(
            x, w_oihw, window_strides=(s, s), padding="VALID",
            dimension_numbers=("NCHW", "OIHW", "NCHW"),
            precision=jax.lax.Precision.HIGHEST)

    x = swap_axis(x_nchw)
    x = conv(x, weights_hwio[0])
    for w in weights_hwio[1:-1]:
        x = conv(x, w)
    x = conv(x, weights_hwio[-1], s=stride)
    return swap_axis(x)


if __name__ == "__main__":
    conf = dict(
        G_structure=[7, 5, 3, 1, 1, 1],   # KernelGAN default structure
        G_chan=32,                        # reduced from 64 for a small test
        scale_factor=0.5,
        input_crop_size=16,
    )

    key = jax.random.PRNGKey(0)
    k_params, k_input = jax.random.split(key)

    gen = Generator(conf, k_params)

    # RGB crop, NCHW (as in KernelGAN: batch=1, 3 color channels)
    x = jax.random.normal(k_input, (1, 3, 16, 16), dtype=jnp.float32)

    out = jax.block_until_ready(gen.forward(x))
    ref = jax.block_until_ready(reference_forward(x, gen.all_weights(), gen.stride))

    assert out.shape == ref.shape, (out.shape, ref.shape)
    max_err = float(jnp.max(jnp.abs(out - ref)))
    assert jnp.allclose(out, ref, atol=1e-3, rtol=2e-2), max_err

    print("KERNEL_OK")
</pallas_src>

<mosaic_0001>
module attributes {stable_mosaic.version = 11 : i64} {
  func.func @_fused_generator_kernel(%arg0: memref<1x16x16xf32, #tpu.memory_space<vmem>>, %arg1: memref<56x128xf32, #tpu.memory_space<vmem>>, %arg2: memref<5x640x128xf32, #tpu.memory_space<vmem>>, %arg3: memref<3x384x128xf32, #tpu.memory_space<vmem>>, %arg4: memref<1x128xf32, #tpu.memory_space<vmem>>, %arg5: memref<1x2x2xf32, #tpu.memory_space<vmem>>) attributes {dimension_semantics = [], scalar_prefetch = 0 : i64, scratch_operands = 0 : i64, tpu.core_type = #tpu.core_type<tc>} {
    %c0 = arith.constant 0 : index
    %c0_0 = arith.constant 0 : index
    %c0_1 = arith.constant 0 : index
    %0 = vector.load %arg0[%c0, %c0_0, %c0_1] : memref<1x16x16xf32, #tpu.memory_space<vmem>>, vector<1x16x16xf32>
    %1 = vector.extract_strided_slice %0 {offsets = [0, 0, 0], sizes = [1, 10, 10], strides = [1, 1, 1]} : vector<1x16x16xf32> to vector<1x10x10xf32>
    %2 = vector.extract_strided_slice %0 {offsets = [0, 0, 1], sizes = [1, 10, 10], strides = [1, 1, 1]} : vector<1x16x16xf32> to vector<1x10x10xf32>
    %3 = vector.extract_strided_slice %0 {offsets = [0, 0, 2], sizes = [1, 10, 10], strides = [1, 1, 1]} : vector<1x16x16xf32> to vector<1x10x10xf32>
    %4 = vector.extract_strided_slice %0 {offsets = [0, 0, 3], sizes = [1, 10, 10], strides = [1, 1, 1]} : vector<1x16x16xf32> to vector<1x10x10xf32>
    %5 = vector.extract_strided_slice %0 {offsets = [0, 0, 4], sizes = [1, 10, 10], strides = [1, 1, 1]} : vector<1x16x16xf32> to vector<1x10x10xf32>
    %6 = vector.extract_strided_slice %0 {offsets = [0, 0, 5], sizes = [1, 10, 10], strides = [1, 1, 1]} : vector<1x16x16xf32> to vector<1x10x10xf32>
    %7 = vector.extract_strided_slice %0 {offsets = [0, 0, 6], sizes = [1, 10, 10], strides = [1, 1, 1]} : vector<1x16x16xf32> to vector<1x10x10xf32>
    %8 = vector.extract_strided_slice %0 {offsets = [0, 1, 0], sizes = [1, 10, 10], strides = [1, 1, 1]} : vector<1x16x16xf32> to vector<1x10x10xf32>
    %9 = vector.extract_strided_slice %0 {offsets = [0, 1, 1], sizes = [1, 10, 10], strides = [1, 1, 1]} : vector<1x16x16xf32> to vector<1x10x10xf32>
    %10 = vector.extract_strided_slice %0 {offsets = [0, 1, 2], sizes = [1, 10, 10], strides = [1, 1, 1]} : vector<1x16x16xf32> to vector<1x10x10xf32>
    %11 = vector.extract_strided_slice %0 {offsets = [0, 1, 3], sizes = [1, 10, 10], strides = [1, 1, 1]} : vector<1x16x16xf32> to vector<1x10x10xf32>
    %12 = vector.extract_strided_slice %0 {offsets = [0, 1, 4], sizes = [1, 10, 10], strides = [1, 1, 1]} : vector<1x16x16xf32> to vector<1x10x10xf32>
    %13 = vector.extract_strided_slice %0 {offsets = [0, 1, 5], sizes = [1, 10, 10], strides = [1, 1, 1]} : vector<1x16x16xf32> to vector<1x10x10xf32>
    %14 = vector.extract_strided_slice %0 {offsets = [0, 1, 6], sizes = [1, 10, 10], strides = [1, 1, 1]} : vector<1x16x16xf32> to vector<1x10x10xf32>
    %15 = vector.extract_strided_slice %0 {offsets = [0, 2, 0], sizes = [1, 10, 10], strides = [1, 1, 1]} : vector<1x16x16xf32> to vector<1x10x10xf32>
    %16 = vector.extract_strided_slice %0 {offsets = [0, 2, 1], sizes = [1, 10, 10], strides = [1, 1, 1]} : vector<1x16x16xf32> to vector<1x10x10xf32>
    %17 = vector.extract_strided_slice %0 {offsets = [0, 2, 2], sizes = [1, 10, 10], strides = [1, 1, 1]} : vector<1x16x16xf32> to vector<1x10x10xf32>
    %18 = vector.extract_strided_slice %0 {offsets = [0, 2, 3], sizes = [1, 10, 10], strides = [1, 1, 1]} : vector<1x16x16xf32> to vector<1x10x10xf32>
    %19 = vector.extract_strided_slice %0 {offsets = [0, 2, 4], sizes = [1, 10, 10], strides = [1, 1, 1]} : vector<1x16x16xf32> to vector<1x10x10xf32>
    %20 = vector.extract_strided_slice %0 {offsets = [0, 2, 5], sizes = [1, 10, 10], strides = [1, 1, 1]} : vector<1x16x16xf32> to vector<1x10x10xf32>
    %21 = vector.extract_strided_slice %0 {offsets = [0, 2, 6], sizes = [1, 10, 10], strides = [1, 1, 1]} : vector<1x16x16xf32> to vector<1x10x10xf32>
    %22 = vector.extract_strided_slice %0 {offsets = [0, 3, 0], sizes = [1, 10, 10], strides = [1, 1, 1]} : vector<1x16x16xf32> to vector<1x10x10xf32>
    %23 = vector.extract_strided_slice %0 {offsets = [0, 3, 1], sizes = [1, 10, 10], strides = [1, 1, 1]} : vector<1x16x16xf32> to vector<1x10x10xf32>
    %24 = vector.extract_strided_slice %0 {offsets = [0, 3, 2], sizes = [1, 10, 10], strides = [1, 1, 1]} : vector<1x16x16xf32> to vector<1x10x10xf32>
    %25 = vector.extract_strided_slice %0 {offsets = [0, 3, 3], sizes = [1, 10, 10], strides = [1, 1, 1]} : vector<1x16x16xf32> to vector<1x10x10xf32>
    %26 = vector.extract_strided_slice %0 {offsets = [0, 3, 4], sizes = [1, 10, 10], strides = [1, 1, 1]} : vector<1x16x16xf32> to vector<1x10x10xf32>
    %27 = vector.extract_strided_slice %0 {offsets = [0, 3, 5], sizes = [1, 10, 10], strides = [1, 1, 1]} : vector<1x16x16xf32> to vector<1x10x10xf32>
    %28 = vector.extract_strided_slice %0 {offsets = [0, 3, 6], sizes = [1, 10, 10], strides = [1, 1, 1]} : vector<1x16x16xf32> to vector<1x10x10xf32>
    %29 = vector.extract_strided_slice %0 {offsets = [0, 4, 0], sizes = [1, 10, 10], strides = [1, 1, 1]} : vector<1x16x16xf32> to vector<1x10x10xf32>
    %30 = vector.extract_strided_slice %0 {offsets = [0, 4, 1], sizes = [1, 10, 10], strides = [1, 1, 1]} : vector<1x16x16xf32> to vector<1x10x10xf32>
    %31 = vector.extract_strided_slice %0 {offsets = [0, 4, 2], sizes = [1, 10, 10], strides = [1, 1, 1]} : vector<1x16x16xf32> to vector<1x10x10xf32>
    %32 = vector.extract_strided_slice %0 {offsets = [0, 4, 3], sizes = [1, 10, 10], strides = [1, 1, 1]} : vector<1x16x16xf32> to vector<1x10x10xf32>
    %33 = vector.extract_strided_slice %0 {offsets = [0, 4, 4], sizes = [1, 10, 10], strides = [1, 1, 1]} : vector<1x16x16xf32> to vector<1x10x10xf32>
    %34 = vector.extract_strided_slice %0 {offsets = [0, 4, 5], sizes = [1, 10, 10], strides = [1, 1, 1]} : vector<1x16x16xf32> to vector<1x10x10xf32>
    %35 = vector.extract_strided_slice %0 {offsets = [0, 4, 6], sizes = [1, 10, 10], strides = [1, 1, 1]} : vector<1x16x16xf32> to vector<1x10x10xf32>
    %36 = vector.extract_strided_slice %0 {offsets = [0, 5, 0], sizes = [1, 10, 10], strides = [1, 1, 1]} : vector<1x16x16xf32> to vector<1x10x10xf32>
    %37 = vector.extract_strided_slice %0 {offsets = [0, 5, 1], sizes = [1, 10, 10], strides = [1, 1, 1]} : vector<1x16x16xf32> to vector<1x10x10xf32>
    %38 = vector.extract_strided_slice %0 {offsets = [0, 5, 2], sizes = [1, 10, 10], strides = [1, 1, 1]} : vector<1x16x16xf32> to vector<1x10x10xf32>
    %39 = vector.extract_strided_slice %0 {offsets = [0, 5, 3], sizes = [1, 10, 10], strides = [1, 1, 1]} : vector<1x16x16xf32> to vector<1x10x10xf32>
    %40 = vector.extract_strided_slice %0 {offsets = [0, 5, 4], sizes = [1, 10, 10], strides = [1, 1, 1]} : vector<1x16x16xf32> to vector<1x10x10xf32>
    %41 = vector.extract_strided_slice %0 {offsets = [0, 5, 5], sizes = [1, 10, 10], strides = [1, 1, 1]} : vector<1x16x16xf32> to vector<1x10x10xf32>
    %42 = vector.extract_strided_slice %0 {offsets = [0, 5, 6], sizes = [1, 10, 10], strides = [1, 1, 1]} : vector<1x16x16xf32> to vector<1x10x10xf32>
    %43 = vector.extract_strided_slice %0 {offsets = [0, 6, 0], sizes = [1, 10, 10], strides = [1, 1, 1]} : vector<1x16x16xf32> to vector<1x10x10xf32>
    %44 = vector.extract_strided_slice %0 {offsets = [0, 6, 1], sizes = [1, 10, 10], strides = [1, 1, 1]} : vector<1x16x16xf32> to vector<1x10x10xf32>
    %45 = vector.extract_strided_slice %0 {offsets = [0, 6, 2], sizes = [1, 10, 10], strides = [1, 1, 1]} : vector<1x16x16xf32> to vector<1x10x10xf32>
    %46 = vector.extract_strided_slice %0 {offsets = [0, 6, 3], sizes = [1, 10, 10], strides = [1, 1, 1]} : vector<1x16x16xf32> to vector<1x10x10xf32>
    %47 = vector.extract_strided_slice %0 {offsets = [0, 6, 4], sizes = [1, 10, 10], strides = [1, 1, 1]} : vector<1x16x16xf32> to vector<1x10x10xf32>
    %48 = vector.extract_strided_slice %0 {offsets = [0, 6, 5], sizes = [1, 10, 10], strides = [1, 1, 1]} : vector<1x16x16xf32> to vector<1x10x10xf32>
    %49 = vector.extract_strided_slice %0 {offsets = [0, 6, 6], sizes = [1, 10, 10], strides = [1, 1, 1]} : vector<1x16x16xf32> to vector<1x10x10xf32>
    %cst = arith.constant 0.000000e+00 : f32
    %50 = vector.broadcast %cst : f32 to vector<1x10x10xf32>
    %51 = vector.shape_cast %1 : vector<1x10x10xf32> to vector<1x10x10x1xf32>
    %52 = vector.shape_cast %2 : vector<1x10x10xf32> to vector<1x10x10x1xf32>
    %53 = vector.shape_cast %3 : vector<1x10x10xf32> to vector<1x10x10x1xf32>
    %54 = vector.shape_cast %4 : vector<1x10x10xf32> to vector<1x10x10x1xf32>
    %55 = vector.shape_cast %5 : vector<1x10x10xf32> to vector<1x10x10x1xf32>
    %56 = vector.shape_cast %6 : vector<1x10x10xf32> to vector<1x10x10x1xf32>
    %57 = vector.shape_cast %7 : vector<1x10x10xf32> to vector<1x10x10x1xf32>
    %58 = vector.shape_cast %8 : vector<1x10x10xf32> to vector<1x10x10x1xf32>
    %59 = vector.shape_cast %9 : vector<1x10x10xf32> to vector<1x10x10x1xf32>
    %60 = vector.shape_cast %10 : vector<1x10x10xf32> to vector<1x10x10x1xf32>
    %61 = vector.shape_cast %11 : vector<1x10x10xf32> to vector<1x10x10x1xf32>
    %62 = vector.shape_cast %12 : vector<1x10x10xf32> to vector<1x10x10x1xf32>
    %63 = vector.shape_cast %13 : vector<1x10x10xf32> to vector<1x10x10x1xf32>
    %64 = vector.shape_cast %14 : vector<1x10x10xf32> to vector<1x10x10x1xf32>
    %65 = vector.shape_cast %15 : vector<1x10x10xf32> to vector<1x10x10x1xf32>
    %66 = vector.shape_cast %16 : vector<1x10x10xf32> to vector<1x10x10x1xf32>
    %67 = vector.shape_cast %17 : vector<1x10x10xf32> to vector<1x10x10x1xf32>
    %68 = vector.shape_cast %18 : vector<1x10x10xf32> to vector<1x10x10x1xf32>
    %69 = vector.shape_cast %19 : vector<1x10x10xf32> to vector<1x10x10x1xf32>
    %70 = vector.shape_cast %20 : vector<1x10x10xf32> to vector<1x10x10x1xf32>
    %71 = vector.shape_cast %21 : vector<1x10x10xf32> to vector<1x10x10x1xf32>
    %72 = vector.shape_cast %22 : vector<1x10x10xf32> to vector<1x10x10x1xf32>
    %73 = vector.shape_cast %23 : vector<1x10x10xf32> to vector<1x10x10x1xf32>
    %74 = vector.shape_cast %24 : vector<1x10x10xf32> to vector<1x10x10x1xf32>
    %75 = vector.shape_cast %25 : vector<1x10x10xf32> to vector<1x10x10x1xf32>
    %76 = vector.shape_cast %26 : vector<1x10x10xf32> to vector<1x10x10x1xf32>
    %77 = vector.shape_cast %27 : vector<1x10x10xf32> to vector<1x10x10x1xf32>
    %78 = vector.shape_cast %28 : vector<1x10x10xf32> to vector<1x10x10x1xf32>
    %79 = vector.shape_cast %29 : vector<1x10x10xf32> to vector<1x10x10x1xf32>
    %80 = vector.shape_cast %30 : vector<1x10x10xf32> to vector<1x10x10x1xf32>
    %81 = vector.shape_cast %31 : vector<1x10x10xf32> to vector<1x10x10x1xf32>
    %82 = vector.shape_cast %32 : vector<1x10x10xf32> to vector<1x10x10x1xf32>
    %83 = vector.shape_cast %33 : vector<1x10x10xf32> to vector<1x10x10x1xf32>
    %84 = vector.shape_cast %34 : vector<1x10x10xf32> to vector<1x10x10x1xf32>
    %85 = vector.shape_cast %35 : vector<1x10x10xf32> to vector<1x10x10x1xf32>
    %86 = vector.shape_cast %36 : vector<1x10x10xf32> to vector<1x10x10x1xf32>
    %87 = vector.shape_cast %37 : vector<1x10x10xf32> to vector<1x10x10x1xf32>
    %88 = vector.shape_cast %38 : vector<1x10x10xf32> to vector<1x10x10x1xf32>
    %89 = vector.shape_cast %39 : vector<1x10x10xf32> to vector<1x10x10x1xf32>
    %90 = vector.shape_cast %40 : vector<1x10x10xf32> to vector<1x10x10x1xf32>
    %91 = vector.shape_cast %41 : vector<1x10x10xf32> to vector<1x10x10x1xf32>
    %92 = vector.shape_cast %42 : vector<1x10x10xf32> to vector<1x10x10x1xf32>
    %93 = vector.shape_cast %43 : vector<1x10x10xf32> to vector<1x10x10x1xf32>
    %94 = vector.shape_cast %44 : vector<1x10x10xf32> to vector<1x10x10x1xf32>
    %95 = vector.shape_cast %45 : vector<1x10x10xf32> to vector<1x10x10x1xf32>
    %96 = vector.shape_cast %46 : vector<1x10x10xf32> to vector<1x10x10x1xf32>
    %97 = vector.shape_cast %47 : vector<1x10x10xf32> to vector<1x10x10x1xf32>
    %98 = vector.shape_cast %48 : vector<1x10x10xf32> to vector<1x10x10x1xf32>
    %99 = vector.shape_cast %49 : vector<1x10x10xf32> to vector<1x10x10x1xf32>
    %100 = vector.shape_cast %50 : vector<1x10x10xf32> to vector<1x10x10x1xf32>
    %101 = vector.shape_cast %50 : vector<1x10x10xf32> to vector<1x10x10x1xf32>
    %102 = vector.shape_cast %50 : vector<1x10x10xf32> to vector<1x10x10x1xf32>
    %103 = vector.shape_cast %50 : vector<1x10x10xf32> to vector<1x10x10x1xf32>
    %104 = vector.shape_cast %50 : vector<1x10x10xf32> to vector<1x10x10x1xf32>
    %105 = vector.shape_cast %50 : vector<1x10x10xf32> to vector<1x10x10x1xf32>
    %106 = vector.shape_cast %50 : vector<1x10x10xf32> to vector<1x10x10x1xf32>
    %107 = tpu.concatenate %51, %52, %53, %54, %55, %56, %57, %58, %59, %60, %61, %62, %63, %64, %65, %66 in 3 : vector<1x10x10x1xf32>, vector<1x10x10x1xf32>, vector<1x10x10x1xf32>, vector<1x10x10x1xf32>, vector<1x10x10x1xf32>, vector<1x10x10x1xf32>, vector<1x10x10x1xf32>, vector<1x10x10x1xf32>, vector<1x10x10x1xf32>, vector<1x10x10x1xf32>, vector<1x10x10x1xf32>, vector<1x10x10x1xf32>, vector<1x10x10x1xf32>, vector<1x10x10x1xf32>, vector<1x10x10x1xf32>, vector<1x10x10x1xf32> -> vector<1x10x10x16xf32>
    %108 = tpu.concatenate %67, %68, %69, %70, %71, %72, %73, %74, %75, %76, %77, %78, %79, %80, %81, %82 in 3 : vector<1x10x10x1xf32>, vector<1x10x10x1xf32>, vector<1x10x10x1xf32>, vector<1x10x10x1xf32>, vector<1x10x10x1xf32>, vector<1x10x10x1xf32>, vector<1x10x10x1xf32>, vector<1x10x10x1xf32>, vector<1x10x10x1xf32>, vector<1x10x10x1xf32>, vector<1x10x10x1xf32>, vector<1x10x10x1xf32>, vector<1x10x10x1xf32>, vector<1x10x10x1xf32>, vector<1x10x10x1xf32>, vector<1x10x10x1xf32> -> vector<1x10x10x16xf32>
    %109 = tpu.concatenate %83, %84, %85, %86, %87, %88, %89, %90, %91, %92, %93, %94, %95, %96, %97, %98 in 3 : vector<1x10x10x1xf32>, vector<1x10x10x1xf32>, vector<1x10x10x1xf32>, vector<1x10x10x1xf32>, vector<1x10x10x1xf32>, vector<1x10x10x1xf32>, vector<1x10x10x1xf32>, vector<1x10x10x1xf32>, vector<1x10x10x1xf32>, vector<1x10x10x1xf32>, vector<1x10x10x1xf32>, vector<1x10x10x1xf32>, vector<1x10x10x1xf32>, vector<1x10x10x1xf32>, vector<1x10x10x1xf32>, vector<1x10x10x1xf32> -> vector<1x10x10x16xf32>
    %110 = tpu.concatenate %99, %100, %101, %102, %103, %104, %105, %106 in 3 : vector<1x10x10x1xf32>, vector<1x10x10x1xf32>, vector<1x10x10x1xf32>, vector<1x10x10x1xf32>, vector<1x10x10x1xf32>, vector<1x10x10x1xf32>, vector<1x10x10x1xf32>, vector<1x10x10x1xf32> -> vector<1x10x10x8xf32>
    %111 = tpu.concatenate %107, %108, %109, %110 in 3 : vector<1x10x10x16xf32>, vector<1x10x10x16xf32>, vector<1x10x10x16xf32>, vector<1x10x10x8xf32> -> vector<1x10x10x56xf32>
    %112 = vector.shape_cast %111 : vector<1x10x10x56xf32> to vector<100x56xf32>
    %c0_2 = arith.constant 0 : index
    %c0_3 = arith.constant 0 : index
    %113 = vector.load %arg1[%c0_2, %c0_3] : memref<56x128xf32, #tpu.memory_space<vmem>>, vector<56x128xf32>
    %cst_4 = arith.constant dense<0.000000e+00> : vector<100x128xf32>
    %114 = tpu.matmul %112, %113, %cst_4 {dimension_numbers = #tpu.dot_dimension_numbers<[1], [0], [0], [1], [0, 0, 1, 1], [], []>} : vector<100x56xf32>, vector<56x128xf32>, vector<100x128xf32> -> vector<100x128xf32>
    %115 = vector.shape_cast %114 : vector<100x128xf32> to vector<1x10x10x128xf32>
    %116 = vector.extract_strided_slice %115 {offsets = [0, 0, 0, 0], sizes = [1, 6, 6, 128], strides = [1, 1, 1, 1]} : vector<1x10x10x128xf32> to vector<1x6x6x128xf32>
    %117 = vector.extract_strided_slice %115 {offsets = [0, 0, 1, 0], sizes = [1, 6, 6, 128], strides = [1, 1, 1, 1]} : vector<1x10x10x128xf32> to vector<1x6x6x128xf32>
    %118 = vector.extract_strided_slice %115 {offsets = [0, 0, 2, 0], sizes = [1, 6, 6, 128], strides = [1, 1, 1, 1]} : vector<1x10x10x128xf32> to vector<1x6x6x128xf32>
    %119 = vector.extract_strided_slice %115 {offsets = [0, 0, 3, 0], sizes = [1, 6, 6, 128], strides = [1, 1, 1, 1]} : vector<1x10x10x128xf32> to vector<1x6x6x128xf32>
    %120 = vector.extract_strided_slice %115 {offsets = [0, 0, 4, 0], sizes = [1, 6, 6, 128], strides = [1, 1, 1, 1]} : vector<1x10x10x128xf32> to vector<1x6x6x128xf32>
    %121 = tpu.concatenate %116, %117, %118, %119, %120 in 3 : vector<1x6x6x128xf32>, vector<1x6x6x128xf32>, vector<1x6x6x128xf32>, vector<1x6x6x128xf32>, vector<1x6x6x128xf32> -> vector<1x6x6x640xf32>
    %122 = vector.shape_cast %121 : vector<1x6x6x640xf32> to vector<36x640xf32>
    %c0_5 = arith.constant 0 : index
    %c0_6 = arith.constant 0 : index
    %c0_7 = arith.constant 0 : index
    %123 = vector.load %arg2[%c0_5, %c0_6, %c0_7] : memref<5x640x128xf32, #tpu.memory_space<vmem>>, vector<1x640x128xf32>
    %124 = vector.shape_cast %123 : vector<1x640x128xf32> to vector<640x128xf32>
    %cst_8 = arith.constant dense<0.000000e+00> : vector<36x128xf32>
    %125 = tpu.matmul %122, %124, %cst_8 {dimension_numbers = #tpu.dot_dimension_numbers<[1], [0], [0], [1], [0, 0, 1, 1], [], []>} : vector<36x640xf32>, vector<640x128xf32>, vector<36x128xf32> -> vector<36x128xf32>
    %126 = vector.extract_strided_slice %115 {offsets = [0, 1, 0, 0], sizes = [1, 6, 6, 128], strides = [1, 1, 1, 1]} : vector<1x10x10x128xf32> to vector<1x6x6x128xf32>
    %127 = vector.extract_strided_slice %115 {offsets = [0, 1, 1, 0], sizes = [1, 6, 6, 128], strides = [1, 1, 1, 1]} : vector<1x10x10x128xf32> to vector<1x6x6x128xf32>
    %128 = vector.extract_strided_slice %115 {offsets = [0, 1, 2, 0], sizes = [1, 6, 6, 128], strides = [1, 1, 1, 1]} : vector<1x10x10x128xf32> to vector<1x6x6x128xf32>
    %129 = vector.extract_strided_slice %115 {offsets = [0, 1, 3, 0], sizes = [1, 6, 6, 128], strides = [1, 1, 1, 1]} : vector<1x10x10x128xf32> to vector<1x6x6x128xf32>
    %130 = vector.extract_strided_slice %115 {offsets = [0, 1, 4, 0], sizes = [1, 6, 6, 128], strides = [1, 1, 1, 1]} : vector<1x10x10x128xf32> to vector<1x6x6x128xf32>
    %131 = tpu.concatenate %126, %127, %128, %129, %130 in 3 : vector<1x6x6x128xf32>, vector<1x6x6x128xf32>, vector<1x6x6x128xf32>, vector<1x6x6x128xf32>, vector<1x6x6x128xf32> -> vector<1x6x6x640xf32>
    %132 = vector.shape_cast %131 : vector<1x6x6x640xf32> to vector<36x640xf32>
    %c1 = arith.constant 1 : index
    %c0_9 = arith.constant 0 : index
    %c0_10 = arith.constant 0 : index
    %133 = vector.load %arg2[%c1, %c0_9, %c0_10] : memref<5x640x128xf32, #tpu.memory_space<vmem>>, vector<1x640x128xf32>
    %134 = vector.shape_cast %133 : vector<1x640x128xf32> to vector<640x128xf32>
    %cst_11 = arith.constant dense<0.000000e+00> : vector<36x128xf32>
    %135 = tpu.matmul %132, %134, %cst_11 {dimension_numbers = #tpu.dot_dimension_numbers<[1], [0], [0], [1], [0, 0, 1, 1], [], []>} : vector<36x640xf32>, vector<640x128xf32>, vector<36x128xf32> -> vector<36x128xf32>
    %136 = arith.addf %125, %135 : vector<36x128xf32>
    %137 = vector.extract_strided_slice %115 {offsets = [0, 2, 0, 0], sizes = [1, 6, 6, 128], strides = [1, 1, 1, 1]} : vector<1x10x10x128xf32> to vector<1x6x6x128xf32>
    %138 = vector.extract_strided_slice %115 {offsets = [0, 2, 1, 0], sizes = [1, 6, 6, 128], strides = [1, 1, 1, 1]} : vector<1x10x10x128xf32> to vector<1x6x6x128xf32>
    %139 = vector.extract_strided_slice %115 {offsets = [0, 2, 2, 0], sizes = [1, 6, 6, 128], strides = [1, 1, 1, 1]} : vector<1x10x10x128xf32> to vector<1x6x6x128xf32>
    %140 = vector.extract_strided_slice %115 {offsets = [0, 2, 3, 0], sizes = [1, 6, 6, 128], strides = [1, 1, 1, 1]} : vector<1x10x10x128xf32> to vector<1x6x6x128xf32>
    %141 = vector.extract_strided_slice %115 {offsets = [0, 2, 4, 0], sizes = [1, 6, 6, 128], strides = [1, 1, 1, 1]} : vector<1x10x10x128xf32> to vector<1x6x6x128xf32>
    %142 = tpu.concatenate %137, %138, %139, %140, %141 in 3 : vector<1x6x6x128xf32>, vector<1x6x6x128xf32>, vector<1x6x6x128xf32>, vector<1x6x6x128xf32>, vector<1x6x6x128xf32> -> vector<1x6x6x640xf32>
    %143 = vector.shape_cast %142 : vector<1x6x6x640xf32> to vector<36x640xf32>
    %c2 = arith.constant 2 : index
    %c0_12 = arith.constant 0 : index
    %c0_13 = arith.constant 0 : index
    %144 = vector.load %arg2[%c2, %c0_12, %c0_13] : memref<5x640x128xf32, #tpu.memory_space<vmem>>, vector<1x640x128xf32>
    %145 = vector.shape_cast %144 : vector<1x640x128xf32> to vector<640x128xf32>
    %cst_14 = arith.constant dense<0.000000e+00> : vector<36x128xf32>
    %146 = tpu.matmul %143, %145, %cst_14 {dimension_numbers = #tpu.dot_dimension_numbers<[1], [0], [0], [1], [0, 0, 1, 1], [], []>} : vector<36x640xf32>, vector<640x128xf32>, vector<36x128xf32> -> vector<36x128xf32>
    %147 = arith.addf %136, %146 : vector<36x128xf32>
    %148 = vector.extract_strided_slice %115 {offsets = [0, 3, 0, 0], sizes = [1, 6, 6, 128], strides = [1, 1, 1, 1]} : vector<1x10x10x128xf32> to vector<1x6x6x128xf32>
    %149 = vector.extract_strided_slice %115 {offsets = [0, 3, 1, 0], sizes = [1, 6, 6, 128], strides = [1, 1, 1, 1]} : vector<1x10x10x128xf32> to vector<1x6x6x128xf32>
    %150 = vector.extract_strided_slice %115 {offsets = [0, 3, 2, 0], sizes = [1, 6, 6, 128], strides = [1, 1, 1, 1]} : vector<1x10x10x128xf32> to vector<1x6x6x128xf32>
    %151 = vector.extract_strided_slice %115 {offsets = [0, 3, 3, 0], sizes = [1, 6, 6, 128], strides = [1, 1, 1, 1]} : vector<1x10x10x128xf32> to vector<1x6x6x128xf32>
    %152 = vector.extract_strided_slice %115 {offsets = [0, 3, 4, 0], sizes = [1, 6, 6, 128], strides = [1, 1, 1, 1]} : vector<1x10x10x128xf32> to vector<1x6x6x128xf32>
    %153 = tpu.concatenate %148, %149, %150, %151, %152 in 3 : vector<1x6x6x128xf32>, vector<1x6x6x128xf32>, vector<1x6x6x128xf32>, vector<1x6x6x128xf32>, vector<1x6x6x128xf32> -> vector<1x6x6x640xf32>
    %154 = vector.shape_cast %153 : vector<1x6x6x640xf32> to vector<36x640xf32>
    %c3 = arith.constant 3 : index
    %c0_15 = arith.constant 0 : index
    %c0_16 = arith.constant 0 : index
    %155 = vector.load %arg2[%c3, %c0_15, %c0_16] : memref<5x640x128xf32, #tpu.memory_space<vmem>>, vector<1x640x128xf32>
    %156 = vector.shape_cast %155 : vector<1x640x128xf32> to vector<640x128xf32>
    %cst_17 = arith.constant dense<0.000000e+00> : vector<36x128xf32>
    %157 = tpu.matmul %154, %156, %cst_17 {dimension_numbers = #tpu.dot_dimension_numbers<[1], [0], [0], [1], [0, 0, 1, 1], [], []>} : vector<36x640xf32>, vector<640x128xf32>, vector<36x128xf32> -> vector<36x128xf32>
    %158 = arith.addf %147, %157 : vector<36x128xf32>
    %159 = vector.extract_strided_slice %115 {offsets = [0, 4, 0, 0], sizes = [1, 6, 6, 128], strides = [1, 1, 1, 1]} : vector<1x10x10x128xf32> to vector<1x6x6x128xf32>
    %160 = vector.extract_strided_slice %115 {offsets = [0, 4, 1, 0], sizes = [1, 6, 6, 128], strides = [1, 1, 1, 1]} : vector<1x10x10x128xf32> to vector<1x6x6x128xf32>
    %161 = vector.extract_strided_slice %115 {offsets = [0, 4, 2, 0], sizes = [1, 6, 6, 128], strides = [1, 1, 1, 1]} : vector<1x10x10x128xf32> to vector<1x6x6x128xf32>
    %162 = vector.extract_strided_slice %115 {offsets = [0, 4, 3, 0], sizes = [1, 6, 6, 128], strides = [1, 1, 1, 1]} : vector<1x10x10x128xf32> to vector<1x6x6x128xf32>
    %163 = vector.extract_strided_slice %115 {offsets = [0, 4, 4, 0], sizes = [1, 6, 6, 128], strides = [1, 1, 1, 1]} : vector<1x10x10x128xf32> to vector<1x6x6x128xf32>
    %164 = tpu.concatenate %159, %160, %161, %162, %163 in 3 : vector<1x6x6x128xf32>, vector<1x6x6x128xf32>, vector<1x6x6x128xf32>, vector<1x6x6x128xf32>, vector<1x6x6x128xf32> -> vector<1x6x6x640xf32>
    %165 = vector.shape_cast %164 : vector<1x6x6x640xf32> to vector<36x640xf32>
    %c4 = arith.constant 4 : index
    %c0_18 = arith.constant 0 : index
    %c0_19 = arith.constant 0 : index
    %166 = vector.load %arg2[%c4, %c0_18, %c0_19] : memref<5x640x128xf32, #tpu.memory_space<vmem>>, vector<1x640x128xf32>
    %167 = vector.shape_cast %166 : vector<1x640x128xf32> to vector<640x128xf32>
    %cst_20 = arith.constant dense<0.000000e+00> : vector<36x128xf32>
    %168 = tpu.matmul %165, %167, %cst_20 {dimension_numbers = #tpu.dot_dimension_numbers<[1], [0], [0], [1], [0, 0, 1, 1], [], []>} : vector<36x640xf32>, vector<640x128xf32>, vector<36x128xf32> -> vector<36x128xf32>
    %169 = arith.addf %158, %168 : vector<36x128xf32>
    %170 = vector.shape_cast %169 : vector<36x128xf32> to vector<1x6x6x128xf32>
    %171 = vector.extract_strided_slice %170 {offsets = [0, 0, 0, 0], sizes = [1, 4, 4, 128], strides = [1, 1, 1, 1]} : vector<1x6x6x128xf32> to vector<1x4x4x128xf32>
    %172 = vector.extract_strided_slice %170 {offsets = [0, 0, 1, 0], sizes = [1, 4, 4, 128], strides = [1, 1, 1, 1]} : vector<1x6x6x128xf32> to vector<1x4x4x128xf32>
    %173 = vector.extract_strided_slice %170 {offsets = [0, 0, 2, 0], sizes = [1, 4, 4, 128], strides = [1, 1, 1, 1]} : vector<1x6x6x128xf32> to vector<1x4x4x128xf32>
    %174 = tpu.concatenate %171, %172, %173 in 3 : vector<1x4x4x128xf32>, vector<1x4x4x128xf32>, vector<1x4x4x128xf32> -> vector<1x4x4x384xf32>
    %175 = vector.shape_cast %174 : vector<1x4x4x384xf32> to vector<16x384xf32>
    %c0_21 = arith.constant 0 : index
    %c0_22 = arith.constant 0 : index
    %c0_23 = arith.constant 0 : index
    %176 = vector.load %arg3[%c0_21, %c0_22, %c0_23] : memref<3x384x128xf32, #tpu.memory_space<vmem>>, vector<1x384x128xf32>
    %177 = vector.shape_cast %176 : vector<1x384x128xf32> to vector<384x128xf32>
    %cst_24 = arith.constant dense<0.000000e+00> : vector<16x128xf32>
    %178 = tpu.matmul %175, %177, %cst_24 {dimension_numbers = #tpu.dot_dimension_numbers<[1], [0], [0], [1], [0, 0, 1, 1], [], []>} : vector<16x384xf32>, vector<384x128xf32>, vector<16x128xf32> -> vector<16x128xf32>
    %179 = vector.extract_strided_slice %170 {offsets = [0, 1, 0, 0], sizes = [1, 4, 4, 128], strides = [1, 1, 1, 1]} : vector<1x6x6x128xf32> to vector<1x4x4x128xf32>
    %180 = vector.extract_strided_slice %170 {offsets = [0, 1, 1, 0], sizes = [1, 4, 4, 128], strides = [1, 1, 1, 1]} : vector<1x6x6x128xf32> to vector<1x4x4x128xf32>
    %181 = vector.extract_strided_slice %170 {offsets = [0, 1, 2, 0], sizes = [1, 4, 4, 128], strides = [1, 1, 1, 1]} : vector<1x6x6x128xf32> to vector<1x4x4x128xf32>
    %182 = tpu.concatenate %179, %180, %181 in 3 : vector<1x4x4x128xf32>, vector<1x4x4x128xf32>, vector<1x4x4x128xf32> -> vector<1x4x4x384xf32>
    %183 = vector.shape_cast %182 : vector<1x4x4x384xf32> to vector<16x384xf32>
    %c1_25 = arith.constant 1 : index
    %c0_26 = arith.constant 0 : index
    %c0_27 = arith.constant 0 : index
    %184 = vector.load %arg3[%c1_25, %c0_26, %c0_27] : memref<3x384x128xf32, #tpu.memory_space<vmem>>, vector<1x384x128xf32>
    %185 = vector.shape_cast %184 : vector<1x384x128xf32> to vector<384x128xf32>
    %cst_28 = arith.constant dense<0.000000e+00> : vector<16x128xf32>
    %186 = tpu.matmul %183, %185, %cst_28 {dimension_numbers = #tpu.dot_dimension_numbers<[1], [0], [0], [1], [0, 0, 1, 1], [], []>} : vector<16x384xf32>, vector<384x128xf32>, vector<16x128xf32> -> vector<16x128xf32>
    %187 = arith.addf %178, %186 : vector<16x128xf32>
    %188 = vector.extract_strided_slice %170 {offsets = [0, 2, 0, 0], sizes = [1, 4, 4, 128], strides = [1, 1, 1, 1]} : vector<1x6x6x128xf32> to vector<1x4x4x128xf32>
    %189 = vector.extract_strided_slice %170 {offsets = [0, 2, 1, 0], sizes = [1, 4, 4, 128], strides = [1, 1, 1, 1]} : vector<1x6x6x128xf32> to vector<1x4x4x128xf32>
    %190 = vector.extract_strided_slice %170 {offsets = [0, 2, 2, 0], sizes = [1, 4, 4, 128], strides = [1, 1, 1, 1]} : vector<1x6x6x128xf32> to vector<1x4x4x128xf32>
    %191 = tpu.concatenate %188, %189, %190 in 3 : vector<1x4x4x128xf32>, vector<1x4x4x128xf32>, vector<1x4x4x128xf32> -> vector<1x4x4x384xf32>
    %192 = vector.shape_cast %191 : vector<1x4x4x384xf32> to vector<16x384xf32>
    %c2_29 = arith.constant 2 : index
    %c0_30 = arith.constant 0 : index
    %c0_31 = arith.constant 0 : index
    %193 = vector.load %arg3[%c2_29, %c0_30, %c0_31] : memref<3x384x128xf32, #tpu.memory_space<vmem>>, vector<1x384x128xf32>
    %194 = vector.shape_cast %193 : vector<1x384x128xf32> to vector<384x128xf32>
    %cst_32 = arith.constant dense<0.000000e+00> : vector<16x128xf32>
    %195 = tpu.matmul %192, %194, %cst_32 {dimension_numbers = #tpu.dot_dimension_numbers<[1], [0], [0], [1], [0, 0, 1, 1], [], []>} : vector<16x384xf32>, vector<384x128xf32>, vector<16x128xf32> -> vector<16x128xf32>
    %196 = arith.addf %187, %195 : vector<16x128xf32>
    %197 = vector.shape_cast %196 : vector<16x128xf32> to vector<1x4x4x128xf32>
    %c0_33 = arith.constant 0 : index
    %c0_34 = arith.constant 0 : index
    %198 = vector.load %arg4[%c0_33, %c0_34] : memref<1x128xf32, #tpu.memory_space<vmem>>, vector<1x128xf32>
    %199 = vector.shape_cast %198 : vector<1x128xf32> to vector<1x1x1x128xf32>
    %200 = vector.broadcast %199 : vector<1x1x1x128xf32> to vector<1x4x4x128xf32>
    %201 = arith.mulf %197, %200 : vector<1x4x4x128xf32>
    %cst_35 = arith.constant dense<0.000000e+00> : vector<1x4x4xf32>
    %202 = vector.multi_reduction <add>, %201, %cst_35 [3] : vector<1x4x4x128xf32> to vector<1x4x4xf32>
    %203 = vector.extract_strided_slice %202 {offsets = [0, 0, 0], sizes = [1, 1, 4], strides = [1, 1, 1]} : vector<1x4x4xf32> to vector<1x1x4xf32>
    %204 = vector.extract_strided_slice %202 {offsets = [0, 2, 0], sizes = [1, 1, 4], strides = [1, 1, 1]} : vector<1x4x4xf32> to vector<1x1x4xf32>
    %205 = tpu.concatenate %203, %204 in 1 : vector<1x1x4xf32>, vector<1x1x4xf32> -> vector<1x2x4xf32>
    %206 = vector.extract_strided_slice %205 {offsets = [0, 0, 0], sizes = [1, 2, 1], strides = [1, 1, 1]} : vector<1x2x4xf32> to vector<1x2x1xf32>
    %207 = vector.extract_strided_slice %205 {offsets = [0, 0, 2], sizes = [1, 2, 1], strides = [1, 1, 1]} : vector<1x2x4xf32> to vector<1x2x1xf32>
    %208 = tpu.concatenate %206, %207 in 2 : vector<1x2x1xf32>, vector<1x2x1xf32> -> vector<1x2x2xf32>
    %c0_36 = arith.constant 0 : index
    %c0_37 = arith.constant 0 : index
    %c0_38 = arith.constant 0 : index
    %209 = vector.load %arg5[%c0_36, %c0_37, %c0_38] : memref<1x2x2xf32, #tpu.memory_space<vmem>>, vector<1x2x2xf32>
    tpu.vector_store %arg5[%c0_36, %c0_37, %c0_38], %208 {strides = array<i32>} : memref<1x2x2xf32, #tpu.memory_space<vmem>>, vector<1x2x2xf32>,
    return
  }
}

</mosaic_0001>

<llo_original>
// kernel: generator_forward.1
$region0: #{generator_forward.1}
  #allocation0 [shape = 'u32[]', space=smem, size = 0x4, offset = 0x4, fixed_abs, tag = 'smem constant byte address 0x4 - core index']
  #allocation1 [shape = 'u32[72,128]{1,0:T(1,128)}', space=vmem, size = 0x9000, scoped, tag = 'internal scratch']
  %s0 = inlined_call_operand.vmem [shape: f32[1,16,16], index: 0, kind: input, shape index: {}]
  %s1 = inlined_call_operand.vmem [shape: f32[56,128], index: 1, kind: input, shape index: {}]
  %s2 = inlined_call_operand.vmem [shape: f32[5,640,128], index: 2, kind: input, shape index: {}]
  %s3 = inlined_call_operand.vmem [shape: f32[3,384,128], index: 3, kind: input, shape index: {}]
  %s4 = inlined_call_operand.vmem [shape: f32[1,128], index: 4, kind: input, shape index: {}]
  %s5 = inlined_call_operand.hbm [shape: f32[1,2,2], index: 5, kind: output, shape index: {}]
  %s6 = sld [smem:[#allocation0]]
  $region30: #{generator_forward.1} parent=0
    _
  %s8 = ssub.s32 1, %s6
  %s9 = scalar_select 0, %s8, %s6
  $region1: #{generator_forward.1} parent=0
    #allocation2 [shape = 'u8[1024]{0}', space=vmem, size = 0x400, scoped, tag = 'output window, operand 0, single buffered']
    #allocation3 [shape = 's32[1]{0}', space=sflag, size = 0x4, scoped, tag = 'scoped memory for generator_forward.1']
    %10 = vsyncpa [#allocation3], 0
    // Predicated region
    $region2: #{generator_forward.1} parent=1 // pred_check
      _
    $region3: #{generator_forward.1} parent=1 // pred_check_branch
      %12 = sbr.rel (0) target = $region5
    $region4: #{generator_forward.1} parent=1 // pred_region
      _
    $region5: #{generator_forward.1} parent=1 // pred_fallthru
      _
    // Predicated region
    $region6: #{generator_forward.1} parent=1 // pred_check
      _
    $region7: #{generator_forward.1} parent=1 // pred_check_branch
      %14 = sbr.rel (0) target = $region9
    $region8: #{generator_forward.1} parent=1 // pred_region
      _
    $region9: #{generator_forward.1} parent=1 // pred_fallthru
      _
    // Predicated region
    $region10: #{generator_forward.1} parent=1 // pred_check
      _
    $region11: #{generator_forward.1} parent=1 // pred_check_branch
      %16 = sbr.rel (0) target = $region13
    $region12: #{generator_forward.1} parent=1 // pred_region
      _
    $region13: #{generator_forward.1} parent=1 // pred_fallthru
      _
    // Predicated region
    $region14: #{generator_forward.1} parent=1 // pred_check
      _
    $region15: #{generator_forward.1} parent=1 // pred_check_branch
      %18 = sbr.rel (0) target = $region17
    $region16: #{generator_forward.1} parent=1 // pred_region
      _
    $region17: #{generator_forward.1} parent=1 // pred_fallthru
      _
    // Predicated region
    $region18: #{generator_forward.1} parent=1 // pred_check
      _
    $region19: #{generator_forward.1} parent=1 // pred_check_branch
      %20 = sbr.rel (0) target = $region21
    $region20: #{generator_forward.1} parent=1 // pred_region
      _
    $region21: #{generator_forward.1} parent=1 // pred_fallthru
      _
    %v21 = vld [vmem:[%s0] sm:$0xff]
    %v22 = vld [vmem:[%s0 + $0x8] sm:$0xff]
    %v23 = vperm.slane %v21, 0
    %v24 = vlaneseq
    %v25 = vshrl.u32 %v24, 7
    %27 = vset.pattern.permute.xlu0 %v25
    %28 = vperm.xlu0 %27, %v23
    %v29 = vpop.permute.xlu0 %28
    %v30 = vlaneseq
    %v31 = vshrl.u32 %v30, 7
    %v32 = vadd.s32 %v31, 8
    %33 = vset.pattern.permute.xlu0 %v32
    %34 = vperm.xlu0 %33, %v23
    %v35 = vpop.permute.xlu0 %34
    %v36 = vperm.slane %v21, 1
    %v37 = vlaneseq
    %v38 = vshrl.u32 %v37, 7
    %40 = vset.pattern.permute.xlu0 %v38
    %41 = vperm.xlu0 %40, %v36
    %v42 = vpop.permute.xlu0 %41
    %v43 = vlaneseq
    %v44 = vshrl.u32 %v43, 7
    %v45 = vadd.s32 %v44, 8
    %46 = vset.pattern.permute.xlu0 %v45
    %47 = vperm.xlu0 %46, %v36
    %v48 = vpop.permute.xlu0 %47
    %v49 = vperm.slane %v21, 2
    %v50 = vlaneseq
    %v51 = vshrl.u32 %v50, 7
    %53 = vset.pattern.permute.xlu0 %v51
    %54 = vperm.xlu0 %53, %v49
    %v55 = vpop.permute.xlu0 %54
    %v56 = vlaneseq
    %v57 = vshrl.u32 %v56, 7
    %v58 = vadd.s32 %v57, 8
    %59 = vset.pattern.permute.xlu0 %v58
    %60 = vperm.xlu0 %59, %v49
    %v61 = vpop.permute.xlu0 %60
    %v62 = vperm.slane %v21, 3
    %v63 = vlaneseq
    %v64 = vshrl.u32 %v63, 7
    %66 = vset.pattern.permute.xlu0 %v64
    %67 = vperm.xlu0 %66, %v62
    %v68 = vpop.permute.xlu0 %67
    %v69 = vlaneseq
    %v70 = vshrl.u32 %v69, 7
    %v71 = vadd.s32 %v70, 8
    %72 = vset.pattern.permute.xlu0 %v71
    %73 = vperm.xlu0 %72, %v62
    %v74 = vpop.permute.xlu0 %73
    %v75 = vperm.slane %v21, 4
    %v76 = vlaneseq
    %v77 = vshrl.u32 %v76, 7
    %79 = vset.pattern.permute.xlu0 %v77
    %80 = vperm.xlu0 %79, %v75
    %v81 = vpop.permute.xlu0 %80
    %v82 = vlaneseq
    %v83 = vshrl.u32 %v82, 7
    %v84 = vadd.s32 %v83, 8
    %85 = vset.pattern.permute.xlu0 %v84
    %86 = vperm.xlu0 %85, %v75
    %v87 = vpop.permute.xlu0 %86
    %v88 = vperm.slane %v21, 5
    %v89 = vlaneseq
    %v90 = vshrl.u32 %v89, 7
    %92 = vset.pattern.permute.xlu0 %v90
    %93 = vperm.xlu0 %92, %v88
    %v94 = vpop.permute.xlu0 %93
    %v95 = vlaneseq
    %v96 = vshrl.u32 %v95, 7
    %v97 = vadd.s32 %v96, 8
    %98 = vset.pattern.permute.xlu0 %v97
    %99 = vperm.xlu0 %98, %v88
    %v100 = vpop.permute.xlu0 %99
    %v101 = vperm.slane %v21, 6
    %v102 = vlaneseq
    %v103 = vshrl.u32 %v102, 7
    %105 = vset.pattern.permute.xlu0 %v103
    %106 = vperm.xlu0 %105, %v101
    %v107 = vpop.permute.xlu0 %106
    %v108 = vlaneseq
    %v109 = vshrl.u32 %v108, 7
    %v110 = vadd.s32 %v109, 8
    %111 = vset.pattern.permute.xlu0 %v110
    %112 = vperm.xlu0 %111, %v101
    %v113 = vpop.permute.xlu0 %112
    %v114 = vperm.slane %v21, 7
    %v115 = vlaneseq
    %v116 = vshrl.u32 %v115, 7
    %118 = vset.pattern.permute.xlu0 %v116
    %119 = vperm.xlu0 %118, %v114
    %v120 = vpop.permute.xlu0 %119
    %v121 = vlaneseq
    %v122 = vshrl.u32 %v121, 7
    %v123 = vadd.s32 %v122, 8
    %124 = vset.pattern.permute.xlu0 %v123
    %125 = vperm.xlu0 %124, %v114
    %v126 = vpop.permute.xlu0 %125
    %v127 = vperm.slane %v22, 0
    %v128 = vlaneseq
    %v129 = vshrl.u32 %v128, 7
    %131 = vset.pattern.permute.xlu0 %v129
    %132 = vperm.xlu0 %131, %v127
    %v133 = vpop.permute.xlu0 %132
    %v134 = vlaneseq
    %v135 = vshrl.u32 %v134, 7
    %v136 = vadd.s32 %v135, 8
    %137 = vset.pattern.permute.xlu0 %v136
    %138 = vperm.xlu0 %137, %v127
    %v139 = vpop.permute.xlu0 %138
    %v140 = vperm.slane %v22, 1
    %v141 = vlaneseq
    %v142 = vshrl.u32 %v141, 7
    %144 = vset.pattern.permute.xlu0 %v142
    %145 = vperm.xlu0 %144, %v140
    %v146 = vpop.permute.xlu0 %145
    %v147 = vlaneseq
    %v148 = vshrl.u32 %v147, 7
    %v149 = vadd.s32 %v148, 8
    %150 = vset.pattern.permute.xlu0 %v149
    %151 = vperm.xlu0 %150, %v140
    %v152 = vpop.permute.xlu0 %151
    %v153 = vlaneseq
    %v154 = vshrl.u32 %v153, 7
    %v155 = vadd.s32 %v154, 1
    %156 = vset.pattern.permute.xlu0 %v155
    %157 = vperm.xlu0 %156, %v23
    %v158 = vpop.permute.xlu0 %157
    %v159 = vlaneseq
    %v160 = vshrl.u32 %v159, 7
    %v161 = vadd.s32 %v160, 9
    %162 = vset.pattern.permute.xlu0 %v161
    %163 = vperm.xlu0 %162, %v23
    %v164 = vpop.permute.xlu0 %163
    %v165 = vlaneseq
    %v166 = vshrl.u32 %v165, 7
    %v167 = vadd.s32 %v166, 1
    %168 = vset.pattern.permute.xlu0 %v167
    %169 = vperm.xlu0 %168, %v36
    %v170 = vpop.permute.xlu0 %169
    %v171 = vlaneseq
    %v172 = vshrl.u32 %v171, 7
    %v173 = vadd.s32 %v172, 9
    %174 = vset.pattern.permute.xlu0 %v173
    %175 = vperm.xlu0 %174, %v36
    %v176 = vpop.permute.xlu0 %175
    %v177 = vlaneseq
    %v178 = vshrl.u32 %v177, 7
    %v179 = vadd.s32 %v178, 1
    %180 = vset.pattern.permute.xlu0 %v179
    %181 = vperm.xlu0 %180, %v49
    %v182 = vpop.permute.xlu0 %181
    %v183 = vlaneseq
    %v184 = vshrl.u32 %v183, 7
    %v185 = vadd.s32 %v184, 9
    %186 = vset.pattern.permute.xlu0 %v185
    %187 = vperm.xlu0 %186, %v49
    %v188 = vpop.permute.xlu0 %187
    %v189 = vlaneseq
    %v190 = vshrl.u32 %v189, 7
    %v191 = vadd.s32 %v190, 1
    %192 = vset.pattern.permute.xlu0 %v191
    %193 = vperm.xlu0 %192, %v62
    %v194 = vpop.permute.xlu0 %193
    %v195 = vlaneseq
    %v196 = vshrl.u32 %v195, 7
    %v197 = vadd.s32 %v196, 9
    %198 = vset.pattern.permute.xlu0 %v197
    %199 = vperm.xlu0 %198, %v62
    %v200 = vpop.permute.xlu0 %199
    %v201 = vlaneseq
    %v202 = vshrl.u32 %v201, 7
    %v203 = vadd.s32 %v202, 1
    %204 = vset.pattern.permute.xlu0 %v203
    %205 = vperm.xlu0 %204, %v75
    %v206 = vpop.permute.xlu0 %205
    %v207 = vlaneseq
    %v208 = vshrl.u32 %v207, 7
    %v209 = vadd.s32 %v208, 9
    %210 = vset.pattern.permute.xlu0 %v209
    %211 = vperm.xlu0 %210, %v75
    %v212 = vpop.permute.xlu0 %211
    %v213 = vlaneseq
    %v214 = vshrl.u32 %v213, 7
    %v215 = vadd.s32 %v214, 1
    %216 = vset.pattern.permute.xlu0 %v215
    %217 = vperm.xlu0 %216, %v88
    %v218 = vpop.permute.xlu0 %217
    %v219 = vlaneseq
    %v220 = vshrl.u32 %v219, 7
    %v221 = vadd.s32 %v220, 9
    %222 = vset.pattern.permute.xlu0 %v221
    %223 = vperm.xlu0 %222, %v88
    %v224 = vpop.permute.xlu0 %223
    %v225 = vlaneseq
    %v226 = vshrl.u32 %v225, 7
    %v227 = vadd.s32 %v226, 1
    %228 = vset.pattern.permute.xlu0 %v227
    %229 = vperm.xlu0 %228, %v101
    %v230 = vpop.permute.xlu0 %229
    %v231 = vlaneseq
    %v232 = vshrl.u32 %v231, 7
    %v233 = vadd.s32 %v232, 9
    %234 = vset.pattern.permute.xlu0 %v233
    %235 = vperm.xlu0 %234, %v101
    %v236 = vpop.permute.xlu0 %235
    %v237 = vlaneseq
    %v238 = vshrl.u32 %v237, 7
    %v239 = vadd.s32 %v238, 1
    %240 = vset.pattern.permute.xlu0 %v239
    %241 = vperm.xlu0 %240, %v114
    %v242 = vpop.permute.xlu0 %241
    %v243 = vlaneseq
    %v244 = vshrl.u32 %v243, 7
    %v245 = vadd.s32 %v244, 9
    %246 = vset.pattern.permute.xlu0 %v245
    %247 = vperm.xlu0 %246, %v114
    %v248 = vpop.permute.xlu0 %247
    %v249 = vlaneseq
    %v250 = vshrl.u32 %v249, 7
    %v251 = vadd.s32 %v250, 1
    %252 = vset.pattern.permute.xlu0 %v251
    %253 = vperm.xlu0 %252, %v127
    %v254 = vpop.permute.xlu0 %253
    %v255 = vlaneseq
    %v256 = vshrl.u32 %v255, 7
    %v257 = vadd.s32 %v256, 9
    %258 = vset.pattern.permute.xlu0 %v257
    %259 = vperm.xlu0 %258, %v127
    %v260 = vpop.permute.xlu0 %259
    %v261 = vlaneseq
    %v262 = vshrl.u32 %v261, 7
    %v263 = vadd.s32 %v262, 1
    %264 = vset.pattern.permute.xlu0 %v263
    %265 = vperm.xlu0 %264, %v140
    %v266 = vpop.permute.xlu0 %265
    %v267 = vlaneseq
    %v268 = vshrl.u32 %v267, 7
    %v269 = vadd.s32 %v268, 9
    %270 = vset.pattern.permute.xlu0 %v269
    %271 = vperm.xlu0 %270, %v140
    %v272 = vpop.permute.xlu0 %271
    %v273 = vlaneseq
    %v274 = vshrl.u32 %v273, 7
    %v275 = vadd.s32 %v274, 2
    %276 = vset.pattern.permute.xlu0 %v275
    %277 = vperm.xlu0 %276, %v23
    %v278 = vpop.permute.xlu0 %277
    %v279 = vlaneseq
    %v280 = vshrl.u32 %v279, 7
    %v281 = vadd.s32 %v280, 10
    %282 = vset.pattern.permute.xlu0 %v281
    %283 = vperm.xlu0 %282, %v23
    %v284 = vpop.permute.xlu0 %283
    %v285 = vlaneseq
    %v286 = vshrl.u32 %v285, 7
    %v287 = vadd.s32 %v286, 2
    %288 = vset.pattern.permute.xlu0 %v287
    %289 = vperm.xlu0 %288, %v36
    %v290 = vpop.permute.xlu0 %289
    %v291 = vlaneseq
    %v292 = vshrl.u32 %v291, 7
    %v293 = vadd.s32 %v292, 10
    %294 = vset.pattern.permute.xlu0 %v293
    %295 = vperm.xlu0 %294, %v36
    %v296 = vpop.permute.xlu0 %295
    %v297 = vlaneseq
    %v298 = vshrl.u32 %v297, 7
    %v299 = vadd.s32 %v298, 2
    %300 = vset.pattern.permute.xlu0 %v299
    %301 = vperm.xlu0 %300, %v49
    %v302 = vpop.permute.xlu0 %301
    %v303 = vlaneseq
    %v304 = vshrl.u32 %v303, 7
    %v305 = vadd.s32 %v304, 10
    %306 = vset.pattern.permute.xlu0 %v305
    %307 = vperm.xlu0 %306, %v49
    %v308 = vpop.permute.xlu0 %307
    %v309 = vlaneseq
    %v310 = vshrl.u32 %v309, 7
    %v311 = vadd.s32 %v310, 2
    %312 = vset.pattern.permute.xlu0 %v311
    %313 = vperm.xlu0 %312, %v62
    %v314 = vpop.permute.xlu0 %313
    %v315 = vlaneseq
    %v316 = vshrl.u32 %v315, 7
    %v317 = vadd.s32 %v316, 10
    %318 = vset.pattern.permute.xlu0 %v317
    %319 = vperm.xlu0 %318, %v62
    %v320 = vpop.permute.xlu0 %319
    %v321 = vlaneseq
    %v322 = vshrl.u32 %v321, 7
    %v323 = vadd.s32 %v322, 2
    %324 = vset.pattern.permute.xlu0 %v323
    %325 = vperm.xlu0 %324, %v75
    %v326 = vpop.permute.xlu0 %325
    %v327 = vlaneseq
    %v328 = vshrl.u32 %v327, 7
    %v329 = vadd.s32 %v328, 10
    %330 = vset.pattern.permute.xlu0 %v329
    %331 = vperm.xlu0 %330, %v75
    %v332 = vpop.permute.xlu0 %331
    %v333 = vlaneseq
    %v334 = vshrl.u32 %v333, 7
    %v335 = vadd.s32 %v334, 2
    %336 = vset.pattern.permute.xlu0 %v335
    %337 = vperm.xlu0 %336, %v88
    %v338 = vpop.permute.xlu0 %337
    %v339 = vlaneseq
    %v340 = vshrl.u32 %v339, 7
    %v341 = vadd.s32 %v340, 10
    %342 = vset.pattern.permute.xlu0 %v341
    %343 = vperm.xlu0 %342, %v88
    %v344 = vpop.permute.xlu0 %343
    %v345 = vlaneseq
    %v346 = vshrl.u32 %v345, 7
    %v347 = vadd.s32 %v346, 2
    %348 = vset.pattern.permute.xlu0 %v347
    %349 = vperm.xlu0 %348, %v101
    %v350 = vpop.permute.xlu0 %349
    %v351 = vlaneseq
    %v352 = vshrl.u32 %v351, 7
    %v353 = vadd.s32 %v352, 10
    %354 = vset.pattern.permute.xlu0 %v353
    %355 = vperm.xlu0 %354, %v101
    %v356 = vpop.permute.xlu0 %355
    %v357 = vlaneseq
    %v358 = vshrl.u32 %v357, 7
    %v359 = vadd.s32 %v358, 2
    %360 = vset.pattern.permute.xlu0 %v359
    %361 = vperm.xlu0 %360, %v114
    %v362 = vpop.permute.xlu0 %361
    %v363 = vlaneseq
    %v364 = vshrl.u32 %v363, 7
    %v365 = vadd.s32 %v364, 10
    %366 = vset.pattern.permute.xlu0 %v365
    %367 = vperm.xlu0 %366, %v114
    %v368 = vpop.permute.xlu0 %367
    %v369 = vlaneseq
    %v370 = vshrl.u32 %v369, 7
    %v371 = vadd.s32 %v370, 2
    %372 = vset.pattern.permute.xlu0 %v371
    %373 = vperm.xlu0 %372, %v127
    %v374 = vpop.permute.xlu0 %373
    %v375 = vlaneseq
    %v376 = vshrl.u32 %v375, 7
    %v377 = vadd.s32 %v376, 10
    %378 = vset.pattern.permute.xlu0 %v377
    %379 = vperm.xlu0 %378, %v127
    %v380 = vpop.permute.xlu0 %379
    %v381 = vlaneseq
    %v382 = vshrl.u32 %v381, 7
    %v383 = vadd.s32 %v382, 2
    %384 = vset.pattern.permute.xlu0 %v383
    %385 = vperm.xlu0 %384, %v140
    %v386 = vpop.permute.xlu0 %385
    %v387 = vlaneseq
    %v388 = vshrl.u32 %v387, 7
    %v389 = vadd.s32 %v388, 10
    %390 = vset.pattern.permute.xlu0 %v389
    %391 = vperm.xlu0 %390, %v140
    %v392 = vpop.permute.xlu0 %391
    %v393 = vlaneseq
    %v394 = vshrl.u32 %v393, 7
    %v395 = vadd.s32 %v394, 3
    %396 = vset.pattern.permute.xlu0 %v395
    %397 = vperm.xlu0 %396, %v23
    %v398 = vpop.permute.xlu0 %397
    %v399 = vlaneseq
    %v400 = vshrl.u32 %v399, 7
    %v401 = vadd.s32 %v400, 11
    %402 = vset.pattern.permute.xlu0 %v401
    %403 = vperm.xlu0 %402, %v23
    %v404 = vpop.permute.xlu0 %403
    %v405 = vlaneseq
    %v406 = vshrl.u32 %v405, 7
    %v407 = vadd.s32 %v406, 3
    %408 = vset.pattern.permute.xlu0 %v407
    %409 = vperm.xlu0 %408, %v36
    %v410 = vpop.permute.xlu0 %409
    %v411 = vlaneseq
    %v412 = vshrl.u32 %v411, 7
    %v413 = vadd.s32 %v412, 11
    %414 = vset.pattern.permute.xlu0 %v413
    %415 = vperm.xlu0 %414, %v36
    %v416 = vpop.permute.xlu0 %415
    %v417 = vlaneseq
    %v418 = vshrl.u32 %v417, 7
    %v419 = vadd.s32 %v418, 3
    %420 = vset.pattern.permute.xlu0 %v419
    %421 = vperm.xlu0 %420, %v49
    %v422 = vpop.permute.xlu0 %421
    %v423 = vlaneseq
    %v424 = vshrl.u32 %v423, 7
    %v425 = vadd.s32 %v424, 11
    %426 = vset.pattern.permute.xlu0 %v425
    %427 = vperm.xlu0 %426, %v49
    %v428 = vpop.permute.xlu0 %427
    %v429 = vlaneseq
    %v430 = vshrl.u32 %v429, 7
    %v431 = vadd.s32 %v430, 3
    %432 = vset.pattern.permute.xlu0 %v431
    %433 = vperm.xlu0 %432, %v62
    %v434 = vpop.permute.xlu0 %433
    %v435 = vlaneseq
    %v436 = vshrl.u32 %v435, 7
    %v437 = vadd.s32 %v436, 11
    %438 = vset.pattern.permute.xlu0 %v437
    %439 = vperm.xlu0 %438, %v62
    %v440 = vpop.permute.xlu0 %439
    %v441 = vlaneseq
    %v442 = vshrl.u32 %v441, 7
    %v443 = vadd.s32 %v442, 3
    %444 = vset.pattern.permute.xlu0 %v443
    %445 = vperm.xlu0 %444, %v75
    %v446 = vpop.permute.xlu0 %445
    %v447 = vlaneseq
    %v448 = vshrl.u32 %v447, 7
    %v449 = vadd.s32 %v448, 11
    %450 = vset.pattern.permute.xlu0 %v449
    %451 = vperm.xlu0 %450, %v75
    %v452 = vpop.permute.xlu0 %451
    %v453 = vlaneseq
    %v454 = vshrl.u32 %v453, 7
    %v455 = vadd.s32 %v454, 3
    %456 = vset.pattern.permute.xlu0 %v455
    %457 = vperm.xlu0 %456, %v88
    %v458 = vpop.permute.xlu0 %457
    %v459 = vlaneseq
    %v460 = vshrl.u32 %v459, 7
    %v461 = vadd.s32 %v460, 11
    %462 = vset.pattern.permute.xlu0 %v461
    %463 = vperm.xlu0 %462, %v88
    %v464 = vpop.permute.xlu0 %463
    %v465 = vlaneseq
    %v466 = vshrl.u32 %v465, 7
    %v467 = vadd.s32 %v466, 3
    %468 = vset.pattern.permute.xlu0 %v467
    %469 = vperm.xlu0 %468, %v101
    %v470 = vpop.permute.xlu0 %469
    %v471 = vlaneseq
    %v472 = vshrl.u32 %v471, 7
    %v473 = vadd.s32 %v472, 11
    %474 = vset.pattern.permute.xlu0 %v473
    %475 = vperm.xlu0 %474, %v101
    %v476 = vpop.permute.xlu0 %475
    %v477 = vlaneseq
    %v478 = vshrl.u32 %v477, 7
    %v479 = vadd.s32 %v478, 3
    %480 = vset.pattern.permute.xlu0 %v479
    %481 = vperm.xlu0 %480, %v114
    %v482 = vpop.permute.xlu0 %481
    %v483 = vlaneseq
    %v484 = vshrl.u32 %v483, 7
    %v485 = vadd.s32 %v484, 11
    %486 = vset.pattern.permute.xlu0 %v485
    %487 = vperm.xlu0 %486, %v114
    %v488 = vpop.permute.xlu0 %487
    %v489 = vlaneseq
    %v490 = vshrl.u32 %v489, 7
    %v491 = vadd.s32 %v490, 3
    %492 = vset.pattern.permute.xlu0 %v491
    %493 = vperm.xlu0 %492, %v127
    %v494 = vpop.permute.xlu0 %493
    %v495 = vlaneseq
    %v496 = vshrl.u32 %v495, 7
    %v497 = vadd.s32 %v496, 11
    %498 = vset.pattern.permute.xlu0 %v497
    %499 = vperm.xlu0 %498, %v127
    %v500 = vpop.permute.xlu0 %499
    %v501 = vlaneseq
    %v502 = vshrl.u32 %v501, 7
    %v503 = vadd.s32 %v502, 3
    %504 = vset.pattern.permute.xlu0 %v503
    %505 = vperm.xlu0 %504, %v140
    %v506 = vpop.permute.xlu0 %505
    %v507 = vlaneseq
    %v508 = vshrl.u32 %v507, 7
    %v509 = vadd.s32 %v508, 11
    %510 = vset.pattern.permute.xlu0 %v509
    %511 = vperm.xlu0 %510, %v140
    %v512 = vpop.permute.xlu0 %511
    %v513 = vlaneseq
    %v514 = vshrl.u32 %v513, 7
    %v515 = vadd.s32 %v514, 4
    %516 = vset.pattern.permute.xlu0 %v515
    %517 = vperm.xlu0 %516, %v23
    %v518 = vpop.permute.xlu0 %517
    %v519 = vlaneseq
    %v520 = vshrl.u32 %v519, 7
    %v521 = vadd.s32 %v520, 12
    %522 = vset.pattern.permute.xlu0 %v521
    %523 = vperm.xlu0 %522, %v23
    %v524 = vpop.permute.xlu0 %523
    %v525 = vlaneseq
    %v526 = vshrl.u32 %v525, 7
    %v527 = vadd.s32 %v526, 4
    %528 = vset.pattern.permute.xlu0 %v527
    %529 = vperm.xlu0 %528, %v36
    %v530 = vpop.permute.xlu0 %529
    %v531 = vlaneseq
    %v532 = vshrl.u32 %v531, 7
    %v533 = vadd.s32 %v532, 12
    %534 = vset.pattern.permute.xlu0 %v533
    %535 = vperm.xlu0 %534, %v36
    %v536 = vpop.permute.xlu0 %535
    %v537 = vlaneseq
    %v538 = vshrl.u32 %v537, 7
    %v539 = vadd.s32 %v538, 4
    %540 = vset.pattern.permute.xlu0 %v539
    %541 = vperm.xlu0 %540, %v49
    %v542 = vpop.permute.xlu0 %541
    %v543 = vlaneseq
    %v544 = vshrl.u32 %v543, 7
    %v545 = vadd.s32 %v544, 12
    %546 = vset.pattern.permute.xlu0 %v545
    %547 = vperm.xlu0 %546, %v49
    %v548 = vpop.permute.xlu0 %547
    %v549 = vlaneseq
    %v550 = vshrl.u32 %v549, 7
    %v551 = vadd.s32 %v550, 4
    %552 = vset.pattern.permute.xlu0 %v551
    %553 = vperm.xlu0 %552, %v62
    %v554 = vpop.permute.xlu0 %553
    %v555 = vlaneseq
    %v556 = vshrl.u32 %v555, 7
    %v557 = vadd.s32 %v556, 12
    %558 = vset.pattern.permute.xlu0 %v557
    %559 = vperm.xlu0 %558, %v62
    %v560 = vpop.permute.xlu0 %559
    %v561 = vlaneseq
    %v562 = vshrl.u32 %v561, 7
    %v563 = vadd.s32 %v562, 4
    %564 = vset.pattern.permute.xlu0 %v563
    %565 = vperm.xlu0 %564, %v75
    %v566 = vpop.permute.xlu0 %565
    %v567 = vlaneseq
    %v568 = vshrl.u32 %v567, 7
    %v569 = vadd.s32 %v568, 12
    %570 = vset.pattern.permute.xlu0 %v569
    %571 = vperm.xlu0 %570, %v75
    %v572 = vpop.permute.xlu0 %571
    %v573 = vlaneseq
    %v574 = vshrl.u32 %v573, 7
    %v575 = vadd.s32 %v574, 4
    %576 = vset.pattern.permute.xlu0 %v575
    %577 = vperm.xlu0 %576, %v88
    %v578 = vpop.permute.xlu0 %577
    %v579 = vlaneseq
    %v580 = vshrl.u32 %v579, 7
    %v581 = vadd.s32 %v580, 12
    %582 = vset.pattern.permute.xlu0 %v581
    %583 = vperm.xlu0 %582, %v88
    %v584 = vpop.permute.xlu0 %583
    %v585 = vlaneseq
    %v586 = vshrl.u32 %v585, 7
    %v587 = vadd.s32 %v586, 4
    %588 = vset.pattern.permute.xlu0 %v587
    %589 = vperm.xlu0 %588, %v101
    %v590 = vpop.permute.xlu0 %589
    %v591 = vlaneseq
    %v592 = vshrl.u32 %v591, 7
    %v593 = vadd.s32 %v592, 12
    %594 = vset.pattern.permute.xlu0 %v593
    %595 = vperm.xlu0 %594, %v101
    %v596 = vpop.permute.xlu0 %595
    %v597 = vlaneseq
    %v598 = vshrl.u32 %v597, 7
    %v599 = vadd.s32 %v598, 4
    %600 = vset.pattern.permute.xlu0 %v599
    %601 = vperm.xlu0 %600, %v114
    %v602 = vpop.permute.xlu0 %601
    %v603 = vlaneseq
    %v604 = vshrl.u32 %v603, 7
    %v605 = vadd.s32 %v604, 12
    %606 = vset.pattern.permute.xlu0 %v605
    %607 = vperm.xlu0 %606, %v114
    %v608 = vpop.permute.xlu0 %607
    %v609 = vlaneseq
    %v610 = vshrl.u32 %v609, 7
    %v611 = vadd.s32 %v610, 4
    %612 = vset.pattern.permute.xlu0 %v611
    %613 = vperm.xlu0 %612, %v127
    %v614 = vpop.permute.xlu0 %613
    %v615 = vlaneseq
    %v616 = vshrl.u32 %v615, 7
    %v617 = vadd.s32 %v616, 12
    %618 = vset.pattern.permute.xlu0 %v617
    %619 = vperm.xlu0 %618, %v127
    %v620 = vpop.permute.xlu0 %619
    %v621 = vlaneseq
    %v622 = vshrl.u32 %v621, 7
    %v623 = vadd.s32 %v622, 4
    %624 = vset.pattern.permute.xlu0 %v623
    %625 = vperm.xlu0 %624, %v140
    %v626 = vpop.permute.xlu0 %625
    %v627 = vlaneseq
    %v628 = vshrl.u32 %v627, 7
    %v629 = vadd.s32 %v628, 12
    %630 = vset.pattern.permute.xlu0 %v629
    %631 = vperm.xlu0 %630, %v140
    %v632 = vpop.permute.xlu0 %631
    %v633 = vlaneseq
    %v634 = vshrl.u32 %v633, 7
    %v635 = vadd.s32 %v634, 5
    %636 = vset.pattern.permute.xlu0 %v635
    %637 = vperm.xlu0 %636, %v23
    %v638 = vpop.permute.xlu0 %637
    %v639 = vlaneseq
    %v640 = vshrl.u32 %v639, 7
    %v641 = vadd.s32 %v640, 13
    %642 = vset.pattern.permute.xlu0 %v641
    %643 = vperm.xlu0 %642, %v23
    %v644 = vpop.permute.xlu0 %643
    %v645 = vlaneseq
    %v646 = vshrl.u32 %v645, 7
    %v647 = vadd.s32 %v646, 5
    %648 = vset.pattern.permute.xlu0 %v647
    %649 = vperm.xlu0 %648, %v36
    %v650 = vpop.permute.xlu0 %649
    %v651 = vlaneseq
    %v652 = vshrl.u32 %v651, 7
    %v653 = vadd.s32 %v652, 13
    %654 = vset.pattern.permute.xlu0 %v653
    %655 = vperm.xlu0 %654, %v36
    %v656 = vpop.permute.xlu0 %655
    %v657 = vlaneseq
    %v658 = vshrl.u32 %v657, 7
    %v659 = vadd.s32 %v658, 5
    %660 = vset.pattern.permute.xlu0 %v659
    %661 = vperm.xlu0 %660, %v49
    %v662 = vpop.permute.xlu0 %661
    %v663 = vlaneseq
    %v664 = vshrl.u32 %v663, 7
    %v665 = vadd.s32 %v664, 13
    %666 = vset.pattern.permute.xlu0 %v665
    %667 = vperm.xlu0 %666, %v49
    %v668 = vpop.permute.xlu0 %667
    %v669 = vlaneseq
    %v670 = vshrl.u32 %v669, 7
    %v671 = vadd.s32 %v670, 5
    %672 = vset.pattern.permute.xlu0 %v671
    %673 = vperm.xlu0 %672, %v62
    %v674 = vpop.permute.xlu0 %673
    %v675 = vlaneseq
    %v676 = vshrl.u32 %v675, 7
    %v677 = vadd.s32 %v676, 13
    %678 = vset.pattern.permute.xlu0 %v677
    %679 = vperm.xlu0 %678, %v62
    %v680 = vpop.permute.xlu0 %679
    %v681 = vlaneseq
    %v682 = vshrl.u32 %v681, 7
    %v683 = vadd.s32 %v682, 5
    %684 = vset.pattern.permute.xlu0 %v683
    %685 = vperm.xlu0 %684, %v75
    %v686 = vpop.permute.xlu0 %685
    %v687 = vlaneseq
    %v688 = vshrl.u32 %v687, 7
    %v689 = vadd.s32 %v688, 13
    %690 = vset.pattern.permute.xlu0 %v689
    %691 = vperm.xlu0 %690, %v75
    %v692 = vpop.permute.xlu0 %691
    %v693 = vlaneseq
    %v694 = vshrl.u32 %v693, 7
    %v695 = vadd.s32 %v694, 5
    %696 = vset.pattern.permute.xlu0 %v695
    %697 = vperm.xlu0 %696, %v88
    %v698 = vpop.permute.xlu0 %697
    %v699 = vlaneseq
    %v700 = vshrl.u32 %v699, 7
    %v701 = vadd.s32 %v700, 13
    %702 = vset.pattern.permute.xlu0 %v701
    %703 = vperm.xlu0 %702, %v88
    %v704 = vpop.permute.xlu0 %703
    %v705 = vlaneseq
    %v706 = vshrl.u32 %v705, 7
    %v707 = vadd.s32 %v706, 5
    %708 = vset.pattern.permute.xlu0 %v707
    %709 = vperm.xlu0 %708, %v101
    %v710 = vpop.permute.xlu0 %709
    %v711 = vlaneseq
    %v712 = vshrl.u32 %v711, 7
    %v713 = vadd.s32 %v712, 13
    %714 = vset.pattern.permute.xlu0 %v713
    %715 = vperm.xlu0 %714, %v101
    %v716 = vpop.permute.xlu0 %715
    %v717 = vlaneseq
    %v718 = vshrl.u32 %v717, 7
    %v719 = vadd.s32 %v718, 5
    %720 = vset.pattern.permute.xlu0 %v719
    %721 = vperm.xlu0 %720, %v114
    %v722 = vpop.permute.xlu0 %721
    %v723 = vlaneseq
    %v724 = vshrl.u32 %v723, 7
    %v725 = vadd.s32 %v724, 13
    %726 = vset.pattern.permute.xlu0 %v725
    %727 = vperm.xlu0 %726, %v114
    %v728 = vpop.permute.xlu0 %727
    %v729 = vlaneseq
    %v730 = vshrl.u32 %v729, 7
    %v731 = vadd.s32 %v730, 5
    %732 = vset.pattern.permute.xlu0 %v731
    %733 = vperm.xlu0 %732, %v127
    %v734 = vpop.permute.xlu0 %733
    %v735 = vlaneseq
    %v736 = vshrl.u32 %v735, 7
    %v737 = vadd.s32 %v736, 13
    %738 = vset.pattern.permute.xlu0 %v737
    %739 = vperm.xlu0 %738, %v127
    %v740 = vpop.permute.xlu0 %739
    %v741 = vlaneseq
    %v742 = vshrl.u32 %v741, 7
    %v743 = vadd.s32 %v742, 5
    %744 = vset.pattern.permute.xlu0 %v743
    %745 = vperm.xlu0 %744, %v140
    %v746 = vpop.permute.xlu0 %745
    %v747 = vlaneseq
    %v748 = vshrl.u32 %v747, 7
    %v749 = vadd.s32 %v748, 13
    %750 = vset.pattern.permute.xlu0 %v749
    %751 = vperm.xlu0 %750, %v140
    %v752 = vpop.permute.xlu0 %751
    %v753 = vlaneseq
    %v754 = vshrl.u32 %v753, 7
    %v755 = vadd.s32 %v754, 6
    %756 = vset.pattern.permute.xlu0 %v755
    %757 = vperm.xlu0 %756, %v23
    %v758 = vpop.permute.xlu0 %757
    %v759 = vlaneseq
    %v760 = vshrl.u32 %v759, 7
    %v761 = vadd.s32 %v760, 14
    %762 = vset.pattern.permute.xlu0 %v761
    %763 = vperm.xlu0 %762, %v23
    %v764 = vpop.permute.xlu0 %763
    %v765 = vlaneseq
    %v766 = vshrl.u32 %v765, 7
    %v767 = vadd.s32 %v766, 6
    %768 = vset.pattern.permute.xlu0 %v767
    %769 = vperm.xlu0 %768, %v36
    %v770 = vpop.permute.xlu0 %769
    %v771 = vlaneseq
    %v772 = vshrl.u32 %v771, 7
    %v773 = vadd.s32 %v772, 14
    %774 = vset.pattern.permute.xlu0 %v773
    %775 = vperm.xlu0 %774, %v36
    %v776 = vpop.permute.xlu0 %775
    %v777 = vlaneseq
    %v778 = vshrl.u32 %v777, 7
    %v779 = vadd.s32 %v778, 6
    %780 = vset.pattern.permute.xlu0 %v779
    %781 = vperm.xlu0 %780, %v49
    %v782 = vpop.permute.xlu0 %781
    %v783 = vlaneseq
    %v784 = vshrl.u32 %v783, 7
    %v785 = vadd.s32 %v784, 14
    %786 = vset.pattern.permute.xlu0 %v785
    %787 = vperm.xlu0 %786, %v49
    %v788 = vpop.permute.xlu0 %787
    %v789 = vlaneseq
    %v790 = vshrl.u32 %v789, 7
    %v791 = vadd.s32 %v790, 6
    %792 = vset.pattern.permute.xlu0 %v791
    %793 = vperm.xlu0 %792, %v62
    %v794 = vpop.permute.xlu0 %793
    %v795 = vlaneseq
    %v796 = vshrl.u32 %v795, 7
    %v797 = vadd.s32 %v796, 14
    %798 = vset.pattern.permute.xlu0 %v797
    %799 = vperm.xlu0 %798, %v62
    %v800 = vpop.permute.xlu0 %799
    %v801 = vlaneseq
    %v802 = vshrl.u32 %v801, 7
    %v803 = vadd.s32 %v802, 6
    %804 = vset.pattern.permute.xlu0 %v803
    %805 = vperm.xlu0 %804, %v75
    %v806 = vpop.permute.xlu0 %805
    %v807 = vlaneseq
    %v808 = vshrl.u32 %v807, 7
    %v809 = vadd.s32 %v808, 14
    %810 = vset.pattern.permute.xlu0 %v809
    %811 = vperm.xlu0 %810, %v75
    %v812 = vpop.permute.xlu0 %811
    %v813 = vlaneseq
    %v814 = vshrl.u32 %v813, 7
    %v815 = vadd.s32 %v814, 6
    %816 = vset.pattern.permute.xlu0 %v815
    %817 = vperm.xlu0 %816, %v88
    %v818 = vpop.permute.xlu0 %817
    %v819 = vlaneseq
    %v820 = vshrl.u32 %v819, 7
    %v821 = vadd.s32 %v820, 14
    %822 = vset.pattern.permute.xlu0 %v821
    %823 = vperm.xlu0 %822, %v88
    %v824 = vpop.permute.xlu0 %823
    %v825 = vlaneseq
    %v826 = vshrl.u32 %v825, 7
    %v827 = vadd.s32 %v826, 6
    %828 = vset.pattern.permute.xlu0 %v827
    %829 = vperm.xlu0 %828, %v101
    %v830 = vpop.permute.xlu0 %829
    %v831 = vlaneseq
    %v832 = vshrl.u32 %v831, 7
    %v833 = vadd.s32 %v832, 14
    %834 = vset.pattern.permute.xlu0 %v833
    %835 = vperm.xlu0 %834, %v101
    %v836 = vpop.permute.xlu0 %835
    %v837 = vlaneseq
    %v838 = vshrl.u32 %v837, 7
    %v839 = vadd.s32 %v838, 6
    %840 = vset.pattern.permute.xlu0 %v839
    %841 = vperm.xlu0 %840, %v114
    %v842 = vpop.permute.xlu0 %841
    %v843 = vlaneseq
    %v844 = vshrl.u32 %v843, 7
    %v845 = vadd.s32 %v844, 14
    %846 = vset.pattern.permute.xlu0 %v845
    %847 = vperm.xlu0 %846, %v114
    %v848 = vpop.permute.xlu0 %847
    %v849 = vlaneseq
    %v850 = vshrl.u32 %v849, 7
    %v851 = vadd.s32 %v850, 6
    %852 = vset.pattern.permute.xlu0 %v851
    %853 = vperm.xlu0 %852, %v127
    %v854 = vpop.permute.xlu0 %853
    %v855 = vlaneseq
    %v856 = vshrl.u32 %v855, 7
    %v857 = vadd.s32 %v856, 14
    %858 = vset.pattern.permute.xlu0 %v857
    %859 = vperm.xlu0 %858, %v127
    %v860 = vpop.permute.xlu0 %859
    %v861 = vlaneseq
    %v862 = vshrl.u32 %v861, 7
    %v863 = vadd.s32 %v862, 6
    %864 = vset.pattern.permute.xlu0 %v863
    %865 = vperm.xlu0 %864, %v140
    %v866 = vpop.permute.xlu0 %865
    %v867 = vlaneseq
    %v868 = vshrl.u32 %v867, 7
    %v869 = vadd.s32 %v868, 14
    %870 = vset.pattern.permute.xlu0 %v869
    %871 = vperm.xlu0 %870, %v140
    %v872 = vpop.permute.xlu0 %871
    %v873 = vperm.slane %v22, 2
    %v874 = vlaneseq
    %v875 = vshrl.u32 %v874, 7
    %877 = vset.pattern.permute.xlu0 %v875
    %878 = vperm.xlu0 %877, %v873
    %v879 = vpop.permute.xlu0 %878
    %v880 = vlaneseq
    %v881 = vshrl.u32 %v880, 7
    %v882 = vadd.s32 %v881, 8
    %883 = vset.pattern.permute.xlu0 %v882
    %884 = vperm.xlu0 %883, %v873
    %v885 = vpop.permute.xlu0 %884
    %v886 = vlaneseq
    %v887 = vshrl.u32 %v886, 7
    %v888 = vadd.s32 %v887, 1
    %889 = vset.pattern.permute.xlu0 %v888
    %890 = vperm.xlu0 %889, %v873
    %v891 = vpop.permute.xlu0 %890
    %v892 = vlaneseq
    %v893 = vshrl.u32 %v892, 7
    %v894 = vadd.s32 %v893, 9
    %895 = vset.pattern.permute.xlu0 %v894
    %896 = vperm.xlu0 %895, %v873
    %v897 = vpop.permute.xlu0 %896
    %v898 = vlaneseq
    %v899 = vshrl.u32 %v898, 7
    %v900 = vadd.s32 %v899, 2
    %901 = vset.pattern.permute.xlu0 %v900
    %902 = vperm.xlu0 %901, %v873
    %v903 = vpop.permute.xlu0 %902
    %v904 = vlaneseq
    %v905 = vshrl.u32 %v904, 7
    %v906 = vadd.s32 %v905, 10
    %907 = vset.pattern.permute.xlu0 %v906
    %908 = vperm.xlu0 %907, %v873
    %v909 = vpop.permute.xlu0 %908
    %v910 = vlaneseq
    %v911 = vshrl.u32 %v910, 7
    %v912 = vadd.s32 %v911, 3
    %913 = vset.pattern.permute.xlu0 %v912
    %914 = vperm.xlu0 %913, %v873
    %v915 = vpop.permute.xlu0 %914
    %v916 = vlaneseq
    %v917 = vshrl.u32 %v916, 7
    %v918 = vadd.s32 %v917, 11
    %919 = vset.pattern.permute.xlu0 %v918
    %920 = vperm.xlu0 %919, %v873
    %v921 = vpop.permute.xlu0 %920
    %v922 = vlaneseq
    %v923 = vshrl.u32 %v922, 7
    %v924 = vadd.s32 %v923, 4
    %925 = vset.pattern.permute.xlu0 %v924
    %926 = vperm.xlu0 %925, %v873
    %v927 = vpop.permute.xlu0 %926
    %v928 = vlaneseq
    %v929 = vshrl.u32 %v928, 7
    %v930 = vadd.s32 %v929, 12
    %931 = vset.pattern.permute.xlu0 %v930
    %932 = vperm.xlu0 %931, %v873
    %v933 = vpop.permute.xlu0 %932
    %v934 = vlaneseq
    %v935 = vshrl.u32 %v934, 7
    %v936 = vadd.s32 %v935, 5
    %937 = vset.pattern.permute.xlu0 %v936
    %938 = vperm.xlu0 %937, %v873
    %v939 = vpop.permute.xlu0 %938
    %v940 = vlaneseq
    %v941 = vshrl.u32 %v940, 7
    %v942 = vadd.s32 %v941, 13
    %943 = vset.pattern.permute.xlu0 %v942
    %944 = vperm.xlu0 %943, %v873
    %v945 = vpop.permute.xlu0 %944
    %v946 = vlaneseq
    %v947 = vshrl.u32 %v946, 7
    %v948 = vadd.s32 %v947, 6
    %949 = vset.pattern.permute.xlu0 %v948
    %950 = vperm.xlu0 %949, %v873
    %v951 = vpop.permute.xlu0 %950
    %v952 = vlaneseq
    %v953 = vshrl.u32 %v952, 7
    %v954 = vadd.s32 %v953, 14
    %955 = vset.pattern.permute.xlu0 %v954
    %956 = vperm.xlu0 %955, %v873
    %v957 = vpop.permute.xlu0 %956
    %v958 = vperm.slane %v22, 3
    %v959 = vlaneseq
    %v960 = vshrl.u32 %v959, 7
    %962 = vset.pattern.permute.xlu0 %v960
    %963 = vperm.xlu0 %962, %v958
    %v964 = vpop.permute.xlu0 %963
    %v965 = vlaneseq
    %v966 = vshrl.u32 %v965, 7
    %v967 = vadd.s32 %v966, 8
    %968 = vset.pattern.permute.xlu0 %v967
    %969 = vperm.xlu0 %968, %v958
    %v970 = vpop.permute.xlu0 %969
    %v971 = vlaneseq
    %v972 = vshrl.u32 %v971, 7
    %v973 = vadd.s32 %v972, 1
    %974 = vset.pattern.permute.xlu0 %v973
    %975 = vperm.xlu0 %974, %v958
    %v976 = vpop.permute.xlu0 %975
    %v977 = vlaneseq
    %v978 = vshrl.u32 %v977, 7
    %v979 = vadd.s32 %v978, 9
    %980 = vset.pattern.permute.xlu0 %v979
    %981 = vperm.xlu0 %980, %v958
    %v982 = vpop.permute.xlu0 %981
    %v983 = vlaneseq
    %v984 = vshrl.u32 %v983, 7
    %v985 = vadd.s32 %v984, 2
    %986 = vset.pattern.permute.xlu0 %v985
    %987 = vperm.xlu0 %986, %v958
    %v988 = vpop.permute.xlu0 %987
    %v989 = vlaneseq
    %v990 = vshrl.u32 %v989, 7
    %v991 = vadd.s32 %v990, 10
    %992 = vset.pattern.permute.xlu0 %v991
    %993 = vperm.xlu0 %992, %v958
    %v994 = vpop.permute.xlu0 %993
    %v995 = vlaneseq
    %v996 = vshrl.u32 %v995, 7
    %v997 = vadd.s32 %v996, 3
    %998 = vset.pattern.permute.xlu0 %v997
    %999 = vperm.xlu0 %998, %v958
    %v1000 = vpop.permute.xlu0 %999
    %v1001 = vlaneseq
    %v1002 = vshrl.u32 %v1001, 7
    %v1003 = vadd.s32 %v1002, 11
    %1004 = vset.pattern.permute.xlu0 %v1003
    %1005 = vperm.xlu0 %1004, %v958
    %v1006 = vpop.permute.xlu0 %1005
    %v1007 = vlaneseq
    %v1008 = vshrl.u32 %v1007, 7
    %v1009 = vadd.s32 %v1008, 4
    %1010 = vset.pattern.permute.xlu0 %v1009
    %1011 = vperm.xlu0 %1010, %v958
    %v1012 = vpop.permute.xlu0 %1011
    %v1013 = vlaneseq
    %v1014 = vshrl.u32 %v1013, 7
    %v1015 = vadd.s32 %v1014, 12
    %1016 = vset.pattern.permute.xlu0 %v1015
    %1017 = vperm.xlu0 %1016, %v958
    %v1018 = vpop.permute.xlu0 %1017
    %v1019 = vlaneseq
    %v1020 = vshrl.u32 %v1019, 7
    %v1021 = vadd.s32 %v1020, 5
    %1022 = vset.pattern.permute.xlu0 %v1021
    %1023 = vperm.xlu0 %1022, %v958
    %v1024 = vpop.permute.xlu0 %1023
    %v1025 = vlaneseq
    %v1026 = vshrl.u32 %v1025, 7
    %v1027 = vadd.s32 %v1026, 13
    %1028 = vset.pattern.permute.xlu0 %v1027
    %1029 = vperm.xlu0 %1028, %v958
    %v1030 = vpop.permute.xlu0 %1029
    %v1031 = vlaneseq
    %v1032 = vshrl.u32 %v1031, 7
    %v1033 = vadd.s32 %v1032, 6
    %1034 = vset.pattern.permute.xlu0 %v1033
    %1035 = vperm.xlu0 %1034, %v958
    %v1036 = vpop.permute.xlu0 %1035
    %v1037 = vlaneseq
    %v1038 = vshrl.u32 %v1037, 7
    %v1039 = vadd.s32 %v1038, 14
    %1040 = vset.pattern.permute.xlu0 %v1039
    %1041 = vperm.xlu0 %1040, %v958
    %v1042 = vpop.permute.xlu0 %1041
    %v1043 = vperm.slane %v22, 4
    %v1044 = vlaneseq
    %v1045 = vshrl.u32 %v1044, 7
    %1047 = vset.pattern.permute.xlu0 %v1045
    %1048 = vperm.xlu0 %1047, %v1043
    %v1049 = vpop.permute.xlu0 %1048
    %v1050 = vlaneseq
    %v1051 = vshrl.u32 %v1050, 7
    %v1052 = vadd.s32 %v1051, 8
    %1053 = vset.pattern.permute.xlu0 %v1052
    %1054 = vperm.xlu0 %1053, %v1043
    %v1055 = vpop.permute.xlu0 %1054
    %v1056 = vlaneseq
    %v1057 = vshrl.u32 %v1056, 7
    %v1058 = vadd.s32 %v1057, 1
    %1059 = vset.pattern.permute.xlu0 %v1058
    %1060 = vperm.xlu0 %1059, %v1043
    %v1061 = vpop.permute.xlu0 %1060
    %v1062 = vlaneseq
    %v1063 = vshrl.u32 %v1062, 7
    %v1064 = vadd.s32 %v1063, 9
    %1065 = vset.pattern.permute.xlu0 %v1064
    %1066 = vperm.xlu0 %1065, %v1043
    %v1067 = vpop.permute.xlu0 %1066
    %v1068 = vlaneseq
    %v1069 = vshrl.u32 %v1068, 7
    %v1070 = vadd.s32 %v1069, 2
    %1071 = vset.pattern.permute.xlu0 %v1070
    %1072 = vperm.xlu0 %1071, %v1043
    %v1073 = vpop.permute.xlu0 %1072
    %v1074 = vlaneseq
    %v1075 = vshrl.u32 %v1074, 7
    %v1076 = vadd.s32 %v1075, 10
    %1077 = vset.pattern.permute.xlu0 %v1076
    %1078 = vperm.xlu0 %1077, %v1043
    %v1079 = vpop.permute.xlu0 %1078
    %v1080 = vlaneseq
    %v1081 = vshrl.u32 %v1080, 7
    %v1082 = vadd.s32 %v1081, 3
    %1083 = vset.pattern.permute.xlu0 %v1082
    %1084 = vperm.xlu0 %1083, %v1043
    %v1085 = vpop.permute.xlu0 %1084
    %v1086 = vlaneseq
    %v1087 = vshrl.u32 %v1086, 7
    %v1088 = vadd.s32 %v1087, 11
    %1089 = vset.pattern.permute.xlu0 %v1088
    %1090 = vperm.xlu0 %1089, %v1043
    %v1091 = vpop.permute.xlu0 %1090
    %v1092 = vlaneseq
    %v1093 = vshrl.u32 %v1092, 7
    %v1094 = vadd.s32 %v1093, 4
    %1095 = vset.pattern.permute.xlu0 %v1094
    %1096 = vperm.xlu0 %1095, %v1043
    %v1097 = vpop.permute.xlu0 %1096
    %v1098 = vlaneseq
    %v1099 = vshrl.u32 %v1098, 7
    %v1100 = vadd.s32 %v1099, 12
    %1101 = vset.pattern.permute.xlu0 %v1100
    %1102 = vperm.xlu0 %1101, %v1043
    %v1103 = vpop.permute.xlu0 %1102
    %v1104 = vlaneseq
    %v1105 = vshrl.u32 %v1104, 7
    %v1106 = vadd.s32 %v1105, 5
    %1107 = vset.pattern.permute.xlu0 %v1106
    %1108 = vperm.xlu0 %1107, %v1043
    %v1109 = vpop.permute.xlu0 %1108
    %v1110 = vlaneseq
    %v1111 = vshrl.u32 %v1110, 7
    %v1112 = vadd.s32 %v1111, 13
    %1113 = vset.pattern.permute.xlu0 %v1112
    %1114 = vperm.xlu0 %1113, %v1043
    %v1115 = vpop.permute.xlu0 %1114
    %v1116 = vlaneseq
    %v1117 = vshrl.u32 %v1116, 7
    %v1118 = vadd.s32 %v1117, 6
    %1119 = vset.pattern.permute.xlu0 %v1118
    %1120 = vperm.xlu0 %1119, %v1043
    %v1121 = vpop.permute.xlu0 %1120
    %v1122 = vlaneseq
    %v1123 = vshrl.u32 %v1122, 7
    %v1124 = vadd.s32 %v1123, 14
    %1125 = vset.pattern.permute.xlu0 %v1124
    %1126 = vperm.xlu0 %1125, %v1043
    %v1127 = vpop.permute.xlu0 %1126
    %v1128 = vperm.slane %v22, 5
    %v1129 = vlaneseq
    %v1130 = vshrl.u32 %v1129, 7
    %1132 = vset.pattern.permute.xlu0 %v1130
    %1133 = vperm.xlu0 %1132, %v1128
    %v1134 = vpop.permute.xlu0 %1133
    %v1135 = vlaneseq
    %v1136 = vshrl.u32 %v1135, 7
    %v1137 = vadd.s32 %v1136, 8
    %1138 = vset.pattern.permute.xlu0 %v1137
    %1139 = vperm.xlu0 %1138, %v1128
    %v1140 = vpop.permute.xlu0 %1139
    %v1141 = vlaneseq
    %v1142 = vshrl.u32 %v1141, 7
    %v1143 = vadd.s32 %v1142, 1
    %1144 = vset.pattern.permute.xlu0 %v1143
    %1145 = vperm.xlu0 %1144, %v1128
    %v1146 = vpop.permute.xlu0 %1145
    %v1147 = vlaneseq
    %v1148 = vshrl.u32 %v1147, 7
    %v1149 = vadd.s32 %v1148, 9
    %1150 = vset.pattern.permute.xlu0 %v1149
    %1151 = vperm.xlu0 %1150, %v1128
    %v1152 = vpop.permute.xlu0 %1151
    %v1153 = vlaneseq
    %v1154 = vshrl.u32 %v1153, 7
    %v1155 = vadd.s32 %v1154, 2
    %1156 = vset.pattern.permute.xlu0 %v1155
    %1157 = vperm.xlu0 %1156, %v1128
    %v1158 = vpop.permute.xlu0 %1157
    %v1159 = vlaneseq
    %v1160 = vshrl.u32 %v1159, 7
    %v1161 = vadd.s32 %v1160, 10
    %1162 = vset.pattern.permute.xlu0 %v1161
    %1163 = vperm.xlu0 %1162, %v1128
    %v1164 = vpop.permute.xlu0 %1163
    %v1165 = vlaneseq
    %v1166 = vshrl.u32 %v1165, 7
    %v1167 = vadd.s32 %v1166, 3
    %1168 = vset.pattern.permute.xlu0 %v1167
    %1169 = vperm.xlu0 %1168, %v1128
    %v1170 = vpop.permute.xlu0 %1169
    %v1171 = vlaneseq
    %v1172 = vshrl.u32 %v1171, 7
    %v1173 = vadd.s32 %v1172, 11
    %1174 = vset.pattern.permute.xlu0 %v1173
    %1175 = vperm.xlu0 %1174, %v1128
    %v1176 = vpop.permute.xlu0 %1175
    %v1177 = vlaneseq
    %v1178 = vshrl.u32 %v1177, 7
    %v1179 = vadd.s32 %v1178, 4
    %1180 = vset.pattern.permute.xlu0 %v1179
    %1181 = vperm.xlu0 %1180, %v1128
    %v1182 = vpop.permute.xlu0 %1181
    %v1183 = vlaneseq
    %v1184 = vshrl.u32 %v1183, 7
    %v1185 = vadd.s32 %v1184, 12
    %1186 = vset.pattern.permute.xlu0 %v1185
    %1187 = vperm.xlu0 %1186, %v1128
    %v1188 = vpop.permute.xlu0 %1187
    %v1189 = vlaneseq
    %v1190 = vshrl.u32 %v1189, 7
    %v1191 = vadd.s32 %v1190, 5
    %1192 = vset.pattern.permute.xlu0 %v1191
    %1193 = vperm.xlu0 %1192, %v1128
    %v1194 = vpop.permute.xlu0 %1193
    %v1195 = vlaneseq
    %v1196 = vshrl.u32 %v1195, 7
    %v1197 = vadd.s32 %v1196, 13
    %1198 = vset.pattern.permute.xlu0 %v1197
    %1199 = vperm.xlu0 %1198, %v1128
    %v1200 = vpop.permute.xlu0 %1199
    %v1201 = vlaneseq
    %v1202 = vshrl.u32 %v1201, 7
    %v1203 = vadd.s32 %v1202, 6
    %1204 = vset.pattern.permute.xlu0 %v1203
    %1205 = vperm.xlu0 %1204, %v1128
    %v1206 = vpop.permute.xlu0 %1205
    %v1207 = vlaneseq
    %v1208 = vshrl.u32 %v1207, 7
    %v1209 = vadd.s32 %v1208, 14
    %1210 = vset.pattern.permute.xlu0 %v1209
    %1211 = vperm.xlu0 %1210, %v1128
    %v1212 = vpop.permute.xlu0 %1211
    %v1213 = vperm.slane %v22, 6
    %v1214 = vlaneseq
    %v1215 = vshrl.u32 %v1214, 7
    %1217 = vset.pattern.permute.xlu0 %v1215
    %1218 = vperm.xlu0 %1217, %v1213
    %v1219 = vpop.permute.xlu0 %1218
    %v1220 = vlaneseq
    %v1221 = vshrl.u32 %v1220, 7
    %v1222 = vadd.s32 %v1221, 8
    %1223 = vset.pattern.permute.xlu0 %v1222
    %1224 = vperm.xlu0 %1223, %v1213
    %v1225 = vpop.permute.xlu0 %1224
    %v1226 = vlaneseq
    %v1227 = vshrl.u32 %v1226, 7
    %v1228 = vadd.s32 %v1227, 1
    %1229 = vset.pattern.permute.xlu0 %v1228
    %1230 = vperm.xlu0 %1229, %v1213
    %v1231 = vpop.permute.xlu0 %1230
    %v1232 = vlaneseq
    %v1233 = vshrl.u32 %v1232, 7
    %v1234 = vadd.s32 %v1233, 9
    %1235 = vset.pattern.permute.xlu0 %v1234
    %1236 = vperm.xlu0 %1235, %v1213
    %v1237 = vpop.permute.xlu0 %1236
    %v1238 = vlaneseq
    %v1239 = vshrl.u32 %v1238, 7
    %v1240 = vadd.s32 %v1239, 2
    %1241 = vset.pattern.permute.xlu0 %v1240
    %1242 = vperm.xlu0 %1241, %v1213
    %v1243 = vpop.permute.xlu0 %1242
    %v1244 = vlaneseq
    %v1245 = vshrl.u32 %v1244, 7
    %v1246 = vadd.s32 %v1245, 10
    %1247 = vset.pattern.permute.xlu0 %v1246
    %1248 = vperm.xlu0 %1247, %v1213
    %v1249 = vpop.permute.xlu0 %1248
    %v1250 = vlaneseq
    %v1251 = vshrl.u32 %v1250, 7
    %v1252 = vadd.s32 %v1251, 3
    %1253 = vset.pattern.permute.xlu0 %v1252
    %1254 = vperm.xlu0 %1253, %v1213
    %v1255 = vpop.permute.xlu0 %1254
    %v1256 = vlaneseq
    %v1257 = vshrl.u32 %v1256, 7
    %v1258 = vadd.s32 %v1257, 11
    %1259 = vset.pattern.permute.xlu0 %v1258
    %1260 = vperm.xlu0 %1259, %v1213
    %v1261 = vpop.permute.xlu0 %1260
    %v1262 = vlaneseq
    %v1263 = vshrl.u32 %v1262, 7
    %v1264 = vadd.s32 %v1263, 4
    %1265 = vset.pattern.permute.xlu0 %v1264
    %1266 = vperm.xlu0 %1265, %v1213
    %v1267 = vpop.permute.xlu0 %1266
    %v1268 = vlaneseq
    %v1269 = vshrl.u32 %v1268, 7
    %v1270 = vadd.s32 %v1269, 12
    %1271 = vset.pattern.permute.xlu0 %v1270
    %1272 = vperm.xlu0 %1271, %v1213
    %v1273 = vpop.permute.xlu0 %1272
    %v1274 = vlaneseq
    %v1275 = vshrl.u32 %v1274, 7
    %v1276 = vadd.s32 %v1275, 5
    %1277 = vset.pattern.permute.xlu0 %v1276
    %1278 = vperm.xlu0 %1277, %v1213
    %v1279 = vpop.permute.xlu0 %1278
    %v1280 = vlaneseq
    %v1281 = vshrl.u32 %v1280, 7
    %v1282 = vadd.s32 %v1281, 13
    %1283 = vset.pattern.permute.xlu0 %v1282
    %1284 = vperm.xlu0 %1283, %v1213
    %v1285 = vpop.permute.xlu0 %1284
    %v1286 = vlaneseq
    %v1287 = vshrl.u32 %v1286, 7
    %v1288 = vadd.s32 %v1287, 6
    %1289 = vset.pattern.permute.xlu0 %v1288
    %1290 = vperm.xlu0 %1289, %v1213
    %v1291 = vpop.permute.xlu0 %1290
    %v1292 = vlaneseq
    %v1293 = vshrl.u32 %v1292, 7
    %v1294 = vadd.s32 %v1293, 14
    %1295 = vset.pattern.permute.xlu0 %v1294
    %1296 = vperm.xlu0 %1295, %v1213
    %v1297 = vpop.permute.xlu0 %1296
    %v1298 = vperm.slane %v22, 7
    %v1299 = vlaneseq
    %v1300 = vshrl.u32 %v1299, 7
    %1302 = vset.pattern.permute.xlu0 %v1300
    %1303 = vperm.xlu0 %1302, %v1298
    %v1304 = vpop.permute.xlu0 %1303
    %v1305 = vlaneseq
    %v1306 = vshrl.u32 %v1305, 7
    %v1307 = vadd.s32 %v1306, 8
    %1308 = vset.pattern.permute.xlu0 %v1307
    %1309 = vperm.xlu0 %1308, %v1298
    %v1310 = vpop.permute.xlu0 %1309
    %v1311 = vlaneseq
    %v1312 = vshrl.u32 %v1311, 7
    %v1313 = vadd.s32 %v1312, 1
    %1314 = vset.pattern.permute.xlu0 %v1313
    %1315 = vperm.xlu0 %1314, %v1298
    %v1316 = vpop.permute.xlu0 %1315
    %v1317 = vlaneseq
    %v1318 = vshrl.u32 %v1317, 7
    %v1319 = vadd.s32 %v1318, 9
    %1320 = vset.pattern.permute.xlu0 %v1319
    %1321 = vperm.xlu0 %1320, %v1298
    %v1322 = vpop.permute.xlu0 %1321
    %v1323 = vlaneseq
    %v1324 = vshrl.u32 %v1323, 7
    %v1325 = vadd.s32 %v1324, 2
    %1326 = vset.pattern.permute.xlu0 %v1325
    %1327 = vperm.xlu0 %1326, %v1298
    %v1328 = vpop.permute.xlu0 %1327
    %v1329 = vlaneseq
    %v1330 = vshrl.u32 %v1329, 7
    %v1331 = vadd.s32 %v1330, 10
    %1332 = vset.pattern.permute.xlu0 %v1331
    %1333 = vperm.xlu0 %1332, %v1298
    %v1334 = vpop.permute.xlu0 %1333
    %v1335 = vlaneseq
    %v1336 = vshrl.u32 %v1335, 7
    %v1337 = vadd.s32 %v1336, 3
    %1338 = vset.pattern.permute.xlu0 %v1337
    %1339 = vperm.xlu0 %1338, %v1298
    %v1340 = vpop.permute.xlu0 %1339
    %v1341 = vlaneseq
    %v1342 = vshrl.u32 %v1341, 7
    %v1343 = vadd.s32 %v1342, 11
    %1344 = vset.pattern.permute.xlu0 %v1343
    %1345 = vperm.xlu0 %1344, %v1298
    %v1346 = vpop.permute.xlu0 %1345
    %v1347 = vlaneseq
    %v1348 = vshrl.u32 %v1347, 7
    %v1349 = vadd.s32 %v1348, 4
    %1350 = vset.pattern.permute.xlu0 %v1349
    %1351 = vperm.xlu0 %1350, %v1298
    %v1352 = vpop.permute.xlu0 %1351
    %v1353 = vlaneseq
    %v1354 = vshrl.u32 %v1353, 7
    %v1355 = vadd.s32 %v1354, 12
    %1356 = vset.pattern.permute.xlu0 %v1355
    %1357 = vperm.xlu0 %1356, %v1298
    %v1358 = vpop.permute.xlu0 %1357
    %v1359 = vlaneseq
    %v1360 = vshrl.u32 %v1359, 7
    %v1361 = vadd.s32 %v1360, 5
    %1362 = vset.pattern.permute.xlu0 %v1361
    %1363 = vperm.xlu0 %1362, %v1298
    %v1364 = vpop.permute.xlu0 %1363
    %v1365 = vlaneseq
    %v1366 = vshrl.u32 %v1365, 7
    %v1367 = vadd.s32 %v1366, 13
    %1368 = vset.pattern.permute.xlu0 %v1367
    %1369 = vperm.xlu0 %1368, %v1298
    %v1370 = vpop.permute.xlu0 %1369
    %v1371 = vlaneseq
    %v1372 = vshrl.u32 %v1371, 7
    %v1373 = vadd.s32 %v1372, 6
    %1374 = vset.pattern.permute.xlu0 %v1373
    %1375 = vperm.xlu0 %1374, %v1298
    %v1376 = vpop.permute.xlu0 %1375
    %v1377 = vlaneseq
    %v1378 = vshrl.u32 %v1377, 7
    %v1379 = vadd.s32 %v1378, 14
    %1380 = vset.pattern.permute.xlu0 %v1379
    %1381 = vperm.xlu0 %1380, %v1298
    %v1382 = vpop.permute.xlu0 %1381
    %vm1383 = vcmask 7168
    %v1384 = vsel %vm1383, %v29, %v158
    %v1385 = vsel %vm1383, %v35, %v164
    %v1386 = vsel %vm1383, %v42, %v170
    %v1387 = vsel %vm1383, %v48, %v176
    %v1388 = vsel %vm1383, %v55, %v182
    %v1389 = vsel %vm1383, %v61, %v188
    %v1390 = vsel %vm1383, %v68, %v194
    %v1391 = vsel %vm1383, %v74, %v200
    %v1392 = vsel %vm1383, %v81, %v206
    %v1393 = vsel %vm1383, %v87, %v212
    %v1394 = vsel %vm1383, %v94, %v218
    %v1395 = vsel %vm1383, %v100, %v224
    %v1396 = vsel %vm1383, %v107, %v230
    %v1397 = vsel %vm1383, %v113, %v236
    %v1398 = vsel %vm1383, %v120, %v242
    %v1399 = vsel %vm1383, %v126, %v248
    %v1400 = vsel %vm1383, %v133, %v254
    %v1401 = vsel %vm1383, %v139, %v260
    %v1402 = vsel %vm1383, %v146, %v266
    %v1403 = vsel %vm1383, %v152, %v272
    %vm1404 = vcmask 15360
    %v1405 = vsel %vm1404, %v1384, %v278
    %v1406 = vsel %vm1404, %v1385, %v284
    %v1407 = vsel %vm1404, %v1386, %v290
    %v1408 = vsel %vm1404, %v1387, %v296
    %v1409 = vsel %vm1404, %v1388, %v302
    %v1410 = vsel %vm1404, %v1389, %v308
    %v1411 = vsel %vm1404, %v1390, %v314
    %v1412 = vsel %vm1404, %v1391, %v320
    %v1413 = vsel %vm1404, %v1392, %v326
    %v1414 = vsel %vm1404, %v1393, %v332
    %v1415 = vsel %vm1404, %v1394, %v338
    %v1416 = vsel %vm1404, %v1395, %v344
    %v1417 = vsel %vm1404, %v1396, %v350
    %v1418 = vsel %vm1404, %v1397, %v356
    %v1419 = vsel %vm1404, %v1398, %v362
    %v1420 = vsel %vm1404, %v1399, %v368
    %v1421 = vsel %vm1404, %v1400, %v374
    %v1422 = vsel %vm1404, %v1401, %v380
    %v1423 = vsel %vm1404, %v1402, %v386
    %v1424 = vsel %vm1404, %v1403, %v392
    %vm1425 = vcmask 23552
    %v1426 = vsel %vm1425, %v1405, %v398
    %v1427 = vsel %vm1425, %v1406, %v404
    %v1428 = vsel %vm1425, %v1407, %v410
    %v1429 = vsel %vm1425, %v1408, %v416
    %v1430 = vsel %vm1425, %v1409, %v422
    %v1431 = vsel %vm1425, %v1410, %v428
    %v1432 = vsel %vm1425, %v1411, %v434
    %v1433 = vsel %vm1425, %v1412, %v440
    %v1434 = vsel %vm1425, %v1413, %v446
    %v1435 = vsel %vm1425, %v1414, %v452
    %v1436 = vsel %vm1425, %v1415, %v458
    %v1437 = vsel %vm1425, %v1416, %v464
    %v1438 = vsel %vm1425, %v1417, %v470
    %v1439 = vsel %vm1425, %v1418, %v476
    %v1440 = vsel %vm1425, %v1419, %v482
    %v1441 = vsel %vm1425, %v1420, %v488
    %v1442 = vsel %vm1425, %v1421, %v494
    %v1443 = vsel %vm1425, %v1422, %v500
    %v1444 = vsel %vm1425, %v1423, %v506
    %v1445 = vsel %vm1425, %v1424, %v512
    %vm1446 = vcmask 31744
    %v1447 = vsel %vm1446, %v1426, %v518
    %v1448 = vsel %vm1446, %v1427, %v524
    %v1449 = vsel %vm1446, %v1428, %v530
    %v1450 = vsel %vm1446, %v1429, %v536
    %v1451 = vsel %vm1446, %v1430, %v542
    %v1452 = vsel %vm1446, %v1431, %v548
    %v1453 = vsel %vm1446, %v1432, %v554
    %v1454 = vsel %vm1446, %v1433, %v560
    %v1455 = vsel %vm1446, %v1434, %v566
    %v1456 = vsel %vm1446, %v1435, %v572
    %v1457 = vsel %vm1446, %v1436, %v578
    %v1458 = vsel %vm1446, %v1437, %v584
    %v1459 = vsel %vm1446, %v1438, %v590
    %v1460 = vsel %vm1446, %v1439, %v596
    %v1461 = vsel %vm1446, %v1440, %v602
    %v1462 = vsel %vm1446, %v1441, %v608
    %v1463 = vsel %vm1446, %v1442, %v614
    %v1464 = vsel %vm1446, %v1443, %v620
    %v1465 = vsel %vm1446, %v1444, %v626
    %v1466 = vsel %vm1446, %v1445, %v632
    %vm1467 = vcmask 39936
    %v1468 = vsel %vm1467, %v1447, %v638
    %v1469 = vsel %vm1467, %v1448, %v644
    %v1470 = vsel %vm1467, %v1449, %v650
    %v1471 = vsel %vm1467, %v1450, %v656
    %v1472 = vsel %vm1467, %v1451, %v662
    %v1473 = vsel %vm1467, %v1452, %v668
    %v1474 = vsel %vm1467, %v1453, %v674
    %v1475 = vsel %vm1467, %v1454, %v680
    %v1476 = vsel %vm1467, %v1455, %v686
    %v1477 = vsel %vm1467, %v1456, %v692
    %v1478 = vsel %vm1467, %v1457, %v698
    %v1479 = vsel %vm1467, %v1458, %v704
    %v1480 = vsel %vm1467, %v1459, %v710
    %v1481 = vsel %vm1467, %v1460, %v716
    %v1482 = vsel %vm1467, %v1461, %v722
    %v1483 = vsel %vm1467, %v1462, %v728
    %v1484 = vsel %vm1467, %v1463, %v734
    %v1485 = vsel %vm1467, %v1464, %v740
    %v1486 = vsel %vm1467, %v1465, %v746
    %v1487 = vsel %vm1467, %v1466, %v752
    %vm1488 = vcmask 48128
    %v1489 = vsel %vm1488, %v1468, %v758
    %v1490 = vsel %vm1488, %v1469, %v764
    %v1491 = vsel %vm1488, %v1470, %v770
    %v1492 = vsel %vm1488, %v1471, %v776
    %v1493 = vsel %vm1488, %v1472, %v782
    %v1494 = vsel %vm1488, %v1473, %v788
    %v1495 = vsel %vm1488, %v1474, %v794
    %v1496 = vsel %vm1488, %v1475, %v800
    %v1497 = vsel %vm1488, %v1476, %v806
    %v1498 = vsel %vm1488, %v1477, %v812
    %v1499 = vsel %vm1488, %v1478, %v818
    %v1500 = vsel %vm1488, %v1479, %v824
    %v1501 = vsel %vm1488, %v1480, %v830
    %v1502 = vsel %vm1488, %v1481, %v836
    %v1503 = vsel %vm1488, %v1482, %v842
    %v1504 = vsel %vm1488, %v1483, %v848
    %v1505 = vsel %vm1488, %v1484, %v854
    %v1506 = vsel %vm1488, %v1485, %v860
    %v1507 = vsel %vm1488, %v1486, %v866
    %v1508 = vsel %vm1488, %v1487, %v872
    %vm1509 = vcmask 56320
    %v1510 = vsel %vm1509, %v1489, %v42
    %v1511 = vsel %vm1509, %v1490, %v48
    %v1512 = vsel %vm1509, %v1491, %v55
    %v1513 = vsel %vm1509, %v1492, %v61
    %v1514 = vsel %vm1509, %v1493, %v68
    %v1515 = vsel %vm1509, %v1494, %v74
    %v1516 = vsel %vm1509, %v1495, %v81
    %v1517 = vsel %vm1509, %v1496, %v87
    %v1518 = vsel %vm1509, %v1497, %v94
    %v1519 = vsel %vm1509, %v1498, %v100
    %v1520 = vsel %vm1509, %v1499, %v107
    %v1521 = vsel %vm1509, %v1500, %v113
    %v1522 = vsel %vm1509, %v1501, %v120
    %v1523 = vsel %vm1509, %v1502, %v126
    %v1524 = vsel %vm1509, %v1503, %v133
    %v1525 = vsel %vm1509, %v1504, %v139
    %v1526 = vsel %vm1509, %v1505, %v146
    %v1527 = vsel %vm1509, %v1506, %v152
    %v1528 = vsel %vm1509, %v1507, %v879
    %v1529 = vsel %vm1509, %v1508, %v885
    %vm1530 = vcmask 64512
    %v1531 = vsel %vm1530, %v1510, %v170
    %v1532 = vsel %vm1530, %v1511, %v176
    %v1533 = vsel %vm1530, %v1512, %v182
    %v1534 = vsel %vm1530, %v1513, %v188
    %v1535 = vsel %vm1530, %v1514, %v194
    %v1536 = vsel %vm1530, %v1515, %v200
    %v1537 = vsel %vm1530, %v1516, %v206
    %v1538 = vsel %vm1530, %v1517, %v212
    %v1539 = vsel %vm1530, %v1518, %v218
    %v1540 = vsel %vm1530, %v1519, %v224
    %v1541 = vsel %vm1530, %v1520, %v230
    %v1542 = vsel %vm1530, %v1521, %v236
    %v1543 = vsel %vm1530, %v1522, %v242
    %v1544 = vsel %vm1530, %v1523, %v248
    %v1545 = vsel %vm1530, %v1524, %v254
    %v1546 = vsel %vm1530, %v1525, %v260
    %v1547 = vsel %vm1530, %v1526, %v266
    %v1548 = vsel %vm1530, %v1527, %v272
    %v1549 = vsel %vm1530, %v1528, %v891
    %v1550 = vsel %vm1530, %v1529, %v897
    %vm1551 = vcmask 72704
    %v1552 = vsel %vm1551, %v1531, %v290
    %v1553 = vsel %vm1551, %v1532, %v296
    %v1554 = vsel %vm1551, %v1533, %v302
    %v1555 = vsel %vm1551, %v1534, %v308
    %v1556 = vsel %vm1551, %v1535, %v314
    %v1557 = vsel %vm1551, %v1536, %v320
    %v1558 = vsel %vm1551, %v1537, %v326
    %v1559 = vsel %vm1551, %v1538, %v332
    %v1560 = vsel %vm1551, %v1539, %v338
    %v1561 = vsel %vm1551, %v1540, %v344
    %v1562 = vsel %vm1551, %v1541, %v350
    %v1563 = vsel %vm1551, %v1542, %v356
    %v1564 = vsel %vm1551, %v1543, %v362
    %v1565 = vsel %vm1551, %v1544, %v368
    %v1566 = vsel %vm1551, %v1545, %v374
    %v1567 = vsel %vm1551, %v1546, %v380
    %v1568 = vsel %vm1551, %v1547, %v386
    %v1569 = vsel %vm1551, %v1548, %v392
    %v1570 = vsel %vm1551, %v1549, %v903
    %v1571 = vsel %vm1551, %v1550, %v909
    %vm1572 = vcmask 80896
    %v1573 = vsel %vm1572, %v1552, %v410
    %v1574 = vsel %vm1572, %v1553, %v416
    %v1575 = vsel %vm1572, %v1554, %v422
    %v1576 = vsel %vm1572, %v1555, %v428
    %v1577 = vsel %vm1572, %v1556, %v434
    %v1578 = vsel %vm1572, %v1557, %v440
    %v1579 = vsel %vm1572, %v1558, %v446
    %v1580 = vsel %vm1572, %v1559, %v452
    %v1581 = vsel %vm1572, %v1560, %v458
    %v1582 = vsel %vm1572, %v1561, %v464
    %v1583 = vsel %vm1572, %v1562, %v470
    %v1584 = vsel %vm1572, %v1563, %v476
    %v1585 = vsel %vm1572, %v1564, %v482
    %v1586 = vsel %vm1572, %v1565, %v488
    %v1587 = vsel %vm1572, %v1566, %v494
    %v1588 = vsel %vm1572, %v1567, %v500
    %v1589 = vsel %vm1572, %v1568, %v506
    %v1590 = vsel %vm1572, %v1569, %v512
    %v1591 = vsel %vm1572, %v1570, %v915
    %v1592 = vsel %vm1572, %v1571, %v921
    %vm1593 = vcmask 89088
    %v1594 = vsel %vm1593, %v1573, %v530
    %v1595 = vsel %vm1593, %v1574, %v536
    %v1596 = vsel %vm1593, %v1575, %v542
    %v1597 = vsel %vm1593, %v1576, %v548
    %v1598 = vsel %vm1593, %v1577, %v554
    %v1599 = vsel %vm1593, %v1578, %v560
    %v1600 = vsel %vm1593, %v1579, %v566
    %v1601 = vsel %vm1593, %v1580, %v572
    %v1602 = vsel %vm1593, %v1581, %v578
    %v1603 = vsel %vm1593, %v1582, %v584
    %v1604 = vsel %vm1593, %v1583, %v590
    %v1605 = vsel %vm1593, %v1584, %v596
    %v1606 = vsel %vm1593, %v1585, %v602
    %v1607 = vsel %vm1593, %v1586, %v608
    %v1608 = vsel %vm1593, %v1587, %v614
    %v1609 = vsel %vm1593, %v1588, %v620
    %v1610 = vsel %vm1593, %v1589, %v626
    %v1611 = vsel %vm1593, %v1590, %v632
    %v1612 = vsel %vm1593, %v1591, %v927
    %v1613 = vsel %vm1593, %v1592, %v933
    %vm1614 = vcmask 97280
    %v1615 = vsel %vm1614, %v1594, %v650
    %v1616 = vsel %vm1614, %v1595, %v656
    %v1617 = vsel %vm1614, %v1596, %v662
    %v1618 = vsel %vm1614, %v1597, %v668
    %v1619 = vsel %vm1614, %v1598, %v674
    %v1620 = vsel %vm1614, %v1599, %v680
    %v1621 = vsel %vm1614, %v1600, %v686
    %v1622 = vsel %vm1614, %v1601, %v692
    %v1623 = vsel %vm1614, %v1602, %v698
    %v1624 = vsel %vm1614, %v1603, %v704
    %v1625 = vsel %vm1614, %v1604, %v710
    %v1626 = vsel %vm1614, %v1605, %v716
    %v1627 = vsel %vm1614, %v1606, %v722
    %v1628 = vsel %vm1614, %v1607, %v728
    %v1629 = vsel %vm1614, %v1608, %v734
    %v1630 = vsel %vm1614, %v1609, %v740
    %v1631 = vsel %vm1614, %v1610, %v746
    %v1632 = vsel %vm1614, %v1611, %v752
    %v1633 = vsel %vm1614, %v1612, %v939
    %v1634 = vsel %vm1614, %v1613, %v945
    %vm1635 = vcmask 105472
    %v1636 = vsel %vm1635, %v1615, %v770
    %v1637 = vsel %vm1635, %v1616, %v776
    %v1638 = vsel %vm1635, %v1617, %v782
    %v1639 = vsel %vm1635, %v1618, %v788
    %v1640 = vsel %vm1635, %v1619, %v794
    %v1641 = vsel %vm1635, %v1620, %v800
    %v1642 = vsel %vm1635, %v1621, %v806
    %v1643 = vsel %vm1635, %v1622, %v812
    %v1644 = vsel %vm1635, %v1623, %v818
    %v1645 = vsel %vm1635, %v1624, %v824
    %v1646 = vsel %vm1635, %v1625, %v830
    %v1647 = vsel %vm1635, %v1626, %v836
    %v1648 = vsel %vm1635, %v1627, %v842
    %v1649 = vsel %vm1635, %v1628, %v848
    %v1650 = vsel %vm1635, %v1629, %v854
    %v1651 = vsel %vm1635, %v1630, %v860
    %v1652 = vsel %vm1635, %v1631, %v866
    %v1653 = vsel %vm1635, %v1632, %v872
    %v1654 = vsel %vm1635, %v1633, %v951
    %v1655 = vsel %vm1635, %v1634, %v957
    %vm1656 = vcmask 113664
    %v1657 = vsel %vm1656, %v1636, %v55
    %v1658 = vsel %vm1656, %v1637, %v61
    %v1659 = vsel %vm1656, %v1638, %v68
    %v1660 = vsel %vm1656, %v1639, %v74
    %v1661 = vsel %vm1656, %v1640, %v81
    %v1662 = vsel %vm1656, %v1641, %v87
    %v1663 = vsel %vm1656, %v1642, %v94
    %v1664 = vsel %vm1656, %v1643, %v100
    %v1665 = vsel %vm1656, %v1644, %v107
    %v1666 = vsel %vm1656, %v1645, %v113
    %v1667 = vsel %vm1656, %v1646, %v120
    %v1668 = vsel %vm1656, %v1647, %v126
    %v1669 = vsel %vm1656, %v1648, %v133
    %v1670 = vsel %vm1656, %v1649, %v139
    %v1671 = vsel %vm1656, %v1650, %v146
    %v1672 = vsel %vm1656, %v1651, %v152
    %v1673 = vsel %vm1656, %v1652, %v879
    %v1674 = vsel %vm1656, %v1653, %v885
    %v1675 = vsel %vm1656, %v1654, %v964
    %v1676 = vsel %vm1656, %v1655, %v970
    %vm1677 = vcmask 121856
    %v1678 = vsel %vm1677, %v1657, %v182
    %v1679 = vsel %vm1677, %v1658, %v188
    %v1680 = vsel %vm1677, %v1659, %v194
    %v1681 = vsel %vm1677, %v1660, %v200
    %v1682 = vsel %vm1677, %v1661, %v206
    %v1683 = vsel %vm1677, %v1662, %v212
    %v1684 = vsel %vm1677, %v1663, %v218
    %v1685 = vsel %vm1677, %v1664, %v224
    %v1686 = vsel %vm1677, %v1665, %v230
    %v1687 = vsel %vm1677, %v1666, %v236
    %v1688 = vsel %vm1677, %v1667, %v242
    %v1689 = vsel %vm1677, %v1668, %v248
    %v1690 = vsel %vm1677, %v1669, %v254
    %v1691 = vsel %vm1677, %v1670, %v260
    %v1692 = vsel %vm1677, %v1671, %v266
    %v1693 = vsel %vm1677, %v1672, %v272
    %v1694 = vsel %vm1677, %v1673, %v891
    %v1695 = vsel %vm1677, %v1674, %v897
    %v1696 = vsel %vm1677, %v1675, %v976
    %v1697 = vsel %vm1677, %v1676, %v982
    %v1698 = vsel %vm1383, %v302, %v422
    %v1699 = vsel %vm1383, %v308, %v428
    %v1700 = vsel %vm1383, %v314, %v434
    %v1701 = vsel %vm1383, %v320, %v440
    %v1702 = vsel %vm1383, %v326, %v446
    %v1703 = vsel %vm1383, %v332, %v452
    %v1704 = vsel %vm1383, %v338, %v458
    %v1705 = vsel %vm1383, %v344, %v464
    %v1706 = vsel %vm1383, %v350, %v470
    %v1707 = vsel %vm1383, %v356, %v476
    %v1708 = vsel %vm1383, %v362, %v482
    %v1709 = vsel %vm1383, %v368, %v488
    %v1710 = vsel %vm1383, %v374, %v494
    %v1711 = vsel %vm1383, %v380, %v500
    %v1712 = vsel %vm1383, %v386, %v506
    %v1713 = vsel %vm1383, %v392, %v512
    %v1714 = vsel %vm1383, %v903, %v915
    %v1715 = vsel %vm1383, %v909, %v921
    %v1716 = vsel %vm1383, %v988, %v1000
    %v1717 = vsel %vm1383, %v994, %v1006
    %v1718 = vsel %vm1404, %v1698, %v542
    %v1719 = vsel %vm1404, %v1699, %v548
    %v1720 = vsel %vm1404, %v1700, %v554
    %v1721 = vsel %vm1404, %v1701, %v560
    %v1722 = vsel %vm1404, %v1702, %v566
    %v1723 = vsel %vm1404, %v1703, %v572
    %v1724 = vsel %vm1404, %v1704, %v578
    %v1725 = vsel %vm1404, %v1705, %v584
    %v1726 = vsel %vm1404, %v1706, %v590
    %v1727 = vsel %vm1404, %v1707, %v596
    %v1728 = vsel %vm1404, %v1708, %v602
    %v1729 = vsel %vm1404, %v1709, %v608
    %v1730 = vsel %vm1404, %v1710, %v614
    %v1731 = vsel %vm1404, %v1711, %v620
    %v1732 = vsel %vm1404, %v1712, %v626
    %v1733 = vsel %vm1404, %v1713, %v632
    %v1734 = vsel %vm1404, %v1714, %v927
    %v1735 = vsel %vm1404, %v1715, %v933
    %v1736 = vsel %vm1404, %v1716, %v1012
    %v1737 = vsel %vm1404, %v1717, %v1018
    %v1738 = vsel %vm1425, %v1718, %v662
    %v1739 = vsel %vm1425, %v1719, %v668
    %v1740 = vsel %vm1425, %v1720, %v674
    %v1741 = vsel %vm1425, %v1721, %v680
    %v1742 = vsel %vm1425, %v1722, %v686
    %v1743 = vsel %vm1425, %v1723, %v692
    %v1744 = vsel %vm1425, %v1724, %v698
    %v1745 = vsel %vm1425, %v1725, %v704
    %v1746 = vsel %vm1425, %v1726, %v710
    %v1747 = vsel %vm1425, %v1727, %v716
    %v1748 = vsel %vm1425, %v1728, %v722
    %v1749 = vsel %vm1425, %v1729, %v728
    %v1750 = vsel %vm1425, %v1730, %v734
    %v1751 = vsel %vm1425, %v1731, %v740
    %v1752 = vsel %vm1425, %v1732, %v746
    %v1753 = vsel %vm1425, %v1733, %v752
    %v1754 = vsel %vm1425, %v1734, %v939
    %v1755 = vsel %vm1425, %v1735, %v945
    %v1756 = vsel %vm1425, %v1736, %v1024
    %v1757 = vsel %vm1425, %v1737, %v1030
    %v1758 = vsel %vm1446, %v1738, %v782
    %v1759 = vsel %vm1446, %v1739, %v788
    %v1760 = vsel %vm1446, %v1740, %v794
    %v1761 = vsel %vm1446, %v1741, %v800
    %v1762 = vsel %vm1446, %v1742, %v806
    %v1763 = vsel %vm1446, %v1743, %v812
    %v1764 = vsel %vm1446, %v1744, %v818
    %v1765 = vsel %vm1446, %v1745, %v824
    %v1766 = vsel %vm1446, %v1746, %v830
    %v1767 = vsel %vm1446, %v1747, %v836
    %v1768 = vsel %vm1446, %v1748, %v842
    %v1769 = vsel %vm1446, %v1749, %v848
    %v1770 = vsel %vm1446, %v1750, %v854
    %v1771 = vsel %vm1446, %v1751, %v860
    %v1772 = vsel %vm1446, %v1752, %v866
    %v1773 = vsel %vm1446, %v1753, %v872
    %v1774 = vsel %vm1446, %v1754, %v951
    %v1775 = vsel %vm1446, %v1755, %v957
    %v1776 = vsel %vm1446, %v1756, %v1036
    %v1777 = vsel %vm1446, %v1757, %v1042
    %v1778 = vsel %vm1467, %v1758, %v68
    %v1779 = vsel %vm1467, %v1759, %v74
    %v1780 = vsel %vm1467, %v1760, %v81
    %v1781 = vsel %vm1467, %v1761, %v87
    %v1782 = vsel %vm1467, %v1762, %v94
    %v1783 = vsel %vm1467, %v1763, %v100
    %v1784 = vsel %vm1467, %v1764, %v107
    %v1785 = vsel %vm1467, %v1765, %v113
    %v1786 = vsel %vm1467, %v1766, %v120
    %v1787 = vsel %vm1467, %v1767, %v126
    %v1788 = vsel %vm1467, %v1768, %v133
    %v1789 = vsel %vm1467, %v1769, %v139
    %v1790 = vsel %vm1467, %v1770, %v146
    %v1791 = vsel %vm1467, %v1771, %v152
    %v1792 = vsel %vm1467, %v1772, %v879
    %v1793 = vsel %vm1467, %v1773, %v885
    %v1794 = vsel %vm1467, %v1774, %v964
    %v1795 = vsel %vm1467, %v1775, %v970
    %v1796 = vsel %vm1467, %v1776, %v1049
    %v1797 = vsel %vm1467, %v1777, %v1055
    %v1798 = vsel %vm1488, %v1778, %v194
    %v1799 = vsel %vm1488, %v1779, %v200
    %v1800 = vsel %vm1488, %v1780, %v206
    %v1801 = vsel %vm1488, %v1781, %v212
    %v1802 = vsel %vm1488, %v1782, %v218
    %v1803 = vsel %vm1488, %v1783, %v224
    %v1804 = vsel %vm1488, %v1784, %v230
    %v1805 = vsel %vm1488, %v1785, %v236
    %v1806 = vsel %vm1488, %v1786, %v242
    %v1807 = vsel %vm1488, %v1787, %v248
    %v1808 = vsel %vm1488, %v1788, %v254
    %v1809 = vsel %vm1488, %v1789, %v260
    %v1810 = vsel %vm1488, %v1790, %v266
    %v1811 = vsel %vm1488, %v1791, %v272
    %v1812 = vsel %vm1488, %v1792, %v891
    %v1813 = vsel %vm1488, %v1793, %v897
    %v1814 = vsel %vm1488, %v1794, %v976
    %v1815 = vsel %vm1488, %v1795, %v982
    %v1816 = vsel %vm1488, %v1796, %v1061
    %v1817 = vsel %vm1488, %v1797, %v1067
    %v1818 = vsel %vm1509, %v1798, %v314
    %v1819 = vsel %vm1509, %v1799, %v320
    %v1820 = vsel %vm1509, %v1800, %v326
    %v1821 = vsel %vm1509, %v1801, %v332
    %v1822 = vsel %vm1509, %v1802, %v338
    %v1823 = vsel %vm1509, %v1803, %v344
    %v1824 = vsel %vm1509, %v1804, %v350
    %v1825 = vsel %vm1509, %v1805, %v356
    %v1826 = vsel %vm1509, %v1806, %v362
    %v1827 = vsel %vm1509, %v1807, %v368
    %v1828 = vsel %vm1509, %v1808, %v374
    %v1829 = vsel %vm1509, %v1809, %v380
    %v1830 = vsel %vm1509, %v1810, %v386
    %v1831 = vsel %vm1509, %v1811, %v392
    %v1832 = vsel %vm1509, %v1812, %v903
    %v1833 = vsel %vm1509, %v1813, %v909
    %v1834 = vsel %vm1509, %v1814, %v988
    %v1835 = vsel %vm1509, %v1815, %v994
    %v1836 = vsel %vm1509, %v1816, %v1073
    %v1837 = vsel %vm1509, %v1817, %v1079
    %v1838 = vsel %vm1530, %v1818, %v434
    %v1839 = vsel %vm1530, %v1819, %v440
    %v1840 = vsel %vm1530, %v1820, %v446
    %v1841 = vsel %vm1530, %v1821, %v452
    %v1842 = vsel %vm1530, %v1822, %v458
    %v1843 = vsel %vm1530, %v1823, %v464
    %v1844 = vsel %vm1530, %v1824, %v470
    %v1845 = vsel %vm1530, %v1825, %v476
    %v1846 = vsel %vm1530, %v1826, %v482
    %v1847 = vsel %vm1530, %v1827, %v488
    %v1848 = vsel %vm1530, %v1828, %v494
    %v1849 = vsel %vm1530, %v1829, %v500
    %v1850 = vsel %vm1530, %v1830, %v506
    %v1851 = vsel %vm1530, %v1831, %v512
    %v1852 = vsel %vm1530, %v1832, %v915
    %v1853 = vsel %vm1530, %v1833, %v921
    %v1854 = vsel %vm1530, %v1834, %v1000
    %v1855 = vsel %vm1530, %v1835, %v1006
    %v1856 = vsel %vm1530, %v1836, %v1085
    %v1857 = vsel %vm1530, %v1837, %v1091
    %v1858 = vsel %vm1551, %v1838, %v554
    %v1859 = vsel %vm1551, %v1839, %v560
    %v1860 = vsel %vm1551, %v1840, %v566
    %v1861 = vsel %vm1551, %v1841, %v572
    %v1862 = vsel %vm1551, %v1842, %v578
    %v1863 = vsel %vm1551, %v1843, %v584
    %v1864 = vsel %vm1551, %v1844, %v590
    %v1865 = vsel %vm1551, %v1845, %v596
    %v1866 = vsel %vm1551, %v1846, %v602
    %v1867 = vsel %vm1551, %v1847, %v608
    %v1868 = vsel %vm1551, %v1848, %v614
    %v1869 = vsel %vm1551, %v1849, %v620
    %v1870 = vsel %vm1551, %v1850, %v626
    %v1871 = vsel %vm1551, %v1851, %v632
    %v1872 = vsel %vm1551, %v1852, %v927
    %v1873 = vsel %vm1551, %v1853, %v933
    %v1874 = vsel %vm1551, %v1854, %v1012
    %v1875 = vsel %vm1551, %v1855, %v1018
    %v1876 = vsel %vm1551, %v1856, %v1097
    %v1877 = vsel %vm1551, %v1857, %v1103
    %v1878 = vsel %vm1572, %v1858, %v674
    %v1879 = vsel %vm1572, %v1859, %v680
    %v1880 = vsel %vm1572, %v1860, %v686
    %v1881 = vsel %vm1572, %v1861, %v692
    %v1882 = vsel %vm1572, %v1862, %v698
    %v1883 = vsel %vm1572, %v1863, %v704
    %v1884 = vsel %vm1572, %v1864, %v710
    %v1885 = vsel %vm1572, %v1865, %v716
    %v1886 = vsel %vm1572, %v1866, %v722
    %v1887 = vsel %vm1572, %v1867, %v728
    %v1888 = vsel %vm1572, %v1868, %v734
    %v1889 = vsel %vm1572, %v1869, %v740
    %v1890 = vsel %vm1572, %v1870, %v746
    %v1891 = vsel %vm1572, %v1871, %v752
    %v1892 = vsel %vm1572, %v1872, %v939
    %v1893 = vsel %vm1572, %v1873, %v945
    %v1894 = vsel %vm1572, %v1874, %v1024
    %v1895 = vsel %vm1572, %v1875, %v1030
    %v1896 = vsel %vm1572, %v1876, %v1109
    %v1897 = vsel %vm1572, %v1877, %v1115
    %v1898 = vsel %vm1593, %v1878, %v794
    %v1899 = vsel %vm1593, %v1879, %v800
    %v1900 = vsel %vm1593, %v1880, %v806
    %v1901 = vsel %vm1593, %v1881, %v812
    %v1902 = vsel %vm1593, %v1882, %v818
    %v1903 = vsel %vm1593, %v1883, %v824
    %v1904 = vsel %vm1593, %v1884, %v830
    %v1905 = vsel %vm1593, %v1885, %v836
    %v1906 = vsel %vm1593, %v1886, %v842
    %v1907 = vsel %vm1593, %v1887, %v848
    %v1908 = vsel %vm1593, %v1888, %v854
    %v1909 = vsel %vm1593, %v1889, %v860
    %v1910 = vsel %vm1593, %v1890, %v866
    %v1911 = vsel %vm1593, %v1891, %v872
    %v1912 = vsel %vm1593, %v1892, %v951
    %v1913 = vsel %vm1593, %v1893, %v957
    %v1914 = vsel %vm1593, %v1894, %v1036
    %v1915 = vsel %vm1593, %v1895, %v1042
    %v1916 = vsel %vm1593, %v1896, %v1121
    %v1917 = vsel %vm1593, %v1897, %v1127
    %v1918 = vsel %vm1614, %v1898, %v81
    %v1919 = vsel %vm1614, %v1899, %v87
    %v1920 = vsel %vm1614, %v1900, %v94
    %v1921 = vsel %vm1614, %v1901, %v100
    %v1922 = vsel %vm1614, %v1902, %v107
    %v1923 = vsel %vm1614, %v1903, %v113
    %v1924 = vsel %vm1614, %v1904, %v120
    %v1925 = vsel %vm1614, %v1905, %v126
    %v1926 = vsel %vm1614, %v1906, %v133
    %v1927 = vsel %vm1614, %v1907, %v139
    %v1928 = vsel %vm1614, %v1908, %v146
    %v1929 = vsel %vm1614, %v1909, %v152
    %v1930 = vsel %vm1614, %v1910, %v879
    %v1931 = vsel %vm1614, %v1911, %v885
    %v1932 = vsel %vm1614, %v1912, %v964
    %v1933 = vsel %vm1614, %v1913, %v970
    %v1934 = vsel %vm1614, %v1914, %v1049
    %v1935 = vsel %vm1614, %v1915, %v1055
    %v1936 = vsel %vm1614, %v1916, %v1134
    %v1937 = vsel %vm1614, %v1917, %v1140
    %v1938 = vsel %vm1635, %v1918, %v206
    %v1939 = vsel %vm1635, %v1919, %v212
    %v1940 = vsel %vm1635, %v1920, %v218
    %v1941 = vsel %vm1635, %v1921, %v224
    %v1942 = vsel %vm1635, %v1922, %v230
    %v1943 = vsel %vm1635, %v1923, %v236
    %v1944 = vsel %vm1635, %v1924, %v242
    %v1945 = vsel %vm1635, %v1925, %v248
    %v1946 = vsel %vm1635, %v1926, %v254
    %v1947 = vsel %vm1635, %v1927, %v260
    %v1948 = vsel %vm1635, %v1928, %v266
    %v1949 = vsel %vm1635, %v1929, %v272
    %v1950 = vsel %vm1635, %v1930, %v891
    %v1951 = vsel %vm1635, %v1931, %v897
    %v1952 = vsel %vm1635, %v1932, %v976
    %v1953 = vsel %vm1635, %v1933, %v982
    %v1954 = vsel %vm1635, %v1934, %v1061
    %v1955 = vsel %vm1635, %v1935, %v1067
    %v1956 = vsel %vm1635, %v1936, %v1146
    %v1957 = vsel %vm1635, %v1937, %v1152
    %v1958 = vsel %vm1656, %v1938, %v326
    %v1959 = vsel %vm1656, %v1939, %v332
    %v1960 = vsel %vm1656, %v1940, %v338
    %v1961 = vsel %vm1656, %v1941, %v344
    %v1962 = vsel %vm1656, %v1942, %v350
    %v1963 = vsel %vm1656, %v1943, %v356
    %v1964 = vsel %vm1656, %v1944, %v362
    %v1965 = vsel %vm1656, %v1945, %v368
    %v1966 = vsel %vm1656, %v1946, %v374
    %v1967 = vsel %vm1656, %v1947, %v380
    %v1968 = vsel %vm1656, %v1948, %v386
    %v1969 = vsel %vm1656, %v1949, %v392
    %v1970 = vsel %vm1656, %v1950, %v903
    %v1971 = vsel %vm1656, %v1951, %v909
    %v1972 = vsel %vm1656, %v1952, %v988
    %v1973 = vsel %vm1656, %v1953, %v994
    %v1974 = vsel %vm1656, %v1954, %v1073
    %v1975 = vsel %vm1656, %v1955, %v1079
    %v1976 = vsel %vm1656, %v1956, %v1158
    %v1977 = vsel %vm1656, %v1957, %v1164
    %v1978 = vsel %vm1677, %v1958, %v446
    %v1979 = vsel %vm1677, %v1959, %v452
    %v1980 = vsel %vm1677, %v1960, %v458
    %v1981 = vsel %vm1677, %v1961, %v464
    %v1982 = vsel %vm1677, %v1962, %v470
    %v1983 = vsel %vm1677, %v1963, %v476
    %v1984 = vsel %vm1677, %v1964, %v482
    %v1985 = vsel %vm1677, %v1965, %v488
    %v1986 = vsel %vm1677, %v1966, %v494
    %v1987 = vsel %vm1677, %v1967, %v500
    %v1988 = vsel %vm1677, %v1968, %v506
    %v1989 = vsel %vm1677, %v1969, %v512
    %v1990 = vsel %vm1677, %v1970, %v915
    %v1991 = vsel %vm1677, %v1971, %v921
    %v1992 = vsel %vm1677, %v1972, %v1000
    %v1993 = vsel %vm1677, %v1973, %v1006
    %v1994 = vsel %vm1677, %v1974, %v1085
    %v1995 = vsel %vm1677, %v1975, %v1091
    %v1996 = vsel %vm1677, %v1976, %v1170
    %v1997 = vsel %vm1677, %v1977, %v1176
    %v1998 = vsel %vm1383, %v566, %v686
    %v1999 = vsel %vm1383, %v572, %v692
    %v2000 = vsel %vm1383, %v578, %v698
    %v2001 = vsel %vm1383, %v584, %v704
    %v2002 = vsel %vm1383, %v590, %v710
    %v2003 = vsel %vm1383, %v596, %v716
    %v2004 = vsel %vm1383, %v602, %v722
    %v2005 = vsel %vm1383, %v608, %v728
    %v2006 = vsel %vm1383, %v614, %v734
    %v2007 = vsel %vm1383, %v620, %v740
    %v2008 = vsel %vm1383, %v626, %v746
    %v2009 = vsel %vm1383, %v632, %v752
    %v2010 = vsel %vm1383, %v927, %v939
    %v2011 = vsel %vm1383, %v933, %v945
    %v2012 = vsel %vm1383, %v1012, %v1024
    %v2013 = vsel %vm1383, %v1018, %v1030
    %v2014 = vsel %vm1383, %v1097, %v1109
    %v2015 = vsel %vm1383, %v1103, %v1115
    %v2016 = vsel %vm1383, %v1182, %v1194
    %v2017 = vsel %vm1383, %v1188, %v1200
    %v2018 = vsel %vm1404, %v1998, %v806
    %v2019 = vsel %vm1404, %v1999, %v812
    %v2020 = vsel %vm1404, %v2000, %v818
    %v2021 = vsel %vm1404, %v2001, %v824
    %v2022 = vsel %vm1404, %v2002, %v830
    %v2023 = vsel %vm1404, %v2003, %v836
    %v2024 = vsel %vm1404, %v2004, %v842
    %v2025 = vsel %vm1404, %v2005, %v848
    %v2026 = vsel %vm1404, %v2006, %v854
    %v2027 = vsel %vm1404, %v2007, %v860
    %v2028 = vsel %vm1404, %v2008, %v866
    %v2029 = vsel %vm1404, %v2009, %v872
    %v2030 = vsel %vm1404, %v2010, %v951
    %v2031 = vsel %vm1404, %v2011, %v957
    %v2032 = vsel %vm1404, %v2012, %v1036
    %v2033 = vsel %vm1404, %v2013, %v1042
    %v2034 = vsel %vm1404, %v2014, %v1121
    %v2035 = vsel %vm1404, %v2015, %v1127
    %v2036 = vsel %vm1404, %v2016, %v1206
    %v2037 = vsel %vm1404, %v2017, %v1212
    %v2038 = vsel %vm1425, %v2018, %v94
    %v2039 = vsel %vm1425, %v2019, %v100
    %v2040 = vsel %vm1425, %v2020, %v107
    %v2041 = vsel %vm1425, %v2021, %v113
    %v2042 = vsel %vm1425, %v2022, %v120
    %v2043 = vsel %vm1425, %v2023, %v126
    %v2044 = vsel %vm1425, %v2024, %v133
    %v2045 = vsel %vm1425, %v2025, %v139
    %v2046 = vsel %vm1425, %v2026, %v146
    %v2047 = vsel %vm1425, %v2027, %v152
    %v2048 = vsel %vm1425, %v2028, %v879
    %v2049 = vsel %vm1425, %v2029, %v885
    %v2050 = vsel %vm1425, %v2030, %v964
    %v2051 = vsel %vm1425, %v2031, %v970
    %v2052 = vsel %vm1425, %v2032, %v1049
    %v2053 = vsel %vm1425, %v2033, %v1055
    %v2054 = vsel %vm1425, %v2034, %v1134
    %v2055 = vsel %vm1425, %v2035, %v1140
    %v2056 = vsel %vm1425, %v2036, %v1219
    %v2057 = vsel %vm1425, %v2037, %v1225
    %v2058 = vsel %vm1446, %v2038, %v218
    %v2059 = vsel %vm1446, %v2039, %v224
    %v2060 = vsel %vm1446, %v2040, %v230
    %v2061 = vsel %vm1446, %v2041, %v236
    %v2062 = vsel %vm1446, %v2042, %v242
    %v2063 = vsel %vm1446, %v2043, %v248
    %v2064 = vsel %vm1446, %v2044, %v254
    %v2065 = vsel %vm1446, %v2045, %v260
    %v2066 = vsel %vm1446, %v2046, %v266
    %v2067 = vsel %vm1446, %v2047, %v272
    %v2068 = vsel %vm1446, %v2048, %v891
    %v2069 = vsel %vm1446, %v2049, %v897
    %v2070 = vsel %vm1446, %v2050, %v976
    %v2071 = vsel %vm1446, %v2051, %v982
    %v2072 = vsel %vm1446, %v2052, %v1061
    %v2073 = vsel %vm1446, %v2053, %v1067
    %v2074 = vsel %vm1446, %v2054, %v1146
    %v2075 = vsel %vm1446, %v2055, %v1152
    %v2076 = vsel %vm1446, %v2056, %v1231
    %v2077 = vsel %vm1446, %v2057, %v1237
    %v2078 = vsel %vm1467, %v2058, %v338
    %v2079 = vsel %vm1467, %v2059, %v344
    %v2080 = vsel %vm1467, %v2060, %v350
    %v2081 = vsel %vm1467, %v2061, %v356
    %v2082 = vsel %vm1467, %v2062, %v362
    %v2083 = vsel %vm1467, %v2063, %v368
    %v2084 = vsel %vm1467, %v2064, %v374
    %v2085 = vsel %vm1467, %v2065, %v380
    %v2086 = vsel %vm1467, %v2066, %v386
    %v2087 = vsel %vm1467, %v2067, %v392
    %v2088 = vsel %vm1467, %v2068, %v903
    %v2089 = vsel %vm1467, %v2069, %v909
    %v2090 = vsel %vm1467, %v2070, %v988
    %v2091 = vsel %vm1467, %v2071, %v994
    %v2092 = vsel %vm1467, %v2072, %v1073
    %v2093 = vsel %vm1467, %v2073, %v1079
    %v2094 = vsel %vm1467, %v2074, %v1158
    %v2095 = vsel %vm1467, %v2075, %v1164
    %v2096 = vsel %vm1467, %v2076, %v1243
    %v2097 = vsel %vm1467, %v2077, %v1249
    %v2098 = vsel %vm1488, %v2078, %v458
    %v2099 = vsel %vm1488, %v2079, %v464
    %v2100 = vsel %vm1488, %v2080, %v470
    %v2101 = vsel %vm1488, %v2081, %v476
    %v2102 = vsel %vm1488, %v2082, %v482
    %v2103 = vsel %vm1488, %v2083, %v488
    %v2104 = vsel %vm1488, %v2084, %v494
    %v2105 = vsel %vm1488, %v2085, %v500
    %v2106 = vsel %vm1488, %v2086, %v506
    %v2107 = vsel %vm1488, %v2087, %v512
    %v2108 = vsel %vm1488, %v2088, %v915
    %v2109 = vsel %vm1488, %v2089, %v921
    %v2110 = vsel %vm1488, %v2090, %v1000
    %v2111 = vsel %vm1488, %v2091, %v1006
    %v2112 = vsel %vm1488, %v2092, %v1085
    %v2113 = vsel %vm1488, %v2093, %v1091
    %v2114 = vsel %vm1488, %v2094, %v1170
    %v2115 = vsel %vm1488, %v2095, %v1176
    %v2116 = vsel %vm1488, %v2096, %v1255
    %v2117 = vsel %vm1488, %v2097, %v1261
    %v2118 = vsel %vm1509, %v2098, %v578
    %v2119 = vsel %vm1509, %v2099, %v584
    %v2120 = vsel %vm1509, %v2100, %v590
    %v2121 = vsel %vm1509, %v2101, %v596
    %v2122 = vsel %vm1509, %v2102, %v602
    %v2123 = vsel %vm1509, %v2103, %v608
    %v2124 = vsel %vm1509, %v2104, %v614
    %v2125 = vsel %vm1509, %v2105, %v620
    %v2126 = vsel %vm1509, %v2106, %v626
    %v2127 = vsel %vm1509, %v2107, %v632
    %v2128 = vsel %vm1509, %v2108, %v927
    %v2129 = vsel %vm1509, %v2109, %v933
    %v2130 = vsel %vm1509, %v2110, %v1012
    %v2131 = vsel %vm1509, %v2111, %v1018
    %v2132 = vsel %vm1509, %v2112, %v1097
    %v2133 = vsel %vm1509, %v2113, %v1103
    %v2134 = vsel %vm1509, %v2114, %v1182
    %v2135 = vsel %vm1509, %v2115, %v1188
    %v2136 = vsel %vm1509, %v2116, %v1267
    %v2137 = vsel %vm1509, %v2117, %v1273
    %v2138 = vsel %vm1530, %v2118, %v698
    %v2139 = vsel %vm1530, %v2119, %v704
    %v2140 = vsel %vm1530, %v2120, %v710
    %v2141 = vsel %vm1530, %v2121, %v716
    %v2142 = vsel %vm1530, %v2122, %v722
    %v2143 = vsel %vm1530, %v2123, %v728
    %v2144 = vsel %vm1530, %v2124, %v734
    %v2145 = vsel %vm1530, %v2125, %v740
    %v2146 = vsel %vm1530, %v2126, %v746
    %v2147 = vsel %vm1530, %v2127, %v752
    %v2148 = vsel %vm1530, %v2128, %v939
    %v2149 = vsel %vm1530, %v2129, %v945
    %v2150 = vsel %vm1530, %v2130, %v1024
    %v2151 = vsel %vm1530, %v2131, %v1030
    %v2152 = vsel %vm1530, %v2132, %v1109
    %v2153 = vsel %vm1530, %v2133, %v1115
    %v2154 = vsel %vm1530, %v2134, %v1194
    %v2155 = vsel %vm1530, %v2135, %v1200
    %v2156 = vsel %vm1530, %v2136, %v1279
    %v2157 = vsel %vm1530, %v2137, %v1285
    %v2158 = vsel %vm1551, %v2138, %v818
    %v2159 = vsel %vm1551, %v2139, %v824
    %v2160 = vsel %vm1551, %v2140, %v830
    %v2161 = vsel %vm1551, %v2141, %v836
    %v2162 = vsel %vm1551, %v2142, %v842
    %v2163 = vsel %vm1551, %v2143, %v848
    %v2164 = vsel %vm1551, %v2144, %v854
    %v2165 = vsel %vm1551, %v2145, %v860
    %v2166 = vsel %vm1551, %v2146, %v866
    %v2167 = vsel %vm1551, %v2147, %v872
    %v2168 = vsel %vm1551, %v2148, %v951
    %v2169 = vsel %vm1551, %v2149, %v957
    %v2170 = vsel %vm1551, %v2150, %v1036
    %v2171 = vsel %vm1551, %v2151, %v1042
    %v2172 = vsel %vm1551, %v2152, %v1121
    %v2173 = vsel %vm1551, %v2153, %v1127
    %v2174 = vsel %vm1551, %v2154, %v1206
    %v2175 = vsel %vm1551, %v2155, %v1212
    %v2176 = vsel %vm1551, %v2156, %v1291
    %v2177 = vsel %vm1551, %v2157, %v1297
    %v2178 = vsel %vm1572, %v2158, %v107
    %v2179 = vsel %vm1572, %v2159, %v113
    %v2180 = vsel %vm1572, %v2160, %v120
    %v2181 = vsel %vm1572, %v2161, %v126
    %v2182 = vsel %vm1572, %v2162, %v133
    %v2183 = vsel %vm1572, %v2163, %v139
    %v2184 = vsel %vm1572, %v2164, %v146
    %v2185 = vsel %vm1572, %v2165, %v152
    %v2186 = vsel %vm1572, %v2166, %v879
    %v2187 = vsel %vm1572, %v2167, %v885
    %v2188 = vsel %vm1572, %v2168, %v964
    %v2189 = vsel %vm1572, %v2169, %v970
    %v2190 = vsel %vm1572, %v2170, %v1049
    %v2191 = vsel %vm1572, %v2171, %v1055
    %v2192 = vsel %vm1572, %v2172, %v1134
    %v2193 = vsel %vm1572, %v2173, %v1140
    %v2194 = vsel %vm1572, %v2174, %v1219
    %v2195 = vsel %vm1572, %v2175, %v1225
    %v2196 = vsel %vm1572, %v2176, %v1304
    %v2197 = vsel %vm1572, %v2177, %v1310
    %v2198 = vsel %vm1593, %v2178, %v230
    %v2199 = vsel %vm1593, %v2179, %v236
    %v2200 = vsel %vm1593, %v2180, %v242
    %v2201 = vsel %vm1593, %v2181, %v248
    %v2202 = vsel %vm1593, %v2182, %v254
    %v2203 = vsel %vm1593, %v2183, %v260
    %v2204 = vsel %vm1593, %v2184, %v266
    %v2205 = vsel %vm1593, %v2185, %v272
    %v2206 = vsel %vm1593, %v2186, %v891
    %v2207 = vsel %vm1593, %v2187, %v897
    %v2208 = vsel %vm1593, %v2188, %v976
    %v2209 = vsel %vm1593, %v2189, %v982
    %v2210 = vsel %vm1593, %v2190, %v1061
    %v2211 = vsel %vm1593, %v2191, %v1067
    %v2212 = vsel %vm1593, %v2192, %v1146
    %v2213 = vsel %vm1593, %v2193, %v1152
    %v2214 = vsel %vm1593, %v2194, %v1231
    %v2215 = vsel %vm1593, %v2195, %v1237
    %v2216 = vsel %vm1593, %v2196, %v1316
    %v2217 = vsel %vm1593, %v2197, %v1322
    %v2218 = vsel %vm1614, %v2198, %v350
    %v2219 = vsel %vm1614, %v2199, %v356
    %v2220 = vsel %vm1614, %v2200, %v362
    %v2221 = vsel %vm1614, %v2201, %v368
    %v2222 = vsel %vm1614, %v2202, %v374
    %v2223 = vsel %vm1614, %v2203, %v380
    %v2224 = vsel %vm1614, %v2204, %v386
    %v2225 = vsel %vm1614, %v2205, %v392
    %v2226 = vsel %vm1614, %v2206, %v903
    %v2227 = vsel %vm1614, %v2207, %v909
    %v2228 = vsel %vm1614, %v2208, %v988
    %v2229 = vsel %vm1614, %v2209, %v994
    %v2230 = vsel %vm1614, %v2210, %v1073
    %v2231 = vsel %vm1614, %v2211, %v1079
    %v2232 = vsel %vm1614, %v2212, %v1158
    %v2233 = vsel %vm1614, %v2213, %v1164
    %v2234 = vsel %vm1614, %v2214, %v1243
    %v2235 = vsel %vm1614, %v2215, %v1249
    %v2236 = vsel %vm1614, %v2216, %v1328
    %v2237 = vsel %vm1614, %v2217, %v1334
    %v2238 = vsel %vm1635, %v2218, %v470
    %v2239 = vsel %vm1635, %v2219, %v476
    %v2240 = vsel %vm1635, %v2220, %v482
    %v2241 = vsel %vm1635, %v2221, %v488
    %v2242 = vsel %vm1635, %v2222, %v494
    %v2243 = vsel %vm1635, %v2223, %v500
    %v2244 = vsel %vm1635, %v2224, %v506
    %v2245 = vsel %vm1635, %v2225, %v512
    %v2246 = vsel %vm1635, %v2226, %v915
    %v2247 = vsel %vm1635, %v2227, %v921
    %v2248 = vsel %vm1635, %v2228, %v1000
    %v2249 = vsel %vm1635, %v2229, %v1006
    %v2250 = vsel %vm1635, %v2230, %v1085
    %v2251 = vsel %vm1635, %v2231, %v1091
    %v2252 = vsel %vm1635, %v2232, %v1170
    %v2253 = vsel %vm1635, %v2233, %v1176
    %v2254 = vsel %vm1635, %v2234, %v1255
    %v2255 = vsel %vm1635, %v2235, %v1261
    %v2256 = vsel %vm1635, %v2236, %v1340
    %v2257 = vsel %vm1635, %v2237, %v1346
    %v2258 = vsel %vm1656, %v2238, %v590
    %v2259 = vsel %vm1656, %v2239, %v596
    %v2260 = vsel %vm1656, %v2240, %v602
    %v2261 = vsel %vm1656, %v2241, %v608
    %v2262 = vsel %vm1656, %v2242, %v614
    %v2263 = vsel %vm1656, %v2243, %v620
    %v2264 = vsel %vm1656, %v2244, %v626
    %v2265 = vsel %vm1656, %v2245, %v632
    %v2266 = vsel %vm1656, %v2246, %v927
    %v2267 = vsel %vm1656, %v2247, %v933
    %v2268 = vsel %vm1656, %v2248, %v1012
    %v2269 = vsel %vm1656, %v2249, %v1018
    %v2270 = vsel %vm1656, %v2250, %v1097
    %v2271 = vsel %vm1656, %v2251, %v1103
    %v2272 = vsel %vm1656, %v2252, %v1182
    %v2273 = vsel %vm1656, %v2253, %v1188
    %v2274 = vsel %vm1656, %v2254, %v1267
    %v2275 = vsel %vm1656, %v2255, %v1273
    %v2276 = vsel %vm1656, %v2256, %v1352
    %v2277 = vsel %vm1656, %v2257, %v1358
    %v2278 = vsel %vm1677, %v2258, %v710
    %v2279 = vsel %vm1677, %v2259, %v716
    %v2280 = vsel %vm1677, %v2260, %v722
    %v2281 = vsel %vm1677, %v2261, %v728
    %v2282 = vsel %vm1677, %v2262, %v734
    %v2283 = vsel %vm1677, %v2263, %v740
    %v2284 = vsel %vm1677, %v2264, %v746
    %v2285 = vsel %vm1677, %v2265, %v752
    %v2286 = vsel %vm1677, %v2266, %v939
    %v2287 = vsel %vm1677, %v2267, %v945
    %v2288 = vsel %vm1677, %v2268, %v1024
    %v2289 = vsel %vm1677, %v2269, %v1030
    %v2290 = vsel %vm1677, %v2270, %v1109
    %v2291 = vsel %vm1677, %v2271, %v1115
    %v2292 = vsel %vm1677, %v2272, %v1194
    %v2293 = vsel %vm1677, %v2273, %v1200
    %v2294 = vsel %vm1677, %v2274, %v1279
    %v2295 = vsel %vm1677, %v2275, %v1285
    %v2296 = vsel %vm1677, %v2276, %v1364
    %v2297 = vsel %vm1677, %v2277, %v1370
    %v2298 = vsel %vm1383, %v830, 0.0
    %v2299 = vsel %vm1383, %v836, 0.0
    %v2300 = vsel %vm1383, %v842, 0.0
    %v2301 = vsel %vm1383, %v848, 0.0
    %v2302 = vsel %vm1383, %v854, 0.0
    %v2303 = vsel %vm1383, %v860, 0.0
    %v2304 = vsel %vm1383, %v866, 0.0
    %v2305 = vsel %vm1383, %v872, 0.0
    %v2306 = vsel %vm1383, %v951, 0.0
    %v2307 = vsel %vm1383, %v957, 0.0
    %v2308 = vsel %vm1383, %v1036, 0.0
    %v2309 = vsel %vm1383, %v1042, 0.0
    %v2310 = vsel %vm1383, %v1121, 0.0
    %v2311 = vsel %vm1383, %v1127, 0.0
    %v2312 = vsel %vm1383, %v1206, 0.0
    %v2313 = vsel %vm1383, %v1212, 0.0
    %v2314 = vsel %vm1383, %v1291, 0.0
    %v2315 = vsel %vm1383, %v1297, 0.0
    %v2316 = vsel %vm1383, %v1376, 0.0
    %v2317 = vsel %vm1383, %v1382, 0.0
    %v2318 = vsel %vm1404, %v2298, 0.0
    %v2319 = vsel %vm1404, %v2299, 0.0
    %v2320 = vsel %vm1404, %v2300, 0.0
    %v2321 = vsel %vm1404, %v2301, 0.0
    %v2322 = vsel %vm1404, %v2302, 0.0
    %v2323 = vsel %vm1404, %v2303, 0.0
    %v2324 = vsel %vm1404, %v2304, 0.0
    %v2325 = vsel %vm1404, %v2305, 0.0
    %v2326 = vsel %vm1404, %v2306, 0.0
    %v2327 = vsel %vm1404, %v2307, 0.0
    %v2328 = vsel %vm1404, %v2308, 0.0
    %v2329 = vsel %vm1404, %v2309, 0.0
    %v2330 = vsel %vm1404, %v2310, 0.0
    %v2331 = vsel %vm1404, %v2311, 0.0
    %v2332 = vsel %vm1404, %v2312, 0.0
    %v2333 = vsel %vm1404, %v2313, 0.0
    %v2334 = vsel %vm1404, %v2314, 0.0
    %v2335 = vsel %vm1404, %v2315, 0.0
    %v2336 = vsel %vm1404, %v2316, 0.0
    %v2337 = vsel %vm1404, %v2317, 0.0
    %v2338 = vsel %vm1425, %v2318, 0.0
    %v2339 = vsel %vm1425, %v2319, 0.0
    %v2340 = vsel %vm1425, %v2320, 0.0
    %v2341 = vsel %vm1425, %v2321, 0.0
    %v2342 = vsel %vm1425, %v2322, 0.0
    %v2343 = vsel %vm1425, %v2323, 0.0
    %v2344 = vsel %vm1425, %v2324, 0.0
    %v2345 = vsel %vm1425, %v2325, 0.0
    %v2346 = vsel %vm1425, %v2326, 0.0
    %v2347 = vsel %vm1425, %v2327, 0.0
    %v2348 = vsel %vm1425, %v2328, 0.0
    %v2349 = vsel %vm1425, %v2329, 0.0
    %v2350 = vsel %vm1425, %v2330, 0.0
    %v2351 = vsel %vm1425, %v2331, 0.0
    %v2352 = vsel %vm1425, %v2332, 0.0
    %v2353 = vsel %vm1425, %v2333, 0.0
    %v2354 = vsel %vm1425, %v2334, 0.0
    %v2355 = vsel %vm1425, %v2335, 0.0
    %v2356 = vsel %vm1425, %v2336, 0.0
    %v2357 = vsel %vm1425, %v2337, 0.0
    %v2358 = vsel %vm1446, %v2338, 0.0
    %v2359 = vsel %vm1446, %v2339, 0.0
    %v2360 = vsel %vm1446, %v2340, 0.0
    %v2361 = vsel %vm1446, %v2341, 0.0
    %v2362 = vsel %vm1446, %v2342, 0.0
    %v2363 = vsel %vm1446, %v2343, 0.0
    %v2364 = vsel %vm1446, %v2344, 0.0
    %v2365 = vsel %vm1446, %v2345, 0.0
    %v2366 = vsel %vm1446, %v2346, 0.0
    %v2367 = vsel %vm1446, %v2347, 0.0
    %v2368 = vsel %vm1446, %v2348, 0.0
    %v2369 = vsel %vm1446, %v2349, 0.0
    %v2370 = vsel %vm1446, %v2350, 0.0
    %v2371 = vsel %vm1446, %v2351, 0.0
    %v2372 = vsel %vm1446, %v2352, 0.0
    %v2373 = vsel %vm1446, %v2353, 0.0
    %v2374 = vsel %vm1446, %v2354, 0.0
    %v2375 = vsel %vm1446, %v2355, 0.0
    %v2376 = vsel %vm1446, %v2356, 0.0
    %v2377 = vsel %vm1446, %v2357, 0.0
    %v2378 = vsel %vm1467, %v2358, 0.0
    %v2379 = vsel %vm1467, %v2359, 0.0
    %v2380 = vsel %vm1467, %v2360, 0.0
    %v2381 = vsel %vm1467, %v2361, 0.0
    %v2382 = vsel %vm1467, %v2362, 0.0
    %v2383 = vsel %vm1467, %v2363, 0.0
    %v2384 = vsel %vm1467, %v2364, 0.0
    %v2385 = vsel %vm1467, %v2365, 0.0
    %v2386 = vsel %vm1467, %v2366, 0.0
    %v2387 = vsel %vm1467, %v2367, 0.0
    %v2388 = vsel %vm1467, %v2368, 0.0
    %v2389 = vsel %vm1467, %v2369, 0.0
    %v2390 = vsel %vm1467, %v2370, 0.0
    %v2391 = vsel %vm1467, %v2371, 0.0
    %v2392 = vsel %vm1467, %v2372, 0.0
    %v2393 = vsel %vm1467, %v2373, 0.0
    %v2394 = vsel %vm1467, %v2374, 0.0
    %v2395 = vsel %vm1467, %v2375, 0.0
    %v2396 = vsel %vm1467, %v2376, 0.0
    %v2397 = vsel %vm1467, %v2377, 0.0
    %v2398 = vsel %vm1488, %v2378, 0.0
    %v2399 = vsel %vm1488, %v2379, 0.0
    %v2400 = vsel %vm1488, %v2380, 0.0
    %v2401 = vsel %vm1488, %v2381, 0.0
    %v2402 = vsel %vm1488, %v2382, 0.0
    %v2403 = vsel %vm1488, %v2383, 0.0
    %v2404 = vsel %vm1488, %v2384, 0.0
    %v2405 = vsel %vm1488, %v2385, 0.0
    %v2406 = vsel %vm1488, %v2386, 0.0
    %v2407 = vsel %vm1488, %v2387, 0.0
    %v2408 = vsel %vm1488, %v2388, 0.0
    %v2409 = vsel %vm1488, %v2389, 0.0
    %v2410 = vsel %vm1488, %v2390, 0.0
    %v2411 = vsel %vm1488, %v2391, 0.0
    %v2412 = vsel %vm1488, %v2392, 0.0
    %v2413 = vsel %vm1488, %v2393, 0.0
    %v2414 = vsel %vm1488, %v2394, 0.0
    %v2415 = vsel %vm1488, %v2395, 0.0
    %v2416 = vsel %vm1488, %v2396, 0.0
    %v2417 = vsel %vm1488, %v2397, 0.0
    %v2418 = vsel %vm1509, %v2398, 0.0
    %v2419 = vsel %vm1509, %v2399, 0.0
    %v2420 = vsel %vm1509, %v2400, 0.0
    %v2421 = vsel %vm1509, %v2401, 0.0
    %v2422 = vsel %vm1509, %v2402, 0.0
    %v2423 = vsel %vm1509, %v2403, 0.0
    %v2424 = vsel %vm1509, %v2404, 0.0
    %v2425 = vsel %vm1509, %v2405, 0.0
    %v2426 = vsel %vm1509, %v2406, 0.0
    %v2427 = vsel %vm1509, %v2407, 0.0
    %v2428 = vsel %vm1509, %v2408, 0.0
    %v2429 = vsel %vm1509, %v2409, 0.0
    %v2430 = vsel %vm1509, %v2410, 0.0
    %v2431 = vsel %vm1509, %v2411, 0.0
    %v2432 = vsel %vm1509, %v2412, 0.0
    %v2433 = vsel %vm1509, %v2413, 0.0
    %v2434 = vsel %vm1509, %v2414, 0.0
    %v2435 = vsel %vm1509, %v2415, 0.0
    %v2436 = vsel %vm1509, %v2416, 0.0
    %v2437 = vsel %vm1509, %v2417, 0.0
    %2458 = vrot.lane.b32.xlu0 %v1978, 16
    %v2459 = vpop.permute.xlu0 %2458
    %2460 = vrot.lane.b32.xlu0 %v1979, 16
    %v2461 = vpop.permute.xlu0 %2460
    %2462 = vrot.lane.b32.xlu0 %v1980, 16
    %v2463 = vpop.permute.xlu0 %2462
    %2464 = vrot.lane.b32.xlu0 %v1981, 16
    %v2465 = vpop.permute.xlu0 %2464
    %2466 = vrot.lane.b32.xlu0 %v1982, 16
    %v2467 = vpop.permute.xlu0 %2466
    %2468 = vrot.lane.b32.xlu0 %v1983, 16
    %v2469 = vpop.permute.xlu0 %2468
    %2470 = vrot.lane.b32.xlu0 %v1984, 16
    %v2471 = vpop.permute.xlu0 %2470
    %2472 = vrot.lane.b32.xlu0 %v1985, 16
    %v2473 = vpop.permute.xlu0 %2472
    %2474 = vrot.lane.b32.xlu0 %v1986, 16
    %v2475 = vpop.permute.xlu0 %2474
    %2476 = vrot.lane.b32.xlu0 %v1987, 16
    %v2477 = vpop.permute.xlu0 %2476
    %2478 = vrot.lane.b32.xlu0 %v1988, 16
    %v2479 = vpop.permute.xlu0 %2478
    %2480 = vrot.lane.b32.xlu0 %v1989, 16
    %v2481 = vpop.permute.xlu0 %2480
    %2482 = vrot.lane.b32.xlu0 %v1990, 16
    %v2483 = vpop.permute.xlu0 %2482
    %2484 = vrot.lane.b32.xlu0 %v1991, 16
    %v2485 = vpop.permute.xlu0 %2484
    %2486 = vrot.lane.b32.xlu0 %v1992, 16
    %v2487 = vpop.permute.xlu0 %2486
    %2488 = vrot.lane.b32.xlu0 %v1993, 16
    %v2489 = vpop.permute.xlu0 %2488
    %2490 = vrot.lane.b32.xlu0 %v1994, 16
    %v2491 = vpop.permute.xlu0 %2490
    %2492 = vrot.lane.b32.xlu0 %v1995, 16
    %v2493 = vpop.permute.xlu0 %2492
    %2494 = vrot.lane.b32.xlu0 %v1996, 16
    %v2495 = vpop.permute.xlu0 %2494
    %2496 = vrot.lane.b32.xlu0 %v1997, 16
    %v2497 = vpop.permute.xlu0 %2496
    %2538 = vrot.lane.b32.xlu0 %v2278, 32
    %v2539 = vpop.permute.xlu0 %2538
    %2540 = vrot.lane.b32.xlu0 %v2279, 32
    %v2541 = vpop.permute.xlu0 %2540
    %2542 = vrot.lane.b32.xlu0 %v2280, 32
    %v2543 = vpop.permute.xlu0 %2542
    %2544 = vrot.lane.b32.xlu0 %v2281, 32
    %v2545 = vpop.permute.xlu0 %2544
    %2546 = vrot.lane.b32.xlu0 %v2282, 32
    %v2547 = vpop.permute.xlu0 %2546
    %2548 = vrot.lane.b32.xlu0 %v2283, 32
    %v2549 = vpop.permute.xlu0 %2548
    %2550 = vrot.lane.b32.xlu0 %v2284, 32
    %v2551 = vpop.permute.xlu0 %2550
    %2552 = vrot.lane.b32.xlu0 %v2285, 32
    %v2553 = vpop.permute.xlu0 %2552
    %2554 = vrot.lane.b32.xlu0 %v2286, 32
    %v2555 = vpop.permute.xlu0 %2554
    %2556 = vrot.lane.b32.xlu0 %v2287, 32
    %v2557 = vpop.permute.xlu0 %2556
    %2558 = vrot.lane.b32.xlu0 %v2288, 32
    %v2559 = vpop.permute.xlu0 %2558
    %2560 = vrot.lane.b32.xlu0 %v2289, 32
    %v2561 = vpop.permute.xlu0 %2560
    %2562 = vrot.lane.b32.xlu0 %v2290, 32
    %v2563 = vpop.permute.xlu0 %2562
    %2564 = vrot.lane.b32.xlu0 %v2291, 32
    %v2565 = vpop.permute.xlu0 %2564
    %2566 = vrot.lane.b32.xlu0 %v2292, 32
    %v2567 = vpop.permute.xlu0 %2566
    %2568 = vrot.lane.b32.xlu0 %v2293, 32
    %v2569 = vpop.permute.xlu0 %2568
    %2570 = vrot.lane.b32.xlu0 %v2294, 32
    %v2571 = vpop.permute.xlu0 %2570
    %2572 = vrot.lane.b32.xlu0 %v2295, 32
    %v2573 = vpop.permute.xlu0 %2572
    %2574 = vrot.lane.b32.xlu0 %v2296, 32
    %v2575 = vpop.permute.xlu0 %2574
    %2576 = vrot.lane.b32.xlu0 %v2297, 32
    %v2577 = vpop.permute.xlu0 %2576
    %2618 = vrot.lane.b32.xlu0 %v2418, 48
    %v2619 = vpop.permute.xlu0 %2618
    %2620 = vrot.lane.b32.xlu0 %v2419, 48
    %v2621 = vpop.permute.xlu0 %2620
    %2622 = vrot.lane.b32.xlu0 %v2420, 48
    %v2623 = vpop.permute.xlu0 %2622
    %2624 = vrot.lane.b32.xlu0 %v2421, 48
    %v2625 = vpop.permute.xlu0 %2624
    %2626 = vrot.lane.b32.xlu0 %v2422, 48
    %v2627 = vpop.permute.xlu0 %2626
    %2628 = vrot.lane.b32.xlu0 %v2423, 48
    %v2629 = vpop.permute.xlu0 %2628
    %2630 = vrot.lane.b32.xlu0 %v2424, 48
    %v2631 = vpop.permute.xlu0 %2630
    %2632 = vrot.lane.b32.xlu0 %v2425, 48
    %v2633 = vpop.permute.xlu0 %2632
    %2634 = vrot.lane.b32.xlu0 %v2426, 48
    %v2635 = vpop.permute.xlu0 %2634
    %2636 = vrot.lane.b32.xlu0 %v2427, 48
    %v2637 = vpop.permute.xlu0 %2636
    %2638 = vrot.lane.b32.xlu0 %v2428, 48
    %v2639 = vpop.permute.xlu0 %2638
    %2640 = vrot.lane.b32.xlu0 %v2429, 48
    %v2641 = vpop.permute.xlu0 %2640
    %2642 = vrot.lane.b32.xlu0 %v2430, 48
    %v2643 = vpop.permute.xlu0 %2642
    %2644 = vrot.lane.b32.xlu0 %v2431, 48
    %v2645 = vpop.permute.xlu0 %2644
    %2646 = vrot.lane.b32.xlu0 %v2432, 48
    %v2647 = vpop.permute.xlu0 %2646
    %2648 = vrot.lane.b32.xlu0 %v2433, 48
    %v2649 = vpop.permute.xlu0 %2648
    %2650 = vrot.lane.b32.xlu0 %v2434, 48
    %v2651 = vpop.permute.xlu0 %2650
    %2652 = vrot.lane.b32.xlu0 %v2435, 48
    %v2653 = vpop.permute.xlu0 %2652
    %2654 = vrot.lane.b32.xlu0 %v2436, 48
    %v2655 = vpop.permute.xlu0 %2654
    %2656 = vrot.lane.b32.xlu0 %v2437, 48
    %v2657 = vpop.permute.xlu0 %2656
    %vm2678 = vcmask 130048
    %v2679 = vsel %vm2678, %v1678, %v2459
    %v2680 = vsel %vm2678, %v1679, %v2461
    %v2681 = vsel %vm2678, %v1680, %v2463
    %v2682 = vsel %vm2678, %v1681, %v2465
    %v2683 = vsel %vm2678, %v1682, %v2467
    %v2684 = vsel %vm2678, %v1683, %v2469
    %v2685 = vsel %vm2678, %v1684, %v2471
    %v2686 = vsel %vm2678, %v1685, %v2473
    %v2687 = vsel %vm2678, %v1686, %v2475
    %v2688 = vsel %vm2678, %v1687, %v2477
    %v2689 = vsel %vm2678, %v1688, %v2479
    %v2690 = vsel %vm2678, %v1689, %v2481
    %v2691 = vsel %vm2678, %v1690, %v2483
    %v2692 = vsel %vm2678, %v1691, %v2485
    %v2693 = vsel %vm2678, %v1692, %v2487
    %v2694 = vsel %vm2678, %v1693, %v2489
    %v2695 = vsel %vm2678, %v1694, %v2491
    %v2696 = vsel %vm2678, %v1695, %v2493
    %v2697 = vsel %vm2678, %v1696, %v2495
    %v2698 = vsel %vm2678, %v1697, %v2497
    %vm2699 = vcmask 261120
    %v2700 = vsel %vm2699, %v2679, %v2539
    %v2701 = vsel %vm2699, %v2680, %v2541
    %v2702 = vsel %vm2699, %v2681, %v2543
    %v2703 = vsel %vm2699, %v2682, %v2545
    %v2704 = vsel %vm2699, %v2683, %v2547
    %v2705 = vsel %vm2699, %v2684, %v2549
    %v2706 = vsel %vm2699, %v2685, %v2551
    %v2707 = vsel %vm2699, %v2686, %v2553
    %v2708 = vsel %vm2699, %v2687, %v2555
    %v2709 = vsel %vm2699, %v2688, %v2557
    %v2710 = vsel %vm2699, %v2689, %v2559
    %v2711 = vsel %vm2699, %v2690, %v2561
    %v2712 = vsel %vm2699, %v2691, %v2563
    %v2713 = vsel %vm2699, %v2692, %v2565
    %v2714 = vsel %vm2699, %v2693, %v2567
    %v2715 = vsel %vm2699, %v2694, %v2569
    %v2716 = vsel %vm2699, %v2695, %v2571
    %v2717 = vsel %vm2699, %v2696, %v2573
    %v2718 = vsel %vm2699, %v2697, %v2575
    %v2719 = vsel %vm2699, %v2698, %v2577
    %vm2720 = vcmask 392192
    %v2721 = vsel %vm2720, %v2700, %v2619
    %v2722 = vsel %vm2720, %v2701, %v2621
    %v2723 = vsel %vm2720, %v2702, %v2623
    %v2724 = vsel %vm2720, %v2703, %v2625
    %v2725 = vsel %vm2720, %v2704, %v2627
    %v2726 = vsel %vm2720, %v2705, %v2629
    %v2727 = vsel %vm2720, %v2706, %v2631
    %v2728 = vsel %vm2720, %v2707, %v2633
    %v2729 = vsel %vm2720, %v2708, %v2635
    %v2730 = vsel %vm2720, %v2709, %v2637
    %v2731 = vsel %vm2720, %v2710, %v2639
    %v2732 = vsel %vm2720, %v2711, %v2641
    %v2733 = vsel %vm2720, %v2712, %v2643
    %v2734 = vsel %vm2720, %v2713, %v2645
    %v2735 = vsel %vm2720, %v2714, %v2647
    %v2736 = vsel %vm2720, %v2715, %v2649
    %v2737 = vsel %vm2720, %v2716, %v2651
    %v2738 = vsel %vm2720, %v2717, %v2653
    %v2739 = vsel %vm2720, %v2718, %v2655
    %v2740 = vsel %vm2720, %v2719, %v2657
    %v2761 = vrot.slane %v2721, 2
    %v2762 = vrot.slane %v2721, 4
    %v2763 = vrot.slane %v2721, 6
    %v2764 = vrot.slane %v2723, 2
    %v2765 = vrot.slane %v2723, 4
    %v2766 = vrot.slane %v2723, 6
    %v2767 = vrot.slane %v2725, 2
    %v2768 = vrot.slane %v2725, 4
    %v2769 = vrot.slane %v2725, 6
    %v2770 = vrot.slane %v2727, 2
    %v2771 = vrot.slane %v2727, 4
    %v2772 = vrot.slane %v2727, 6
    %v2773 = vrot.slane %v2729, 2
    %v2774 = vrot.slane %v2729, 4
    %v2775 = vrot.slane %v2729, 6
    %v2776 = vrot.slane %v2731, 2
    %v2777 = vrot.slane %v2731, 4
    %v2778 = vrot.slane %v2731, 6
    %v2779 = vrot.slane %v2733, 2
    %v2780 = vrot.slane %v2733, 4
    %v2781 = vrot.slane %v2733, 6
    %v2782 = vrot.slane %v2735, 2
    %v2783 = vrot.slane %v2735, 4
    %v2784 = vrot.slane %v2735, 6
    %v2785 = vrot.slane %v2737, 2
    %v2786 = vrot.slane %v2737, 4
    %v2787 = vrot.slane %v2737, 6
    %v2788 = vrot.slane %v2739, 2
    %v2789 = vrot.slane %v2739, 4
    %v2790 = vrot.slane %v2739, 6
    %v2791 = vld [vmem:[%s1] sm:$0xff]
    %v2792 = vld [vmem:[%s1 + $0x8] sm:$0xff]
    %v2793 = vld [vmem:[%s1 + $0x10] sm:$0xff]
    %v2794 = vld [vmem:[%s1 + $0x18] sm:$0xff]
    %v2795 = vld [vmem:[%s1 + $0x20] sm:$0xff]
    %v2796 = vld [vmem:[%s1 + $0x28] sm:$0xff]
    %v2797 = vld [vmem:[%s1 + $0x30] sm:$0xff]
    %2798 = vst [vmem:[#allocation1] ss:$4 sm:$0xff] %v2721
    %s2799 = scalar_lea.vmem [#allocation1], 1
    %2800 = vst [vmem:[%s2799] ss:$4 sm:$0xff] %v2761
    %s2801 = scalar_lea.vmem [#allocation1], 2
    %2802 = vst [vmem:[%s2801] ss:$4 sm:$0xff] %v2762
    %s2803 = scalar_lea.vmem [#allocation1], 3
    %2804 = vst [vmem:[%s2803] ss:$4 sm:$0xff] %v2763
    %s2805 = scalar_lea.vmem [#allocation1], 32
    %2806 = vst [vmem:[%s2805] ss:$4 sm:$0xff] %v2722
    %s2807 = scalar_lea.vmem [#allocation1], 33
    %2808 = vst [vmem:[%s2807] ss:$4 sm:$0xff] %v2723
    %s2809 = scalar_lea.vmem [#allocation1], 34
    %2810 = vst [vmem:[%s2809] ss:$4 sm:$0xff] %v2764
    %s2811 = scalar_lea.vmem [#allocation1], 35
    %2812 = vst [vmem:[%s2811] ss:$4 sm:$0xff] %v2765
    %v2813 = vld.sshfl [vmem:[#allocation1] sm:$0xff pattern:$0x73625140]
    %v2814 = vld.sshfl [vmem:[#allocation1 + $0x20] sm:$0xff pattern:$0x73625140]
    %2815 = vst [vmem:[#allocation1] ss:$4 sm:$0xff] %v2766
    %2816 = vst [vmem:[%s2799] ss:$4 sm:$0xff] %v2724
    %2817 = vst [vmem:[%s2801] ss:$4 sm:$0xff] %v2725
    %2818 = vst [vmem:[%s2803] ss:$4 sm:$0xff] %v2767
    %2819 = vst [vmem:[%s2805] ss:$4 sm:$0xff] %v2768
    %2820 = vst [vmem:[%s2807] ss:$4 sm:$0xff] %v2769
    %2821 = vst [vmem:[%s2809] ss:$4 sm:$0xff] %v2726
    %2822 = vst [vmem:[%s2811] ss:$4 sm:$0xff] %v2727
    %v2823 = vld.sshfl [vmem:[#allocation1] sm:$0xff pattern:$0x73625140]
    %v2824 = vld.sshfl [vmem:[#allocation1 + $0x20] sm:$0xff pattern:$0x73625140]
    %2825 = vst [vmem:[#allocation1] ss:$4 sm:$0xff] %v2770
    %2826 = vst [vmem:[%s2799] ss:$4 sm:$0xff] %v2771
    %2827 = vst [vmem:[%s2801] ss:$4 sm:$0xff] %v2772
    %2828 = vst [vmem:[%s2803] ss:$4 sm:$0xff] %v2728
    %2829 = vst [vmem:[%s2805] ss:$4 sm:$0xff] %v2729
    %2830 = vst [vmem:[%s2807] ss:$4 sm:$0xff] %v2773
    %2831 = vst [vmem:[%s2809] ss:$4 sm:$0xff] %v2774
    %2832 = vst [vmem:[%s2811] ss:$4 sm:$0xff] %v2775
    %v2833 = vld.sshfl [vmem:[#allocation1] sm:$0xff pattern:$0x73625140]
    %v2834 = vld.sshfl [vmem:[#allocation1 + $0x20] sm:$0xff pattern:$0x73625140]
    %2835 = vst [vmem:[#allocation1] ss:$4 sm:$0xff] %v2730
    %2836 = vst [vmem:[%s2799] ss:$4 sm:$0xff] %v2731
    %2837 = vst [vmem:[%s2801] ss:$4 sm:$0xff] %v2776
    %2838 = vst [vmem:[%s2803] ss:$4 sm:$0xff] %v2777
    %2839 = vst [vmem:[%s2805] ss:$4 sm:$0xff] %v2778
    %2840 = vst [vmem:[%s2807] ss:$4 sm:$0xff] %v2732
    %2841 = vst [vmem:[%s2809] ss:$4 sm:$0xff] %v2733
    %2842 = vst [vmem:[%s2811] ss:$4 sm:$0xff] %v2779
    %v2843 = vld.sshfl [vmem:[#allocation1] sm:$0xff pattern:$0x73625140]
    %v2844 = vld.sshfl [vmem:[#allocation1 + $0x20] sm:$0xff pattern:$0x73625140]
    %2845 = vst [vmem:[#allocation1] ss:$4 sm:$0xff] %v2780
    %2846 = vst [vmem:[%s2799] ss:$4 sm:$0xff] %v2781
    %2847 = vst [vmem:[%s2801] ss:$4 sm:$0xff] %v2734
    %2848 = vst [vmem:[%s2803] ss:$4 sm:$0xff] %v2735
    %2849 = vst [vmem:[%s2805] ss:$4 sm:$0xff] %v2782
    %2850 = vst [vmem:[%s2807] ss:$4 sm:$0xff] %v2783
    %2851 = vst [vmem:[%s2809] ss:$4 sm:$0xff] %v2784
    %2852 = vst [vmem:[%s2811] ss:$4 sm:$0xff] %v2736
    %v2853 = vld.sshfl [vmem:[#allocation1] sm:$0xff pattern:$0x73625140]
    %v2854 = vld.sshfl [vmem:[#allocation1 + $0x20] sm:$0xff pattern:$0x73625140]
    %2855 = vst [vmem:[#allocation1] ss:$4 sm:$0xff] %v2737
    %2856 = vst [vmem:[%s2799] ss:$4 sm:$0xff] %v2785
    %2857 = vst [vmem:[%s2801] ss:$4 sm:$0xff] %v2786
    %2858 = vst [vmem:[%s2803] ss:$4 sm:$0xff] %v2787
    %2859 = vst [vmem:[%s2805] ss:$4 sm:$0xff] %v2738
    %2860 = vst [vmem:[%s2807] ss:$4 sm:$0xff] %v2739
    %2861 = vst [vmem:[%s2809] ss:$4 sm:$0xff] %v2788
    %2862 = vst [vmem:[%s2811] ss:$4 sm:$0xff] %v2789
    %v2863 = vld.sshfl [vmem:[#allocation1] sm:$0xff pattern:$0x73625140]
    %v2864 = vld.sshfl [vmem:[#allocation1 + $0x20] sm:$0xff pattern:$0x73625140]
    %2865 = vst [vmem:[#allocation1] ss:$4 sm:$0xff] %v2790
    %2866 = vst [vmem:[%s2799] ss:$4 sm:$0xff] %v2740
    %v2867 = vld.sshfl [vmem:[#allocation1] sm:$0xff pattern:$0x73625140]
    %vm2868 = vcmask 457728
    %v2869 = vsel %vm2868, %v2813, 0
    %v2871 = vsel %vm2868, %v2814, 0
    %v2873 = vsel %vm2868, %v2823, 0
    %v2875 = vsel %vm2868, %v2824, 0
    %v2877 = vsel %vm2868, %v2833, 0
    %v2879 = vsel %vm2868, %v2834, 0
    %v2881 = vsel %vm2868, %v2843, 0
    %v2883 = vsel %vm2868, %v2844, 0
    %v2885 = vsel %vm2868, %v2853, 0
    %v2887 = vsel %vm2868, %v2854, 0
    %v2889 = vsel %vm2868, %v2863, 0
    %v2891 = vsel %vm2868, %v2864, 0
    %v2893 = vsel %vm2868, %v2867, 0
    %2895 = vmatpush.msra.mxu0 0.0
    %2896 = vmatpush.msra.mxu0 0.0
    %2897 = vmatpush.msra.mxu0 0.0
    %2898 = vmatpush.msra.mxu0 0.0
    %2899 = vmatpush.msra.mxu0 0.0
    %2900 = vmatpush.msra.mxu0 0.0
    %2901 = vmatpush.msra.mxu0 0.0
    %2902 = vmatpush.msra.mxu0 0.0
    %2903 = vmatpush.msra.mxu0 0.0
    %2904 = vmatpush.msra.mxu0 %v2797
    %2905 = vmatpush.msra.mxu0 %v2796
    %2906 = vmatpush.msra.mxu0 %v2795
    %2907 = vmatpush.msra.mxu0 %v2794
    %2908 = vmatpush.msra.mxu0 %v2793
    %2909 = vmatpush.msra.mxu0 %v2792
    %2910 = vmatpush.msra.mxu0 %v2791
    %2911 = vmatmul.f32.gmra.mxu0 %v2869
    %v2912 = vpop.f32.mrf.mxu0
    %v2913 = vadd.f32 0.0, %v2912
    %2914 = vmatmul.f32.gmra.mxu0 %v2871
    %v2915 = vpop.f32.mrf.mxu0
    %v2916 = vadd.f32 0.0, %v2915
    %2917 = vmatmul.f32.gmra.mxu0 %v2873
    %v2918 = vpop.f32.mrf.mxu0
    %v2919 = vadd.f32 0.0, %v2918
    %2920 = vmatmul.f32.gmra.mxu0 %v2875
    %v2921 = vpop.f32.mrf.mxu0
    %v2922 = vadd.f32 0.0, %v2921
    %2923 = vmatmul.f32.gmra.mxu0 %v2877
    %v2924 = vpop.f32.mrf.mxu0
    %v2925 = vadd.f32 0.0, %v2924
    %2926 = vmatmul.f32.gmra.mxu0 %v2879
    %v2927 = vpop.f32.mrf.mxu0
    %v2928 = vadd.f32 0.0, %v2927
    %2929 = vmatmul.f32.gmra.mxu0 %v2881
    %v2930 = vpop.f32.mrf.mxu0
    %v2931 = vadd.f32 0.0, %v2930
    %2932 = vmatmul.f32.gmra.mxu0 %v2883
    %v2933 = vpop.f32.mrf.mxu0
    %v2934 = vadd.f32 0.0, %v2933
    %2935 = vmatmul.f32.gmra.mxu0 %v2885
    %v2936 = vpop.f32.mrf.mxu0
    %v2937 = vadd.f32 0.0, %v2936
    %2938 = vmatmul.f32.gmra.mxu0 %v2887
    %v2939 = vpop.f32.mrf.mxu0
    %v2940 = vadd.f32 0.0, %v2939
    %2941 = vmatmul.f32.gmra.mxu0 %v2889
    %v2942 = vpop.f32.mrf.mxu0
    %v2943 = vadd.f32 0.0, %v2942
    %2944 = vmatmul.f32.gmra.mxu0 %v2891
    %v2945 = vpop.f32.mrf.mxu0
    %v2946 = vadd.f32 0.0, %v2945
    %2947 = vmatmul.f32.gmra.mxu0 %v2893
    %v2948 = vpop.f32.mrf.mxu0
    %v2949 = vadd.f32 0.0, %v2948
    %2950 = vdwg.mxu0
    %v2964 = vrot.slane %v2913, 2
    %v2965 = vrot.slane %v2913, 4
    %v2966 = vrot.slane %v2913, 6
    %v2967 = vrot.slane %v2916, 2
    %v2968 = vrot.slane %v2916, 4
    %v2969 = vrot.slane %v2916, 6
    %v2970 = vrot.slane %v2919, 2
    %v2971 = vrot.slane %v2919, 4
    %v2972 = vrot.slane %v2919, 6
    %v2973 = vrot.slane %v2922, 2
    %v2974 = vrot.slane %v2922, 4
    %v2975 = vrot.slane %v2922, 6
    %v2976 = vrot.slane %v2925, 2
    %v2977 = vrot.slane %v2925, 4
    %v2978 = vrot.slane %v2925, 6
    %v2979 = vrot.slane %v2928, 2
    %v2980 = vrot.slane %v2928, 4
    %v2981 = vrot.slane %v2928, 6
    %v2982 = vrot.slane %v2931, 2
    %v2983 = vrot.slane %v2931, 4
    %v2984 = vrot.slane %v2931, 6
    %v2985 = vrot.slane %v2934, 2
    %v2986 = vrot.slane %v2934, 4
    %v2987 = vrot.slane %v2934, 6
    %v2988 = vrot.slane %v2937, 2
    %v2989 = vrot.slane %v2937, 4
    %v2990 = vrot.slane %v2937, 6
    %v2991 = vrot.slane %v2940, 2
    %v2992 = vrot.slane %v2940, 4
    %v2993 = vrot.slane %v2940, 6
    %v2994 = vrot.slane %v2943, 2
    %v2995 = vrot.slane %v2943, 4
    %v2996 = vrot.slane %v2943, 6
    %v2997 = vrot.slane %v2946, 2
    %v2998 = vrot.slane %v2946, 4
    %v2999 = vrot.slane %v2946, 6
    %v3000 = vrot.slane %v2949, 2
    %3001 = vst [vmem:[#allocation1] ss:$4 sm:$0xff] %v2913
    %s3002 = scalar_lea.vmem [#allocation1], 1
    %3003 = vst [vmem:[%s3002] ss:$4 sm:$0xff] %v2964
    %s3004 = scalar_lea.vmem [#allocation1], 2
    %3005 = vst [vmem:[%s3004] ss:$4 sm:$0xff] %v2965
    %v3006 = vld.sshfl [vmem:[#allocation1] sm:$0xff pattern:$0x73625140]
    %s3007 = scalar_lea.vmem [#allocation1], 32
    %3008 = vst [vmem:[%s3007] ss:$4 sm:$0xff] %v2967
    %s3009 = scalar_lea.vmem [#allocation1], 33
    %3010 = vst [vmem:[%s3009] ss:$4 sm:$0xff] %v2968
    %s3011 = scalar_lea.vmem [#allocation1], 34
    %3012 = vst [vmem:[%s3011] ss:$4 sm:$0xff] %v2969
    %v3013 = vld.sshfl [vmem:[#allocation1 + $0x20] sm:$0xff pattern:$0x73625140]
    %3014 = vst [vmem:[#allocation1] ss:$4 sm:$0xff] %v2971
    %3015 = vst [vmem:[%s3002] ss:$4 sm:$0xff] %v2972
    %3016 = vst [vmem:[%s3004] ss:$4 sm:$0xff] %v2922
    %v3017 = vld.sshfl [vmem:[#allocation1] sm:$0xff pattern:$0x73625140]
    %3018 = vst [vmem:[%s3007] ss:$4 sm:$0xff] %v2975
    %3019 = vst [vmem:[%s3009] ss:$4 sm:$0xff] %v2925
    %3020 = vst [vmem:[%s3011] ss:$4 sm:$0xff] %v2976
    %v3021 = vld.sshfl [vmem:[#allocation1 + $0x20] sm:$0xff pattern:$0x73625140]
    %3022 = vst [vmem:[#allocation1] ss:$4 sm:$0xff] %v2928
    %3023 = vst [vmem:[%s3002] ss:$4 sm:$0xff] %v2979
    %3024 = vst [vmem:[%s3004] ss:$4 sm:$0xff] %v2980
    %v3025 = vld.sshfl [vmem:[#allocation1] sm:$0xff pattern:$0x73625140]
    %3026 = vst [vmem:[%s3007] ss:$4 sm:$0xff] %v2982
    %3027 = vst [vmem:[%s3009] ss:$4 sm:$0xff] %v2983
    %3028 = vst [vmem:[%s3011] ss:$4 sm:$0xff] %v2984
    %v3029 = vld.sshfl [vmem:[#allocation1 + $0x20] sm:$0xff pattern:$0x73625140]
    %3030 = vst [vmem:[#allocation1] ss:$4 sm:$0xff] %v2913
    %s3031 = scalar_lea.vmem [#allocation1], 1
    %3032 = vst [vmem:[%s3031] ss:$4 sm:$0xff] %v2964
    %s3033 = scalar_lea.vmem [#allocation1], 2
    %3034 = vst [vmem:[%s3033] ss:$4 sm:$0xff] %v2965
    %s3035 = scalar_lea.vmem [#allocation1], 3
    %3036 = vst [vmem:[%s3035] ss:$4 sm:$0xff] %v2966
    %v3037 = vld.sshfl [vmem:[#allocation1] sm:$0xff pattern:$0x73625140]
    %s3038 = scalar_lea.vmem [#allocation1], 32
    %3039 = vst [vmem:[%s3038] ss:$4 sm:$0xff] %v2967
    %s3040 = scalar_lea.vmem [#allocation1], 33
    %3041 = vst [vmem:[%s3040] ss:$4 sm:$0xff] %v2968
    %s3042 = scalar_lea.vmem [#allocation1], 34
    %3043 = vst [vmem:[%s3042] ss:$4 sm:$0xff] %v2969
    %s3044 = scalar_lea.vmem [#allocation1], 35
    %3045 = vst [vmem:[%s3044] ss:$4 sm:$0xff] %v2919
    %v3046 = vld.sshfl [vmem:[#allocation1 + $0x20] sm:$0xff pattern:$0x73625140]
    %3047 = vst [vmem:[#allocation1] ss:$4 sm:$0xff] %v2971
    %3048 = vst [vmem:[%s3031] ss:$4 sm:$0xff] %v2972
    %3049 = vst [vmem:[%s3033] ss:$4 sm:$0xff] %v2922
    %3050 = vst [vmem:[%s3035] ss:$4 sm:$0xff] %v2973
    %v3051 = vld.sshfl [vmem:[#allocation1] sm:$0xff pattern:$0x73625140]
    %3052 = vst [vmem:[%s3038] ss:$4 sm:$0xff] %v2975
    %3053 = vst [vmem:[%s3040] ss:$4 sm:$0xff] %v2925
    %3054 = vst [vmem:[%s3042] ss:$4 sm:$0xff] %v2976
    %3055 = vst [vmem:[%s3044] ss:$4 sm:$0xff] %v2977
    %v3056 = vld.sshfl [vmem:[#allocation1 + $0x20] sm:$0xff pattern:$0x73625140]
    %3057 = vst [vmem:[#allocation1] ss:$4 sm:$0xff] %v2928
    %3058 = vst [vmem:[%s3031] ss:$4 sm:$0xff] %v2979
    %3059 = vst [vmem:[%s3033] ss:$4 sm:$0xff] %v2980
    %3060 = vst [vmem:[%s3035] ss:$4 sm:$0xff] %v2981
    %v3061 = vld.sshfl [vmem:[#allocation1] sm:$0xff pattern:$0x73625140]
    %3062 = vst [vmem:[%s3038] ss:$4 sm:$0xff] %v2982
    %3063 = vst [vmem:[%s3040] ss:$4 sm:$0xff] %v2983
    %3064 = vst [vmem:[%s3042] ss:$4 sm:$0xff] %v2984
    %3065 = vst [vmem:[%s3044] ss:$4 sm:$0xff] %v2934
    %v3066 = vld.sshfl [vmem:[#allocation1 + $0x20] sm:$0xff pattern:$0x73625140]
    %v3067 = vrot.slane %v3037, 1
    %v3068 = vrot.slane %v3046, 1
    %v3069 = vrot.slane %v3051, 1
    %v3070 = vrot.slane %v3056, 1
    %v3071 = vrot.slane %v3061, 1
    %v3072 = vrot.slane %v3066, 1
    %3073 = vst [vmem:[#allocation1] ss:$4 sm:$0xff] %v2964
    %s3074 = scalar_lea.vmem [#allocation1], 1
    %3075 = vst [vmem:[%s3074] ss:$4 sm:$0xff] %v2965
    %s3076 = scalar_lea.vmem [#allocation1], 2
    %3077 = vst [vmem:[%s3076] ss:$4 sm:$0xff] %v2966
    %v3078 = vld.sshfl [vmem:[#allocation1] sm:$0xff pattern:$0x73625140]
    %s3079 = scalar_lea.vmem [#allocation1], 32
    %3080 = vst [vmem:[%s3079] ss:$4 sm:$0xff] %v2968
    %s3081 = scalar_lea.vmem [#allocation1], 33
    %3082 = vst [vmem:[%s3081] ss:$4 sm:$0xff] %v2969
    %s3083 = scalar_lea.vmem [#allocation1], 34
    %3084 = vst [vmem:[%s3083] ss:$4 sm:$0xff] %v2919
    %v3085 = vld.sshfl [vmem:[#allocation1 + $0x20] sm:$0xff pattern:$0x73625140]
    %3086 = vst [vmem:[#allocation1] ss:$4 sm:$0xff] %v2972
    %3087 = vst [vmem:[%s3074] ss:$4 sm:$0xff] %v2922
    %3088 = vst [vmem:[%s3076] ss:$4 sm:$0xff] %v2973
    %v3089 = vld.sshfl [vmem:[#allocation1] sm:$0xff pattern:$0x73625140]
    %3090 = vst [vmem:[%s3079] ss:$4 sm:$0xff] %v2925
    %3091 = vst [vmem:[%s3081] ss:$4 sm:$0xff] %v2976
    %3092 = vst [vmem:[%s3083] ss:$4 sm:$0xff] %v2977
    %v3093 = vld.sshfl [vmem:[#allocation1 + $0x20] sm:$0xff pattern:$0x73625140]
    %3094 = vst [vmem:[#allocation1] ss:$4 sm:$0xff] %v2979
    %3095 = vst [vmem:[%s3074] ss:$4 sm:$0xff] %v2980
    %3096 = vst [vmem:[%s3076] ss:$4 sm:$0xff] %v2981
    %v3097 = vld.sshfl [vmem:[#allocation1] sm:$0xff pattern:$0x73625140]
    %3098 = vst [vmem:[%s3079] ss:$4 sm:$0xff] %v2983
    %3099 = vst [vmem:[%s3081] ss:$4 sm:$0xff] %v2984
    %3100 = vst [vmem:[%s3083] ss:$4 sm:$0xff] %v2934
    %v3101 = vld.sshfl [vmem:[#allocation1 + $0x20] sm:$0xff pattern:$0x73625140]
    %3102 = vst [vmem:[#allocation1] ss:$4 sm:$0xff] %v2964
    %s3103 = scalar_lea.vmem [#allocation1], 1
    %3104 = vst [vmem:[%s3103] ss:$4 sm:$0xff] %v2965
    %s3105 = scalar_lea.vmem [#allocation1], 2
    %3106 = vst [vmem:[%s3105] ss:$4 sm:$0xff] %v2966
    %s3107 = scalar_lea.vmem [#allocation1], 3
    %3108 = vst [vmem:[%s3107] ss:$4 sm:$0xff] %v2916
    %v3109 = vld.sshfl [vmem:[#allocation1] sm:$0xff pattern:$0x73625140]
    %s3110 = scalar_lea.vmem [#allocation1], 32
    %3111 = vst [vmem:[%s3110] ss:$4 sm:$0xff] %v2968
    %s3112 = scalar_lea.vmem [#allocation1], 33
    %3113 = vst [vmem:[%s3112] ss:$4 sm:$0xff] %v2969
    %s3114 = scalar_lea.vmem [#allocation1], 34
    %3115 = vst [vmem:[%s3114] ss:$4 sm:$0xff] %v2919
    %s3116 = scalar_lea.vmem [#allocation1], 35
    %3117 = vst [vmem:[%s3116] ss:$4 sm:$0xff] %v2970
    %v3118 = vld.sshfl [vmem:[#allocation1 + $0x20] sm:$0xff pattern:$0x73625140]
    %3119 = vst [vmem:[#allocation1] ss:$4 sm:$0xff] %v2972
    %3120 = vst [vmem:[%s3103] ss:$4 sm:$0xff] %v2922
    %3121 = vst [vmem:[%s3105] ss:$4 sm:$0xff] %v2973
    %3122 = vst [vmem:[%s3107] ss:$4 sm:$0xff] %v2974
    %v3123 = vld.sshfl [vmem:[#allocation1] sm:$0xff pattern:$0x73625140]
    %3124 = vst [vmem:[%s3110] ss:$4 sm:$0xff] %v2925
    %3125 = vst [vmem:[%s3112] ss:$4 sm:$0xff] %v2976
    %3126 = vst [vmem:[%s3114] ss:$4 sm:$0xff] %v2977
    %3127 = vst [vmem:[%s3116] ss:$4 sm:$0xff] %v2978
    %v3128 = vld.sshfl [vmem:[#allocation1 + $0x20] sm:$0xff pattern:$0x73625140]
    %3129 = vst [vmem:[#allocation1] ss:$4 sm:$0xff] %v2979
    %3130 = vst [vmem:[%s3103] ss:$4 sm:$0xff] %v2980
    %3131 = vst [vmem:[%s3105] ss:$4 sm:$0xff] %v2981
    %3132 = vst [vmem:[%s3107] ss:$4 sm:$0xff] %v2931
    %v3133 = vld.sshfl [vmem:[#allocation1] sm:$0xff pattern:$0x73625140]
    %3134 = vst [vmem:[%s3110] ss:$4 sm:$0xff] %v2983
    %3135 = vst [vmem:[%s3112] ss:$4 sm:$0xff] %v2984
    %3136 = vst [vmem:[%s3114] ss:$4 sm:$0xff] %v2934
    %3137 = vst [vmem:[%s3116] ss:$4 sm:$0xff] %v2985
    %v3138 = vld.sshfl [vmem:[#allocation1 + $0x20] sm:$0xff pattern:$0x73625140]
    %v3139 = vrot.slane %v3109, 1
    %v3140 = vrot.slane %v3118, 1
    %v3141 = vrot.slane %v3123, 1
    %v3142 = vrot.slane %v3128, 1
    %v3143 = vrot.slane %v3133, 1
    %v3144 = vrot.slane %v3138, 1
    %3145 = vst [vmem:[#allocation1] ss:$4 sm:$0xff] %v2965
    %s3146 = scalar_lea.vmem [#allocation1], 1
    %3147 = vst [vmem:[%s3146] ss:$4 sm:$0xff] %v2966
    %s3148 = scalar_lea.vmem [#allocation1], 2
    %3149 = vst [vmem:[%s3148] ss:$4 sm:$0xff] %v2916
    %v3150 = vld.sshfl [vmem:[#allocation1] sm:$0xff pattern:$0x73625140]
    %s3151 = scalar_lea.vmem [#allocation1], 32
    %3152 = vst [vmem:[%s3151] ss:$4 sm:$0xff] %v2969
    %s3153 = scalar_lea.vmem [#allocation1], 33
    %3154 = vst [vmem:[%s3153] ss:$4 sm:$0xff] %v2919
    %s3155 = scalar_lea.vmem [#allocation1], 34
    %3156 = vst [vmem:[%s3155] ss:$4 sm:$0xff] %v2970
    %v3157 = vld.sshfl [vmem:[#allocation1 + $0x20] sm:$0xff pattern:$0x73625140]
    %3158 = vst [vmem:[#allocation1] ss:$4 sm:$0xff] %v2922
    %3159 = vst [vmem:[%s3146] ss:$4 sm:$0xff] %v2973
    %3160 = vst [vmem:[%s3148] ss:$4 sm:$0xff] %v2974
    %v3161 = vld.sshfl [vmem:[#allocation1] sm:$0xff pattern:$0x73625140]
    %3162 = vst [vmem:[%s3151] ss:$4 sm:$0xff] %v2976
    %3163 = vst [vmem:[%s3153] ss:$4 sm:$0xff] %v2977
    %3164 = vst [vmem:[%s3155] ss:$4 sm:$0xff] %v2978
    %v3165 = vld.sshfl [vmem:[#allocation1 + $0x20] sm:$0xff pattern:$0x73625140]
    %3166 = vst [vmem:[#allocation1] ss:$4 sm:$0xff] %v2980
    %3167 = vst [vmem:[%s3146] ss:$4 sm:$0xff] %v2981
    %3168 = vst [vmem:[%s3148] ss:$4 sm:$0xff] %v2931
    %v3169 = vld.sshfl [vmem:[#allocation1] sm:$0xff pattern:$0x73625140]
    %3170 = vst [vmem:[%s3151] ss:$4 sm:$0xff] %v2984
    %3171 = vst [vmem:[%s3153] ss:$4 sm:$0xff] %v2934
    %3172 = vst [vmem:[%s3155] ss:$4 sm:$0xff] %v2985
    %v3173 = vld.sshfl [vmem:[#allocation1 + $0x20] sm:$0xff pattern:$0x73625140]
    %v3174 = vrot.slane %v3067, 6
    %v3175 = vrot.slane %v3078, 4
    %v3176 = vrot.slane %v3139, 2
    %v3177 = vrot.slane %v3068, 6
    %v3178 = vrot.slane %v3085, 4
    %v3179 = vrot.slane %v3140, 2
    %v3180 = vrot.slane %v3069, 6
    %v3181 = vrot.slane %v3089, 4
    %v3182 = vrot.slane %v3141, 2
    %v3183 = vrot.slane %v3070, 6
    %v3184 = vrot.slane %v3093, 4
    %v3185 = vrot.slane %v3142, 2
    %v3186 = vrot.slane %v3071, 6
    %v3187 = vrot.slane %v3097, 4
    %v3188 = vrot.slane %v3143, 2
    %v3189 = vrot.slane %v3072, 6
    %v3190 = vrot.slane %v3101, 4
    %v3191 = vrot.slane %v3144, 2
    %vm3192 = vcmask 1041408
    %v3193 = vsel %vm3192, %v3006, %v3174
    %vm3194 = vcmask 1045508
    %v3195 = vsel %vm3194, %v3175, %v3176
    %vm3196 = vcmask 1043456
    %v3197 = vsel %vm3196, %v3193, %v3195
    %vm3198 = vcmask 1043458
    %v3199 = vsel %vm3198, %v3006, %v3174
    %vm3200 = vcmask 1045504
    %v3201 = vsel %vm3200, %v3176, %v3175
    %vm3202 = vcmask 1045506
    %v3203 = vsel %vm3202, %v3199, %v3201
    %v3204 = vrot.slane %v3203, 2
    %v3205 = vrot.slane %v3150, 2
    %v3206 = vsel %vm3194, %v3006, %v3174
    %v3207 = vsel %vm3192, %v3175, %v3176
    %v3208 = vsel %vm3196, %v3207, %v3206
    %v3209 = vrot.slane %v3208, 4
    %v3210 = vrot.slane %v3150, 4
    %v3211 = vsel %vm3192, %v3013, %v3177
    %v3212 = vsel %vm3194, %v3178, %v3179
    %v3213 = vsel %vm3196, %v3211, %v3212
    %v3214 = vsel %vm3198, %v3013, %v3177
    %v3215 = vsel %vm3200, %v3179, %v3178
    %v3216 = vsel %vm3202, %v3214, %v3215
    %v3217 = vrot.slane %v3216, 2
    %v3218 = vrot.slane %v3157, 2
    %v3219 = vsel %vm3194, %v3013, %v3177
    %v3220 = vsel %vm3192, %v3178, %v3179
    %v3221 = vsel %vm3196, %v3220, %v3219
    %v3222 = vrot.slane %v3221, 4
    %v3223 = vrot.slane %v3157, 4
    %v3224 = vsel %vm3192, %v3017, %v3180
    %v3225 = vsel %vm3194, %v3181, %v3182
    %v3226 = vsel %vm3196, %v3224, %v3225
    %v3227 = vsel %vm3198, %v3017, %v3180
    %v3228 = vsel %vm3200, %v3182, %v3181
    %v3229 = vsel %vm3202, %v3227, %v3228
    %v3230 = vrot.slane %v3229, 2
    %v3231 = vrot.slane %v3161, 2
    %v3232 = vsel %vm3194, %v3017, %v3180
    %v3233 = vsel %vm3192, %v3181, %v3182
    %v3234 = vsel %vm3196, %v3233, %v3232
    %v3235 = vrot.slane %v3234, 4
    %v3236 = vrot.slane %v3161, 4
    %v3237 = vsel %vm3192, %v3021, %v3183
    %v3238 = vsel %vm3194, %v3184, %v3185
    %v3239 = vsel %vm3196, %v3237, %v3238
    %v3240 = vsel %vm3198, %v3021, %v3183
    %v3241 = vsel %vm3200, %v3185, %v3184
    %v3242 = vsel %vm3202, %v3240, %v3241
    %v3243 = vrot.slane %v3242, 2
    %v3244 = vrot.slane %v3165, 2
    %v3245 = vsel %vm3194, %v3021, %v3183
    %v3246 = vsel %vm3192, %v3184, %v3185
    %v3247 = vsel %vm3196, %v3246, %v3245
    %v3248 = vrot.slane %v3247, 4
    %v3249 = vrot.slane %v3165, 4
    %v3250 = vsel %vm3192, %v3025, %v3186
    %v3251 = vsel %vm3194, %v3187, %v3188
    %v3252 = vsel %vm3196, %v3250, %v3251
    %v3253 = vsel %vm3198, %v3025, %v3186
    %v3254 = vsel %vm3200, %v3188, %v3187
    %v3255 = vsel %vm3202, %v3253, %v3254
    %v3256 = vrot.slane %v3255, 2
    %v3257 = vrot.slane %v3169, 2
    %v3258 = vsel %vm3194, %v3025, %v3186
    %v3259 = vsel %vm3192, %v3187, %v3188
    %v3260 = vsel %vm3196, %v3259, %v3258
    %v3261 = vrot.slane %v3260, 4
    %v3262 = vrot.slane %v3169, 4
    %v3263 = vsel %vm3192, %v3029, %v3189
    %v3264 = vsel %vm3194, %v3190, %v3191
    %v3265 = vsel %vm3196, %v3263, %v3264
    %v3266 = vsel %vm3198, %v3029, %v3189
    %v3267 = vsel %vm3200, %v3191, %v3190
    %v3268 = vsel %vm3202, %v3266, %v3267
    %v3269 = vrot.slane %v3268, 2
    %v3270 = vrot.slane %v3173, 2
    %v3271 = vsel %vm3194, %v3029, %v3189
    %v3272 = vsel %vm3192, %v3190, %v3191
    %v3273 = vsel %vm3196, %v3272, %v3271
    %v3274 = vrot.slane %v3273, 4
    %v3275 = vrot.slane %v3173, 4
    %v3276 = vld [vmem:[%s2] sm:$0xff]
    %v3277 = vld [vmem:[%s2 + $0x8] sm:$0xff]
    %v3278 = vld [vmem:[%s2 + $0x10] sm:$0xff]
    %v3279 = vld [vmem:[%s2 + $0x18] sm:$0xff]
    %v3280 = vld [vmem:[%s2 + $0x20] sm:$0xff]
    %v3281 = vld [vmem:[%s2 + $0x28] sm:$0xff]
    %v3282 = vld [vmem:[%s2 + $0x30] sm:$0xff]
    %v3283 = vld [vmem:[%s2 + $0x38] sm:$0xff]
    %v3284 = vld [vmem:[%s2 + $0x40] sm:$0xff]
    %v3285 = vld [vmem:[%s2 + $0x48] sm:$0xff]
    %v3286 = vld [vmem:[%s2 + $0x50] sm:$0xff]
    %v3287 = vld [vmem:[%s2 + $0x58] sm:$0xff]
    %v3288 = vld [vmem:[%s2 + $0x60] sm:$0xff]
    %v3289 = vld [vmem:[%s2 + $0x68] sm:$0xff]
    %v3290 = vld [vmem:[%s2 + $0x70] sm:$0xff]
    %v3291 = vld [vmem:[%s2 + $0x78] sm:$0xff]
    %v3292 = vld [vmem:[%s2 + $0x80] sm:$0xff]
    %v3293 = vld [vmem:[%s2 + $0x88] sm:$0xff]
    %v3294 = vld [vmem:[%s2 + $0x90] sm:$0xff]
    %v3295 = vld [vmem:[%s2 + $0x98] sm:$0xff]
    %v3296 = vld [vmem:[%s2 + $0xa0] sm:$0xff]
    %v3297 = vld [vmem:[%s2 + $0xa8] sm:$0xff]
    %v3298 = vld [vmem:[%s2 + $0xb0] sm:$0xff]
    %v3299 = vld [vmem:[%s2 + $0xb8] sm:$0xff]
    %v3300 = vld [vmem:[%s2 + $0xc0] sm:$0xff]
    %v3301 = vld [vmem:[%s2 + $0xc8] sm:$0xff]
    %v3302 = vld [vmem:[%s2 + $0xd0] sm:$0xff]
    %v3303 = vld [vmem:[%s2 + $0xd8] sm:$0xff]
    %v3304 = vld [vmem:[%s2 + $0xe0] sm:$0xff]
    %v3305 = vld [vmem:[%s2 + $0xe8] sm:$0xff]
    %v3306 = vld [vmem:[%s2 + $0xf0] sm:$0xff]
    %v3307 = vld [vmem:[%s2 + $0xf8] sm:$0xff]
    %v3308 = vld [vmem:[%s2 + $0x100] sm:$0xff]
    %v3309 = vld [vmem:[%s2 + $0x108] sm:$0xff]
    %v3310 = vld [vmem:[%s2 + $0x110] sm:$0xff]
    %v3311 = vld [vmem:[%s2 + $0x118] sm:$0xff]
    %v3312 = vld [vmem:[%s2 + $0x120] sm:$0xff]
    %v3313 = vld [vmem:[%s2 + $0x128] sm:$0xff]
    %v3314 = vld [vmem:[%s2 + $0x130] sm:$0xff]
    %v3315 = vld [vmem:[%s2 + $0x138] sm:$0xff]
    %v3316 = vld [vmem:[%s2 + $0x140] sm:$0xff]
    %v3317 = vld [vmem:[%s2 + $0x148] sm:$0xff]
    %v3318 = vld [vmem:[%s2 + $0x150] sm:$0xff]
    %v3319 = vld [vmem:[%s2 + $0x158] sm:$0xff]
    %v3320 = vld [vmem:[%s2 + $0x160] sm:$0xff]
    %v3321 = vld [vmem:[%s2 + $0x168] sm:$0xff]
    %v3322 = vld [vmem:[%s2 + $0x170] sm:$0xff]
    %v3323 = vld [vmem:[%s2 + $0x178] sm:$0xff]
    %v3324 = vld [vmem:[%s2 + $0x180] sm:$0xff]
    %v3325 = vld [vmem:[%s2 + $0x188] sm:$0xff]
    %v3326 = vld [vmem:[%s2 + $0x190] sm:$0xff]
    %v3327 = vld [vmem:[%s2 + $0x198] sm:$0xff]
    %v3328 = vld [vmem:[%s2 + $0x1a0] sm:$0xff]
    %v3329 = vld [vmem:[%s2 + $0x1a8] sm:$0xff]
    %v3330 = vld [vmem:[%s2 + $0x1b0] sm:$0xff]
    %v3331 = vld [vmem:[%s2 + $0x1b8] sm:$0xff]
    %v3332 = vld [vmem:[%s2 + $0x1c0] sm:$0xff]
    %v3333 = vld [vmem:[%s2 + $0x1c8] sm:$0xff]
    %v3334 = vld [vmem:[%s2 + $0x1d0] sm:$0xff]
    %v3335 = vld [vmem:[%s2 + $0x1d8] sm:$0xff]
    %v3336 = vld [vmem:[%s2 + $0x1e0] sm:$0xff]
    %v3337 = vld [vmem:[%s2 + $0x1e8] sm:$0xff]
    %v3338 = vld [vmem:[%s2 + $0x1f0] sm:$0xff]
    %v3339 = vld [vmem:[%s2 + $0x1f8] sm:$0xff]
    %v3340 = vld [vmem:[%s2 + $0x200] sm:$0xff]
    %v3341 = vld [vmem:[%s2 + $0x208] sm:$0xff]
    %v3342 = vld [vmem:[%s2 + $0x210] sm:$0xff]
    %v3343 = vld [vmem:[%s2 + $0x218] sm:$0xff]
    %v3344 = vld [vmem:[%s2 + $0x220] sm:$0xff]
    %v3345 = vld [vmem:[%s2 + $0x228] sm:$0xff]
    %v3346 = vld [vmem:[%s2 + $0x230] sm:$0xff]
    %v3347 = vld [vmem:[%s2 + $0x238] sm:$0xff]
    %v3348 = vld [vmem:[%s2 + $0x240] sm:$0xff]
    %v3349 = vld [vmem:[%s2 + $0x248] sm:$0xff]
    %v3350 = vld [vmem:[%s2 + $0x250] sm:$0xff]
    %v3351 = vld [vmem:[%s2 + $0x258] sm:$0xff]
    %v3352 = vld [vmem:[%s2 + $0x260] sm:$0xff]
    %v3353 = vld [vmem:[%s2 + $0x268] sm:$0xff]
    %v3354 = vld [vmem:[%s2 + $0x270] sm:$0xff]
    %v3355 = vld [vmem:[%s2 + $0x278] sm:$0xff]
    %3356 = vst [vmem:[#allocation1] ss:$4 sm:$0xff] %v2967
    %s3357 = scalar_lea.vmem [#allocation1], 1
    %3358 = vst [vmem:[%s3357] ss:$4 sm:$0xff] %v2968
    %s3359 = scalar_lea.vmem [#allocation1], 2
    %3360 = vst [vmem:[%s3359] ss:$4 sm:$0xff] %v2969
    %v3361 = vld.sshfl [vmem:[#allocation1] sm:$0xff pattern:$0x73625140]
    %s3362 = scalar_lea.vmem [#allocation1], 32
    %3363 = vst [vmem:[%s3362] ss:$4 sm:$0xff] %v2971
    %s3364 = scalar_lea.vmem [#allocation1], 33
    %3365 = vst [vmem:[%s3364] ss:$4 sm:$0xff] %v2972
    %s3366 = scalar_lea.vmem [#allocation1], 34
    %3367 = vst [vmem:[%s3366] ss:$4 sm:$0xff] %v2922
    %v3368 = vld.sshfl [vmem:[#allocation1 + $0x20] sm:$0xff pattern:$0x73625140]
    %3369 = vst [vmem:[#allocation1] ss:$4 sm:$0xff] %v2975
    %3370 = vst [vmem:[%s3357] ss:$4 sm:$0xff] %v2925
    %3371 = vst [vmem:[%s3359] ss:$4 sm:$0xff] %v2976
    %v3372 = vld.sshfl [vmem:[#allocation1] sm:$0xff pattern:$0x73625140]
    %3373 = vst [vmem:[%s3362] ss:$4 sm:$0xff] %v2928
    %3374 = vst [vmem:[%s3364] ss:$4 sm:$0xff] %v2979
    %3375 = vst [vmem:[%s3366] ss:$4 sm:$0xff] %v2980
    %v3376 = vld.sshfl [vmem:[#allocation1 + $0x20] sm:$0xff pattern:$0x73625140]
    %3377 = vst [vmem:[#allocation1] ss:$4 sm:$0xff] %v2982
    %3378 = vst [vmem:[%s3357] ss:$4 sm:$0xff] %v2983
    %3379 = vst [vmem:[%s3359] ss:$4 sm:$0xff] %v2984
    %v3380 = vld.sshfl [vmem:[#allocation1] sm:$0xff pattern:$0x73625140]
    %3381 = vst [vmem:[%s3362] ss:$4 sm:$0xff] %v2986
    %3382 = vst [vmem:[%s3364] ss:$4 sm:$0xff] %v2987
    %3383 = vst [vmem:[%s3366] ss:$4 sm:$0xff] %v2937
    %v3384 = vld.sshfl [vmem:[#allocation1 + $0x20] sm:$0xff pattern:$0x73625140]
    %3385 = vst [vmem:[#allocation1] ss:$4 sm:$0xff] %v2967
    %s3386 = scalar_lea.vmem [#allocation1], 1
    %3387 = vst [vmem:[%s3386] ss:$4 sm:$0xff] %v2968
    %s3388 = scalar_lea.vmem [#allocation1], 2
    %3389 = vst [vmem:[%s3388] ss:$4 sm:$0xff] %v2969
    %s3390 = scalar_lea.vmem [#allocation1], 3
    %3391 = vst [vmem:[%s3390] ss:$4 sm:$0xff] %v2919
    %v3392 = vld.sshfl [vmem:[#allocation1] sm:$0xff pattern:$0x73625140]
    %s3393 = scalar_lea.vmem [#allocation1], 32
    %3394 = vst [vmem:[%s3393] ss:$4 sm:$0xff] %v2971
    %s3395 = scalar_lea.vmem [#allocation1], 33
    %3396 = vst [vmem:[%s3395] ss:$4 sm:$0xff] %v2972
    %s3397 = scalar_lea.vmem [#allocation1], 34
    %3398 = vst [vmem:[%s3397] ss:$4 sm:$0xff] %v2922
    %s3399 = scalar_lea.vmem [#allocation1], 35
    %3400 = vst [vmem:[%s3399] ss:$4 sm:$0xff] %v2973
    %v3401 = vld.sshfl [vmem:[#allocation1 + $0x20] sm:$0xff pattern:$0x73625140]
    %3402 = vst [vmem:[#allocation1] ss:$4 sm:$0xff] %v2975
    %3403 = vst [vmem:[%s3386] ss:$4 sm:$0xff] %v2925
    %3404 = vst [vmem:[%s3388] ss:$4 sm:$0xff] %v2976
    %3405 = vst [vmem:[%s3390] ss:$4 sm:$0xff] %v2977
    %v3406 = vld.sshfl [vmem:[#allocation1] sm:$0xff pattern:$0x73625140]
    %3407 = vst [vmem:[%s3393] ss:$4 sm:$0xff] %v2928
    %3408 = vst [vmem:[%s3395] ss:$4 sm:$0xff] %v2979
    %3409 = vst [vmem:[%s3397] ss:$4 sm:$0xff] %v2980
    %3410 = vst [vmem:[%s3399] ss:$4 sm:$0xff] %v2981
    %v3411 = vld.sshfl [vmem:[#allocation1 + $0x20] sm:$0xff pattern:$0x73625140]
    %3412 = vst [vmem:[#allocation1] ss:$4 sm:$0xff] %v2982
    %3413 = vst [vmem:[%s3386] ss:$4 sm:$0xff] %v2983
    %3414 = vst [vmem:[%s3388] ss:$4 sm:$0xff] %v2984
    %3415 = vst [vmem:[%s3390] ss:$4 sm:$0xff] %v2934
    %v3416 = vld.sshfl [vmem:[#allocation1] sm:$0xff pattern:$0x73625140]
    %3417 = vst [vmem:[%s3393] ss:$4 sm:$0xff] %v2986
    %3418 = vst [vmem:[%s3395] ss:$4 sm:$0xff] %v2987
    %3419 = vst [vmem:[%s3397] ss:$4 sm:$0xff] %v2937
    %3420 = vst [vmem:[%s3399] ss:$4 sm:$0xff] %v2988
    %v3421 = vld.sshfl [vmem:[#allocation1 + $0x20] sm:$0xff pattern:$0x73625140]
    %v3422 = vrot.slane %v3392, 1
    %v3423 = vrot.slane %v3401, 1
    %v3424 = vrot.slane %v3406, 1
    %v3425 = vrot.slane %v3411, 1
    %v3426 = vrot.slane %v3416, 1
    %v3427 = vrot.slane %v3421, 1
    %3428 = vst [vmem:[#allocation1] ss:$4 sm:$0xff] %v2968
    %s3429 = scalar_lea.vmem [#allocation1], 1
    %3430 = vst [vmem:[%s3429] ss:$4 sm:$0xff] %v2969
    %s3431 = scalar_lea.vmem [#allocation1], 2
    %3432 = vst [vmem:[%s3431] ss:$4 sm:$0xff] %v2919
    %v3433 = vld.sshfl [vmem:[#allocation1] sm:$0xff pattern:$0x73625140]
    %s3434 = scalar_lea.vmem [#allocation1], 32
    %3435 = vst [vmem:[%s3434] ss:$4 sm:$0xff] %v2972
    %s3436 = scalar_lea.vmem [#allocation1], 33
    %3437 = vst [vmem:[%s3436] ss:$4 sm:$0xff] %v2922
    %s3438 = scalar_lea.vmem [#allocation1], 34
    %3439 = vst [vmem:[%s3438] ss:$4 sm:$0xff] %v2973
    %v3440 = vld.sshfl [vmem:[#allocation1 + $0x20] sm:$0xff pattern:$0x73625140]
    %3441 = vst [vmem:[#allocation1] ss:$4 sm:$0xff] %v2925
    %3442 = vst [vmem:[%s3429] ss:$4 sm:$0xff] %v2976
    %3443 = vst [vmem:[%s3431] ss:$4 sm:$0xff] %v2977
    %v3444 = vld.sshfl [vmem:[#allocation1] sm:$0xff pattern:$0x73625140]
    %3445 = vst [vmem:[%s3434] ss:$4 sm:$0xff] %v2979
    %3446 = vst [vmem:[%s3436] ss:$4 sm:$0xff] %v2980
    %3447 = vst [vmem:[%s3438] ss:$4 sm:$0xff] %v2981
    %v3448 = vld.sshfl [vmem:[#allocation1 + $0x20] sm:$0xff pattern:$0x73625140]
    %3449 = vst [vmem:[#allocation1] ss:$4 sm:$0xff] %v2983
    %3450 = vst [vmem:[%s3429] ss:$4 sm:$0xff] %v2984
    %3451 = vst [vmem:[%s3431] ss:$4 sm:$0xff] %v2934
    %v3452 = vld.sshfl [vmem:[#allocation1] sm:$0xff pattern:$0x73625140]
    %3453 = vst [vmem:[%s3434] ss:$4 sm:$0xff] %v2987
    %3454 = vst [vmem:[%s3436] ss:$4 sm:$0xff] %v2937
    %3455 = vst [vmem:[%s3438] ss:$4 sm:$0xff] %v2988
    %v3456 = vld.sshfl [vmem:[#allocation1 + $0x20] sm:$0xff pattern:$0x73625140]
    %3457 = vst [vmem:[#allocation1] ss:$4 sm:$0xff] %v2968
    %s3458 = scalar_lea.vmem [#allocation1], 1
    %3459 = vst [vmem:[%s3458] ss:$4 sm:$0xff] %v2969
    %s3460 = scalar_lea.vmem [#allocation1], 2
    %3461 = vst [vmem:[%s3460] ss:$4 sm:$0xff] %v2919
    %s3462 = scalar_lea.vmem [#allocation1], 3
    %3463 = vst [vmem:[%s3462] ss:$4 sm:$0xff] %v2970
    %v3464 = vld.sshfl [vmem:[#allocation1] sm:$0xff pattern:$0x73625140]
    %s3465 = scalar_lea.vmem [#allocation1], 32
    %3466 = vst [vmem:[%s3465] ss:$4 sm:$0xff] %v2972
    %s3467 = scalar_lea.vmem [#allocation1], 33
    %3468 = vst [vmem:[%s3467] ss:$4 sm:$0xff] %v2922
    %s3469 = scalar_lea.vmem [#allocation1], 34
    %3470 = vst [vmem:[%s3469] ss:$4 sm:$0xff] %v2973
    %s3471 = scalar_lea.vmem [#allocation1], 35
    %3472 = vst [vmem:[%s3471] ss:$4 sm:$0xff] %v2974
    %v3473 = vld.sshfl [vmem:[#allocation1 + $0x20] sm:$0xff pattern:$0x73625140]
    %3474 = vst [vmem:[#allocation1] ss:$4 sm:$0xff] %v2925
    %3475 = vst [vmem:[%s3458] ss:$4 sm:$0xff] %v2976
    %3476 = vst [vmem:[%s3460] ss:$4 sm:$0xff] %v2977
    %3477 = vst [vmem:[%s3462] ss:$4 sm:$0xff] %v2978
    %v3478 = vld.sshfl [vmem:[#allocation1] sm:$0xff pattern:$0x73625140]
    %3479 = vst [vmem:[%s3465] ss:$4 sm:$0xff] %v2979
    %3480 = vst [vmem:[%s3467] ss:$4 sm:$0xff] %v2980
    %3481 = vst [vmem:[%s3469] ss:$4 sm:$0xff] %v2981
    %3482 = vst [vmem:[%s3471] ss:$4 sm:$0xff] %v2931
    %v3483 = vld.sshfl [vmem:[#allocation1 + $0x20] sm:$0xff pattern:$0x73625140]
    %3484 = vst [vmem:[#allocation1] ss:$4 sm:$0xff] %v2983
    %3485 = vst [vmem:[%s3458] ss:$4 sm:$0xff] %v2984
    %3486 = vst [vmem:[%s3460] ss:$4 sm:$0xff] %v2934
    %3487 = vst [vmem:[%s3462] ss:$4 sm:$0xff] %v2985
    %v3488 = vld.sshfl [vmem:[#allocation1] sm:$0xff pattern:$0x73625140]
    %3489 = vst [vmem:[%s3465] ss:$4 sm:$0xff] %v2987
    %3490 = vst [vmem:[%s3467] ss:$4 sm:$0xff] %v2937
    %3491 = vst [vmem:[%s3469] ss:$4 sm:$0xff] %v2988
    %3492 = vst [vmem:[%s3471] ss:$4 sm:$0xff] %v2989
    %v3493 = vld.sshfl [vmem:[#allocation1 + $0x20] sm:$0xff pattern:$0x73625140]
    %v3494 = vrot.slane %v3464, 1
    %v3495 = vrot.slane %v3473, 1
    %v3496 = vrot.slane %v3478, 1
    %v3497 = vrot.slane %v3483, 1
    %v3498 = vrot.slane %v3488, 1
    %v3499 = vrot.slane %v3493, 1
    %3500 = vst [vmem:[#allocation1] ss:$4 sm:$0xff] %v2969
    %s3501 = scalar_lea.vmem [#allocation1], 1
    %3502 = vst [vmem:[%s3501] ss:$4 sm:$0xff] %v2919
    %s3503 = scalar_lea.vmem [#allocation1], 2
    %3504 = vst [vmem:[%s3503] ss:$4 sm:$0xff] %v2970
    %v3505 = vld.sshfl [vmem:[#allocation1] sm:$0xff pattern:$0x73625140]
    %s3506 = scalar_lea.vmem [#allocation1], 32
    %3507 = vst [vmem:[%s3506] ss:$4 sm:$0xff] %v2922
    %s3508 = scalar_lea.vmem [#allocation1], 33
    %3509 = vst [vmem:[%s3508] ss:$4 sm:$0xff] %v2973
    %s3510 = scalar_lea.vmem [#allocation1], 34
    %3511 = vst [vmem:[%s3510] ss:$4 sm:$0xff] %v2974
    %v3512 = vld.sshfl [vmem:[#allocation1 + $0x20] sm:$0xff pattern:$0x73625140]
    %3513 = vst [vmem:[#allocation1] ss:$4 sm:$0xff] %v2976
    %3514 = vst [vmem:[%s3501] ss:$4 sm:$0xff] %v2977
    %3515 = vst [vmem:[%s3503] ss:$4 sm:$0xff] %v2978
    %v3516 = vld.sshfl [vmem:[#allocation1] sm:$0xff pattern:$0x73625140]
    %3517 = vst [vmem:[%s3506] ss:$4 sm:$0xff] %v2980
    %3518 = vst [vmem:[%s3508] ss:$4 sm:$0xff] %v2981
    %3519 = vst [vmem:[%s3510] ss:$4 sm:$0xff] %v2931
    %v3520 = vld.sshfl [vmem:[#allocation1 + $0x20] sm:$0xff pattern:$0x73625140]
    %3521 = vst [vmem:[#allocation1] ss:$4 sm:$0xff] %v2984
    %3522 = vst [vmem:[%s3501] ss:$4 sm:$0xff] %v2934
    %3523 = vst [vmem:[%s3503] ss:$4 sm:$0xff] %v2985
    %v3524 = vld.sshfl [vmem:[#allocation1] sm:$0xff pattern:$0x73625140]
    %3525 = vst [vmem:[%s3506] ss:$4 sm:$0xff] %v2937
    %3526 = vst [vmem:[%s3508] ss:$4 sm:$0xff] %v2988
    %3527 = vst [vmem:[%s3510] ss:$4 sm:$0xff] %v2989
    %v3528 = vld.sshfl [vmem:[#allocation1 + $0x20] sm:$0xff pattern:$0x73625140]
    %v3529 = vrot.slane %v3422, 6
    %v3530 = vrot.slane %v3433, 4
    %v3531 = vrot.slane %v3494, 2
    %v3532 = vrot.slane %v3423, 6
    %v3533 = vrot.slane %v3440, 4
    %v3534 = vrot.slane %v3495, 2
    %v3535 = vrot.slane %v3424, 6
    %v3536 = vrot.slane %v3444, 4
    %v3537 = vrot.slane %v3496, 2
    %v3538 = vrot.slane %v3425, 6
    %v3539 = vrot.slane %v3448, 4
    %v3540 = vrot.slane %v3497, 2
    %v3541 = vrot.slane %v3426, 6
    %v3542 = vrot.slane %v3452, 4
    %v3543 = vrot.slane %v3498, 2
    %v3544 = vrot.slane %v3427, 6
    %v3545 = vrot.slane %v3456, 4
    %v3546 = vrot.slane %v3499, 2
    %v3547 = vsel %vm3192, %v3361, %v3529
    %v3548 = vsel %vm3194, %v3530, %v3531
    %v3549 = vsel %vm3196, %v3547, %v3548
    %v3550 = vsel %vm3198, %v3361, %v3529
    %v3551 = vsel %vm3200, %v3531, %v3530
    %v3552 = vsel %vm3202, %v3550, %v3551
    %v3553 = vrot.slane %v3552, 2
    %v3554 = vrot.slane %v3505, 2
    %v3555 = vsel %vm3194, %v3361, %v3529
    %v3556 = vsel %vm3192, %v3530, %v3531
    %v3557 = vsel %vm3196, %v3556, %v3555
    %v3558 = vrot.slane %v3557, 4
    %v3559 = vrot.slane %v3505, 4
    %v3560 = vsel %vm3192, %v3368, %v3532
    %v3561 = vsel %vm3194, %v3533, %v3534
    %v3562 = vsel %vm3196, %v3560, %v3561
    %v3563 = vsel %vm3198, %v3368, %v3532
    %v3564 = vsel %vm3200, %v3534, %v3533
    %v3565 = vsel %vm3202, %v3563, %v3564
    %v3566 = vrot.slane %v3565, 2
    %v3567 = vrot.slane %v3512, 2
    %v3568 = vsel %vm3194, %v3368, %v3532
    %v3569 = vsel %vm3192, %v3533, %v3534
    %v3570 = vsel %vm3196, %v3569, %v3568
    %v3571 = vrot.slane %v3570, 4
    %v3572 = vrot.slane %v3512, 4
    %v3573 = vsel %vm3192, %v3372, %v3535
    %v3574 = vsel %vm3194, %v3536, %v3537
    %v3575 = vsel %vm3196, %v3573, %v3574
    %v3576 = vsel %vm3198, %v3372, %v3535
    %v3577 = vsel %vm3200, %v3537, %v3536
    %v3578 = vsel %vm3202, %v3576, %v3577
    %v3579 = vrot.slane %v3578, 2
    %v3580 = vrot.slane %v3516, 2
    %v3581 = vsel %vm3194, %v3372, %v3535
    %v3582 = vsel %vm3192, %v3536, %v3537
    %v3583 = vsel %vm3196, %v3582, %v3581
    %v3584 = vrot.slane %v3583, 4
    %v3585 = vrot.slane %v3516, 4
    %v3586 = vsel %vm3192, %v3376, %v3538
    %v3587 = vsel %vm3194, %v3539, %v3540
    %v3588 = vsel %vm3196, %v3586, %v3587
    %v3589 = vsel %vm3198, %v3376, %v3538
    %v3590 = vsel %vm3200, %v3540, %v3539
    %v3591 = vsel %vm3202, %v3589, %v3590
    %v3592 = vrot.slane %v3591, 2
    %v3593 = vrot.slane %v3520, 2
    %v3594 = vsel %vm3194, %v3376, %v3538
    %v3595 = vsel %vm3192, %v3539, %v3540
    %v3596 = vsel %vm3196, %v3595, %v3594
    %v3597 = vrot.slane %v3596, 4
    %v3598 = vrot.slane %v3520, 4
    %v3599 = vsel %vm3192, %v3380, %v3541
    %v3600 = vsel %vm3194, %v3542, %v3543
    %v3601 = vsel %vm3196, %v3599, %v3600
    %v3602 = vsel %vm3198, %v3380, %v3541
    %v3603 = vsel %vm3200, %v3543, %v3542
    %v3604 = vsel %vm3202, %v3602, %v3603
    %v3605 = vrot.slane %v3604, 2
    %v3606 = vrot.slane %v3524, 2
    %v3607 = vsel %vm3194, %v3380, %v3541
    %v3608 = vsel %vm3192, %v3542, %v3543
    %v3609 = vsel %vm3196, %v3608, %v3607
    %v3610 = vrot.slane %v3609, 4
    %v3611 = vrot.slane %v3524, 4
    %v3612 = vsel %vm3192, %v3384, %v3544
    %v3613 = vsel %vm3194, %v3545, %v3546
    %v3614 = vsel %vm3196, %v3612, %v3613
    %v3615 = vsel %vm3198, %v3384, %v3544
    %v3616 = vsel %vm3200, %v3546, %v3545
    %v3617 = vsel %vm3202, %v3615, %v3616
    %v3618 = vrot.slane %v3617, 2
    %v3619 = vrot.slane %v3528, 2
    %v3620 = vsel %vm3194, %v3384, %v3544
    %v3621 = vsel %vm3192, %v3545, %v3546
    %v3622 = vsel %vm3196, %v3621, %v3620
    %v3623 = vrot.slane %v3622, 4
    %v3624 = vrot.slane %v3528, 4
    %s3625 = scalar_lea.vmem %s2, 640
    %v3626 = vld [vmem:[%s3625] sm:$0xff]
    %v3627 = vld [vmem:[%s3625 + $0x8] sm:$0xff]
    %v3628 = vld [vmem:[%s3625 + $0x10] sm:$0xff]
    %v3629 = vld [vmem:[%s3625 + $0x18] sm:$0xff]
    %v3630 = vld [vmem:[%s3625 + $0x20] sm:$0xff]
    %v3631 = vld [vmem:[%s3625 + $0x28] sm:$0xff]
    %v3632 = vld [vmem:[%s3625 + $0x30] sm:$0xff]
    %v3633 = vld [vmem:[%s3625 + $0x38] sm:$0xff]
    %v3634 = vld [vmem:[%s3625 + $0x40] sm:$0xff]
    %v3635 = vld [vmem:[%s3625 + $0x48] sm:$0xff]
    %v3636 = vld [vmem:[%s3625 + $0x50] sm:$0xff]
    %v3637 = vld [vmem:[%s3625 + $0x58] sm:$0xff]
    %v3638 = vld [vmem:[%s3625 + $0x60] sm:$0xff]
    %v3639 = vld [vmem:[%s3625 + $0x68] sm:$0xff]
    %v3640 = vld [vmem:[%s3625 + $0x70] sm:$0xff]
    %v3641 = vld [vmem:[%s3625 + $0x78] sm:$0xff]
    %v3642 = vld [vmem:[%s3625 + $0x80] sm:$0xff]
    %v3643 = vld [vmem:[%s3625 + $0x88] sm:$0xff]
    %v3644 = vld [vmem:[%s3625 + $0x90] sm:$0xff]
    %v3645 = vld [vmem:[%s3625 + $0x98] sm:$0xff]
    %v3646 = vld [vmem:[%s3625 + $0xa0] sm:$0xff]
    %v3647 = vld [vmem:[%s3625 + $0xa8] sm:$0xff]
    %v3648 = vld [vmem:[%s3625 + $0xb0] sm:$0xff]
    %v3649 = vld [vmem:[%s3625 + $0xb8] sm:$0xff]
    %v3650 = vld [vmem:[%s3625 + $0xc0] sm:$0xff]
    %v3651 = vld [vmem:[%s3625 + $0xc8] sm:$0xff]
    %v3652 = vld [vmem:[%s3625 + $0xd0] sm:$0xff]
    %v3653 = vld [vmem:[%s3625 + $0xd8] sm:$0xff]
    %v3654 = vld [vmem:[%s3625 + $0xe0] sm:$0xff]
    %v3655 = vld [vmem:[%s3625 + $0xe8] sm:$0xff]
    %v3656 = vld [vmem:[%s3625 + $0xf0] sm:$0xff]
    %v3657 = vld [vmem:[%s3625 + $0xf8] sm:$0xff]
    %v3658 = vld [vmem:[%s3625 + $0x100] sm:$0xff]
    %v3659 = vld [vmem:[%s3625 + $0x108] sm:$0xff]
    %v3660 = vld [vmem:[%s3625 + $0x110] sm:$0xff]
    %v3661 = vld [vmem:[%s3625 + $0x118] sm:$0xff]
    %v3662 = vld [vmem:[%s3625 + $0x120] sm:$0xff]
    %v3663 = vld [vmem:[%s3625 + $0x128] sm:$0xff]
    %v3664 = vld [vmem:[%s3625 + $0x130] sm:$0xff]
    %v3665 = vld [vmem:[%s3625 + $0x138] sm:$0xff]
    %v3666 = vld [vmem:[%s3625 + $0x140] sm:$0xff]
    %v3667 = vld [vmem:[%s3625 + $0x148] sm:$0xff]
    %v3668 = vld [vmem:[%s3625 + $0x150] sm:$0xff]
    %v3669 = vld [vmem:[%s3625 + $0x158] sm:$0xff]
    %v3670 = vld [vmem:[%s3625 + $0x160] sm:$0xff]
    %v3671 = vld [vmem:[%s3625 + $0x168] sm:$0xff]
    %v3672 = vld [vmem:[%s3625 + $0x170] sm:$0xff]
    %v3673 = vld [vmem:[%s3625 + $0x178] sm:$0xff]
    %v3674 = vld [vmem:[%s3625 + $0x180] sm:$0xff]
    %v3675 = vld [vmem:[%s3625 + $0x188] sm:$0xff]
    %v3676 = vld [vmem:[%s3625 + $0x190] sm:$0xff]
    %v3677 = vld [vmem:[%s3625 + $0x198] sm:$0xff]
    %v3678 = vld [vmem:[%s3625 + $0x1a0] sm:$0xff]
    %v3679 = vld [vmem:[%s3625 + $0x1a8] sm:$0xff]
    %v3680 = vld [vmem:[%s3625 + $0x1b0] sm:$0xff]
    %v3681 = vld [vmem:[%s3625 + $0x1b8] sm:$0xff]
    %v3682 = vld [vmem:[%s3625 + $0x1c0] sm:$0xff]
    %v3683 = vld [vmem:[%s3625 + $0x1c8] sm:$0xff]
    %v3684 = vld [vmem:[%s3625 + $0x1d0] sm:$0xff]
    %v3685 = vld [vmem:[%s3625 + $0x1d8] sm:$0xff]
    %v3686 = vld [vmem:[%s3625 + $0x1e0] sm:$0xff]
    %v3687 = vld [vmem:[%s3625 + $0x1e8] sm:$0xff]
    %v3688 = vld [vmem:[%s3625 + $0x1f0] sm:$0xff]
    %v3689 = vld [vmem:[%s3625 + $0x1f8] sm:$0xff]
    %v3690 = vld [vmem:[%s3625 + $0x200] sm:$0xff]
    %v3691 = vld [vmem:[%s3625 + $0x208] sm:$0xff]
    %v3692 = vld [vmem:[%s3625 + $0x210] sm:$0xff]
    %v3693 = vld [vmem:[%s3625 + $0x218] sm:$0xff]
    %v3694 = vld [vmem:[%s3625 + $0x220] sm:$0xff]
    %v3695 = vld [vmem:[%s3625 + $0x228] sm:$0xff]
    %v3696 = vld [vmem:[%s3625 + $0x230] sm:$0xff]
    %v3697 = vld [vmem:[%s3625 + $0x238] sm:$0xff]
    %v3698 = vld [vmem:[%s3625 + $0x240] sm:$0xff]
    %v3699 = vld [vmem:[%s3625 + $0x248] sm:$0xff]
    %v3700 = vld [vmem:[%s3625 + $0x250] sm:$0xff]
    %v3701 = vld [vmem:[%s3625 + $0x258] sm:$0xff]
    %v3702 = vld [vmem:[%s3625 + $0x260] sm:$0xff]
    %v3703 = vld [vmem:[%s3625 + $0x268] sm:$0xff]
    %v3704 = vld [vmem:[%s3625 + $0x270] sm:$0xff]
    %v3705 = vld [vmem:[%s3625 + $0x278] sm:$0xff]
    %3706 = vst [vmem:[#allocation1] ss:$4 sm:$0xff] %v3549
    %s3707 = scalar_lea.vmem [#allocation1], 1
    %3708 = vst [vmem:[%s3707] ss:$4 sm:$0xff] %v3553
    %s3709 = scalar_lea.vmem [#allocation1], 2
    %3710 = vst [vmem:[%s3709] ss:$4 sm:$0xff] %v3558
    %s3711 = scalar_lea.vmem [#allocation1], 3
    %3712 = vst [vmem:[%s3711] ss:$4 sm:$0xff] %v3562
    %s3713 = scalar_lea.vmem [#allocation1], 32
    %3714 = vst [vmem:[%s3713] ss:$4 sm:$0xff] %v3505
    %s3715 = scalar_lea.vmem [#allocation1], 33
    %3716 = vst [vmem:[%s3715] ss:$4 sm:$0xff] %v3554
    %s3717 = scalar_lea.vmem [#allocation1], 34
    %3718 = vst [vmem:[%s3717] ss:$4 sm:$0xff] %v3559
    %s3719 = scalar_lea.vmem [#allocation1], 35
    %3720 = vst [vmem:[%s3719] ss:$4 sm:$0xff] %v3512
    %v3721 = vld.sshfl [vmem:[#allocation1] sm:$0xff pattern:$0x73625140]
    %v3722 = vld.sshfl [vmem:[#allocation1 + $0x8] sm:$0xff pattern:$0x73625140]
    %v3723 = vld.sshfl [vmem:[#allocation1 + $0x10] sm:$0xff pattern:$0x73625140]
    %v3724 = vld.sshfl [vmem:[#allocation1 + $0x18] sm:$0xff pattern:$0x73625140]
    %v3725 = vld.sshfl [vmem:[#allocation1 + $0x20] sm:$0xff pattern:$0x73625140]
    %3726 = vst [vmem:[#allocation1] ss:$4 sm:$0xff] %v3566
    %3727 = vst [vmem:[%s3707] ss:$4 sm:$0xff] %v3571
    %3728 = vst [vmem:[%s3709] ss:$4 sm:$0xff] %v3575
    %3729 = vst [vmem:[%s3711] ss:$4 sm:$0xff] %v3579
    %3730 = vst [vmem:[%s3713] ss:$4 sm:$0xff] %v3567
    %3731 = vst [vmem:[%s3715] ss:$4 sm:$0xff] %v3572
    %3732 = vst [vmem:[%s3717] ss:$4 sm:$0xff] %v3516
    %3733 = vst [vmem:[%s3719] ss:$4 sm:$0xff] %v3580
    %v3734 = vld.sshfl [vmem:[#allocation1] sm:$0xff pattern:$0x73625140]
    %v3735 = vld.sshfl [vmem:[#allocation1 + $0x8] sm:$0xff pattern:$0x73625140]
    %v3736 = vld.sshfl [vmem:[#allocation1 + $0x10] sm:$0xff pattern:$0x73625140]
    %v3737 = vld.sshfl [vmem:[#allocation1 + $0x18] sm:$0xff pattern:$0x73625140]
    %v3738 = vld.sshfl [vmem:[#allocation1 + $0x20] sm:$0xff pattern:$0x73625140]
    %3739 = vst [vmem:[#allocation1] ss:$4 sm:$0xff] %v3584
    %3740 = vst [vmem:[%s3707] ss:$4 sm:$0xff] %v3588
    %3741 = vst [vmem:[%s3709] ss:$4 sm:$0xff] %v3592
    %3742 = vst [vmem:[%s3711] ss:$4 sm:$0xff] %v3597
    %3743 = vst [vmem:[%s3713] ss:$4 sm:$0xff] %v3585
    %3744 = vst [vmem:[%s3715] ss:$4 sm:$0xff] %v3520
    %3745 = vst [vmem:[%s3717] ss:$4 sm:$0xff] %v3593
    %3746 = vst [vmem:[%s3719] ss:$4 sm:$0xff] %v3598
    %v3747 = vld.sshfl [vmem:[#allocation1] sm:$0xff pattern:$0x73625140]
    %v3748 = vld.sshfl [vmem:[#allocation1 + $0x8] sm:$0xff pattern:$0x73625140]
    %v3749 = vld.sshfl [vmem:[#allocation1 + $0x10] sm:$0xff pattern:$0x73625140]
    %v3750 = vld.sshfl [vmem:[#allocation1 + $0x18] sm:$0xff pattern:$0x73625140]
    %v3751 = vld.sshfl [vmem:[#allocation1 + $0x20] sm:$0xff pattern:$0x73625140]
    %3752 = vst [vmem:[#allocation1] ss:$4 sm:$0xff] %v3601
    %3753 = vst [vmem:[%s3707] ss:$4 sm:$0xff] %v3605
    %3754 = vst [vmem:[%s3709] ss:$4 sm:$0xff] %v3610
    %3755 = vst [vmem:[%s3711] ss:$4 sm:$0xff] %v3614
    %3756 = vst [vmem:[%s3713] ss:$4 sm:$0xff] %v3524
    %3757 = vst [vmem:[%s3715] ss:$4 sm:$0xff] %v3606
    %3758 = vst [vmem:[%s3717] ss:$4 sm:$0xff] %v3611
    %3759 = vst [vmem:[%s3719] ss:$4 sm:$0xff] %v3528
    %v3760 = vld.sshfl [vmem:[#allocation1] sm:$0xff pattern:$0x73625140]
    %v3761 = vld.sshfl [vmem:[#allocation1 + $0x8] sm:$0xff pattern:$0x73625140]
    %v3762 = vld.sshfl [vmem:[#allocation1 + $0x10] sm:$0xff pattern:$0x73625140]
    %v3763 = vld.sshfl [vmem:[#allocation1 + $0x18] sm:$0xff pattern:$0x73625140]
    %v3764 = vld.sshfl [vmem:[#allocation1 + $0x20] sm:$0xff pattern:$0x73625140]
    %3765 = vst [vmem:[#allocation1] ss:$4 sm:$0xff] %v3618
    %3766 = vst [vmem:[%s3707] ss:$4 sm:$0xff] %v3623
    %3767 = vst [vmem:[%s3713] ss:$4 sm:$0xff] %v3619
    %3768 = vst [vmem:[%s3715] ss:$4 sm:$0xff] %v3624
    %v3769 = vld.sshfl [vmem:[#allocation1] sm:$0xff pattern:$0x73625140]
    %v3770 = vld.sshfl [vmem:[#allocation1 + $0x8] sm:$0xff pattern:$0x73625140]
    %v3771 = vld.sshfl [vmem:[#allocation1 + $0x10] sm:$0xff pattern:$0x73625140]
    %v3772 = vld.sshfl [vmem:[#allocation1 + $0x18] sm:$0xff pattern:$0x73625140]
    %v3773 = vld.sshfl [vmem:[#allocation1 + $0x20] sm:$0xff pattern:$0x73625140]
    %3799 = vmatpush.msra.mxu0 %v3641
    %3800 = vmatpush.msra.mxu0 %v3640
    %3801 = vmatpush.msra.mxu0 %v3639
    %3802 = vmatpush.msra.mxu0 %v3638
    %3803 = vmatpush.msra.mxu0 %v3637
    %3804 = vmatpush.msra.mxu0 %v3636
    %3805 = vmatpush.msra.mxu0 %v3635
    %3806 = vmatpush.msra.mxu0 %v3634
    %3807 = vmatpush.msra.mxu0 %v3633
    %3808 = vmatpush.msra.mxu0 %v3632
    %3809 = vmatpush.msra.mxu0 %v3631
    %3810 = vmatpush.msra.mxu0 %v3630
    %3811 = vmatpush.msra.mxu0 %v3629
    %3812 = vmatpush.msra.mxu0 %v3628
    %3813 = vmatpush.msra.mxu0 %v3627
    %3814 = vmatpush.msra.mxu0 %v3626
    %3815 = vmatmul.f32.gmra.mxu0 %v3721
    %v3816 = vpop.f32.mrf.mxu0
    %v3817 = vadd.f32 0.0, %v3816
    %3818 = vmatmul.f32.gmra.mxu0 %v3734
    %v3819 = vpop.f32.mrf.mxu0
    %v3820 = vadd.f32 0.0, %v3819
    %3821 = vmatmul.f32.gmra.mxu0 %v3747
    %v3822 = vpop.f32.mrf.mxu0
    %v3823 = vadd.f32 0.0, %v3822
    %3824 = vmatmul.f32.gmra.mxu0 %v3760
    %v3825 = vpop.f32.mrf.mxu0
    %v3826 = vadd.f32 0.0, %v3825
    %3827 = vmatmul.f32.gmra.mxu0 %v3769
    %v3828 = vpop.f32.mrf.mxu0
    %v3829 = vadd.f32 0.0, %v3828
    %3830 = vdwg.mxu0
    %3831 = vmatpush.msra.mxu0 %v3657
    %3832 = vmatpush.msra.mxu0 %v3656
    %3833 = vmatpush.msra.mxu0 %v3655
    %3834 = vmatpush.msra.mxu0 %v3654
    %3835 = vmatpush.msra.mxu0 %v3653
    %3836 = vmatpush.msra.mxu0 %v3652
    %3837 = vmatpush.msra.mxu0 %v3651
    %3838 = vmatpush.msra.mxu0 %v3650
    %3839 = vmatpush.msra.mxu0 %v3649
    %3840 = vmatpush.msra.mxu0 %v3648
    %3841 = vmatpush.msra.mxu0 %v3647
    %3842 = vmatpush.msra.mxu0 %v3646
    %3843 = vmatpush.msra.mxu0 %v3645
    %3844 = vmatpush.msra.mxu0 %v3644
    %3845 = vmatpush.msra.mxu0 %v3643
    %3846 = vmatpush.msra.mxu0 %v3642
    %3847 = vmatmul.f32.gmra.mxu0 %v3722
    %v3848 = vpop.f32.mrf.mxu0
    %v3849 = vadd.f32 %v3817, %v3848
    %3850 = vmatmul.f32.gmra.mxu0 %v3735
    %v3851 = vpop.f32.mrf.mxu0
    %v3852 = vadd.f32 %v3820, %v3851
    %3853 = vmatmul.f32.gmra.mxu0 %v3748
    %v3854 = vpop.f32.mrf.mxu0
    %v3855 = vadd.f32 %v3823, %v3854
    %3856 = vmatmul.f32.gmra.mxu0 %v3761
    %v3857 = vpop.f32.mrf.mxu0
    %v3858 = vadd.f32 %v3826, %v3857
    %3859 = vmatmul.f32.gmra.mxu0 %v3770
    %v3860 = vpop.f32.mrf.mxu0
    %v3861 = vadd.f32 %v3829, %v3860
    %3862 = vdwg.mxu0
    %3863 = vmatpush.msra.mxu0 %v3673
    %3864 = vmatpush.msra.mxu0 %v3672
    %3865 = vmatpush.msra.mxu0 %v3671
    %3866 = vmatpush.msra.mxu0 %v3670
    %3867 = vmatpush.msra.mxu0 %v3669
    %3868 = vmatpush.msra.mxu0 %v3668
    %3869 = vmatpush.msra.mxu0 %v3667
    %3870 = vmatpush.msra.mxu0 %v3666
    %3871 = vmatpush.msra.mxu0 %v3665
    %3872 = vmatpush.msra.mxu0 %v3664
    %3873 = vmatpush.msra.mxu0 %v3663
    %3874 = vmatpush.msra.mxu0 %v3662
    %3875 = vmatpush.msra.mxu0 %v3661
    %3876 = vmatpush.msra.mxu0 %v3660
    %3877 = vmatpush.msra.mxu0 %v3659
    %3878 = vmatpush.msra.mxu0 %v3658
    %3879 = vmatmul.f32.gmra.mxu0 %v3723
    %v3880 = vpop.f32.mrf.mxu0
    %v3881 = vadd.f32 %v3849, %v3880
    %3882 = vmatmul.f32.gmra.mxu0 %v3736
    %v3883 = vpop.f32.mrf.mxu0
    %v3884 = vadd.f32 %v3852, %v3883
    %3885 = vmatmul.f32.gmra.mxu0 %v3749
    %v3886 = vpop.f32.mrf.mxu0
    %v3887 = vadd.f32 %v3855, %v3886
    %3888 = vmatmul.f32.gmra.mxu0 %v3762
    %v3889 = vpop.f32.mrf.mxu0
    %v3890 = vadd.f32 %v3858, %v3889
    %3891 = vmatmul.f32.gmra.mxu0 %v3771
    %v3892 = vpop.f32.mrf.mxu0
    %v3893 = vadd.f32 %v3861, %v3892
    %3894 = vdwg.mxu0
    %3895 = vmatpush.msra.mxu0 %v3689
    %3896 = vmatpush.msra.mxu0 %v3688
    %3897 = vmatpush.msra.mxu0 %v3687
    %3898 = vmatpush.msra.mxu0 %v3686
    %3899 = vmatpush.msra.mxu0 %v3685
    %3900 = vmatpush.msra.mxu0 %v3684
    %3901 = vmatpush.msra.mxu0 %v3683
    %3902 = vmatpush.msra.mxu0 %v3682
    %3903 = vmatpush.msra.mxu0 %v3681
    %3904 = vmatpush.msra.mxu0 %v3680
    %3905 = vmatpush.msra.mxu0 %v3679
    %3906 = vmatpush.msra.mxu0 %v3678
    %3907 = vmatpush.msra.mxu0 %v3677
    %3908 = vmatpush.msra.mxu0 %v3676
    %3909 = vmatpush.msra.mxu0 %v3675
    %3910 = vmatpush.msra.mxu0 %v3674
    %3911 = vmatmul.f32.gmra.mxu0 %v3724
    %v3912 = vpop.f32.mrf.mxu0
    %v3913 = vadd.f32 %v3881, %v3912
    %3914 = vmatmul.f32.gmra.mxu0 %v3737
    %v3915 = vpop.f32.mrf.mxu0
    %v3916 = vadd.f32 %v3884, %v3915
    %3917 = vmatmul.f32.gmra.mxu0 %v3750
    %v3918 = vpop.f32.mrf.mxu0
    %v3919 = vadd.f32 %v3887, %v3918
    %3920 = vmatmul.f32.gmra.mxu0 %v3763
    %v3921 = vpop.f32.mrf.mxu0
    %v3922 = vadd.f32 %v3890, %v3921
    %3923 = vmatmul.f32.gmra.mxu0 %v3772
    %v3924 = vpop.f32.mrf.mxu0
    %v3925 = vadd.f32 %v3893, %v3924
    %3926 = vdwg.mxu0
    %3927 = vmatpush.msra.mxu0 %v3705
    %3928 = vmatpush.msra.mxu0 %v3704
    %3929 = vmatpush.msra.mxu0 %v3703
    %3930 = vmatpush.msra.mxu0 %v3702
    %3931 = vmatpush.msra.mxu0 %v3701
    %3932 = vmatpush.msra.mxu0 %v3700
    %3933 = vmatpush.msra.mxu0 %v3699
    %3934 = vmatpush.msra.mxu0 %v3698
    %3935 = vmatpush.msra.mxu0 %v3697
    %3936 = vmatpush.msra.mxu0 %v3696
    %3937 = vmatpush.msra.mxu0 %v3695
    %3938 = vmatpush.msra.mxu0 %v3694
    %3939 = vmatpush.msra.mxu0 %v3693
    %3940 = vmatpush.msra.mxu0 %v3692
    %3941 = vmatpush.msra.mxu0 %v3691
    %3942 = vmatpush.msra.mxu0 %v3690
    %3943 = vmatmul.f32.gmra.mxu0 %v3725
    %v3944 = vpop.f32.mrf.mxu0
    %v3945 = vadd.f32 %v3913, %v3944
    %3946 = vmatmul.f32.gmra.mxu0 %v3738
    %v3947 = vpop.f32.mrf.mxu0
    %v3948 = vadd.f32 %v3916, %v3947
    %3949 = vmatmul.f32.gmra.mxu0 %v3751
    %v3950 = vpop.f32.mrf.mxu0
    %v3951 = vadd.f32 %v3919, %v3950
    %3952 = vmatmul.f32.gmra.mxu0 %v3764
    %v3953 = vpop.f32.mrf.mxu0
    %v3954 = vadd.f32 %v3922, %v3953
    %3955 = vmatmul.f32.gmra.mxu0 %v3773
    %v3956 = vpop.f32.mrf.mxu0
    %v3957 = vadd.f32 %v3925, %v3956
    %3958 = vdwg.mxu0
    %3959 = vst [vmem:[#allocation1] ss:$4 sm:$0xff] %v3197
    %s3960 = scalar_lea.vmem [#allocation1], 1
    %3961 = vst [vmem:[%s3960] ss:$4 sm:$0xff] %v3204
    %s3962 = scalar_lea.vmem [#allocation1], 2
    %3963 = vst [vmem:[%s3962] ss:$4 sm:$0xff] %v3209
    %s3964 = scalar_lea.vmem [#allocation1], 3
    %3965 = vst [vmem:[%s3964] ss:$4 sm:$0xff] %v3213
    %s3966 = scalar_lea.vmem [#allocation1], 32
    %3967 = vst [vmem:[%s3966] ss:$4 sm:$0xff] %v3150
    %s3968 = scalar_lea.vmem [#allocation1], 33
    %3969 = vst [vmem:[%s3968] ss:$4 sm:$0xff] %v3205
    %s3970 = scalar_lea.vmem [#allocation1], 34
    %3971 = vst [vmem:[%s3970] ss:$4 sm:$0xff] %v3210
    %s3972 = scalar_lea.vmem [#allocation1], 35
    %3973 = vst [vmem:[%s3972] ss:$4 sm:$0xff] %v3157
    %v3974 = vld.sshfl [vmem:[#allocation1] sm:$0xff pattern:$0x73625140]
    %v3975 = vld.sshfl [vmem:[#allocation1 + $0x8] sm:$0xff pattern:$0x73625140]
    %v3976 = vld.sshfl [vmem:[#allocation1 + $0x10] sm:$0xff pattern:$0x73625140]
    %v3977 = vld.sshfl [vmem:[#allocation1 + $0x18] sm:$0xff pattern:$0x73625140]
    %v3978 = vld.sshfl [vmem:[#allocation1 + $0x20] sm:$0xff pattern:$0x73625140]
    %3979 = vst [vmem:[#allocation1] ss:$4 sm:$0xff] %v3217
    %3980 = vst [vmem:[%s3960] ss:$4 sm:$0xff] %v3222
    %3981 = vst [vmem:[%s3962] ss:$4 sm:$0xff] %v3226
    %3982 = vst [vmem:[%s3964] ss:$4 sm:$0xff] %v3230
    %3983 = vst [vmem:[%s3966] ss:$4 sm:$0xff] %v3218
    %3984 = vst [vmem:[%s3968] ss:$4 sm:$0xff] %v3223
    %3985 = vst [vmem:[%s3970] ss:$4 sm:$0xff] %v3161
    %3986 = vst [vmem:[%s3972] ss:$4 sm:$0xff] %v3231
    %v3987 = vld.sshfl [vmem:[#allocation1] sm:$0xff pattern:$0x73625140]
    %v3988 = vld.sshfl [vmem:[#allocation1 + $0x8] sm:$0xff pattern:$0x73625140]
    %v3989 = vld.sshfl [vmem:[#allocation1 + $0x10] sm:$0xff pattern:$0x73625140]
    %v3990 = vld.sshfl [vmem:[#allocation1 + $0x18] sm:$0xff pattern:$0x73625140]
    %v3991 = vld.sshfl [vmem:[#allocation1 + $0x20] sm:$0xff pattern:$0x73625140]
    %3992 = vst [vmem:[#allocation1] ss:$4 sm:$0xff] %v3235
    %3993 = vst [vmem:[%s3960] ss:$4 sm:$0xff] %v3239
    %3994 = vst [vmem:[%s3962] ss:$4 sm:$0xff] %v3243
    %3995 = vst [vmem:[%s3964] ss:$4 sm:$0xff] %v3248
    %3996 = vst [vmem:[%s3966] ss:$4 sm:$0xff] %v3236
    %3997 = vst [vmem:[%s3968] ss:$4 sm:$0xff] %v3165
    %3998 = vst [vmem:[%s3970] ss:$4 sm:$0xff] %v3244
    %3999 = vst [vmem:[%s3972] ss:$4 sm:$0xff] %v3249
    %v4000 = vld.sshfl [vmem:[#allocation1] sm:$0xff pattern:$0x73625140]
    %v4001 = vld.sshfl [vmem:[#allocation1 + $0x8] sm:$0xff pattern:$0x73625140]
    %v4002 = vld.sshfl [vmem:[#allocation1 + $0x10] sm:$0xff pattern:$0x73625140]
    %v4003 = vld.sshfl [vmem:[#allocation1 + $0x18] sm:$0xff pattern:$0x73625140]
    %v4004 = vld.sshfl [vmem:[#allocation1 + $0x20] sm:$0xff pattern:$0x73625140]
    %4005 = vst [vmem:[#allocation1] ss:$4 sm:$0xff] %v3252
    %4006 = vst [vmem:[%s3960] ss:$4 sm:$0xff] %v3256
    %4007 = vst [vmem:[%s3962] ss:$4 sm:$0xff] %v3261
    %4008 = vst [vmem:[%s3964] ss:$4 sm:$0xff] %v3265
    %4009 = vst [vmem:[%s3966] ss:$4 sm:$0xff] %v3169
    %4010 = vst [vmem:[%s3968] ss:$4 sm:$0xff] %v3257
    %4011 = vst [vmem:[%s3970] ss:$4 sm:$0xff] %v3262
    %4012 = vst [vmem:[%s3972] ss:$4 sm:$0xff] %v3173
    %v4013 = vld.sshfl [vmem:[#allocation1] sm:$0xff pattern:$0x73625140]
    %v4014 = vld.sshfl [vmem:[#allocation1 + $0x8] sm:$0xff pattern:$0x73625140]
    %v4015 = vld.sshfl [vmem:[#allocation1 + $0x10] sm:$0xff pattern:$0x73625140]
    %v4016 = vld.sshfl [vmem:[#allocation1 + $0x18] sm:$0xff pattern:$0x73625140]
    %v4017 = vld.sshfl [vmem:[#allocation1 + $0x20] sm:$0xff pattern:$0x73625140]
    %4018 = vst [vmem:[#allocation1] ss:$4 sm:$0xff] %v3269
    %4019 = vst [vmem:[%s3960] ss:$4 sm:$0xff] %v3274
    %4020 = vst [vmem:[%s3966] ss:$4 sm:$0xff] %v3270
    %4021 = vst [vmem:[%s3968] ss:$4 sm:$0xff] %v3275
    %v4022 = vld.sshfl [vmem:[#allocation1] sm:$0xff pattern:$0x73625140]
    %v4023 = vld.sshfl [vmem:[#allocation1 + $0x8] sm:$0xff pattern:$0x73625140]
    %v4024 = vld.sshfl [vmem:[#allocation1 + $0x10] sm:$0xff pattern:$0x73625140]
    %v4025 = vld.sshfl [vmem:[#allocation1 + $0x18] sm:$0xff pattern:$0x73625140]
    %v4026 = vld.sshfl [vmem:[#allocation1 + $0x20] sm:$0xff pattern:$0x73625140]
    %4052 = vmatpush.msra.mxu0 %v3291
    %4053 = vmatpush.msra.mxu0 %v3290
    %4054 = vmatpush.msra.mxu0 %v3289
    %4055 = vmatpush.msra.mxu0 %v3288
    %4056 = vmatpush.msra.mxu0 %v3287
    %4057 = vmatpush.msra.mxu0 %v3286
    %4058 = vmatpush.msra.mxu0 %v3285
    %4059 = vmatpush.msra.mxu0 %v3284
    %4060 = vmatpush.msra.mxu0 %v3283
    %4061 = vmatpush.msra.mxu0 %v3282
    %4062 = vmatpush.msra.mxu0 %v3281
    %4063 = vmatpush.msra.mxu0 %v3280
    %4064 = vmatpush.msra.mxu0 %v3279
    %4065 = vmatpush.msra.mxu0 %v3278
    %4066 = vmatpush.msra.mxu0 %v3277
    %4067 = vmatpush.msra.mxu0 %v3276
    %4068 = vmatmul.f32.gmra.mxu0 %v3974
    %v4069 = vpop.f32.mrf.mxu0
    %v4070 = vadd.f32 %v3945, %v4069
    %4071 = vmatmul.f32.gmra.mxu0 %v3987
    %v4072 = vpop.f32.mrf.mxu0
    %v4073 = vadd.f32 %v3948, %v4072
    %4074 = vmatmul.f32.gmra.mxu0 %v4000
    %v4075 = vpop.f32.mrf.mxu0
    %v4076 = vadd.f32 %v3951, %v4075
    %4077 = vmatmul.f32.gmra.mxu0 %v4013
    %v4078 = vpop.f32.mrf.mxu0
    %v4079 = vadd.f32 %v3954, %v4078
    %4080 = vmatmul.f32.gmra.mxu0 %v4022
    %v4081 = vpop.f32.mrf.mxu0
    %v4082 = vadd.f32 %v3957, %v4081
    %4083 = vdwg.mxu0
    %4084 = vmatpush.msra.mxu0 %v3307
    %4085 = vmatpush.msra.mxu0 %v3306
    %4086 = vmatpush.msra.mxu0 %v3305
    %4087 = vmatpush.msra.mxu0 %v3304
    %4088 = vmatpush.msra.mxu0 %v3303
    %4089 = vmatpush.msra.mxu0 %v3302
    %4090 = vmatpush.msra.mxu0 %v3301
    %4091 = vmatpush.msra.mxu0 %v3300
    %4092 = vmatpush.msra.mxu0 %v3299
    %4093 = vmatpush.msra.mxu0 %v3298
    %4094 = vmatpush.msra.mxu0 %v3297
    %4095 = vmatpush.msra.mxu0 %v3296
    %4096 = vmatpush.msra.mxu0 %v3295
    %4097 = vmatpush.msra.mxu0 %v3294
    %4098 = vmatpush.msra.mxu0 %v3293
    %4099 = vmatpush.msra.mxu0 %v3292
    %4100 = vmatmul.f32.gmra.mxu0 %v3975
    %v4101 = vpop.f32.mrf.mxu0
    %v4102 = vadd.f32 %v4070, %v4101
    %4103 = vmatmul.f32.gmra.mxu0 %v3988
    %v4104 = vpop.f32.mrf.mxu0
    %v4105 = vadd.f32 %v4073, %v4104
    %4106 = vmatmul.f32.gmra.mxu0 %v4001
    %v4107 = vpop.f32.mrf.mxu0
    %v4108 = vadd.f32 %v4076, %v4107
    %4109 = vmatmul.f32.gmra.mxu0 %v4014
    %v4110 = vpop.f32.mrf.mxu0
    %v4111 = vadd.f32 %v4079, %v4110
    %4112 = vmatmul.f32.gmra.mxu0 %v4023
    %v4113 = vpop.f32.mrf.mxu0
    %v4114 = vadd.f32 %v4082, %v4113
    %4115 = vdwg.mxu0
    %4116 = vmatpush.msra.mxu0 %v3323
    %4117 = vmatpush.msra.mxu0 %v3322
    %4118 = vmatpush.msra.mxu0 %v3321
    %4119 = vmatpush.msra.mxu0 %v3320
    %4120 = vmatpush.msra.mxu0 %v3319
    %4121 = vmatpush.msra.mxu0 %v3318
    %4122 = vmatpush.msra.mxu0 %v3317
    %4123 = vmatpush.msra.mxu0 %v3316
    %4124 = vmatpush.msra.mxu0 %v3315
    %4125 = vmatpush.msra.mxu0 %v3314
    %4126 = vmatpush.msra.mxu0 %v3313
    %4127 = vmatpush.msra.mxu0 %v3312
    %4128 = vmatpush.msra.mxu0 %v3311
    %4129 = vmatpush.msra.mxu0 %v3310
    %4130 = vmatpush.msra.mxu0 %v3309
    %4131 = vmatpush.msra.mxu0 %v3308
    %4132 = vmatmul.f32.gmra.mxu0 %v3976
    %v4133 = vpop.f32.mrf.mxu0
    %v4134 = vadd.f32 %v4102, %v4133
    %4135 = vmatmul.f32.gmra.mxu0 %v3989
    %v4136 = vpop.f32.mrf.mxu0
    %v4137 = vadd.f32 %v4105, %v4136
    %4138 = vmatmul.f32.gmra.mxu0 %v4002
    %v4139 = vpop.f32.mrf.mxu0
    %v4140 = vadd.f32 %v4108, %v4139
    %4141 = vmatmul.f32.gmra.mxu0 %v4015
    %v4142 = vpop.f32.mrf.mxu0
    %v4143 = vadd.f32 %v4111, %v4142
    %4144 = vmatmul.f32.gmra.mxu0 %v4024
    %v4145 = vpop.f32.mrf.mxu0
    %v4146 = vadd.f32 %v4114, %v4145
    %4147 = vdwg.mxu0
    %4148 = vmatpush.msra.mxu0 %v3339
    %4149 = vmatpush.msra.mxu0 %v3338
    %4150 = vmatpush.msra.mxu0 %v3337
    %4151 = vmatpush.msra.mxu0 %v3336
    %4152 = vmatpush.msra.mxu0 %v3335
    %4153 = vmatpush.msra.mxu0 %v3334
    %4154 = vmatpush.msra.mxu0 %v3333
    %4155 = vmatpush.msra.mxu0 %v3332
    %4156 = vmatpush.msra.mxu0 %v3331
    %4157 = vmatpush.msra.mxu0 %v3330
    %4158 = vmatpush.msra.mxu0 %v3329
    %4159 = vmatpush.msra.mxu0 %v3328
    %4160 = vmatpush.msra.mxu0 %v3327
    %4161 = vmatpush.msra.mxu0 %v3326
    %4162 = vmatpush.msra.mxu0 %v3325
    %4163 = vmatpush.msra.mxu0 %v3324
    %4164 = vmatmul.f32.gmra.mxu0 %v3977
    %v4165 = vpop.f32.mrf.mxu0
    %v4166 = vadd.f32 %v4134, %v4165
    %4167 = vmatmul.f32.gmra.mxu0 %v3990
    %v4168 = vpop.f32.mrf.mxu0
    %v4169 = vadd.f32 %v4137, %v4168
    %4170 = vmatmul.f32.gmra.mxu0 %v4003
    %v4171 = vpop.f32.mrf.mxu0
    %v4172 = vadd.f32 %v4140, %v4171
    %4173 = vmatmul.f32.gmra.mxu0 %v4016
    %v4174 = vpop.f32.mrf.mxu0
    %v4175 = vadd.f32 %v4143, %v4174
    %4176 = vmatmul.f32.gmra.mxu0 %v4025
    %v4177 = vpop.f32.mrf.mxu0
    %v4178 = vadd.f32 %v4146, %v4177
    %4179 = vdwg.mxu0
    %4180 = vmatpush.msra.mxu0 %v3355
    %4181 = vmatpush.msra.mxu0 %v3354
    %4182 = vmatpush.msra.mxu0 %v3353
    %4183 = vmatpush.msra.mxu0 %v3352
    %4184 = vmatpush.msra.mxu0 %v3351
    %4185 = vmatpush.msra.mxu0 %v3350
    %4186 = vmatpush.msra.mxu0 %v3349
    %4187 = vmatpush.msra.mxu0 %v3348
    %4188 = vmatpush.msra.mxu0 %v3347
    %4189 = vmatpush.msra.mxu0 %v3346
    %4190 = vmatpush.msra.mxu0 %v3345
    %4191 = vmatpush.msra.mxu0 %v3344
    %4192 = vmatpush.msra.mxu0 %v3343
    %4193 = vmatpush.msra.mxu0 %v3342
    %4194 = vmatpush.msra.mxu0 %v3341
    %4195 = vmatpush.msra.mxu0 %v3340
    %4196 = vmatmul.f32.gmra.mxu0 %v3978
    %v4197 = vpop.f32.mrf.mxu0
    %v4198 = vadd.f32 %v4166, %v4197
    %4199 = vmatmul.f32.gmra.mxu0 %v3991
    %v4200 = vpop.f32.mrf.mxu0
    %v4201 = vadd.f32 %v4169, %v4200
    %4202 = vmatmul.f32.gmra.mxu0 %v4004
    %v4203 = vpop.f32.mrf.mxu0
    %v4204 = vadd.f32 %v4172, %v4203
    %4205 = vmatmul.f32.gmra.mxu0 %v4017
    %v4206 = vpop.f32.mrf.mxu0
    %v4207 = vadd.f32 %v4175, %v4206
    %4208 = vmatmul.f32.gmra.mxu0 %v4026
    %v4209 = vpop.f32.mrf.mxu0
    %v4210 = vadd.f32 %v4178, %v4209
    %4211 = vdwg.mxu0
    %4212 = vst [vmem:[#allocation1] ss:$4 sm:$0xff] %v2971
    %s4213 = scalar_lea.vmem [#allocation1], 1
    %4214 = vst [vmem:[%s4213] ss:$4 sm:$0xff] %v2972
    %s4215 = scalar_lea.vmem [#allocation1], 2
    %4216 = vst [vmem:[%s4215] ss:$4 sm:$0xff] %v2922
    %v4217 = vld.sshfl [vmem:[#allocation1] sm:$0xff pattern:$0x73625140]
    %s4218 = scalar_lea.vmem [#allocation1], 32
    %4219 = vst [vmem:[%s4218] ss:$4 sm:$0xff] %v2975
    %s4220 = scalar_lea.vmem [#allocation1], 33
    %4221 = vst [vmem:[%s4220] ss:$4 sm:$0xff] %v2925
    %s4222 = scalar_lea.vmem [#allocation1], 34
    %4223 = vst [vmem:[%s4222] ss:$4 sm:$0xff] %v2976
    %v4224 = vld.sshfl [vmem:[#allocation1 + $0x20] sm:$0xff pattern:$0x73625140]
    %4225 = vst [vmem:[#allocation1] ss:$4 sm:$0xff] %v2928
    %4226 = vst [vmem:[%s4213] ss:$4 sm:$0xff] %v2979
    %4227 = vst [vmem:[%s4215] ss:$4 sm:$0xff] %v2980
    %v4228 = vld.sshfl [vmem:[#allocation1] sm:$0xff pattern:$0x73625140]
    %4229 = vst [vmem:[%s4218] ss:$4 sm:$0xff] %v2982
    %4230 = vst [vmem:[%s4220] ss:$4 sm:$0xff] %v2983
    %4231 = vst [vmem:[%s4222] ss:$4 sm:$0xff] %v2984
    %v4232 = vld.sshfl [vmem:[#allocation1 + $0x20] sm:$0xff pattern:$0x73625140]
    %4233 = vst [vmem:[#allocation1] ss:$4 sm:$0xff] %v2986
    %4234 = vst [vmem:[%s4213] ss:$4 sm:$0xff] %v2987
    %4235 = vst [vmem:[%s4215] ss:$4 sm:$0xff] %v2937
    %v4236 = vld.sshfl [vmem:[#allocation1] sm:$0xff pattern:$0x73625140]
    %4237 = vst [vmem:[%s4218] ss:$4 sm:$0xff] %v2990
    %4238 = vst [vmem:[%s4220] ss:$4 sm:$0xff] %v2940
    %4239 = vst [vmem:[%s4222] ss:$4 sm:$0xff] %v2991
    %v4240 = vld.sshfl [vmem:[#allocation1 + $0x20] sm:$0xff pattern:$0x73625140]
    %4241 = vst [vmem:[#allocation1] ss:$4 sm:$0xff] %v2971
    %s4242 = scalar_lea.vmem [#allocation1], 1
    %4243 = vst [vmem:[%s4242] ss:$4 sm:$0xff] %v2972
    %s4244 = scalar_lea.vmem [#allocation1], 2
    %4245 = vst [vmem:[%s4244] ss:$4 sm:$0xff] %v2922
    %s4246 = scalar_lea.vmem [#allocation1], 3
    %4247 = vst [vmem:[%s4246] ss:$4 sm:$0xff] %v2973
    %v4248 = vld.sshfl [vmem:[#allocation1] sm:$0xff pattern:$0x73625140]
    %s4249 = scalar_lea.vmem [#allocation1], 32
    %4250 = vst [vmem:[%s4249] ss:$4 sm:$0xff] %v2975
    %s4251 = scalar_lea.vmem [#allocation1], 33
    %4252 = vst [vmem:[%s4251] ss:$4 sm:$0xff] %v2925
    %s4253 = scalar_lea.vmem [#allocation1], 34
    %4254 = vst [vmem:[%s4253] ss:$4 sm:$0xff] %v2976
    %s4255 = scalar_lea.vmem [#allocation1], 35
    %4256 = vst [vmem:[%s4255] ss:$4 sm:$0xff] %v2977
    %v4257 = vld.sshfl [vmem:[#allocation1 + $0x20] sm:$0xff pattern:$0x73625140]
    %4258 = vst [vmem:[#allocation1] ss:$4 sm:$0xff] %v2928
    %4259 = vst [vmem:[%s4242] ss:$4 sm:$0xff] %v2979
    %4260 = vst [vmem:[%s4244] ss:$4 sm:$0xff] %v2980
    %4261 = vst [vmem:[%s4246] ss:$4 sm:$0xff] %v2981
    %v4262 = vld.sshfl [vmem:[#allocation1] sm:$0xff pattern:$0x73625140]
    %4263 = vst [vmem:[%s4249] ss:$4 sm:$0xff] %v2982
    %4264 = vst [vmem:[%s4251] ss:$4 sm:$0xff] %v2983
    %4265 = vst [vmem:[%s4253] ss:$4 sm:$0xff] %v2984
    %4266 = vst [vmem:[%s4255] ss:$4 sm:$0xff] %v2934
    %v4267 = vld.sshfl [vmem:[#allocation1 + $0x20] sm:$0xff pattern:$0x73625140]
    %4268 = vst [vmem:[#allocation1] ss:$4 sm:$0xff] %v2986
    %4269 = vst [vmem:[%s4242] ss:$4 sm:$0xff] %v2987
    %4270 = vst [vmem:[%s4244] ss:$4 sm:$0xff] %v2937
    %4271 = vst [vmem:[%s4246] ss:$4 sm:$0xff] %v2988
    %v4272 = vld.sshfl [vmem:[#allocation1] sm:$0xff pattern:$0x73625140]
    %4273 = vst [vmem:[%s4249] ss:$4 sm:$0xff] %v2990
    %4274 = vst [vmem:[%s4251] ss:$4 sm:$0xff] %v2940
    %4275 = vst [vmem:[%s4253] ss:$4 sm:$0xff] %v2991
    %4276 = vst [vmem:[%s4255] ss:$4 sm:$0xff] %v2992
    %v4277 = vld.sshfl [vmem:[#allocation1 + $0x20] sm:$0xff pattern:$0x73625140]
    %v4278 = vrot.slane %v4248, 1
    %v4279 = vrot.slane %v4257, 1
    %v4280 = vrot.slane %v4262, 1
    %v4281 = vrot.slane %v4267, 1
    %v4282 = vrot.slane %v4272, 1
    %v4283 = vrot.slane %v4277, 1
    %4284 = vst [vmem:[#allocation1] ss:$4 sm:$0xff] %v2972
    %s4285 = scalar_lea.vmem [#allocation1], 1
    %4286 = vst [vmem:[%s4285] ss:$4 sm:$0xff] %v2922
    %s4287 = scalar_lea.vmem [#allocation1], 2
    %4288 = vst [vmem:[%s4287] ss:$4 sm:$0xff] %v2973
    %v4289 = vld.sshfl [vmem:[#allocation1] sm:$0xff pattern:$0x73625140]
    %s4290 = scalar_lea.vmem [#allocation1], 32
    %4291 = vst [vmem:[%s4290] ss:$4 sm:$0xff] %v2925
    %s4292 = scalar_lea.vmem [#allocation1], 33
    %4293 = vst [vmem:[%s4292] ss:$4 sm:$0xff] %v2976
    %s4294 = scalar_lea.vmem [#allocation1], 34
    %4295 = vst [vmem:[%s4294] ss:$4 sm:$0xff] %v2977
    %v4296 = vld.sshfl [vmem:[#allocation1 + $0x20] sm:$0xff pattern:$0x73625140]
    %4297 = vst [vmem:[#allocation1] ss:$4 sm:$0xff] %v2979
    %4298 = vst [vmem:[%s4285] ss:$4 sm:$0xff] %v2980
    %4299 = vst [vmem:[%s4287] ss:$4 sm:$0xff] %v2981
    %v4300 = vld.sshfl [vmem:[#allocation1] sm:$0xff pattern:$0x73625140]
    %4301 = vst [vmem:[%s4290] ss:$4 sm:$0xff] %v2983
    %4302 = vst [vmem:[%s4292] ss:$4 sm:$0xff] %v2984
    %4303 = vst [vmem:[%s4294] ss:$4 sm:$0xff] %v2934
    %v4304 = vld.sshfl [vmem:[#allocation1 + $0x20] sm:$0xff pattern:$0x73625140]
    %4305 = vst [vmem:[#allocation1] ss:$4 sm:$0xff] %v2987
    %4306 = vst [vmem:[%s4285] ss:$4 sm:$0xff] %v2937
    %4307 = vst [vmem:[%s4287] ss:$4 sm:$0xff] %v2988
    %v4308 = vld.sshfl [vmem:[#allocation1] sm:$0xff pattern:$0x73625140]
    %4309 = vst [vmem:[%s4290] ss:$4 sm:$0xff] %v2940
    %4310 = vst [vmem:[%s4292] ss:$4 sm:$0xff] %v2991
    %4311 = vst [vmem:[%s4294] ss:$4 sm:$0xff] %v2992
    %v4312 = vld.sshfl [vmem:[#allocation1 + $0x20] sm:$0xff pattern:$0x73625140]
    %4313 = vst [vmem:[#allocation1] ss:$4 sm:$0xff] %v2972
    %s4314 = scalar_lea.vmem [#allocation1], 1
    %4315 = vst [vmem:[%s4314] ss:$4 sm:$0xff] %v2922
    %s4316 = scalar_lea.vmem [#allocation1], 2
    %4317 = vst [vmem:[%s4316] ss:$4 sm:$0xff] %v2973
    %s4318 = scalar_lea.vmem [#allocation1], 3
    %4319 = vst [vmem:[%s4318] ss:$4 sm:$0xff] %v2974
    %v4320 = vld.sshfl [vmem:[#allocation1] sm:$0xff pattern:$0x73625140]
    %s4321 = scalar_lea.vmem [#allocation1], 32
    %4322 = vst [vmem:[%s4321] ss:$4 sm:$0xff] %v2925
    %s4323 = scalar_lea.vmem [#allocation1], 33
    %4324 = vst [vmem:[%s4323] ss:$4 sm:$0xff] %v2976
    %s4325 = scalar_lea.vmem [#allocation1], 34
    %4326 = vst [vmem:[%s4325] ss:$4 sm:$0xff] %v2977
    %s4327 = scalar_lea.vmem [#allocation1], 35
    %4328 = vst [vmem:[%s4327] ss:$4 sm:$0xff] %v2978
    %v4329 = vld.sshfl [vmem:[#allocation1 + $0x20] sm:$0xff pattern:$0x73625140]
    %4330 = vst [vmem:[#allocation1] ss:$4 sm:$0xff] %v2979
    %4331 = vst [vmem:[%s4314] ss:$4 sm:$0xff] %v2980
    %4332 = vst [vmem:[%s4316] ss:$4 sm:$0xff] %v2981
    %4333 = vst [vmem:[%s4318] ss:$4 sm:$0xff] %v2931
    %v4334 = vld.sshfl [vmem:[#allocation1] sm:$0xff pattern:$0x73625140]
    %4335 = vst [vmem:[%s4321] ss:$4 sm:$0xff] %v2983
    %4336 = vst [vmem:[%s4323] ss:$4 sm:$0xff] %v2984
    %4337 = vst [vmem:[%s4325] ss:$4 sm:$0xff] %v2934
    %4338 = vst [vmem:[%s4327] ss:$4 sm:$0xff] %v2985
    %v4339 = vld.sshfl [vmem:[#allocation1 + $0x20] sm:$0xff pattern:$0x73625140]
    %4340 = vst [vmem:[#allocation1] ss:$4 sm:$0xff] %v2987
    %4341 = vst [vmem:[%s4314] ss:$4 sm:$0xff] %v2937
    %4342 = vst [vmem:[%s4316] ss:$4 sm:$0xff] %v2988
    %4343 = vst [vmem:[%s4318] ss:$4 sm:$0xff] %v2989
    %v4344 = vld.sshfl [vmem:[#allocation1] sm:$0xff pattern:$0x73625140]
    %4345 = vst [vmem:[%s4321] ss:$4 sm:$0xff] %v2940
    %4346 = vst [vmem:[%s4323] ss:$4 sm:$0xff] %v2991
    %4347 = vst [vmem:[%s4325] ss:$4 sm:$0xff] %v2992
    %4348 = vst [vmem:[%s4327] ss:$4 sm:$0xff] %v2993
    %v4349 = vld.sshfl [vmem:[#allocation1 + $0x20] sm:$0xff pattern:$0x73625140]
    %v4350 = vrot.slane %v4320, 1
    %v4351 = vrot.slane %v4329, 1
    %v4352 = vrot.slane %v4334, 1
    %v4353 = vrot.slane %v4339, 1
    %v4354 = vrot.slane %v4344, 1
    %v4355 = vrot.slane %v4349, 1
    %4356 = vst [vmem:[#allocation1] ss:$4 sm:$0xff] %v2922
    %s4357 = scalar_lea.vmem [#allocation1], 1
    %4358 = vst [vmem:[%s4357] ss:$4 sm:$0xff] %v2973
    %s4359 = scalar_lea.vmem [#allocation1], 2
    %4360 = vst [vmem:[%s4359] ss:$4 sm:$0xff] %v2974
    %v4361 = vld.sshfl [vmem:[#allocation1] sm:$0xff pattern:$0x73625140]
    %s4362 = scalar_lea.vmem [#allocation1], 32
    %4363 = vst [vmem:[%s4362] ss:$4 sm:$0xff] %v2976
    %s4364 = scalar_lea.vmem [#allocation1], 33
    %4365 = vst [vmem:[%s4364] ss:$4 sm:$0xff] %v2977
    %s4366 = scalar_lea.vmem [#allocation1], 34
    %4367 = vst [vmem:[%s4366] ss:$4 sm:$0xff] %v2978
    %v4368 = vld.sshfl [vmem:[#allocation1 + $0x20] sm:$0xff pattern:$0x73625140]
    %4369 = vst [vmem:[#allocation1] ss:$4 sm:$0xff] %v2980
    %4370 = vst [vmem:[%s4357] ss:$4 sm:$0xff] %v2981
    %4371 = vst [vmem:[%s4359] ss:$4 sm:$0xff] %v2931
    %v4372 = vld.sshfl [vmem:[#allocation1] sm:$0xff pattern:$0x73625140]
    %4373 = vst [vmem:[%s4362] ss:$4 sm:$0xff] %v2984
    %4374 = vst [vmem:[%s4364] ss:$4 sm:$0xff] %v2934
    %4375 = vst [vmem:[%s4366] ss:$4 sm:$0xff] %v2985
    %v4376 = vld.sshfl [vmem:[#allocation1 + $0x20] sm:$0xff pattern:$0x73625140]
    %4377 = vst [vmem:[#allocation1] ss:$4 sm:$0xff] %v2937
    %4378 = vst [vmem:[%s4357] ss:$4 sm:$0xff] %v2988
    %4379 = vst [vmem:[%s4359] ss:$4 sm:$0xff] %v2989
    %v4380 = vld.sshfl [vmem:[#allocation1] sm:$0xff pattern:$0x73625140]
    %4381 = vst [vmem:[%s4362] ss:$4 sm:$0xff] %v2991
    %4382 = vst [vmem:[%s4364] ss:$4 sm:$0xff] %v2992
    %4383 = vst [vmem:[%s4366] ss:$4 sm:$0xff] %v2993
    %v4384 = vld.sshfl [vmem:[#allocation1 + $0x20] sm:$0xff pattern:$0x73625140]
    %v4385 = vrot.slane %v4278, 6
    %v4386 = vrot.slane %v4289, 4
    %v4387 = vrot.slane %v4350, 2
    %v4388 = vrot.slane %v4279, 6
    %v4389 = vrot.slane %v4296, 4
    %v4390 = vrot.slane %v4351, 2
    %v4391 = vrot.slane %v4280, 6
    %v4392 = vrot.slane %v4300, 4
    %v4393 = vrot.slane %v4352, 2
    %v4394 = vrot.slane %v4281, 6
    %v4395 = vrot.slane %v4304, 4
    %v4396 = vrot.slane %v4353, 2
    %v4397 = vrot.slane %v4282, 6
    %v4398 = vrot.slane %v4308, 4
    %v4399 = vrot.slane %v4354, 2
    %v4400 = vrot.slane %v4283, 6
    %v4401 = vrot.slane %v4312, 4
    %v4402 = vrot.slane %v4355, 2
    %v4403 = vsel %vm3192, %v4217, %v4385
    %v4404 = vsel %vm3194, %v4386, %v4387
    %v4405 = vsel %vm3196, %v4403, %v4404
    %v4406 = vsel %vm3198, %v4217, %v4385
    %v4407 = vsel %vm3200, %v4387, %v4386
    %v4408 = vsel %vm3202, %v4406, %v4407
    %v4409 = vrot.slane %v4408, 2
    %v4410 = vrot.slane %v4361, 2
    %v4411 = vsel %vm3194, %v4217, %v4385
    %v4412 = vsel %vm3192, %v4386, %v4387
    %v4413 = vsel %vm3196, %v4412, %v4411
    %v4414 = vrot.slane %v4413, 4
    %v4415 = vrot.slane %v4361, 4
    %v4416 = vsel %vm3192, %v4224, %v4388
    %v4417 = vsel %vm3194, %v4389, %v4390
    %v4418 = vsel %vm3196, %v4416, %v4417
    %v4419 = vsel %vm3198, %v4224, %v4388
    %v4420 = vsel %vm3200, %v4390, %v4389
    %v4421 = vsel %vm3202, %v4419, %v4420
    %v4422 = vrot.slane %v4421, 2
    %v4423 = vrot.slane %v4368, 2
    %v4424 = vsel %vm3194, %v4224, %v4388
    %v4425 = vsel %vm3192, %v4389, %v4390
    %v4426 = vsel %vm3196, %v4425, %v4424
    %v4427 = vrot.slane %v4426, 4
    %v4428 = vrot.slane %v4368, 4
    %v4429 = vsel %vm3192, %v4228, %v4391
    %v4430 = vsel %vm3194, %v4392, %v4393
    %v4431 = vsel %vm3196, %v4429, %v4430
    %v4432 = vsel %vm3198, %v4228, %v4391
    %v4433 = vsel %vm3200, %v4393, %v4392
    %v4434 = vsel %vm3202, %v4432, %v4433
    %v4435 = vrot.slane %v4434, 2
    %v4436 = vrot.slane %v4372, 2
    %v4437 = vsel %vm3194, %v4228, %v4391
    %v4438 = vsel %vm3192, %v4392, %v4393
    %v4439 = vsel %vm3196, %v4438, %v4437
    %v4440 = vrot.slane %v4439, 4
    %v4441 = vrot.slane %v4372, 4
    %v4442 = vsel %vm3192, %v4232, %v4394
    %v4443 = vsel %vm3194, %v4395, %v4396
    %v4444 = vsel %vm3196, %v4442, %v4443
    %v4445 = vsel %vm3198, %v4232, %v4394
    %v4446 = vsel %vm3200, %v4396, %v4395
    %v4447 = vsel %vm3202, %v4445, %v4446
    %v4448 = vrot.slane %v4447, 2
    %v4449 = vrot.slane %v4376, 2
    %v4450 = vsel %vm3194, %v4232, %v4394
    %v4451 = vsel %vm3192, %v4395, %v4396
    %v4452 = vsel %vm3196, %v4451, %v4450
    %v4453 = vrot.slane %v4452, 4
    %v4454 = vrot.slane %v4376, 4
    %v4455 = vsel %vm3192, %v4236, %v4397
    %v4456 = vsel %vm3194, %v4398, %v4399
    %v4457 = vsel %vm3196, %v4455, %v4456
    %v4458 = vsel %vm3198, %v4236, %v4397
    %v4459 = vsel %vm3200, %v4399, %v4398
    %v4460 = vsel %vm3202, %v4458, %v4459
    %v4461 = vrot.slane %v4460, 2
    %v4462 = vrot.slane %v4380, 2
    %v4463 = vsel %vm3194, %v4236, %v4397
    %v4464 = vsel %vm3192, %v4398, %v4399
    %v4465 = vsel %vm3196, %v4464, %v4463
    %v4466 = vrot.slane %v4465, 4
    %v4467 = vrot.slane %v4380, 4
    %v4468 = vsel %vm3192, %v4240, %v4400
    %v4469 = vsel %vm3194, %v4401, %v4402
    %v4470 = vsel %vm3196, %v4468, %v4469
    %v4471 = vsel %vm3198, %v4240, %v4400
    %v4472 = vsel %vm3200, %v4402, %v4401
    %v4473 = vsel %vm3202, %v4471, %v4472
    %v4474 = vrot.slane %v4473, 2
    %v4475 = vrot.slane %v4384, 2
    %v4476 = vsel %vm3194, %v4240, %v4400
    %v4477 = vsel %vm3192, %v4401, %v4402
    %v4478 = vsel %vm3196, %v4477, %v4476
    %v4479 = vrot.slane %v4478, 4
    %v4480 = vrot.slane %v4384, 4
    %s4481 = scalar_lea.vmem %s2, 1280
    %v4482 = vld [vmem:[%s4481] sm:$0xff]
    %v4483 = vld [vmem:[%s4481 + $0x8] sm:$0xff]
    %v4484 = vld [vmem:[%s4481 + $0x10] sm:$0xff]
    %v4485 = vld [vmem:[%s4481 + $0x18] sm:$0xff]
    %v4486 = vld [vmem:[%s4481 + $0x20] sm:$0xff]
    %v4487 = vld [vmem:[%s4481 + $0x28] sm:$0xff]
    %v4488 = vld [vmem:[%s4481 + $0x30] sm:$0xff]
    %v4489 = vld [vmem:[%s4481 + $0x38] sm:$0xff]
    %v4490 = vld [vmem:[%s4481 + $0x40] sm:$0xff]
    %v4491 = vld [vmem:[%s4481 + $0x48] sm:$0xff]
    %v4492 = vld [vmem:[%s4481 + $0x50] sm:$0xff]
    %v4493 = vld [vmem:[%s4481 + $0x58] sm:$0xff]
    %v4494 = vld [vmem:[%s4481 + $0x60] sm:$0xff]
    %v4495 = vld [vmem:[%s4481 + $0x68] sm:$0xff]
    %v4496 = vld [vmem:[%s4481 + $0x70] sm:$0xff]
    %v4497 = vld [vmem:[%s4481 + $0x78] sm:$0xff]
    %v4498 = vld [vmem:[%s4481 + $0x80] sm:$0xff]
    %v4499 = vld [vmem:[%s4481 + $0x88] sm:$0xff]
    %v4500 = vld [vmem:[%s4481 + $0x90] sm:$0xff]
    %v4501 = vld [vmem:[%s4481 + $0x98] sm:$0xff]
    %v4502 = vld [vmem:[%s4481 + $0xa0] sm:$0xff]
    %v4503 = vld [vmem:[%s4481 + $0xa8] sm:$0xff]
    %v4504 = vld [vmem:[%s4481 + $0xb0] sm:$0xff]
    %v4505 = vld [vmem:[%s4481 + $0xb8] sm:$0xff]
    %v4506 = vld [vmem:[%s4481 + $0xc0] sm:$0xff]
    %v4507 = vld [vmem:[%s4481 + $0xc8] sm:$0xff]
    %v4508 = vld [vmem:[%s4481 + $0xd0] sm:$0xff]
    %v4509 = vld [vmem:[%s4481 + $0xd8] sm:$0xff]
    %v4510 = vld [vmem:[%s4481 + $0xe0] sm:$0xff]
    %v4511 = vld [vmem:[%s4481 + $0xe8] sm:$0xff]
    %v4512 = vld [vmem:[%s4481 + $0xf0] sm:$0xff]
    %v4513 = vld [vmem:[%s4481 + $0xf8] sm:$0xff]
    %v4514 = vld [vmem:[%s4481 + $0x100] sm:$0xff]
    %v4515 = vld [vmem:[%s4481 + $0x108] sm:$0xff]
    %v4516 = vld [vmem:[%s4481 + $0x110] sm:$0xff]
    %v4517 = vld [vmem:[%s4481 + $0x118] sm:$0xff]
    %v4518 = vld [vmem:[%s4481 + $0x120] sm:$0xff]
    %v4519 = vld [vmem:[%s4481 + $0x128] sm:$0xff]
    %v4520 = vld [vmem:[%s4481 + $0x130] sm:$0xff]
    %v4521 = vld [vmem:[%s4481 + $0x138] sm:$0xff]
    %v4522 = vld [vmem:[%s4481 + $0x140] sm:$0xff]
    %v4523 = vld [vmem:[%s4481 + $0x148] sm:$0xff]
    %v4524 = vld [vmem:[%s4481 + $0x150] sm:$0xff]
    %v4525 = vld [vmem:[%s4481 + $0x158] sm:$0xff]
    %v4526 = vld [vmem:[%s4481 + $0x160] sm:$0xff]
    %v4527 = vld [vmem:[%s4481 + $0x168] sm:$0xff]
    %v4528 = vld [vmem:[%s4481 + $0x170] sm:$0xff]
    %v4529 = vld [vmem:[%s4481 + $0x178] sm:$0xff]
    %v4530 = vld [vmem:[%s4481 + $0x180] sm:$0xff]
    %v4531 = vld [vmem:[%s4481 + $0x188] sm:$0xff]
    %v4532 = vld [vmem:[%s4481 + $0x190] sm:$0xff]
    %v4533 = vld [vmem:[%s4481 + $0x198] sm:$0xff]
    %v4534 = vld [vmem:[%s4481 + $0x1a0] sm:$0xff]
    %v4535 = vld [vmem:[%s4481 + $0x1a8] sm:$0xff]
    %v4536 = vld [vmem:[%s4481 + $0x1b0] sm:$0xff]
    %v4537 = vld [vmem:[%s4481 + $0x1b8] sm:$0xff]
    %v4538 = vld [vmem:[%s4481 + $0x1c0] sm:$0xff]
    %v4539 = vld [vmem:[%s4481 + $0x1c8] sm:$0xff]
    %v4540 = vld [vmem:[%s4481 + $0x1d0] sm:$0xff]
    %v4541 = vld [vmem:[%s4481 + $0x1d8] sm:$0xff]
    %v4542 = vld [vmem:[%s4481 + $0x1e0] sm:$0xff]
    %v4543 = vld [vmem:[%s4481 + $0x1e8] sm:$0xff]
    %v4544 = vld [vmem:[%s4481 + $0x1f0] sm:$0xff]
    %v4545 = vld [vmem:[%s4481 + $0x1f8] sm:$0xff]
    %v4546 = vld [vmem:[%s4481 + $0x200] sm:$0xff]
    %v4547 = vld [vmem:[%s4481 + $0x208] sm:$0xff]
    %v4548 = vld [vmem:[%s4481 + $0x210] sm:$0xff]
    %v4549 = vld [vmem:[%s4481 + $0x218] sm:$0xff]
    %v4550 = vld [vmem:[%s4481 + $0x220] sm:$0xff]
    %v4551 = vld [vmem:[%s4481 + $0x228] sm:$0xff]
    %v4552 = vld [vmem:[%s4481 + $0x230] sm:$0xff]
    %v4553 = vld [vmem:[%s4481 + $0x238] sm:$0xff]
    %v4554 = vld [vmem:[%s4481 + $0x240] sm:$0xff]
    %v4555 = vld [vmem:[%s4481 + $0x248] sm:$0xff]
    %v4556 = vld [vmem:[%s4481 + $0x250] sm:$0xff]
    %v4557 = vld [vmem:[%s4481 + $0x258] sm:$0xff]
    %v4558 = vld [vmem:[%s4481 + $0x260] sm:$0xff]
    %v4559 = vld [vmem:[%s4481 + $0x268] sm:$0xff]
    %v4560 = vld [vmem:[%s4481 + $0x270] sm:$0xff]
    %v4561 = vld [vmem:[%s4481 + $0x278] sm:$0xff]
    %4562 = vst [vmem:[#allocation1] ss:$4 sm:$0xff] %v4405
    %s4563 = scalar_lea.vmem [#allocation1], 1
    %4564 = vst [vmem:[%s4563] ss:$4 sm:$0xff] %v4409
    %s4565 = scalar_lea.vmem [#allocation1], 2
    %4566 = vst [vmem:[%s4565] ss:$4 sm:$0xff] %v4414
    %s4567 = scalar_lea.vmem [#allocation1], 3
    %4568 = vst [vmem:[%s4567] ss:$4 sm:$0xff] %v4418
    %s4569 = scalar_lea.vmem [#allocation1], 32
    %4570 = vst [vmem:[%s4569] ss:$4 sm:$0xff] %v4361
    %s4571 = scalar_lea.vmem [#allocation1], 33
    %4572 = vst [vmem:[%s4571] ss:$4 sm:$0xff] %v4410
    %s4573 = scalar_lea.vmem [#allocation1], 34
    %4574 = vst [vmem:[%s4573] ss:$4 sm:$0xff] %v4415
    %s4575 = scalar_lea.vmem [#allocation1], 35
    %4576 = vst [vmem:[%s4575] ss:$4 sm:$0xff] %v4368
    %v4577 = vld.sshfl [vmem:[#allocation1] sm:$0xff pattern:$0x73625140]
    %v4578 = vld.sshfl [vmem:[#allocation1 + $0x8] sm:$0xff pattern:$0x73625140]
    %v4579 = vld.sshfl [vmem:[#allocation1 + $0x10] sm:$0xff pattern:$0x73625140]
    %v4580 = vld.sshfl [vmem:[#allocation1 + $0x18] sm:$0xff pattern:$0x73625140]
    %v4581 = vld.sshfl [vmem:[#allocation1 + $0x20] sm:$0xff pattern:$0x73625140]
    %4582 = vst [vmem:[#allocation1] ss:$4 sm:$0xff] %v4422
    %4583 = vst [vmem:[%s4563] ss:$4 sm:$0xff] %v4427
    %4584 = vst [vmem:[%s4565] ss:$4 sm:$0xff] %v4431
    %4585 = vst [vmem:[%s4567] ss:$4 sm:$0xff] %v4435
    %4586 = vst [vmem:[%s4569] ss:$4 sm:$0xff] %v4423
    %4587 = vst [vmem:[%s4571] ss:$4 sm:$0xff] %v4428
    %4588 = vst [vmem:[%s4573] ss:$4 sm:$0xff] %v4372
    %4589 = vst [vmem:[%s4575] ss:$4 sm:$0xff] %v4436
    %v4590 = vld.sshfl [vmem:[#allocation1] sm:$0xff pattern:$0x73625140]
    %v4591 = vld.sshfl [vmem:[#allocation1 + $0x8] sm:$0xff pattern:$0x73625140]
    %v4592 = vld.sshfl [vmem:[#allocation1 + $0x10] sm:$0xff pattern:$0x73625140]
    %v4593 = vld.sshfl [vmem:[#allocation1 + $0x18] sm:$0xff pattern:$0x73625140]
    %v4594 = vld.sshfl [vmem:[#allocation1 + $0x20] sm:$0xff pattern:$0x73625140]
    %4595 = vst [vmem:[#allocation1] ss:$4 sm:$0xff] %v4440
    %4596 = vst [vmem:[%s4563] ss:$4 sm:$0xff] %v4444
    %4597 = vst [vmem:[%s4565] ss:$4 sm:$0xff] %v4448
    %4598 = vst [vmem:[%s4567] ss:$4 sm:$0xff] %v4453
    %4599 = vst [vmem:[%s4569] ss:$4 sm:$0xff] %v4441
    %4600 = vst [vmem:[%s4571] ss:$4 sm:$0xff] %v4376
    %4601 = vst [vmem:[%s4573] ss:$4 sm:$0xff] %v4449
    %4602 = vst [vmem:[%s4575] ss:$4 sm:$0xff] %v4454
    %v4603 = vld.sshfl [vmem:[#allocation1] sm:$0xff pattern:$0x73625140]
    %v4604 = vld.sshfl [vmem:[#allocation1 + $0x8] sm:$0xff pattern:$0x73625140]
    %v4605 = vld.sshfl [vmem:[#allocation1 + $0x10] sm:$0xff pattern:$0x73625140]
    %v4606 = vld.sshfl [vmem:[#allocation1 + $0x18] sm:$0xff pattern:$0x73625140]
    %v4607 = vld.sshfl [vmem:[#allocation1 + $0x20] sm:$0xff pattern:$0x73625140]
    %4608 = vst [vmem:[#allocation1] ss:$4 sm:$0xff] %v4457
    %4609 = vst [vmem:[%s4563] ss:$4 sm:$0xff] %v4461
    %4610 = vst [vmem:[%s4565] ss:$4 sm:$0xff] %v4466
    %4611 = vst [vmem:[%s4567] ss:$4 sm:$0xff] %v4470
    %4612 = vst [vmem:[%s4569] ss:$4 sm:$0xff] %v4380
    %4613 = vst [vmem:[%s4571] ss:$4 sm:$0xff] %v4462
    %4614 = vst [vmem:[%s4573] ss:$4 sm:$0xff] %v4467
    %4615 = vst [vmem:[%s4575] ss:$4 sm:$0xff] %v4384
    %v4616 = vld.sshfl [vmem:[#allocation1] sm:$0xff pattern:$0x73625140]
    %v4617 = vld.sshfl [vmem:[#allocation1 + $0x8] sm:$0xff pattern:$0x73625140]
    %v4618 = vld.sshfl [vmem:[#allocation1 + $0x10] sm:$0xff pattern:$0x73625140]
    %v4619 = vld.sshfl [vmem:[#allocation1 + $0x18] sm:$0xff pattern:$0x73625140]
    %v4620 = vld.sshfl [vmem:[#allocation1 + $0x20] sm:$0xff pattern:$0x73625140]
    %4621 = vst [vmem:[#allocation1] ss:$4 sm:$0xff] %v4474
    %4622 = vst [vmem:[%s4563] ss:$4 sm:$0xff] %v4479
    %4623 = vst [vmem:[%s4569] ss:$4 sm:$0xff] %v4475
    %4624 = vst [vmem:[%s4571] ss:$4 sm:$0xff] %v4480
    %v4625 = vld.sshfl [vmem:[#allocation1] sm:$0xff pattern:$0x73625140]
    %v4626 = vld.sshfl [vmem:[#allocation1 + $0x8] sm:$0xff pattern:$0x73625140]
    %v4627 = vld.sshfl [vmem:[#allocation1 + $0x10] sm:$0xff pattern:$0x73625140]
    %v4628 = vld.sshfl [vmem:[#allocation1 + $0x18] sm:$0xff pattern:$0x73625140]
    %v4629 = vld.sshfl [vmem:[#allocation1 + $0x20] sm:$0xff pattern:$0x73625140]
    %4655 = vmatpush.msra.mxu0 %v4497
    %4656 = vmatpush.msra.mxu0 %v4496
    %4657 = vmatpush.msra.mxu0 %v4495
    %4658 = vmatpush.msra.mxu0 %v4494
    %4659 = vmatpush.msra.mxu0 %v4493
    %4660 = vmatpush.msra.mxu0 %v4492
    %4661 = vmatpush.msra.mxu0 %v4491
    %4662 = vmatpush.msra.mxu0 %v4490
    %4663 = vmatpush.msra.mxu0 %v4489
    %4664 = vmatpush.msra.mxu0 %v4488
    %4665 = vmatpush.msra.mxu0 %v4487
    %4666 = vmatpush.msra.mxu0 %v4486
    %4667 = vmatpush.msra.mxu0 %v4485
    %4668 = vmatpush.msra.mxu0 %v4484
    %4669 = vmatpush.msra.mxu0 %v4483
    %4670 = vmatpush.msra.mxu0 %v4482
    %4671 = vmatmul.f32.gmra.mxu0 %v4577
    %v4672 = vpop.f32.mrf.mxu0
    %v4673 = vadd.f32 0.0, %v4672
    %4674 = vmatmul.f32.gmra.mxu0 %v4590
    %v4675 = vpop.f32.mrf.mxu0
    %v4676 = vadd.f32 0.0, %v4675
    %4677 = vmatmul.f32.gmra.mxu0 %v4603
    %v4678 = vpop.f32.mrf.mxu0
    %v4679 = vadd.f32 0.0, %v4678
    %4680 = vmatmul.f32.gmra.mxu0 %v4616
    %v4681 = vpop.f32.mrf.mxu0
    %v4682 = vadd.f32 0.0, %v4681
    %4683 = vmatmul.f32.gmra.mxu0 %v4625
    %v4684 = vpop.f32.mrf.mxu0
    %v4685 = vadd.f32 0.0, %v4684
    %4686 = vdwg.mxu0
    %4687 = vmatpush.msra.mxu0 %v4513
    %4688 = vmatpush.msra.mxu0 %v4512
    %4689 = vmatpush.msra.mxu0 %v4511
    %4690 = vmatpush.msra.mxu0 %v4510
    %4691 = vmatpush.msra.mxu0 %v4509
    %4692 = vmatpush.msra.mxu0 %v4508
    %4693 = vmatpush.msra.mxu0 %v4507
    %4694 = vmatpush.msra.mxu0 %v4506
    %4695 = vmatpush.msra.mxu0 %v4505
    %4696 = vmatpush.msra.mxu0 %v4504
    %4697 = vmatpush.msra.mxu0 %v4503
    %4698 = vmatpush.msra.mxu0 %v4502
    %4699 = vmatpush.msra.mxu0 %v4501
    %4700 = vmatpush.msra.mxu0 %v4500
    %4701 = vmatpush.msra.mxu0 %v4499
    %4702 = vmatpush.msra.mxu0 %v4498
    %4703 = vmatmul.f32.gmra.mxu0 %v4578
    %v4704 = vpop.f32.mrf.mxu0
    %v4705 = vadd.f32 %v4673, %v4704
    %4706 = vmatmul.f32.gmra.mxu0 %v4591
    %v4707 = vpop.f32.mrf.mxu0
    %v4708 = vadd.f32 %v4676, %v4707
    %4709 = vmatmul.f32.gmra.mxu0 %v4604
    %v4710 = vpop.f32.mrf.mxu0
    %v4711 = vadd.f32 %v4679, %v4710
    %4712 = vmatmul.f32.gmra.mxu0 %v4617
    %v4713 = vpop.f32.mrf.mxu0
    %v4714 = vadd.f32 %v4682, %v4713
    %4715 = vmatmul.f32.gmra.mxu0 %v4626
    %v4716 = vpop.f32.mrf.mxu0
    %v4717 = vadd.f32 %v4685, %v4716
    %4718 = vdwg.mxu0
    %4719 = vmatpush.msra.mxu0 %v4529
    %4720 = vmatpush.msra.mxu0 %v4528
    %4721 = vmatpush.msra.mxu0 %v4527
    %4722 = vmatpush.msra.mxu0 %v4526
    %4723 = vmatpush.msra.mxu0 %v4525
    %4724 = vmatpush.msra.mxu0 %v4524
    %4725 = vmatpush.msra.mxu0 %v4523
    %4726 = vmatpush.msra.mxu0 %v4522
    %4727 = vmatpush.msra.mxu0 %v4521
    %4728 = vmatpush.msra.mxu0 %v4520
    %4729 = vmatpush.msra.mxu0 %v4519
    %4730 = vmatpush.msra.mxu0 %v4518
    %4731 = vmatpush.msra.mxu0 %v4517
    %4732 = vmatpush.msra.mxu0 %v4516
    %4733 = vmatpush.msra.mxu0 %v4515
    %4734 = vmatpush.msra.mxu0 %v4514
    %4735 = vmatmul.f32.gmra.mxu0 %v4579
    %v4736 = vpop.f32.mrf.mxu0
    %v4737 = vadd.f32 %v4705, %v4736
    %4738 = vmatmul.f32.gmra.mxu0 %v4592
    %v4739 = vpop.f32.mrf.mxu0
    %v4740 = vadd.f32 %v4708, %v4739
    %4741 = vmatmul.f32.gmra.mxu0 %v4605
    %v4742 = vpop.f32.mrf.mxu0
    %v4743 = vadd.f32 %v4711, %v4742
    %4744 = vmatmul.f32.gmra.mxu0 %v4618
    %v4745 = vpop.f32.mrf.mxu0
    %v4746 = vadd.f32 %v4714, %v4745
    %4747 = vmatmul.f32.gmra.mxu0 %v4627
    %v4748 = vpop.f32.mrf.mxu0
    %v4749 = vadd.f32 %v4717, %v4748
    %4750 = vdwg.mxu0
    %4751 = vmatpush.msra.mxu0 %v4545
    %4752 = vmatpush.msra.mxu0 %v4544
    %4753 = vmatpush.msra.mxu0 %v4543
    %4754 = vmatpush.msra.mxu0 %v4542
    %4755 = vmatpush.msra.mxu0 %v4541
    %4756 = vmatpush.msra.mxu0 %v4540
    %4757 = vmatpush.msra.mxu0 %v4539
    %4758 = vmatpush.msra.mxu0 %v4538
    %4759 = vmatpush.msra.mxu0 %v4537
    %4760 = vmatpush.msra.mxu0 %v4536
    %4761 = vmatpush.msra.mxu0 %v4535
    %4762 = vmatpush.msra.mxu0 %v4534
    %4763 = vmatpush.msra.mxu0 %v4533
    %4764 = vmatpush.msra.mxu0 %v4532
    %4765 = vmatpush.msra.mxu0 %v4531
    %4766 = vmatpush.msra.mxu0 %v4530
    %4767 = vmatmul.f32.gmra.mxu0 %v4580
    %v4768 = vpop.f32.mrf.mxu0
    %v4769 = vadd.f32 %v4737, %v4768
    %4770 = vmatmul.f32.gmra.mxu0 %v4593
    %v4771 = vpop.f32.mrf.mxu0
    %v4772 = vadd.f32 %v4740, %v4771
    %4773 = vmatmul.f32.gmra.mxu0 %v4606
    %v4774 = vpop.f32.mrf.mxu0
    %v4775 = vadd.f32 %v4743, %v4774
    %4776 = vmatmul.f32.gmra.mxu0 %v4619
    %v4777 = vpop.f32.mrf.mxu0
    %v4778 = vadd.f32 %v4746, %v4777
    %4779 = vmatmul.f32.gmra.mxu0 %v4628
    %v4780 = vpop.f32.mrf.mxu0
    %v4781 = vadd.f32 %v4749, %v4780
    %4782 = vdwg.mxu0
    %4783 = vmatpush.msra.mxu0 %v4561
    %4784 = vmatpush.msra.mxu0 %v4560
    %4785 = vmatpush.msra.mxu0 %v4559
    %4786 = vmatpush.msra.mxu0 %v4558
    %4787 = vmatpush.msra.mxu0 %v4557
    %4788 = vmatpush.msra.mxu0 %v4556
    %4789 = vmatpush.msra.mxu0 %v4555
    %4790 = vmatpush.msra.mxu0 %v4554
    %4791 = vmatpush.msra.mxu0 %v4553
    %4792 = vmatpush.msra.mxu0 %v4552
    %4793 = vmatpush.msra.mxu0 %v4551
    %4794 = vmatpush.msra.mxu0 %v4550
    %4795 = vmatpush.msra.mxu0 %v4549
    %4796 = vmatpush.msra.mxu0 %v4548
    %4797 = vmatpush.msra.mxu0 %v4547
    %4798 = vmatpush.msra.mxu0 %v4546
    %4799 = vmatmul.f32.gmra.mxu0 %v4581
    %v4800 = vpop.f32.mrf.mxu0
    %v4801 = vadd.f32 %v4769, %v4800
    %4802 = vmatmul.f32.gmra.mxu0 %v4594
    %v4803 = vpop.f32.mrf.mxu0
    %v4804 = vadd.f32 %v4772, %v4803
    %4805 = vmatmul.f32.gmra.mxu0 %v4607
    %v4806 = vpop.f32.mrf.mxu0
    %v4807 = vadd.f32 %v4775, %v4806
    %4808 = vmatmul.f32.gmra.mxu0 %v4620
    %v4809 = vpop.f32.mrf.mxu0
    %v4810 = vadd.f32 %v4778, %v4809
    %4811 = vmatmul.f32.gmra.mxu0 %v4629
    %v4812 = vpop.f32.mrf.mxu0
    %v4813 = vadd.f32 %v4781, %v4812
    %4814 = vdwg.mxu0
    %v4815 = vadd.f32 %v4198, %v4801
    %v4816 = vadd.f32 %v4201, %v4804
    %v4817 = vadd.f32 %v4204, %v4807
    %v4818 = vadd.f32 %v4207, %v4810
    %v4819 = vadd.f32 %v4210, %v4813
    %4820 = vst [vmem:[#allocation1] ss:$4 sm:$0xff] %v2975
    %s4821 = scalar_lea.vmem [#allocation1], 1
    %4822 = vst [vmem:[%s4821] ss:$4 sm:$0xff] %v2925
    %s4823 = scalar_lea.vmem [#allocation1], 2
    %4824 = vst [vmem:[%s4823] ss:$4 sm:$0xff] %v2976
    %v4825 = vld.sshfl [vmem:[#allocation1] sm:$0xff pattern:$0x73625140]
    %s4826 = scalar_lea.vmem [#allocation1], 32
    %4827 = vst [vmem:[%s4826] ss:$4 sm:$0xff] %v2928
    %s4828 = scalar_lea.vmem [#allocation1], 33
    %4829 = vst [vmem:[%s4828] ss:$4 sm:$0xff] %v2979
    %s4830 = scalar_lea.vmem [#allocation1], 34
    %4831 = vst [vmem:[%s4830] ss:$4 sm:$0xff] %v2980
    %v4832 = vld.sshfl [vmem:[#allocation1 + $0x20] sm:$0xff pattern:$0x73625140]
    %4833 = vst [vmem:[#allocation1] ss:$4 sm:$0xff] %v2982
    %4834 = vst [vmem:[%s4821] ss:$4 sm:$0xff] %v2983
    %4835 = vst [vmem:[%s4823] ss:$4 sm:$0xff] %v2984
    %v4836 = vld.sshfl [vmem:[#allocation1] sm:$0xff pattern:$0x73625140]
    %4837 = vst [vmem:[%s4826] ss:$4 sm:$0xff] %v2986
    %4838 = vst [vmem:[%s4828] ss:$4 sm:$0xff] %v2987
    %4839 = vst [vmem:[%s4830] ss:$4 sm:$0xff] %v2937
    %v4840 = vld.sshfl [vmem:[#allocation1 + $0x20] sm:$0xff pattern:$0x73625140]
    %4841 = vst [vmem:[#allocation1] ss:$4 sm:$0xff] %v2990
    %4842 = vst [vmem:[%s4821] ss:$4 sm:$0xff] %v2940
    %4843 = vst [vmem:[%s4823] ss:$4 sm:$0xff] %v2991
    %v4844 = vld.sshfl [vmem:[#allocation1] sm:$0xff pattern:$0x73625140]
    %4845 = vst [vmem:[%s4826] ss:$4 sm:$0xff] %v2943
    %4846 = vst [vmem:[%s4828] ss:$4 sm:$0xff] %v2994
    %4847 = vst [vmem:[%s4830] ss:$4 sm:$0xff] %v2995
    %v4848 = vld.sshfl [vmem:[#allocation1 + $0x20] sm:$0xff pattern:$0x73625140]
    %4849 = vst [vmem:[#allocation1] ss:$4 sm:$0xff] %v2975
    %s4850 = scalar_lea.vmem [#allocation1], 1
    %4851 = vst [vmem:[%s4850] ss:$4 sm:$0xff] %v2925
    %s4852 = scalar_lea.vmem [#allocation1], 2
    %4853 = vst [vmem:[%s4852] ss:$4 sm:$0xff] %v2976
    %s4854 = scalar_lea.vmem [#allocation1], 3
    %4855 = vst [vmem:[%s4854] ss:$4 sm:$0xff] %v2977
    %v4856 = vld.sshfl [vmem:[#allocation1] sm:$0xff pattern:$0x73625140]
    %s4857 = scalar_lea.vmem [#allocation1], 32
    %4858 = vst [vmem:[%s4857] ss:$4 sm:$0xff] %v2928
    %s4859 = scalar_lea.vmem [#allocation1], 33
    %4860 = vst [vmem:[%s4859] ss:$4 sm:$0xff] %v2979
    %s4861 = scalar_lea.vmem [#allocation1], 34
    %4862 = vst [vmem:[%s4861] ss:$4 sm:$0xff] %v2980
    %s4863 = scalar_lea.vmem [#allocation1], 35
    %4864 = vst [vmem:[%s4863] ss:$4 sm:$0xff] %v2981
    %v4865 = vld.sshfl [vmem:[#allocation1 + $0x20] sm:$0xff pattern:$0x73625140]
    %4866 = vst [vmem:[#allocation1] ss:$4 sm:$0xff] %v2982
    %4867 = vst [vmem:[%s4850] ss:$4 sm:$0xff] %v2983
    %4868 = vst [vmem:[%s4852] ss:$4 sm:$0xff] %v2984
    %4869 = vst [vmem:[%s4854] ss:$4 sm:$0xff] %v2934
    %v4870 = vld.sshfl [vmem:[#allocation1] sm:$0xff pattern:$0x73625140]
    %4871 = vst [vmem:[%s4857] ss:$4 sm:$0xff] %v2986
    %4872 = vst [vmem:[%s4859] ss:$4 sm:$0xff] %v2987
    %4873 = vst [vmem:[%s4861] ss:$4 sm:$0xff] %v2937
    %4874 = vst [vmem:[%s4863] ss:$4 sm:$0xff] %v2988
    %v4875 = vld.sshfl [vmem:[#allocation1 + $0x20] sm:$0xff pattern:$0x73625140]
    %4876 = vst [vmem:[#allocation1] ss:$4 sm:$0xff] %v2990
    %4877 = vst [vmem:[%s4850] ss:$4 sm:$0xff] %v2940
    %4878 = vst [vmem:[%s4852] ss:$4 sm:$0xff] %v2991
    %4879 = vst [vmem:[%s4854] ss:$4 sm:$0xff] %v2992
    %v4880 = vld.sshfl [vmem:[#allocation1] sm:$0xff pattern:$0x73625140]
    %4881 = vst [vmem:[%s4857] ss:$4 sm:$0xff] %v2943
    %4882 = vst [vmem:[%s4859] ss:$4 sm:$0xff] %v2994
    %4883 = vst [vmem:[%s4861] ss:$4 sm:$0xff] %v2995
    %4884 = vst [vmem:[%s4863] ss:$4 sm:$0xff] %v2996
    %v4885 = vld.sshfl [vmem:[#allocation1 + $0x20] sm:$0xff pattern:$0x73625140]
    %v4886 = vrot.slane %v4856, 1
    %v4887 = vrot.slane %v4865, 1
    %v4888 = vrot.slane %v4870, 1
    %v4889 = vrot.slane %v4875, 1
    %v4890 = vrot.slane %v4880, 1
    %v4891 = vrot.slane %v4885, 1
    %4892 = vst [vmem:[#allocation1] ss:$4 sm:$0xff] %v2925
    %s4893 = scalar_lea.vmem [#allocation1], 1
    %4894 = vst [vmem:[%s4893] ss:$4 sm:$0xff] %v2976
    %s4895 = scalar_lea.vmem [#allocation1], 2
    %4896 = vst [vmem:[%s4895] ss:$4 sm:$0xff] %v2977
    %v4897 = vld.sshfl [vmem:[#allocation1] sm:$0xff pattern:$0x73625140]
    %s4898 = scalar_lea.vmem [#allocation1], 32
    %4899 = vst [vmem:[%s4898] ss:$4 sm:$0xff] %v2979
    %s4900 = scalar_lea.vmem [#allocation1], 33
    %4901 = vst [vmem:[%s4900] ss:$4 sm:$0xff] %v2980
    %s4902 = scalar_lea.vmem [#allocation1], 34
    %4903 = vst [vmem:[%s4902] ss:$4 sm:$0xff] %v2981
    %v4904 = vld.sshfl [vmem:[#allocation1 + $0x20] sm:$0xff pattern:$0x73625140]
    %4905 = vst [vmem:[#allocation1] ss:$4 sm:$0xff] %v2983
    %4906 = vst [vmem:[%s4893] ss:$4 sm:$0xff] %v2984
    %4907 = vst [vmem:[%s4895] ss:$4 sm:$0xff] %v2934
    %v4908 = vld.sshfl [vmem:[#allocation1] sm:$0xff pattern:$0x73625140]
    %4909 = vst [vmem:[%s4898] ss:$4 sm:$0xff] %v2987
    %4910 = vst [vmem:[%s4900] ss:$4 sm:$0xff] %v2937
    %4911 = vst [vmem:[%s4902] ss:$4 sm:$0xff] %v2988
    %v4912 = vld.sshfl [vmem:[#allocation1 + $0x20] sm:$0xff pattern:$0x73625140]
    %4913 = vst [vmem:[#allocation1] ss:$4 sm:$0xff] %v2940
    %4914 = vst [vmem:[%s4893] ss:$4 sm:$0xff] %v2991
    %4915 = vst [vmem:[%s4895] ss:$4 sm:$0xff] %v2992
    %v4916 = vld.sshfl [vmem:[#allocation1] sm:$0xff pattern:$0x73625140]
    %4917 = vst [vmem:[%s4898] ss:$4 sm:$0xff] %v2994
    %4918 = vst [vmem:[%s4900] ss:$4 sm:$0xff] %v2995
    %4919 = vst [vmem:[%s4902] ss:$4 sm:$0xff] %v2996
    %v4920 = vld.sshfl [vmem:[#allocation1 + $0x20] sm:$0xff pattern:$0x73625140]
    %4921 = vst [vmem:[#allocation1] ss:$4 sm:$0xff] %v2925
    %s4922 = scalar_lea.vmem [#allocation1], 1
    %4923 = vst [vmem:[%s4922] ss:$4 sm:$0xff] %v2976
    %s4924 = scalar_lea.vmem [#allocation1], 2
    %4925 = vst [vmem:[%s4924] ss:$4 sm:$0xff] %v2977
    %s4926 = scalar_lea.vmem [#allocation1], 3
    %4927 = vst [vmem:[%s4926] ss:$4 sm:$0xff] %v2978
    %v4928 = vld.sshfl [vmem:[#allocation1] sm:$0xff pattern:$0x73625140]
    %s4929 = scalar_lea.vmem [#allocation1], 32
    %4930 = vst [vmem:[%s4929] ss:$4 sm:$0xff] %v2979
    %s4931 = scalar_lea.vmem [#allocation1], 33
    %4932 = vst [vmem:[%s4931] ss:$4 sm:$0xff] %v2980
    %s4933 = scalar_lea.vmem [#allocation1], 34
    %4934 = vst [vmem:[%s4933] ss:$4 sm:$0xff] %v2981
    %s4935 = scalar_lea.vmem [#allocation1], 35
    %4936 = vst [vmem:[%s4935] ss:$4 sm:$0xff] %v2931
    %v4937 = vld.sshfl [vmem:[#allocation1 + $0x20] sm:$0xff pattern:$0x73625140]
    %4938 = vst [vmem:[#allocation1] ss:$4 sm:$0xff] %v2983
    %4939 = vst [vmem:[%s4922] ss:$4 sm:$0xff] %v2984
    %4940 = vst [vmem:[%s4924] ss:$4 sm:$0xff] %v2934
    %4941 = vst [vmem:[%s4926] ss:$4 sm:$0xff] %v2985
    %v4942 = vld.sshfl [vmem:[#allocation1] sm:$0xff pattern:$0x73625140]
    %4943 = vst [vmem:[%s4929] ss:$4 sm:$0xff] %v2987
    %4944 = vst [vmem:[%s4931] ss:$4 sm:$0xff] %v2937
    %4945 = vst [vmem:[%s4933] ss:$4 sm:$0xff] %v2988
    %4946 = vst [vmem:[%s4935] ss:$4 sm:$0xff] %v2989
    %v4947 = vld.sshfl [vmem:[#allocation1 + $0x20] sm:$0xff pattern:$0x73625140]
    %4948 = vst [vmem:[#allocation1] ss:$4 sm:$0xff] %v2940
    %4949 = vst [vmem:[%s4922] ss:$4 sm:$0xff] %v2991
    %4950 = vst [vmem:[%s4924] ss:$4 sm:$0xff] %v2992
    %4951 = vst [vmem:[%s4926] ss:$4 sm:$0xff] %v2993
    %v4952 = vld.sshfl [vmem:[#allocation1] sm:$0xff pattern:$0x73625140]
    %4953 = vst [vmem:[%s4929] ss:$4 sm:$0xff] %v2994
    %4954 = vst [vmem:[%s4931] ss:$4 sm:$0xff] %v2995
    %4955 = vst [vmem:[%s4933] ss:$4 sm:$0xff] %v2996
    %4956 = vst [vmem:[%s4935] ss:$4 sm:$0xff] %v2946
    %v4957 = vld.sshfl [vmem:[#allocation1 + $0x20] sm:$0xff pattern:$0x73625140]
    %v4958 = vrot.slane %v4928, 1
    %v4959 = vrot.slane %v4937, 1
    %v4960 = vrot.slane %v4942, 1
    %v4961 = vrot.slane %v4947, 1
    %v4962 = vrot.slane %v4952, 1
    %v4963 = vrot.slane %v4957, 1
    %4964 = vst [vmem:[#allocation1] ss:$4 sm:$0xff] %v2976
    %s4965 = scalar_lea.vmem [#allocation1], 1
    %4966 = vst [vmem:[%s4965] ss:$4 sm:$0xff] %v2977
    %s4967 = scalar_lea.vmem [#allocation1], 2
    %4968 = vst [vmem:[%s4967] ss:$4 sm:$0xff] %v2978
    %v4969 = vld.sshfl [vmem:[#allocation1] sm:$0xff pattern:$0x73625140]
    %s4970 = scalar_lea.vmem [#allocation1], 32
    %4971 = vst [vmem:[%s4970] ss:$4 sm:$0xff] %v2980
    %s4972 = scalar_lea.vmem [#allocation1], 33
    %4973 = vst [vmem:[%s4972] ss:$4 sm:$0xff] %v2981
    %s4974 = scalar_lea.vmem [#allocation1], 34
    %4975 = vst [vmem:[%s4974] ss:$4 sm:$0xff] %v2931
    %v4976 = vld.sshfl [vmem:[#allocation1 + $0x20] sm:$0xff pattern:$0x73625140]
    %4977 = vst [vmem:[#allocation1] ss:$4 sm:$0xff] %v2984
    %4978 = vst [vmem:[%s4965] ss:$4 sm:$0xff] %v2934
    %4979 = vst [vmem:[%s4967] ss:$4 sm:$0xff] %v2985
    %v4980 = vld.sshfl [vmem:[#allocation1] sm:$0xff pattern:$0x73625140]
    %4981 = vst [vmem:[%s4970] ss:$4 sm:$0xff] %v2937
    %4982 = vst [vmem:[%s4972] ss:$4 sm:$0xff] %v2988
    %4983 = vst [vmem:[%s4974] ss:$4 sm:$0xff] %v2989
    %v4984 = vld.sshfl [vmem:[#allocation1 + $0x20] sm:$0xff pattern:$0x73625140]
    %4985 = vst [vmem:[#allocation1] ss:$4 sm:$0xff] %v2991
    %4986 = vst [vmem:[%s4965] ss:$4 sm:$0xff] %v2992
    %4987 = vst [vmem:[%s4967] ss:$4 sm:$0xff] %v2993
    %v4988 = vld.sshfl [vmem:[#allocation1] sm:$0xff pattern:$0x73625140]
    %4989 = vst [vmem:[%s4970] ss:$4 sm:$0xff] %v2995
    %4990 = vst [vmem:[%s4972] ss:$4 sm:$0xff] %v2996
    %4991 = vst [vmem:[%s4974] ss:$4 sm:$0xff] %v2946
    %v4992 = vld.sshfl [vmem:[#allocation1 + $0x20] sm:$0xff pattern:$0x73625140]
    %v4993 = vrot.slane %v4886, 6
    %v4994 = vrot.slane %v4897, 4
    %v4995 = vrot.slane %v4958, 2
    %v4996 = vrot.slane %v4887, 6
    %v4997 = vrot.slane %v4904, 4
    %v4998 = vrot.slane %v4959, 2
    %v4999 = vrot.slane %v4888, 6
    %v5000 = vrot.slane %v4908, 4
    %v5001 = vrot.slane %v4960, 2
    %v5002 = vrot.slane %v4889, 6
    %v5003 = vrot.slane %v4912, 4
    %v5004 = vrot.slane %v4961, 2
    %v5005 = vrot.slane %v4890, 6
    %v5006 = vrot.slane %v4916, 4
    %v5007 = vrot.slane %v4962, 2
    %v5008 = vrot.slane %v4891, 6
    %v5009 = vrot.slane %v4920, 4
    %v5010 = vrot.slane %v4963, 2
    %v5011 = vsel %vm3192, %v4825, %v4993
    %v5012 = vsel %vm3194, %v4994, %v4995
    %v5013 = vsel %vm3196, %v5011, %v5012
    %v5014 = vsel %vm3198, %v4825, %v4993
    %v5015 = vsel %vm3200, %v4995, %v4994
    %v5016 = vsel %vm3202, %v5014, %v5015
    %v5017 = vrot.slane %v5016, 2
    %v5018 = vrot.slane %v4969, 2
    %v5019 = vsel %vm3194, %v4825, %v4993
    %v5020 = vsel %vm3192, %v4994, %v4995
    %v5021 = vsel %vm3196, %v5020, %v5019
    %v5022 = vrot.slane %v5021, 4
    %v5023 = vrot.slane %v4969, 4
    %v5024 = vsel %vm3192, %v4832, %v4996
    %v5025 = vsel %vm3194, %v4997, %v4998
    %v5026 = vsel %vm3196, %v5024, %v5025
    %v5027 = vsel %vm3198, %v4832, %v4996
    %v5028 = vsel %vm3200, %v4998, %v4997
    %v5029 = vsel %vm3202, %v5027, %v5028
    %v5030 = vrot.slane %v5029, 2
    %v5031 = vrot.slane %v4976, 2
    %v5032 = vsel %vm3194, %v4832, %v4996
    %v5033 = vsel %vm3192, %v4997, %v4998
    %v5034 = vsel %vm3196, %v5033, %v5032
    %v5035 = vrot.slane %v5034, 4
    %v5036 = vrot.slane %v4976, 4
    %v5037 = vsel %vm3192, %v4836, %v4999
    %v5038 = vsel %vm3194, %v5000, %v5001
    %v5039 = vsel %vm3196, %v5037, %v5038
    %v5040 = vsel %vm3198, %v4836, %v4999
    %v5041 = vsel %vm3200, %v5001, %v5000
    %v5042 = vsel %vm3202, %v5040, %v5041
    %v5043 = vrot.slane %v5042, 2
    %v5044 = vrot.slane %v4980, 2
    %v5045 = vsel %vm3194, %v4836, %v4999
    %v5046 = vsel %vm3192, %v5000, %v5001
    %v5047 = vsel %vm3196, %v5046, %v5045
    %v5048 = vrot.slane %v5047, 4
    %v5049 = vrot.slane %v4980, 4
    %v5050 = vsel %vm3192, %v4840, %v5002
    %v5051 = vsel %vm3194, %v5003, %v5004
    %v5052 = vsel %vm3196, %v5050, %v5051
    %v5053 = vsel %vm3198, %v4840, %v5002
    %v5054 = vsel %vm3200, %v5004, %v5003
    %v5055 = vsel %vm3202, %v5053, %v5054
    %v5056 = vrot.slane %v5055, 2
    %v5057 = vrot.slane %v4984, 2
    %v5058 = vsel %vm3194, %v4840, %v5002
    %v5059 = vsel %vm3192, %v5003, %v5004
    %v5060 = vsel %vm3196, %v5059, %v5058
    %v5061 = vrot.slane %v5060, 4
    %v5062 = vrot.slane %v4984, 4
    %v5063 = vsel %vm3192, %v4844, %v5005
    %v5064 = vsel %vm3194, %v5006, %v5007
    %v5065 = vsel %vm3196, %v5063, %v5064
    %v5066 = vsel %vm3198, %v4844, %v5005
    %v5067 = vsel %vm3200, %v5007, %v5006
    %v5068 = vsel %vm3202, %v5066, %v5067
    %v5069 = vrot.slane %v5068, 2
    %v5070 = vrot.slane %v4988, 2
    %v5071 = vsel %vm3194, %v4844, %v5005
    %v5072 = vsel %vm3192, %v5006, %v5007
    %v5073 = vsel %vm3196, %v5072, %v5071
    %v5074 = vrot.slane %v5073, 4
    %v5075 = vrot.slane %v4988, 4
    %v5076 = vsel %vm3192, %v4848, %v5008
    %v5077 = vsel %vm3194, %v5009, %v5010
    %v5078 = vsel %vm3196, %v5076, %v5077
    %v5079 = vsel %vm3198, %v4848, %v5008
    %v5080 = vsel %vm3200, %v5010, %v5009
    %v5081 = vsel %vm3202, %v5079, %v5080
    %v5082 = vrot.slane %v5081, 2
    %v5083 = vrot.slane %v4992, 2
    %v5084 = vsel %vm3194, %v4848, %v5008
    %v5085 = vsel %vm3192, %v5009, %v5010
    %v5086 = vsel %vm3196, %v5085, %v5084
    %v5087 = vrot.slane %v5086, 4
    %v5088 = vrot.slane %v4992, 4
    %s5089 = scalar_lea.vmem %s2, 1920
    %v5090 = vld [vmem:[%s5089] sm:$0xff]
    %v5091 = vld [vmem:[%s5089 + $0x8] sm:$0xff]
    %v5092 = vld [vmem:[%s5089 + $0x10] sm:$0xff]
    %v5093 = vld [vmem:[%s5089 + $0x18] sm:$0xff]
    %v5094 = vld [vmem:[%s5089 + $0x20] sm:$0xff]
    %v5095 = vld [vmem:[%s5089 + $0x28] sm:$0xff]
    %v5096 = vld [vmem:[%s5089 + $0x30] sm:$0xff]
    %v5097 = vld [vmem:[%s5089 + $0x38] sm:$0xff]
    %v5098 = vld [vmem:[%s5089 + $0x40] sm:$0xff]
    %v5099 = vld [vmem:[%s5089 + $0x48] sm:$0xff]
    %v5100 = vld [vmem:[%s5089 + $0x50] sm:$0xff]
    %v5101 = vld [vmem:[%s5089 + $0x58] sm:$0xff]
    %v5102 = vld [vmem:[%s5089 + $0x60] sm:$0xff]
    %v5103 = vld [vmem:[%s5089 + $0x68] sm:$0xff]
    %v5104 = vld [vmem:[%s5089 + $0x70] sm:$0xff]
    %v5105 = vld [vmem:[%s5089 + $0x78] sm:$0xff]
    %v5106 = vld [vmem:[%s5089 + $0x80] sm:$0xff]
    %v5107 = vld [vmem:[%s5089 + $0x88] sm:$0xff]
    %v5108 = vld [vmem:[%s5089 + $0x90] sm:$0xff]
    %v5109 = vld [vmem:[%s5089 + $0x98] sm:$0xff]
    %v5110 = vld [vmem:[%s5089 + $0xa0] sm:$0xff]
    %v5111 = vld [vmem:[%s5089 + $0xa8] sm:$0xff]
    %v5112 = vld [vmem:[%s5089 + $0xb0] sm:$0xff]
    %v5113 = vld [vmem:[%s5089 + $0xb8] sm:$0xff]
    %v5114 = vld [vmem:[%s5089 + $0xc0] sm:$0xff]
    %v5115 = vld [vmem:[%s5089 + $0xc8] sm:$0xff]
    %v5116 = vld [vmem:[%s5089 + $0xd0] sm:$0xff]
    %v5117 = vld [vmem:[%s5089 + $0xd8] sm:$0xff]
    %v5118 = vld [vmem:[%s5089 + $0xe0] sm:$0xff]
    %v5119 = vld [vmem:[%s5089 + $0xe8] sm:$0xff]
    %v5120 = vld [vmem:[%s5089 + $0xf0] sm:$0xff]
    %v5121 = vld [vmem:[%s5089 + $0xf8] sm:$0xff]
    %v5122 = vld [vmem:[%s5089 + $0x100] sm:$0xff]
    %v5123 = vld [vmem:[%s5089 + $0x108] sm:$0xff]
    %v5124 = vld [vmem:[%s5089 + $0x110] sm:$0xff]
    %v5125 = vld [vmem:[%s5089 + $0x118] sm:$0xff]
    %v5126 = vld [vmem:[%s5089 + $0x120] sm:$0xff]
    %v5127 = vld [vmem:[%s5089 + $0x128] sm:$0xff]
    %v5128 = vld [vmem:[%s5089 + $0x130] sm:$0xff]
    %v5129 = vld [vmem:[%s5089 + $0x138] sm:$0xff]
    %v5130 = vld [vmem:[%s5089 + $0x140] sm:$0xff]
    %v5131 = vld [vmem:[%s5089 + $0x148] sm:$0xff]
    %v5132 = vld [vmem:[%s5089 + $0x150] sm:$0xff]
    %v5133 = vld [vmem:[%s5089 + $0x158] sm:$0xff]
    %v5134 = vld [vmem:[%s5089 + $0x160] sm:$0xff]
    %v5135 = vld [vmem:[%s5089 + $0x168] sm:$0xff]
    %v5136 = vld [vmem:[%s5089 + $0x170] sm:$0xff]
    %v5137 = vld [vmem:[%s5089 + $0x178] sm:$0xff]
    %v5138 = vld [vmem:[%s5089 + $0x180] sm:$0xff]
    %v5139 = vld [vmem:[%s5089 + $0x188] sm:$0xff]
    %v5140 = vld [vmem:[%s5089 + $0x190] sm:$0xff]
    %v5141 = vld [vmem:[%s5089 + $0x198] sm:$0xff]
    %v5142 = vld [vmem:[%s5089 + $0x1a0] sm:$0xff]
    %v5143 = vld [vmem:[%s5089 + $0x1a8] sm:$0xff]
    %v5144 = vld [vmem:[%s5089 + $0x1b0] sm:$0xff]
    %v5145 = vld [vmem:[%s5089 + $0x1b8] sm:$0xff]
    %v5146 = vld [vmem:[%s5089 + $0x1c0] sm:$0xff]
    %v5147 = vld [vmem:[%s5089 + $0x1c8] sm:$0xff]
    %v5148 = vld [vmem:[%s5089 + $0x1d0] sm:$0xff]
    %v5149 = vld [vmem:[%s5089 + $0x1d8] sm:$0xff]
    %v5150 = vld [vmem:[%s5089 + $0x1e0] sm:$0xff]
    %v5151 = vld [vmem:[%s5089 + $0x1e8] sm:$0xff]
    %v5152 = vld [vmem:[%s5089 + $0x1f0] sm:$0xff]
    %v5153 = vld [vmem:[%s5089 + $0x1f8] sm:$0xff]
    %v5154 = vld [vmem:[%s5089 + $0x200] sm:$0xff]
    %v5155 = vld [vmem:[%s5089 + $0x208] sm:$0xff]
    %v5156 = vld [vmem:[%s5089 + $0x210] sm:$0xff]
    %v5157 = vld [vmem:[%s5089 + $0x218] sm:$0xff]
    %v5158 = vld [vmem:[%s5089 + $0x220] sm:$0xff]
    %v5159 = vld [vmem:[%s5089 + $0x228] sm:$0xff]
    %v5160 = vld [vmem:[%s5089 + $0x230] sm:$0xff]
    %v5161 = vld [vmem:[%s5089 + $0x238] sm:$0xff]
    %v5162 = vld [vmem:[%s5089 + $0x240] sm:$0xff]
    %v5163 = vld [vmem:[%s5089 + $0x248] sm:$0xff]
    %v5164 = vld [vmem:[%s5089 + $0x250] sm:$0xff]
    %v5165 = vld [vmem:[%s5089 + $0x258] sm:$0xff]
    %v5166 = vld [vmem:[%s5089 + $0x260] sm:$0xff]
    %v5167 = vld [vmem:[%s5089 + $0x268] sm:$0xff]
    %v5168 = vld [vmem:[%s5089 + $0x270] sm:$0xff]
    %v5169 = vld [vmem:[%s5089 + $0x278] sm:$0xff]
    %5170 = vst [vmem:[#allocation1] ss:$4 sm:$0xff] %v5013
    %s5171 = scalar_lea.vmem [#allocation1], 1
    %5172 = vst [vmem:[%s5171] ss:$4 sm:$0xff] %v5017
    %s5173 = scalar_lea.vmem [#allocation1], 2
    %5174 = vst [vmem:[%s5173] ss:$4 sm:$0xff] %v5022
    %s5175 = scalar_lea.vmem [#allocation1], 3
    %5176 = vst [vmem:[%s5175] ss:$4 sm:$0xff] %v5026
    %s5177 = scalar_lea.vmem [#allocation1], 32
    %5178 = vst [vmem:[%s5177] ss:$4 sm:$0xff] %v4969
    %s5179 = scalar_lea.vmem [#allocation1], 33
    %5180 = vst [vmem:[%s5179] ss:$4 sm:$0xff] %v5018
    %s5181 = scalar_lea.vmem [#allocation1], 34
    %5182 = vst [vmem:[%s5181] ss:$4 sm:$0xff] %v5023
    %s5183 = scalar_lea.vmem [#allocation1], 35
    %5184 = vst [vmem:[%s5183] ss:$4 sm:$0xff] %v4976
    %v5185 = vld.sshfl [vmem:[#allocation1] sm:$0xff pattern:$0x73625140]
    %v5186 = vld.sshfl [vmem:[#allocation1 + $0x8] sm:$0xff pattern:$0x73625140]
    %v5187 = vld.sshfl [vmem:[#allocation1 + $0x10] sm:$0xff pattern:$0x73625140]
    %v5188 = vld.sshfl [vmem:[#allocation1 + $0x18] sm:$0xff pattern:$0x73625140]
    %v5189 = vld.sshfl [vmem:[#allocation1 + $0x20] sm:$0xff pattern:$0x73625140]
    %5190 = vst [vmem:[#allocation1] ss:$4 sm:$0xff] %v5030
    %5191 = vst [vmem:[%s5171] ss:$4 sm:$0xff] %v5035
    %5192 = vst [vmem:[%s5173] ss:$4 sm:$0xff] %v5039
    %5193 = vst [vmem:[%s5175] ss:$4 sm:$0xff] %v5043
    %5194 = vst [vmem:[%s5177] ss:$4 sm:$0xff] %v5031
    %5195 = vst [vmem:[%s5179] ss:$4 sm:$0xff] %v5036
    %5196 = vst [vmem:[%s5181] ss:$4 sm:$0xff] %v4980
    %5197 = vst [vmem:[%s5183] ss:$4 sm:$0xff] %v5044
    %v5198 = vld.sshfl [vmem:[#allocation1] sm:$0xff pattern:$0x73625140]
    %v5199 = vld.sshfl [vmem:[#allocation1 + $0x8] sm:$0xff pattern:$0x73625140]
    %v5200 = vld.sshfl [vmem:[#allocation1 + $0x10] sm:$0xff pattern:$0x73625140]
    %v5201 = vld.sshfl [vmem:[#allocation1 + $0x18] sm:$0xff pattern:$0x73625140]
    %v5202 = vld.sshfl [vmem:[#allocation1 + $0x20] sm:$0xff pattern:$0x73625140]
    %5203 = vst [vmem:[#allocation1] ss:$4 sm:$0xff] %v5048
    %5204 = vst [vmem:[%s5171] ss:$4 sm:$0xff] %v5052
    %5205 = vst [vmem:[%s5173] ss:$4 sm:$0xff] %v5056
    %5206 = vst [vmem:[%s5175] ss:$4 sm:$0xff] %v5061
    %5207 = vst [vmem:[%s5177] ss:$4 sm:$0xff] %v5049
    %5208 = vst [vmem:[%s5179] ss:$4 sm:$0xff] %v4984
    %5209 = vst [vmem:[%s5181] ss:$4 sm:$0xff] %v5057
    %5210 = vst [vmem:[%s5183] ss:$4 sm:$0xff] %v5062
    %v5211 = vld.sshfl [vmem:[#allocation1] sm:$0xff pattern:$0x73625140]
    %v5212 = vld.sshfl [vmem:[#allocation1 + $0x8] sm:$0xff pattern:$0x73625140]
    %v5213 = vld.sshfl [vmem:[#allocation1 + $0x10] sm:$0xff pattern:$0x73625140]
    %v5214 = vld.sshfl [vmem:[#allocation1 + $0x18] sm:$0xff pattern:$0x73625140]
    %v5215 = vld.sshfl [vmem:[#allocation1 + $0x20] sm:$0xff pattern:$0x73625140]
    %5216 = vst [vmem:[#allocation1] ss:$4 sm:$0xff] %v5065
    %5217 = vst [vmem:[%s5171] ss:$4 sm:$0xff] %v5069
    %5218 = vst [vmem:[%s5173] ss:$4 sm:$0xff] %v5074
    %5219 = vst [vmem:[%s5175] ss:$4 sm:$0xff] %v5078
    %5220 = vst [vmem:[%s5177] ss:$4 sm:$0xff] %v4988
    %5221 = vst [vmem:[%s5179] ss:$4 sm:$0xff] %v5070
    %5222 = vst [vmem:[%s5181] ss:$4 sm:$0xff] %v5075
    %5223 = vst [vmem:[%s5183] ss:$4 sm:$0xff] %v4992
    %v5224 = vld.sshfl [vmem:[#allocation1] sm:$0xff pattern:$0x73625140]
    %v5225 = vld.sshfl [vmem:[#allocation1 + $0x8] sm:$0xff pattern:$0x73625140]
    %v5226 = vld.sshfl [vmem:[#allocation1 + $0x10] sm:$0xff pattern:$0x73625140]
    %v5227 = vld.sshfl [vmem:[#allocation1 + $0x18] sm:$0xff pattern:$0x73625140]
    %v5228 = vld.sshfl [vmem:[#allocation1 + $0x20] sm:$0xff pattern:$0x73625140]
    %5229 = vst [vmem:[#allocation1] ss:$4 sm:$0xff] %v5082
    %5230 = vst [vmem:[%s5171] ss:$4 sm:$0xff] %v5087
    %5231 = vst [vmem:[%s5177] ss:$4 sm:$0xff] %v5083
    %5232 = vst [vmem:[%s5179] ss:$4 sm:$0xff] %v5088
    %v5233 = vld.sshfl [vmem:[#allocation1] sm:$0xff pattern:$0x73625140]
    %v5234 = vld.sshfl [vmem:[#allocation1 + $0x8] sm:$0xff pattern:$0x73625140]
    %v5235 = vld.sshfl [vmem:[#allocation1 + $0x10] sm:$0xff pattern:$0x73625140]
    %v5236 = vld.sshfl [vmem:[#allocation1 + $0x18] sm:$0xff pattern:$0x73625140]
    %v5237 = vld.sshfl [vmem:[#allocation1 + $0x20] sm:$0xff pattern:$0x73625140]
    %5263 = vmatpush.msra.mxu0 %v5105
    %5264 = vmatpush.msra.mxu0 %v5104
    %5265 = vmatpush.msra.mxu0 %v5103
    %5266 = vmatpush.msra.mxu0 %v5102
    %5267 = vmatpush.msra.mxu0 %v5101
    %5268 = vmatpush.msra.mxu0 %v5100
    %5269 = vmatpush.msra.mxu0 %v5099
    %5270 = vmatpush.msra.mxu0 %v5098
    %5271 = vmatpush.msra.mxu0 %v5097
    %5272 = vmatpush.msra.mxu0 %v5096
    %5273 = vmatpush.msra.mxu0 %v5095
    %5274 = vmatpush.msra.mxu0 %v5094
    %5275 = vmatpush.msra.mxu0 %v5093
    %5276 = vmatpush.msra.mxu0 %v5092
    %5277 = vmatpush.msra.mxu0 %v5091
    %5278 = vmatpush.msra.mxu0 %v5090
    %5279 = vmatmul.f32.gmra.mxu0 %v5185
    %v5280 = vpop.f32.mrf.mxu0
    %v5281 = vadd.f32 0.0, %v5280
    %5282 = vmatmul.f32.gmra.mxu0 %v5198
    %v5283 = vpop.f32.mrf.mxu0
    %v5284 = vadd.f32 0.0, %v5283
    %5285 = vmatmul.f32.gmra.mxu0 %v5211
    %v5286 = vpop.f32.mrf.mxu0
    %v5287 = vadd.f32 0.0, %v5286
    %5288 = vmatmul.f32.gmra.mxu0 %v5224
    %v5289 = vpop.f32.mrf.mxu0
    %v5290 = vadd.f32 0.0, %v5289
    %5291 = vmatmul.f32.gmra.mxu0 %v5233
    %v5292 = vpop.f32.mrf.mxu0
    %v5293 = vadd.f32 0.0, %v5292
    %5294 = vdwg.mxu0
    %5295 = vmatpush.msra.mxu0 %v5121
    %5296 = vmatpush.msra.mxu0 %v5120
    %5297 = vmatpush.msra.mxu0 %v5119
    %5298 = vmatpush.msra.mxu0 %v5118
    %5299 = vmatpush.msra.mxu0 %v5117
    %5300 = vmatpush.msra.mxu0 %v5116
    %5301 = vmatpush.msra.mxu0 %v5115
    %5302 = vmatpush.msra.mxu0 %v5114
    %5303 = vmatpush.msra.mxu0 %v5113
    %5304 = vmatpush.msra.mxu0 %v5112
    %5305 = vmatpush.msra.mxu0 %v5111
    %5306 = vmatpush.msra.mxu0 %v5110
    %5307 = vmatpush.msra.mxu0 %v5109
    %5308 = vmatpush.msra.mxu0 %v5108
    %5309 = vmatpush.msra.mxu0 %v5107
    %5310 = vmatpush.msra.mxu0 %v5106
    %5311 = vmatmul.f32.gmra.mxu0 %v5186
    %v5312 = vpop.f32.mrf.mxu0
    %v5313 = vadd.f32 %v5281, %v5312
    %5314 = vmatmul.f32.gmra.mxu0 %v5199
    %v5315 = vpop.f32.mrf.mxu0
    %v5316 = vadd.f32 %v5284, %v5315
    %5317 = vmatmul.f32.gmra.mxu0 %v5212
    %v5318 = vpop.f32.mrf.mxu0
    %v5319 = vadd.f32 %v5287, %v5318
    %5320 = vmatmul.f32.gmra.mxu0 %v5225
    %v5321 = vpop.f32.mrf.mxu0
    %v5322 = vadd.f32 %v5290, %v5321
    %5323 = vmatmul.f32.gmra.mxu0 %v5234
    %v5324 = vpop.f32.mrf.mxu0
    %v5325 = vadd.f32 %v5293, %v5324
    %5326 = vdwg.mxu0
    %5327 = vmatpush.msra.mxu0 %v5137
    %5328 = vmatpush.msra.mxu0 %v5136
    %5329 = vmatpush.msra.mxu0 %v5135
    %5330 = vmatpush.msra.mxu0 %v5134
    %5331 = vmatpush.msra.mxu0 %v5133
    %5332 = vmatpush.msra.mxu0 %v5132
    %5333 = vmatpush.msra.mxu0 %v5131
    %5334 = vmatpush.msra.mxu0 %v5130
    %5335 = vmatpush.msra.mxu0 %v5129
    %5336 = vmatpush.msra.mxu0 %v5128
    %5337 = vmatpush.msra.mxu0 %v5127
    %5338 = vmatpush.msra.mxu0 %v5126
    %5339 = vmatpush.msra.mxu0 %v5125
    %5340 = vmatpush.msra.mxu0 %v5124
    %5341 = vmatpush.msra.mxu0 %v5123
    %5342 = vmatpush.msra.mxu0 %v5122
    %5343 = vmatmul.f32.gmra.mxu0 %v5187
    %v5344 = vpop.f32.mrf.mxu0
    %v5345 = vadd.f32 %v5313, %v5344
    %5346 = vmatmul.f32.gmra.mxu0 %v5200
    %v5347 = vpop.f32.mrf.mxu0
    %v5348 = vadd.f32 %v5316, %v5347
    %5349 = vmatmul.f32.gmra.mxu0 %v5213
    %v5350 = vpop.f32.mrf.mxu0
    %v5351 = vadd.f32 %v5319, %v5350
    %5352 = vmatmul.f32.gmra.mxu0 %v5226
    %v5353 = vpop.f32.mrf.mxu0
    %v5354 = vadd.f32 %v5322, %v5353
    %5355 = vmatmul.f32.gmra.mxu0 %v5235
    %v5356 = vpop.f32.mrf.mxu0
    %v5357 = vadd.f32 %v5325, %v5356
    %5358 = vdwg.mxu0
    %5359 = vmatpush.msra.mxu0 %v5153
    %5360 = vmatpush.msra.mxu0 %v5152
    %5361 = vmatpush.msra.mxu0 %v5151
    %5362 = vmatpush.msra.mxu0 %v5150
    %5363 = vmatpush.msra.mxu0 %v5149
    %5364 = vmatpush.msra.mxu0 %v5148
    %5365 = vmatpush.msra.mxu0 %v5147
    %5366 = vmatpush.msra.mxu0 %v5146
    %5367 = vmatpush.msra.mxu0 %v5145
    %5368 = vmatpush.msra.mxu0 %v5144
    %5369 = vmatpush.msra.mxu0 %v5143
    %5370 = vmatpush.msra.mxu0 %v5142
    %5371 = vmatpush.msra.mxu0 %v5141
    %5372 = vmatpush.msra.mxu0 %v5140
    %5373 = vmatpush.msra.mxu0 %v5139
    %5374 = vmatpush.msra.mxu0 %v5138
    %5375 = vmatmul.f32.gmra.mxu0 %v5188
    %v5376 = vpop.f32.mrf.mxu0
    %v5377 = vadd.f32 %v5345, %v5376
    %5378 = vmatmul.f32.gmra.mxu0 %v5201
    %v5379 = vpop.f32.mrf.mxu0
    %v5380 = vadd.f32 %v5348, %v5379
    %5381 = vmatmul.f32.gmra.mxu0 %v5214
    %v5382 = vpop.f32.mrf.mxu0
    %v5383 = vadd.f32 %v5351, %v5382
    %5384 = vmatmul.f32.gmra.mxu0 %v5227
    %v5385 = vpop.f32.mrf.mxu0
    %v5386 = vadd.f32 %v5354, %v5385
    %5387 = vmatmul.f32.gmra.mxu0 %v5236
    %v5388 = vpop.f32.mrf.mxu0
    %v5389 = vadd.f32 %v5357, %v5388
    %5390 = vdwg.mxu0
    %5391 = vmatpush.msra.mxu0 %v5169
    %5392 = vmatpush.msra.mxu0 %v5168
    %5393 = vmatpush.msra.mxu0 %v5167
    %5394 = vmatpush.msra.mxu0 %v5166
    %5395 = vmatpush.msra.mxu0 %v5165
    %5396 = vmatpush.msra.mxu0 %v5164
    %5397 = vmatpush.msra.mxu0 %v5163
    %5398 = vmatpush.msra.mxu0 %v5162
    %5399 = vmatpush.msra.mxu0 %v5161
    %5400 = vmatpush.msra.mxu0 %v5160
    %5401 = vmatpush.msra.mxu0 %v5159
    %5402 = vmatpush.msra.mxu0 %v5158
    %5403 = vmatpush.msra.mxu0 %v5157
    %5404 = vmatpush.msra.mxu0 %v5156
    %5405 = vmatpush.msra.mxu0 %v5155
    %5406 = vmatpush.msra.mxu0 %v5154
    %5407 = vmatmul.f32.gmra.mxu0 %v5189
    %v5408 = vpop.f32.mrf.mxu0
    %v5409 = vadd.f32 %v5377, %v5408
    %5410 = vmatmul.f32.gmra.mxu0 %v5202
    %v5411 = vpop.f32.mrf.mxu0
    %v5412 = vadd.f32 %v5380, %v5411
    %5413 = vmatmul.f32.gmra.mxu0 %v5215
    %v5414 = vpop.f32.mrf.mxu0
    %v5415 = vadd.f32 %v5383, %v5414
    %5416 = vmatmul.f32.gmra.mxu0 %v5228
    %v5417 = vpop.f32.mrf.mxu0
    %v5418 = vadd.f32 %v5386, %v5417
    %5419 = vmatmul.f32.gmra.mxu0 %v5237
    %v5420 = vpop.f32.mrf.mxu0
    %v5421 = vadd.f32 %v5389, %v5420
    %5422 = vdwg.mxu0
    %v5423 = vadd.f32 %v4815, %v5409
    %v5424 = vadd.f32 %v4816, %v5412
    %v5425 = vadd.f32 %v4817, %v5415
    %v5426 = vadd.f32 %v4818, %v5418
    %v5427 = vadd.f32 %v4819, %v5421
    %5428 = vst [vmem:[#allocation1] ss:$4 sm:$0xff] %v2928
    %s5429 = scalar_lea.vmem [#allocation1], 1
    %5430 = vst [vmem:[%s5429] ss:$4 sm:$0xff] %v2979
    %s5431 = scalar_lea.vmem [#allocation1], 2
    %5432 = vst [vmem:[%s5431] ss:$4 sm:$0xff] %v2980
    %v5433 = vld.sshfl [vmem:[#allocation1] sm:$0xff pattern:$0x73625140]
    %s5434 = scalar_lea.vmem [#allocation1], 32
    %5435 = vst [vmem:[%s5434] ss:$4 sm:$0xff] %v2982
    %s5436 = scalar_lea.vmem [#allocation1], 33
    %5437 = vst [vmem:[%s5436] ss:$4 sm:$0xff] %v2983
    %s5438 = scalar_lea.vmem [#allocation1], 34
    %5439 = vst [vmem:[%s5438] ss:$4 sm:$0xff] %v2984
    %v5440 = vld.sshfl [vmem:[#allocation1 + $0x20] sm:$0xff pattern:$0x73625140]
    %5441 = vst [vmem:[#allocation1] ss:$4 sm:$0xff] %v2986
    %5442 = vst [vmem:[%s5429] ss:$4 sm:$0xff] %v2987
    %5443 = vst [vmem:[%s5431] ss:$4 sm:$0xff] %v2937
    %v5444 = vld.sshfl [vmem:[#allocation1] sm:$0xff pattern:$0x73625140]
    %5445 = vst [vmem:[%s5434] ss:$4 sm:$0xff] %v2990
    %5446 = vst [vmem:[%s5436] ss:$4 sm:$0xff] %v2940
    %5447 = vst [vmem:[%s5438] ss:$4 sm:$0xff] %v2991
    %v5448 = vld.sshfl [vmem:[#allocation1 + $0x20] sm:$0xff pattern:$0x73625140]
    %5449 = vst [vmem:[#allocation1] ss:$4 sm:$0xff] %v2943
    %5450 = vst [vmem:[%s5429] ss:$4 sm:$0xff] %v2994
    %5451 = vst [vmem:[%s5431] ss:$4 sm:$0xff] %v2995
    %v5452 = vld.sshfl [vmem:[#allocation1] sm:$0xff pattern:$0x73625140]
    %5453 = vst [vmem:[%s5434] ss:$4 sm:$0xff] %v2997
    %5454 = vst [vmem:[%s5436] ss:$4 sm:$0xff] %v2998
    %5455 = vst [vmem:[%s5438] ss:$4 sm:$0xff] %v2999
    %v5456 = vld.sshfl [vmem:[#allocation1 + $0x20] sm:$0xff pattern:$0x73625140]
    %5457 = vst [vmem:[#allocation1] ss:$4 sm:$0xff] %v2928
    %s5458 = scalar_lea.vmem [#allocation1], 1
    %5459 = vst [vmem:[%s5458] ss:$4 sm:$0xff] %v2979
    %s5460 = scalar_lea.vmem [#allocation1], 2
    %5461 = vst [vmem:[%s5460] ss:$4 sm:$0xff] %v2980
    %s5462 = scalar_lea.vmem [#allocation1], 3
    %5463 = vst [vmem:[%s5462] ss:$4 sm:$0xff] %v2981
    %v5464 = vld.sshfl [vmem:[#allocation1] sm:$0xff pattern:$0x73625140]
    %s5465 = scalar_lea.vmem [#allocation1], 32
    %5466 = vst [vmem:[%s5465] ss:$4 sm:$0xff] %v2982
    %s5467 = scalar_lea.vmem [#allocation1], 33
    %5468 = vst [vmem:[%s5467] ss:$4 sm:$0xff] %v2983
    %s5469 = scalar_lea.vmem [#allocation1], 34
    %5470 = vst [vmem:[%s5469] ss:$4 sm:$0xff] %v2984
    %s5471 = scalar_lea.vmem [#allocation1], 35
    %5472 = vst [vmem:[%s5471] ss:$4 sm:$0xff] %v2934
    %v5473 = vld.sshfl [vmem:[#allocation1 + $0x20] sm:$0xff pattern:$0x73625140]
    %5474 = vst [vmem:[#allocation1] ss:$4 sm:$0xff] %v2986
    %5475 = vst [vmem:[%s5458] ss:$4 sm:$0xff] %v2987
    %5476 = vst [vmem:[%s5460] ss:$4 sm:$0xff] %v2937
    %5477 = vst [vmem:[%s5462] ss:$4 sm:$0xff] %v2988
    %v5478 = vld.sshfl [vmem:[#allocation1] sm:$0xff pattern:$0x73625140]
    %5479 = vst [vmem:[%s5465] ss:$4 sm:$0xff] %v2990
    %5480 = vst [vmem:[%s5467] ss:$4 sm:$0xff] %v2940
    %5481 = vst [vmem:[%s5469] ss:$4 sm:$0xff] %v2991
    %5482 = vst [vmem:[%s5471] ss:$4 sm:$0xff] %v2992
    %v5483 = vld.sshfl [vmem:[#allocation1 + $0x20] sm:$0xff pattern:$0x73625140]
    %5484 = vst [vmem:[#allocation1] ss:$4 sm:$0xff] %v2943
    %5485 = vst [vmem:[%s5458] ss:$4 sm:$0xff] %v2994
    %5486 = vst [vmem:[%s5460] ss:$4 sm:$0xff] %v2995
    %5487 = vst [vmem:[%s5462] ss:$4 sm:$0xff] %v2996
    %v5488 = vld.sshfl [vmem:[#allocation1] sm:$0xff pattern:$0x73625140]
    %5489 = vst [vmem:[%s5465] ss:$4 sm:$0xff] %v2997
    %5490 = vst [vmem:[%s5467] ss:$4 sm:$0xff] %v2998
    %5491 = vst [vmem:[%s5469] ss:$4 sm:$0xff] %v2999
    %5492 = vst [vmem:[%s5471] ss:$4 sm:$0xff] %v2949
    %v5493 = vld.sshfl [vmem:[#allocation1 + $0x20] sm:$0xff pattern:$0x73625140]
    %v5494 = vrot.slane %v5464, 1
    %v5495 = vrot.slane %v5473, 1
    %v5496 = vrot.slane %v5478, 1
    %v5497 = vrot.slane %v5483, 1
    %v5498 = vrot.slane %v5488, 1
    %v5499 = vrot.slane %v5493, 1
    %5500 = vst [vmem:[#allocation1] ss:$4 sm:$0xff] %v2979
    %s5501 = scalar_lea.vmem [#allocation1], 1
    %5502 = vst [vmem:[%s5501] ss:$4 sm:$0xff] %v2980
    %s5503 = scalar_lea.vmem [#allocation1], 2
    %5504 = vst [vmem:[%s5503] ss:$4 sm:$0xff] %v2981
    %v5505 = vld.sshfl [vmem:[#allocation1] sm:$0xff pattern:$0x73625140]
    %s5506 = scalar_lea.vmem [#allocation1], 32
    %5507 = vst [vmem:[%s5506] ss:$4 sm:$0xff] %v2983
    %s5508 = scalar_lea.vmem [#allocation1], 33
    %5509 = vst [vmem:[%s5508] ss:$4 sm:$0xff] %v2984
    %s5510 = scalar_lea.vmem [#allocation1], 34
    %5511 = vst [vmem:[%s5510] ss:$4 sm:$0xff] %v2934
    %v5512 = vld.sshfl [vmem:[#allocation1 + $0x20] sm:$0xff pattern:$0x73625140]
    %5513 = vst [vmem:[#allocation1] ss:$4 sm:$0xff] %v2987
    %5514 = vst [vmem:[%s5501] ss:$4 sm:$0xff] %v2937
    %5515 = vst [vmem:[%s5503] ss:$4 sm:$0xff] %v2988
    %v5516 = vld.sshfl [vmem:[#allocation1] sm:$0xff pattern:$0x73625140]
    %5517 = vst [vmem:[%s5506] ss:$4 sm:$0xff] %v2940
    %5518 = vst [vmem:[%s5508] ss:$4 sm:$0xff] %v2991
    %5519 = vst [vmem:[%s5510] ss:$4 sm:$0xff] %v2992
    %v5520 = vld.sshfl [vmem:[#allocation1 + $0x20] sm:$0xff pattern:$0x73625140]
    %5521 = vst [vmem:[#allocation1] ss:$4 sm:$0xff] %v2994
    %5522 = vst [vmem:[%s5501] ss:$4 sm:$0xff] %v2995
    %5523 = vst [vmem:[%s5503] ss:$4 sm:$0xff] %v2996
    %v5524 = vld.sshfl [vmem:[#allocation1] sm:$0xff pattern:$0x73625140]
    %5525 = vst [vmem:[%s5506] ss:$4 sm:$0xff] %v2998
    %5526 = vst [vmem:[%s5508] ss:$4 sm:$0xff] %v2999
    %5527 = vst [vmem:[%s5510] ss:$4 sm:$0xff] %v2949
    %v5528 = vld.sshfl [vmem:[#allocation1 + $0x20] sm:$0xff pattern:$0x73625140]
    %5529 = vst [vmem:[#allocation1] ss:$4 sm:$0xff] %v2979
    %s5530 = scalar_lea.vmem [#allocation1], 1
    %5531 = vst [vmem:[%s5530] ss:$4 sm:$0xff] %v2980
    %s5532 = scalar_lea.vmem [#allocation1], 2
    %5533 = vst [vmem:[%s5532] ss:$4 sm:$0xff] %v2981
    %s5534 = scalar_lea.vmem [#allocation1], 3
    %5535 = vst [vmem:[%s5534] ss:$4 sm:$0xff] %v2931
    %v5536 = vld.sshfl [vmem:[#allocation1] sm:$0xff pattern:$0x73625140]
    %s5537 = scalar_lea.vmem [#allocation1], 32
    %5538 = vst [vmem:[%s5537] ss:$4 sm:$0xff] %v2983
    %s5539 = scalar_lea.vmem [#allocation1], 33
    %5540 = vst [vmem:[%s5539] ss:$4 sm:$0xff] %v2984
    %s5541 = scalar_lea.vmem [#allocation1], 34
    %5542 = vst [vmem:[%s5541] ss:$4 sm:$0xff] %v2934
    %s5543 = scalar_lea.vmem [#allocation1], 35
    %5544 = vst [vmem:[%s5543] ss:$4 sm:$0xff] %v2985
    %v5545 = vld.sshfl [vmem:[#allocation1 + $0x20] sm:$0xff pattern:$0x73625140]
    %5546 = vst [vmem:[#allocation1] ss:$4 sm:$0xff] %v2987
    %5547 = vst [vmem:[%s5530] ss:$4 sm:$0xff] %v2937
    %5548 = vst [vmem:[%s5532] ss:$4 sm:$0xff] %v2988
    %5549 = vst [vmem:[%s5534] ss:$4 sm:$0xff] %v2989
    %v5550 = vld.sshfl [vmem:[#allocation1] sm:$0xff pattern:$0x73625140]
    %5551 = vst [vmem:[%s5537] ss:$4 sm:$0xff] %v2940
    %5552 = vst [vmem:[%s5539] ss:$4 sm:$0xff] %v2991
    %5553 = vst [vmem:[%s5541] ss:$4 sm:$0xff] %v2992
    %5554 = vst [vmem:[%s5543] ss:$4 sm:$0xff] %v2993
    %v5555 = vld.sshfl [vmem:[#allocation1 + $0x20] sm:$0xff pattern:$0x73625140]
    %5556 = vst [vmem:[#allocation1] ss:$4 sm:$0xff] %v2994
    %5557 = vst [vmem:[%s5530] ss:$4 sm:$0xff] %v2995
    %5558 = vst [vmem:[%s5532] ss:$4 sm:$0xff] %v2996
    %5559 = vst [vmem:[%s5534] ss:$4 sm:$0xff] %v2946
    %v5560 = vld.sshfl [vmem:[#allocation1] sm:$0xff pattern:$0x73625140]
    %5561 = vst [vmem:[%s5537] ss:$4 sm:$0xff] %v2998
    %5562 = vst [vmem:[%s5539] ss:$4 sm:$0xff] %v2999
    %5563 = vst [vmem:[%s5541] ss:$4 sm:$0xff] %v2949
    %5564 = vst [vmem:[%s5543] ss:$4 sm:$0xff] %v3000
    %v5565 = vld.sshfl [vmem:[#allocation1 + $0x20] sm:$0xff pattern:$0x73625140]
    %v5566 = vrot.slane %v5536, 1
    %v5567 = vrot.slane %v5545, 1
    %v5568 = vrot.slane %v5550, 1
    %v5569 = vrot.slane %v5555, 1
    %v5570 = vrot.slane %v5560, 1
    %v5571 = vrot.slane %v5565, 1
    %5572 = vst [vmem:[#allocation1] ss:$4 sm:$0xff] %v2980
    %s5573 = scalar_lea.vmem [#allocation1], 1
    %5574 = vst [vmem:[%s5573] ss:$4 sm:$0xff] %v2981
    %s5575 = scalar_lea.vmem [#allocation1], 2
    %5576 = vst [vmem:[%s5575] ss:$4 sm:$0xff] %v2931
    %v5577 = vld.sshfl [vmem:[#allocation1] sm:$0xff pattern:$0x73625140]
    %s5578 = scalar_lea.vmem [#allocation1], 32
    %5579 = vst [vmem:[%s5578] ss:$4 sm:$0xff] %v2984
    %s5580 = scalar_lea.vmem [#allocation1], 33
    %5581 = vst [vmem:[%s5580] ss:$4 sm:$0xff] %v2934
    %s5582 = scalar_lea.vmem [#allocation1], 34
    %5583 = vst [vmem:[%s5582] ss:$4 sm:$0xff] %v2985
    %v5584 = vld.sshfl [vmem:[#allocation1 + $0x20] sm:$0xff pattern:$0x73625140]
    %5585 = vst [vmem:[#allocation1] ss:$4 sm:$0xff] %v2937
    %5586 = vst [vmem:[%s5573] ss:$4 sm:$0xff] %v2988
    %5587 = vst [vmem:[%s5575] ss:$4 sm:$0xff] %v2989
    %v5588 = vld.sshfl [vmem:[#allocation1] sm:$0xff pattern:$0x73625140]
    %5589 = vst [vmem:[%s5578] ss:$4 sm:$0xff] %v2991
    %5590 = vst [vmem:[%s5580] ss:$4 sm:$0xff] %v2992
    %5591 = vst [vmem:[%s5582] ss:$4 sm:$0xff] %v2993
    %v5592 = vld.sshfl [vmem:[#allocation1 + $0x20] sm:$0xff pattern:$0x73625140]
    %5593 = vst [vmem:[#allocation1] ss:$4 sm:$0xff] %v2995
    %5594 = vst [vmem:[%s5573] ss:$4 sm:$0xff] %v2996
    %5595 = vst [vmem:[%s5575] ss:$4 sm:$0xff] %v2946
    %v5596 = vld.sshfl [vmem:[#allocation1] sm:$0xff pattern:$0x73625140]
    %5597 = vst [vmem:[%s5578] ss:$4 sm:$0xff] %v2999
    %5598 = vst [vmem:[%s5580] ss:$4 sm:$0xff] %v2949
    %5599 = vst [vmem:[%s5582] ss:$4 sm:$0xff] %v3000
    %v5600 = vld.sshfl [vmem:[#allocation1 + $0x20] sm:$0xff pattern:$0x73625140]
    %v5601 = vrot.slane %v5494, 6
    %v5602 = vrot.slane %v5505, 4
    %v5603 = vrot.slane %v5566, 2
    %v5604 = vrot.slane %v5495, 6
    %v5605 = vrot.slane %v5512, 4
    %v5606 = vrot.slane %v5567, 2
    %v5607 = vrot.slane %v5496, 6
    %v5608 = vrot.slane %v5516, 4
    %v5609 = vrot.slane %v5568, 2
    %v5610 = vrot.slane %v5497, 6
    %v5611 = vrot.slane %v5520, 4
    %v5612 = vrot.slane %v5569, 2
    %v5613 = vrot.slane %v5498, 6
    %v5614 = vrot.slane %v5524, 4
    %v5615 = vrot.slane %v5570, 2
    %v5616 = vrot.slane %v5499, 6
    %v5617 = vrot.slane %v5528, 4
    %v5618 = vrot.slane %v5571, 2
    %v5619 = vsel %vm3192, %v5433, %v5601
    %v5620 = vsel %vm3194, %v5602, %v5603
    %v5621 = vsel %vm3196, %v5619, %v5620
    %v5622 = vsel %vm3198, %v5433, %v5601
    %v5623 = vsel %vm3200, %v5603, %v5602
    %v5624 = vsel %vm3202, %v5622, %v5623
    %v5625 = vrot.slane %v5624, 2
    %v5626 = vrot.slane %v5577, 2
    %v5627 = vsel %vm3194, %v5433, %v5601
    %v5628 = vsel %vm3192, %v5602, %v5603
    %v5629 = vsel %vm3196, %v5628, %v5627
    %v5630 = vrot.slane %v5629, 4
    %v5631 = vrot.slane %v5577, 4
    %v5632 = vsel %vm3192, %v5440, %v5604
    %v5633 = vsel %vm3194, %v5605, %v5606
    %v5634 = vsel %vm3196, %v5632, %v5633
    %v5635 = vsel %vm3198, %v5440, %v5604
    %v5636 = vsel %vm3200, %v5606, %v5605
    %v5637 = vsel %vm3202, %v5635, %v5636
    %v5638 = vrot.slane %v5637, 2
    %v5639 = vrot.slane %v5584, 2
    %v5640 = vsel %vm3194, %v5440, %v5604
    %v5641 = vsel %vm3192, %v5605, %v5606
    %v5642 = vsel %vm3196, %v5641, %v5640
    %v5643 = vrot.slane %v5642, 4
    %v5644 = vrot.slane %v5584, 4
    %v5645 = vsel %vm3192, %v5444, %v5607
    %v5646 = vsel %vm3194, %v5608, %v5609
    %v5647 = vsel %vm3196, %v5645, %v5646
    %v5648 = vsel %vm3198, %v5444, %v5607
    %v5649 = vsel %vm3200, %v5609, %v5608
    %v5650 = vsel %vm3202, %v5648, %v5649
    %v5651 = vrot.slane %v5650, 2
    %v5652 = vrot.slane %v5588, 2
    %v5653 = vsel %vm3194, %v5444, %v5607
    %v5654 = vsel %vm3192, %v5608, %v5609
    %v5655 = vsel %vm3196, %v5654, %v5653
    %v5656 = vrot.slane %v5655, 4
    %v5657 = vrot.slane %v5588, 4
    %v5658 = vsel %vm3192, %v5448, %v5610
    %v5659 = vsel %vm3194, %v5611, %v5612
    %v5660 = vsel %vm3196, %v5658, %v5659
    %v5661 = vsel %vm3198, %v5448, %v5610
    %v5662 = vsel %vm3200, %v5612, %v5611
    %v5663 = vsel %vm3202, %v5661, %v5662
    %v5664 = vrot.slane %v5663, 2
    %v5665 = vrot.slane %v5592, 2
    %v5666 = vsel %vm3194, %v5448, %v5610
    %v5667 = vsel %vm3192, %v5611, %v5612
    %v5668 = vsel %vm3196, %v5667, %v5666
    %v5669 = vrot.slane %v5668, 4
    %v5670 = vrot.slane %v5592, 4
    %v5671 = vsel %vm3192, %v5452, %v5613
    %v5672 = vsel %vm3194, %v5614, %v5615
    %v5673 = vsel %vm3196, %v5671, %v5672
    %v5674 = vsel %vm3198, %v5452, %v5613
    %v5675 = vsel %vm3200, %v5615, %v5614
    %v5676 = vsel %vm3202, %v5674, %v5675
    %v5677 = vrot.slane %v5676, 2
    %v5678 = vrot.slane %v5596, 2
    %v5679 = vsel %vm3194, %v5452, %v5613
    %v5680 = vsel %vm3192, %v5614, %v5615
    %v5681 = vsel %vm3196, %v5680, %v5679
    %v5682 = vrot.slane %v5681, 4
    %v5683 = vrot.slane %v5596, 4
    %v5684 = vsel %vm3192, %v5456, %v5616
    %v5685 = vsel %vm3194, %v5617, %v5618
    %v5686 = vsel %vm3196, %v5684, %v5685
    %v5687 = vsel %vm3198, %v5456, %v5616
    %v5688 = vsel %vm3200, %v5618, %v5617
    %v5689 = vsel %vm3202, %v5687, %v5688
    %v5690 = vrot.slane %v5689, 2
    %v5691 = vrot.slane %v5600, 2
    %v5692 = vsel %vm3194, %v5456, %v5616
    %v5693 = vsel %vm3192, %v5617, %v5618
    %v5694 = vsel %vm3196, %v5693, %v5692
    %v5695 = vrot.slane %v5694, 4
    %v5696 = vrot.slane %v5600, 4
    %s5697 = scalar_lea.vmem %s2, 2560
    %v5698 = vld [vmem:[%s5697] sm:$0xff]
    %v5699 = vld [vmem:[%s5697 + $0x8] sm:$0xff]
    %v5700 = vld [vmem:[%s5697 + $0x10] sm:$0xff]
    %v5701 = vld [vmem:[%s5697 + $0x18] sm:$0xff]
    %v5702 = vld [vmem:[%s5697 + $0x20] sm:$0xff]
    %v5703 = vld [vmem:[%s5697 + $0x28] sm:$0xff]
    %v5704 = vld [vmem:[%s5697 + $0x30] sm:$0xff]
    %v5705 = vld [vmem:[%s5697 + $0x38] sm:$0xff]
    %v5706 = vld [vmem:[%s5697 + $0x40] sm:$0xff]
    %v5707 = vld [vmem:[%s5697 + $0x48] sm:$0xff]
    %v5708 = vld [vmem:[%s5697 + $0x50] sm:$0xff]
    %v5709 = vld [vmem:[%s5697 + $0x58] sm:$0xff]
    %v5710 = vld [vmem:[%s5697 + $0x60] sm:$0xff]
    %v5711 = vld [vmem:[%s5697 + $0x68] sm:$0xff]
    %v5712 = vld [vmem:[%s5697 + $0x70] sm:$0xff]
    %v5713 = vld [vmem:[%s5697 + $0x78] sm:$0xff]
    %v5714 = vld [vmem:[%s5697 + $0x80] sm:$0xff]
    %v5715 = vld [vmem:[%s5697 + $0x88] sm:$0xff]
    %v5716 = vld [vmem:[%s5697 + $0x90] sm:$0xff]
    %v5717 = vld [vmem:[%s5697 + $0x98] sm:$0xff]
    %v5718 = vld [vmem:[%s5697 + $0xa0] sm:$0xff]
    %v5719 = vld [vmem:[%s5697 + $0xa8] sm:$0xff]
    %v5720 = vld [vmem:[%s5697 + $0xb0] sm:$0xff]
    %v5721 = vld [vmem:[%s5697 + $0xb8] sm:$0xff]
    %v5722 = vld [vmem:[%s5697 + $0xc0] sm:$0xff]
    %v5723 = vld [vmem:[%s5697 + $0xc8] sm:$0xff]
    %v5724 = vld [vmem:[%s5697 + $0xd0] sm:$0xff]
    %v5725 = vld [vmem:[%s5697 + $0xd8] sm:$0xff]
    %v5726 = vld [vmem:[%s5697 + $0xe0] sm:$0xff]
    %v5727 = vld [vmem:[%s5697 + $0xe8] sm:$0xff]
    %v5728 = vld [vmem:[%s5697 + $0xf0] sm:$0xff]
    %v5729 = vld [vmem:[%s5697 + $0xf8] sm:$0xff]
    %v5730 = vld [vmem:[%s5697 + $0x100] sm:$0xff]
    %v5731 = vld [vmem:[%s5697 + $0x108] sm:$0xff]
    %v5732 = vld [vmem:[%s5697 + $0x110] sm:$0xff]
    %v5733 = vld [vmem:[%s5697 + $0x118] sm:$0xff]
    %v5734 = vld [vmem:[%s5697 + $0x120] sm:$0xff]
    %v5735 = vld [vmem:[%s5697 + $0x128] sm:$0xff]
    %v5736 = vld [vmem:[%s5697 + $0x130] sm:$0xff]
    %v5737 = vld [vmem:[%s5697 + $0x138] sm:$0xff]
    %v5738 = vld [vmem:[%s5697 + $0x140] sm:$0xff]
    %v5739 = vld [vmem:[%s5697 + $0x148] sm:$0xff]
    %v5740 = vld [vmem:[%s5697 + $0x150] sm:$0xff]
    %v5741 = vld [vmem:[%s5697 + $0x158] sm:$0xff]
    %v5742 = vld [vmem:[%s5697 + $0x160] sm:$0xff]
    %v5743 = vld [vmem:[%s5697 + $0x168] sm:$0xff]
    %v5744 = vld [vmem:[%s5697 + $0x170] sm:$0xff]
    %v5745 = vld [vmem:[%s5697 + $0x178] sm:$0xff]
    %v5746 = vld [vmem:[%s5697 + $0x180] sm:$0xff]
    %v5747 = vld [vmem:[%s5697 + $0x188] sm:$0xff]
    %v5748 = vld [vmem:[%s5697 + $0x190] sm:$0xff]
    %v5749 = vld [vmem:[%s5697 + $0x198] sm:$0xff]
    %v5750 = vld [vmem:[%s5697 + $0x1a0] sm:$0xff]
    %v5751 = vld [vmem:[%s5697 + $0x1a8] sm:$0xff]
    %v5752 = vld [vmem:[%s5697 + $0x1b0] sm:$0xff]
    %v5753 = vld [vmem:[%s5697 + $0x1b8] sm:$0xff]
    %v5754 = vld [vmem:[%s5697 + $0x1c0] sm:$0xff]
    %v5755 = vld [vmem:[%s5697 + $0x1c8] sm:$0xff]
    %v5756 = vld [vmem:[%s5697 + $0x1d0] sm:$0xff]
    %v5757 = vld [vmem:[%s5697 + $0x1d8] sm:$0xff]
    %v5758 = vld [vmem:[%s5697 + $0x1e0] sm:$0xff]
    %v5759 = vld [vmem:[%s5697 + $0x1e8] sm:$0xff]
    %v5760 = vld [vmem:[%s5697 + $0x1f0] sm:$0xff]
    %v5761 = vld [vmem:[%s5697 + $0x1f8] sm:$0xff]
    %v5762 = vld [vmem:[%s5697 + $0x200] sm:$0xff]
    %v5763 = vld [vmem:[%s5697 + $0x208] sm:$0xff]
    %v5764 = vld [vmem:[%s5697 + $0x210] sm:$0xff]
    %v5765 = vld [vmem:[%s5697 + $0x218] sm:$0xff]
    %v5766 = vld [vmem:[%s5697 + $0x220] sm:$0xff]
    %v5767 = vld [vmem:[%s5697 + $0x228] sm:$0xff]
    %v5768 = vld [vmem:[%s5697 + $0x230] sm:$0xff]
    %v5769 = vld [vmem:[%s5697 + $0x238] sm:$0xff]
    %v5770 = vld [vmem:[%s5697 + $0x240] sm:$0xff]
    %v5771 = vld [vmem:[%s5697 + $0x248] sm:$0xff]
    %v5772 = vld [vmem:[%s5697 + $0x250] sm:$0xff]
    %v5773 = vld [vmem:[%s5697 + $0x258] sm:$0xff]
    %v5774 = vld [vmem:[%s5697 + $0x260] sm:$0xff]
    %v5775 = vld [vmem:[%s5697 + $0x268] sm:$0xff]
    %v5776 = vld [vmem:[%s5697 + $0x270] sm:$0xff]
    %v5777 = vld [vmem:[%s5697 + $0x278] sm:$0xff]
    %5778 = vst [vmem:[#allocation1] ss:$4 sm:$0xff] %v5621
    %s5779 = scalar_lea.vmem [#allocation1], 1
    %5780 = vst [vmem:[%s5779] ss:$4 sm:$0xff] %v5625
    %s5781 = scalar_lea.vmem [#allocation1], 2
    %5782 = vst [vmem:[%s5781] ss:$4 sm:$0xff] %v5630
    %s5783 = scalar_lea.vmem [#allocation1], 3
    %5784 = vst [vmem:[%s5783] ss:$4 sm:$0xff] %v5634
    %s5785 = scalar_lea.vmem [#allocation1], 32
    %5786 = vst [vmem:[%s5785] ss:$4 sm:$0xff] %v5577
    %s5787 = scalar_lea.vmem [#allocation1], 33
    %5788 = vst [vmem:[%s5787] ss:$4 sm:$0xff] %v5626
    %s5789 = scalar_lea.vmem [#allocation1], 34
    %5790 = vst [vmem:[%s5789] ss:$4 sm:$0xff] %v5631
    %s5791 = scalar_lea.vmem [#allocation1], 35
    %5792 = vst [vmem:[%s5791] ss:$4 sm:$0xff] %v5584
    %v5793 = vld.sshfl [vmem:[#allocation1] sm:$0xff pattern:$0x73625140]
    %v5794 = vld.sshfl [vmem:[#allocation1 + $0x8] sm:$0xff pattern:$0x73625140]
    %v5795 = vld.sshfl [vmem:[#allocation1 + $0x10] sm:$0xff pattern:$0x73625140]
    %v5796 = vld.sshfl [vmem:[#allocation1 + $0x18] sm:$0xff pattern:$0x73625140]
    %v5797 = vld.sshfl [vmem:[#allocation1 + $0x20] sm:$0xff pattern:$0x73625140]
    %5798 = vst [vmem:[#allocation1] ss:$4 sm:$0xff] %v5638
    %5799 = vst [vmem:[%s5779] ss:$4 sm:$0xff] %v5643
    %5800 = vst [vmem:[%s5781] ss:$4 sm:$0xff] %v5647
    %5801 = vst [vmem:[%s5783] ss:$4 sm:$0xff] %v5651
    %5802 = vst [vmem:[%s5785] ss:$4 sm:$0xff] %v5639
    %5803 = vst [vmem:[%s5787] ss:$4 sm:$0xff] %v5644
    %5804 = vst [vmem:[%s5789] ss:$4 sm:$0xff] %v5588
    %5805 = vst [vmem:[%s5791] ss:$4 sm:$0xff] %v5652
    %v5806 = vld.sshfl [vmem:[#allocation1] sm:$0xff pattern:$0x73625140]
    %v5807 = vld.sshfl [vmem:[#allocation1 + $0x8] sm:$0xff pattern:$0x73625140]
    %v5808 = vld.sshfl [vmem:[#allocation1 + $0x10] sm:$0xff pattern:$0x73625140]
    %v5809 = vld.sshfl [vmem:[#allocation1 + $0x18] sm:$0xff pattern:$0x73625140]
    %v5810 = vld.sshfl [vmem:[#allocation1 + $0x20] sm:$0xff pattern:$0x73625140]
    %5811 = vst [vmem:[#allocation1] ss:$4 sm:$0xff] %v5656
    %5812 = vst [vmem:[%s5779] ss:$4 sm:$0xff] %v5660
    %5813 = vst [vmem:[%s5781] ss:$4 sm:$0xff] %v5664
    %5814 = vst [vmem:[%s5783] ss:$4 sm:$0xff] %v5669
    %5815 = vst [vmem:[%s5785] ss:$4 sm:$0xff] %v5657
    %5816 = vst [vmem:[%s5787] ss:$4 sm:$0xff] %v5592
    %5817 = vst [vmem:[%s5789] ss:$4 sm:$0xff] %v5665
    %5818 = vst [vmem:[%s5791] ss:$4 sm:$0xff] %v5670
    %v5819 = vld.sshfl [vmem:[#allocation1] sm:$0xff pattern:$0x73625140]
    %v5820 = vld.sshfl [vmem:[#allocation1 + $0x8] sm:$0xff pattern:$0x73625140]
    %v5821 = vld.sshfl [vmem:[#allocation1 + $0x10] sm:$0xff pattern:$0x73625140]
    %v5822 = vld.sshfl [vmem:[#allocation1 + $0x18] sm:$0xff pattern:$0x73625140]
    %v5823 = vld.sshfl [vmem:[#allocation1 + $0x20] sm:$0xff pattern:$0x73625140]
    %5824 = vst [vmem:[#allocation1] ss:$4 sm:$0xff] %v5673
    %5825 = vst [vmem:[%s5779] ss:$4 sm:$0xff] %v5677
    %5826 = vst [vmem:[%s5781] ss:$4 sm:$0xff] %v5682
    %5827 = vst [vmem:[%s5783] ss:$4 sm:$0xff] %v5686
    %5828 = vst [vmem:[%s5785] ss:$4 sm:$0xff] %v5596
    %5829 = vst [vmem:[%s5787] ss:$4 sm:$0xff] %v5678
    %5830 = vst [vmem:[%s5789] ss:$4 sm:$0xff] %v5683
    %5831 = vst [vmem:[%s5791] ss:$4 sm:$0xff] %v5600
    %v5832 = vld.sshfl [vmem:[#allocation1] sm:$0xff pattern:$0x73625140]
    %v5833 = vld.sshfl [vmem:[#allocation1 + $0x8] sm:$0xff pattern:$0x73625140]
    %v5834 = vld.sshfl [vmem:[#allocation1 + $0x10] sm:$0xff pattern:$0x73625140]
    %v5835 = vld.sshfl [vmem:[#allocation1 + $0x18] sm:$0xff pattern:$0x73625140]
    %v5836 = vld.sshfl [vmem:[#allocation1 + $0x20] sm:$0xff pattern:$0x73625140]
    %5837 = vst [vmem:[#allocation1] ss:$4 sm:$0xff] %v5690
    %5838 = vst [vmem:[%s5779] ss:$4 sm:$0xff] %v5695
    %5839 = vst [vmem:[%s5785] ss:$4 sm:$0xff] %v5691
    %5840 = vst [vmem:[%s5787] ss:$4 sm:$0xff] %v5696
    %v5841 = vld.sshfl [vmem:[#allocation1] sm:$0xff pattern:$0x73625140]
    %v5842 = vld.sshfl [vmem:[#allocation1 + $0x8] sm:$0xff pattern:$0x73625140]
    %v5843 = vld.sshfl [vmem:[#allocation1 + $0x10] sm:$0xff pattern:$0x73625140]
    %v5844 = vld.sshfl [vmem:[#allocation1 + $0x18] sm:$0xff pattern:$0x73625140]
    %v5845 = vld.sshfl [vmem:[#allocation1 + $0x20] sm:$0xff pattern:$0x73625140]
    %5871 = vmatpush.msra.mxu0 %v5713
    %5872 = vmatpush.msra.mxu0 %v5712
    %5873 = vmatpush.msra.mxu0 %v5711
    %5874 = vmatpush.msra.mxu0 %v5710
    %5875 = vmatpush.msra.mxu0 %v5709
    %5876 = vmatpush.msra.mxu0 %v5708
    %5877 = vmatpush.msra.mxu0 %v5707
    %5878 = vmatpush.msra.mxu0 %v5706
    %5879 = vmatpush.msra.mxu0 %v5705
    %5880 = vmatpush.msra.mxu0 %v5704
    %5881 = vmatpush.msra.mxu0 %v5703
    %5882 = vmatpush.msra.mxu0 %v5702
    %5883 = vmatpush.msra.mxu0 %v5701
    %5884 = vmatpush.msra.mxu0 %v5700
    %5885 = vmatpush.msra.mxu0 %v5699
    %5886 = vmatpush.msra.mxu0 %v5698
    %5887 = vmatmul.f32.gmra.mxu0 %v5793
    %v5888 = vpop.f32.mrf.mxu0
    %v5889 = vadd.f32 0.0, %v5888
    %5890 = vmatmul.f32.gmra.mxu0 %v5806
    %v5891 = vpop.f32.mrf.mxu0
    %v5892 = vadd.f32 0.0, %v5891
    %5893 = vmatmul.f32.gmra.mxu0 %v5819
    %v5894 = vpop.f32.mrf.mxu0
    %v5895 = vadd.f32 0.0, %v5894
    %5896 = vmatmul.f32.gmra.mxu0 %v5832
    %v5897 = vpop.f32.mrf.mxu0
    %v5898 = vadd.f32 0.0, %v5897
    %5899 = vmatmul.f32.gmra.mxu0 %v5841
    %v5900 = vpop.f32.mrf.mxu0
    %v5901 = vadd.f32 0.0, %v5900
    %5902 = vdwg.mxu0
    %5903 = vmatpush.msra.mxu0 %v5729
    %5904 = vmatpush.msra.mxu0 %v5728
    %5905 = vmatpush.msra.mxu0 %v5727
    %5906 = vmatpush.msra.mxu0 %v5726
    %5907 = vmatpush.msra.mxu0 %v5725
    %5908 = vmatpush.msra.mxu0 %v5724
    %5909 = vmatpush.msra.mxu0 %v5723
    %5910 = vmatpush.msra.mxu0 %v5722
    %5911 = vmatpush.msra.mxu0 %v5721
    %5912 = vmatpush.msra.mxu0 %v5720
    %5913 = vmatpush.msra.mxu0 %v5719
    %5914 = vmatpush.msra.mxu0 %v5718
    %5915 = vmatpush.msra.mxu0 %v5717
    %5916 = vmatpush.msra.mxu0 %v5716
    %5917 = vmatpush.msra.mxu0 %v5715
    %5918 = vmatpush.msra.mxu0 %v5714
    %5919 = vmatmul.f32.gmra.mxu0 %v5794
    %v5920 = vpop.f32.mrf.mxu0
    %v5921 = vadd.f32 %v5889, %v5920
    %5922 = vmatmul.f32.gmra.mxu0 %v5807
    %v5923 = vpop.f32.mrf.mxu0
    %v5924 = vadd.f32 %v5892, %v5923
    %5925 = vmatmul.f32.gmra.mxu0 %v5820
    %v5926 = vpop.f32.mrf.mxu0
    %v5927 = vadd.f32 %v5895, %v5926
    %5928 = vmatmul.f32.gmra.mxu0 %v5833
    %v5929 = vpop.f32.mrf.mxu0
    %v5930 = vadd.f32 %v5898, %v5929
    %5931 = vmatmul.f32.gmra.mxu0 %v5842
    %v5932 = vpop.f32.mrf.mxu0
    %v5933 = vadd.f32 %v5901, %v5932
    %5934 = vdwg.mxu0
    %5935 = vmatpush.msra.mxu0 %v5745
    %5936 = vmatpush.msra.mxu0 %v5744
    %5937 = vmatpush.msra.mxu0 %v5743
    %5938 = vmatpush.msra.mxu0 %v5742
    %5939 = vmatpush.msra.mxu0 %v5741
    %5940 = vmatpush.msra.mxu0 %v5740
    %5941 = vmatpush.msra.mxu0 %v5739
    %5942 = vmatpush.msra.mxu0 %v5738
    %5943 = vmatpush.msra.mxu0 %v5737
    %5944 = vmatpush.msra.mxu0 %v5736
    %5945 = vmatpush.msra.mxu0 %v5735
    %5946 = vmatpush.msra.mxu0 %v5734
    %5947 = vmatpush.msra.mxu0 %v5733
    %5948 = vmatpush.msra.mxu0 %v5732
    %5949 = vmatpush.msra.mxu0 %v5731
    %5950 = vmatpush.msra.mxu0 %v5730
    %5951 = vmatmul.f32.gmra.mxu0 %v5795
    %v5952 = vpop.f32.mrf.mxu0
    %v5953 = vadd.f32 %v5921, %v5952
    %5954 = vmatmul.f32.gmra.mxu0 %v5808
    %v5955 = vpop.f32.mrf.mxu0
    %v5956 = vadd.f32 %v5924, %v5955
    %5957 = vmatmul.f32.gmra.mxu0 %v5821
    %v5958 = vpop.f32.mrf.mxu0
    %v5959 = vadd.f32 %v5927, %v5958
    %5960 = vmatmul.f32.gmra.mxu0 %v5834
    %v5961 = vpop.f32.mrf.mxu0
    %v5962 = vadd.f32 %v5930, %v5961
    %5963 = vmatmul.f32.gmra.mxu0 %v5843
    %v5964 = vpop.f32.mrf.mxu0
    %v5965 = vadd.f32 %v5933, %v5964
    %5966 = vdwg.mxu0
    %5967 = vmatpush.msra.mxu0 %v5761
    %5968 = vmatpush.msra.mxu0 %v5760
    %5969 = vmatpush.msra.mxu0 %v5759
    %5970 = vmatpush.msra.mxu0 %v5758
    %5971 = vmatpush.msra.mxu0 %v5757
    %5972 = vmatpush.msra.mxu0 %v5756
    %5973 = vmatpush.msra.mxu0 %v5755
    %5974 = vmatpush.msra.mxu0 %v5754
    %5975 = vmatpush.msra.mxu0 %v5753
    %5976 = vmatpush.msra.mxu0 %v5752
    %5977 = vmatpush.msra.mxu0 %v5751
    %5978 = vmatpush.msra.mxu0 %v5750
    %5979 = vmatpush.msra.mxu0 %v5749
    %5980 = vmatpush.msra.mxu0 %v5748
    %5981 = vmatpush.msra.mxu0 %v5747
    %5982 = vmatpush.msra.mxu0 %v5746
    %5983 = vmatmul.f32.gmra.mxu0 %v5796
    %v5984 = vpop.f32.mrf.mxu0
    %v5985 = vadd.f32 %v5953, %v5984
    %5986 = vmatmul.f32.gmra.mxu0 %v5809
    %v5987 = vpop.f32.mrf.mxu0
    %v5988 = vadd.f32 %v5956, %v5987
    %5989 = vmatmul.f32.gmra.mxu0 %v5822
    %v5990 = vpop.f32.mrf.mxu0
    %v5991 = vadd.f32 %v5959, %v5990
    %5992 = vmatmul.f32.gmra.mxu0 %v5835
    %v5993 = vpop.f32.mrf.mxu0
    %v5994 = vadd.f32 %v5962, %v5993
    %5995 = vmatmul.f32.gmra.mxu0 %v5844
    %v5996 = vpop.f32.mrf.mxu0
    %v5997 = vadd.f32 %v5965, %v5996
    %5998 = vdwg.mxu0
    %5999 = vmatpush.msra.mxu0 %v5777
    %6000 = vmatpush.msra.mxu0 %v5776
    %6001 = vmatpush.msra.mxu0 %v5775
    %6002 = vmatpush.msra.mxu0 %v5774
    %6003 = vmatpush.msra.mxu0 %v5773
    %6004 = vmatpush.msra.mxu0 %v5772
    %6005 = vmatpush.msra.mxu0 %v5771
    %6006 = vmatpush.msra.mxu0 %v5770
    %6007 = vmatpush.msra.mxu0 %v5769
    %6008 = vmatpush.msra.mxu0 %v5768
    %6009 = vmatpush.msra.mxu0 %v5767
    %6010 = vmatpush.msra.mxu0 %v5766
    %6011 = vmatpush.msra.mxu0 %v5765
    %6012 = vmatpush.msra.mxu0 %v5764
    %6013 = vmatpush.msra.mxu0 %v5763
    %6014 = vmatpush.msra.mxu0 %v5762
    %6015 = vmatmul.f32.gmra.mxu0 %v5797
    %v6016 = vpop.f32.mrf.mxu0
    %v6017 = vadd.f32 %v5985, %v6016
    %6018 = vmatmul.f32.gmra.mxu0 %v5810
    %v6019 = vpop.f32.mrf.mxu0
    %v6020 = vadd.f32 %v5988, %v6019
    %6021 = vmatmul.f32.gmra.mxu0 %v5823
    %v6022 = vpop.f32.mrf.mxu0
    %v6023 = vadd.f32 %v5991, %v6022
    %6024 = vmatmul.f32.gmra.mxu0 %v5836
    %v6025 = vpop.f32.mrf.mxu0
    %v6026 = vadd.f32 %v5994, %v6025
    %6027 = vmatmul.f32.gmra.mxu0 %v5845
    %v6028 = vpop.f32.mrf.mxu0
    %v6029 = vadd.f32 %v5997, %v6028
    %6030 = vdwg.mxu0
    %v6031 = vadd.f32 %v5423, %v6017
    %v6032 = vadd.f32 %v5424, %v6020
    %v6033 = vadd.f32 %v5425, %v6023
    %v6034 = vadd.f32 %v5426, %v6026
    %v6035 = vadd.f32 %v5427, %v6029
    %v6041 = vrot.slane %v6031, 2
    %v6042 = vrot.slane %v6031, 4
    %v6043 = vrot.slane %v6031, 6
    %v6044 = vrot.slane %v6032, 2
    %v6045 = vrot.slane %v6032, 4
    %v6046 = vrot.slane %v6032, 6
    %v6047 = vrot.slane %v6033, 2
    %v6048 = vrot.slane %v6033, 4
    %v6049 = vrot.slane %v6033, 6
    %v6050 = vrot.slane %v6034, 2
    %v6051 = vrot.slane %v6034, 4
    %v6052 = vrot.slane %v6034, 6
    %v6053 = vrot.slane %v6035, 2
    %6054 = vst [vmem:[#allocation1] ss:$4 sm:$0xff] %v6031
    %s6055 = scalar_lea.vmem [#allocation1], 1
    %6056 = vst [vmem:[%s6055] ss:$4 sm:$0xff] %v6041
    %v6057 = vld.sshfl [vmem:[#allocation1] sm:$0xff pattern:$0x73625140]
    %s6058 = scalar_lea.vmem [#allocation1], 32
    %6059 = vst [vmem:[%s6058] ss:$4 sm:$0xff] %v6043
    %s6060 = scalar_lea.vmem [#allocation1], 33
    %6061 = vst [vmem:[%s6060] ss:$4 sm:$0xff] %v6032
    %v6062 = vld.sshfl [vmem:[#allocation1 + $0x20] sm:$0xff pattern:$0x73625140]
    %6063 = vst [vmem:[#allocation1] ss:$4 sm:$0xff] %v6045
    %6064 = vst [vmem:[%s6055] ss:$4 sm:$0xff] %v6046
    %v6065 = vld.sshfl [vmem:[#allocation1] sm:$0xff pattern:$0x73625140]
    %6066 = vst [vmem:[%s6058] ss:$4 sm:$0xff] %v6047
    %6067 = vst [vmem:[%s6060] ss:$4 sm:$0xff] %v6048
    %v6068 = vld.sshfl [vmem:[#allocation1 + $0x20] sm:$0xff pattern:$0x73625140]
    %6069 = vst [vmem:[#allocation1] ss:$4 sm:$0xff] %v6031
    %s6070 = scalar_lea.vmem [#allocation1], 1
    %6071 = vst [vmem:[%s6070] ss:$4 sm:$0xff] %v6041
    %s6072 = scalar_lea.vmem [#allocation1], 2
    %6073 = vst [vmem:[%s6072] ss:$4 sm:$0xff] %v6042
    %v6074 = vld.sshfl [vmem:[#allocation1] sm:$0xff pattern:$0x73625140]
    %s6075 = scalar_lea.vmem [#allocation1], 32
    %6076 = vst [vmem:[%s6075] ss:$4 sm:$0xff] %v6043
    %s6077 = scalar_lea.vmem [#allocation1], 33
    %6078 = vst [vmem:[%s6077] ss:$4 sm:$0xff] %v6032
    %s6079 = scalar_lea.vmem [#allocation1], 34
    %6080 = vst [vmem:[%s6079] ss:$4 sm:$0xff] %v6044
    %v6081 = vld.sshfl [vmem:[#allocation1 + $0x20] sm:$0xff pattern:$0x73625140]
    %6082 = vst [vmem:[#allocation1] ss:$4 sm:$0xff] %v6045
    %6083 = vst [vmem:[%s6070] ss:$4 sm:$0xff] %v6046
    %6084 = vst [vmem:[%s6072] ss:$4 sm:$0xff] %v6033
    %v6085 = vld.sshfl [vmem:[#allocation1] sm:$0xff pattern:$0x73625140]
    %6086 = vst [vmem:[%s6075] ss:$4 sm:$0xff] %v6047
    %6087 = vst [vmem:[%s6077] ss:$4 sm:$0xff] %v6048
    %6088 = vst [vmem:[%s6079] ss:$4 sm:$0xff] %v6049
    %v6089 = vld.sshfl [vmem:[#allocation1 + $0x20] sm:$0xff pattern:$0x73625140]
    %v6090 = vrot.slane %v6074, 1
    %v6091 = vrot.slane %v6081, 1
    %v6092 = vrot.slane %v6085, 1
    %v6093 = vrot.slane %v6089, 1
    %6094 = vst [vmem:[#allocation1] ss:$4 sm:$0xff] %v6041
    %s6095 = scalar_lea.vmem [#allocation1], 1
    %6096 = vst [vmem:[%s6095] ss:$4 sm:$0xff] %v6042
    %v6097 = vld.sshfl [vmem:[#allocation1] sm:$0xff pattern:$0x73625140]
    %s6098 = scalar_lea.vmem [#allocation1], 32
    %6099 = vst [vmem:[%s6098] ss:$4 sm:$0xff] %v6032
    %s6100 = scalar_lea.vmem [#allocation1], 33
    %6101 = vst [vmem:[%s6100] ss:$4 sm:$0xff] %v6044
    %v6102 = vld.sshfl [vmem:[#allocation1 + $0x20] sm:$0xff pattern:$0x73625140]
    %6103 = vst [vmem:[#allocation1] ss:$4 sm:$0xff] %v6046
    %6104 = vst [vmem:[%s6095] ss:$4 sm:$0xff] %v6033
    %v6105 = vld.sshfl [vmem:[#allocation1] sm:$0xff pattern:$0x73625140]
    %6106 = vst [vmem:[%s6098] ss:$4 sm:$0xff] %v6048
    %6107 = vst [vmem:[%s6100] ss:$4 sm:$0xff] %v6049
    %v6108 = vld.sshfl [vmem:[#allocation1 + $0x20] sm:$0xff pattern:$0x73625140]
    %v6109 = vrot.slane %v6090, 4
    %v6110 = vrot.slane %v6091, 4
    %v6111 = vrot.slane %v6092, 4
    %v6112 = vrot.slane %v6093, 4
    %v6113 = vsel %vm3196, %v6057, %v6109
    %v6114 = vsel %vm3196, %v6062, %v6110
    %v6115 = vsel %vm3196, %v6065, %v6111
    %v6116 = vsel %vm3196, %v6068, %v6112
    %v6117 = vld [vmem:[%s3] sm:$0xff]
    %v6118 = vld [vmem:[%s3 + $0x8] sm:$0xff]
    %v6119 = vld [vmem:[%s3 + $0x10] sm:$0xff]
    %v6120 = vld [vmem:[%s3 + $0x18] sm:$0xff]
    %v6121 = vld [vmem:[%s3 + $0x20] sm:$0xff]
    %v6122 = vld [vmem:[%s3 + $0x28] sm:$0xff]
    %v6123 = vld [vmem:[%s3 + $0x30] sm:$0xff]
    %v6124 = vld [vmem:[%s3 + $0x38] sm:$0xff]
    %v6125 = vld [vmem:[%s3 + $0x40] sm:$0xff]
    %v6126 = vld [vmem:[%s3 + $0x48] sm:$0xff]
    %v6127 = vld [vmem:[%s3 + $0x50] sm:$0xff]
    %v6128 = vld [vmem:[%s3 + $0x58] sm:$0xff]
    %v6129 = vld [vmem:[%s3 + $0x60] sm:$0xff]
    %v6130 = vld [vmem:[%s3 + $0x68] sm:$0xff]
    %v6131 = vld [vmem:[%s3 + $0x70] sm:$0xff]
    %v6132 = vld [vmem:[%s3 + $0x78] sm:$0xff]
    %v6133 = vld [vmem:[%s3 + $0x80] sm:$0xff]
    %v6134 = vld [vmem:[%s3 + $0x88] sm:$0xff]
    %v6135 = vld [vmem:[%s3 + $0x90] sm:$0xff]
    %v6136 = vld [vmem:[%s3 + $0x98] sm:$0xff]
    %v6137 = vld [vmem:[%s3 + $0xa0] sm:$0xff]
    %v6138 = vld [vmem:[%s3 + $0xa8] sm:$0xff]
    %v6139 = vld [vmem:[%s3 + $0xb0] sm:$0xff]
    %v6140 = vld [vmem:[%s3 + $0xb8] sm:$0xff]
    %v6141 = vld [vmem:[%s3 + $0xc0] sm:$0xff]
    %v6142 = vld [vmem:[%s3 + $0xc8] sm:$0xff]
    %v6143 = vld [vmem:[%s3 + $0xd0] sm:$0xff]
    %v6144 = vld [vmem:[%s3 + $0xd8] sm:$0xff]
    %v6145 = vld [vmem:[%s3 + $0xe0] sm:$0xff]
    %v6146 = vld [vmem:[%s3 + $0xe8] sm:$0xff]
    %v6147 = vld [vmem:[%s3 + $0xf0] sm:$0xff]
    %v6148 = vld [vmem:[%s3 + $0xf8] sm:$0xff]
    %v6149 = vld [vmem:[%s3 + $0x100] sm:$0xff]
    %v6150 = vld [vmem:[%s3 + $0x108] sm:$0xff]
    %v6151 = vld [vmem:[%s3 + $0x110] sm:$0xff]
    %v6152 = vld [vmem:[%s3 + $0x118] sm:$0xff]
    %v6153 = vld [vmem:[%s3 + $0x120] sm:$0xff]
    %v6154 = vld [vmem:[%s3 + $0x128] sm:$0xff]
    %v6155 = vld [vmem:[%s3 + $0x130] sm:$0xff]
    %v6156 = vld [vmem:[%s3 + $0x138] sm:$0xff]
    %v6157 = vld [vmem:[%s3 + $0x140] sm:$0xff]
    %v6158 = vld [vmem:[%s3 + $0x148] sm:$0xff]
    %v6159 = vld [vmem:[%s3 + $0x150] sm:$0xff]
    %v6160 = vld [vmem:[%s3 + $0x158] sm:$0xff]
    %v6161 = vld [vmem:[%s3 + $0x160] sm:$0xff]
    %v6162 = vld [vmem:[%s3 + $0x168] sm:$0xff]
    %v6163 = vld [vmem:[%s3 + $0x170] sm:$0xff]
    %v6164 = vld [vmem:[%s3 + $0x178] sm:$0xff]
    %6165 = vst [vmem:[#allocation1] ss:$4 sm:$0xff] %v6043
    %s6166 = scalar_lea.vmem [#allocation1], 1
    %6167 = vst [vmem:[%s6166] ss:$4 sm:$0xff] %v6032
    %v6168 = vld.sshfl [vmem:[#allocation1] sm:$0xff pattern:$0x73625140]
    %s6169 = scalar_lea.vmem [#allocation1], 32
    %6170 = vst [vmem:[%s6169] ss:$4 sm:$0xff] %v6045
    %s6171 = scalar_lea.vmem [#allocation1], 33
    %6172 = vst [vmem:[%s6171] ss:$4 sm:$0xff] %v6046
    %v6173 = vld.sshfl [vmem:[#allocation1 + $0x20] sm:$0xff pattern:$0x73625140]
    %6174 = vst [vmem:[#allocation1] ss:$4 sm:$0xff] %v6047
    %6175 = vst [vmem:[%s6166] ss:$4 sm:$0xff] %v6048
    %v6176 = vld.sshfl [vmem:[#allocation1] sm:$0xff pattern:$0x73625140]
    %6177 = vst [vmem:[%s6169] ss:$4 sm:$0xff] %v6034
    %6178 = vst [vmem:[%s6171] ss:$4 sm:$0xff] %v6050
    %v6179 = vld.sshfl [vmem:[#allocation1 + $0x20] sm:$0xff pattern:$0x73625140]
    %6180 = vst [vmem:[#allocation1] ss:$4 sm:$0xff] %v6043
    %s6181 = scalar_lea.vmem [#allocation1], 1
    %6182 = vst [vmem:[%s6181] ss:$4 sm:$0xff] %v6032
    %s6183 = scalar_lea.vmem [#allocation1], 2
    %6184 = vst [vmem:[%s6183] ss:$4 sm:$0xff] %v6044
    %v6185 = vld.sshfl [vmem:[#allocation1] sm:$0xff pattern:$0x73625140]
    %s6186 = scalar_lea.vmem [#allocation1], 32
    %6187 = vst [vmem:[%s6186] ss:$4 sm:$0xff] %v6045
    %s6188 = scalar_lea.vmem [#allocation1], 33
    %6189 = vst [vmem:[%s6188] ss:$4 sm:$0xff] %v6046
    %s6190 = scalar_lea.vmem [#allocation1], 34
    %6191 = vst [vmem:[%s6190] ss:$4 sm:$0xff] %v6033
    %v6192 = vld.sshfl [vmem:[#allocation1 + $0x20] sm:$0xff pattern:$0x73625140]
    %6193 = vst [vmem:[#allocation1] ss:$4 sm:$0xff] %v6047
    %6194 = vst [vmem:[%s6181] ss:$4 sm:$0xff] %v6048
    %6195 = vst [vmem:[%s6183] ss:$4 sm:$0xff] %v6049
    %v6196 = vld.sshfl [vmem:[#allocation1] sm:$0xff pattern:$0x73625140]
    %6197 = vst [vmem:[%s6186] ss:$4 sm:$0xff] %v6034
    %6198 = vst [vmem:[%s6188] ss:$4 sm:$0xff] %v6050
    %6199 = vst [vmem:[%s6190] ss:$4 sm:$0xff] %v6051
    %v6200 = vld.sshfl [vmem:[#allocation1 + $0x20] sm:$0xff pattern:$0x73625140]
    %v6201 = vrot.slane %v6185, 1
    %v6202 = vrot.slane %v6192, 1
    %v6203 = vrot.slane %v6196, 1
    %v6204 = vrot.slane %v6200, 1
    %6205 = vst [vmem:[#allocation1] ss:$4 sm:$0xff] %v6032
    %s6206 = scalar_lea.vmem [#allocation1], 1
    %6207 = vst [vmem:[%s6206] ss:$4 sm:$0xff] %v6044
    %v6208 = vld.sshfl [vmem:[#allocation1] sm:$0xff pattern:$0x73625140]
    %s6209 = scalar_lea.vmem [#allocation1], 32
    %6210 = vst [vmem:[%s6209] ss:$4 sm:$0xff] %v6046
    %s6211 = scalar_lea.vmem [#allocation1], 33
    %6212 = vst [vmem:[%s6211] ss:$4 sm:$0xff] %v6033
    %v6213 = vld.sshfl [vmem:[#allocation1 + $0x20] sm:$0xff pattern:$0x73625140]
    %6214 = vst [vmem:[#allocation1] ss:$4 sm:$0xff] %v6048
    %6215 = vst [vmem:[%s6206] ss:$4 sm:$0xff] %v6049
    %v6216 = vld.sshfl [vmem:[#allocation1] sm:$0xff pattern:$0x73625140]
    %6217 = vst [vmem:[%s6209] ss:$4 sm:$0xff] %v6050
    %6218 = vst [vmem:[%s6211] ss:$4 sm:$0xff] %v6051
    %v6219 = vld.sshfl [vmem:[#allocation1 + $0x20] sm:$0xff pattern:$0x73625140]
    %v6220 = vrot.slane %v6201, 4
    %v6221 = vrot.slane %v6202, 4
    %v6222 = vrot.slane %v6203, 4
    %v6223 = vrot.slane %v6204, 4
    %v6224 = vsel %vm3196, %v6168, %v6220
    %v6225 = vsel %vm3196, %v6173, %v6221
    %v6226 = vsel %vm3196, %v6176, %v6222
    %v6227 = vsel %vm3196, %v6179, %v6223
    %s6228 = scalar_lea.vmem %s3, 384
    %v6229 = vld [vmem:[%s6228] sm:$0xff]
    %v6230 = vld [vmem:[%s6228 + $0x8] sm:$0xff]
    %v6231 = vld [vmem:[%s6228 + $0x10] sm:$0xff]
    %v6232 = vld [vmem:[%s6228 + $0x18] sm:$0xff]
    %v6233 = vld [vmem:[%s6228 + $0x20] sm:$0xff]
    %v6234 = vld [vmem:[%s6228 + $0x28] sm:$0xff]
    %v6235 = vld [vmem:[%s6228 + $0x30] sm:$0xff]
    %v6236 = vld [vmem:[%s6228 + $0x38] sm:$0xff]
    %v6237 = vld [vmem:[%s6228 + $0x40] sm:$0xff]
    %v6238 = vld [vmem:[%s6228 + $0x48] sm:$0xff]
    %v6239 = vld [vmem:[%s6228 + $0x50] sm:$0xff]
    %v6240 = vld [vmem:[%s6228 + $0x58] sm:$0xff]
    %v6241 = vld [vmem:[%s6228 + $0x60] sm:$0xff]
    %v6242 = vld [vmem:[%s6228 + $0x68] sm:$0xff]
    %v6243 = vld [vmem:[%s6228 + $0x70] sm:$0xff]
    %v6244 = vld [vmem:[%s6228 + $0x78] sm:$0xff]
    %v6245 = vld [vmem:[%s6228 + $0x80] sm:$0xff]
    %v6246 = vld [vmem:[%s6228 + $0x88] sm:$0xff]
    %v6247 = vld [vmem:[%s6228 + $0x90] sm:$0xff]
    %v6248 = vld [vmem:[%s6228 + $0x98] sm:$0xff]
    %v6249 = vld [vmem:[%s6228 + $0xa0] sm:$0xff]
    %v6250 = vld [vmem:[%s6228 + $0xa8] sm:$0xff]
    %v6251 = vld [vmem:[%s6228 + $0xb0] sm:$0xff]
    %v6252 = vld [vmem:[%s6228 + $0xb8] sm:$0xff]
    %v6253 = vld [vmem:[%s6228 + $0xc0] sm:$0xff]
    %v6254 = vld [vmem:[%s6228 + $0xc8] sm:$0xff]
    %v6255 = vld [vmem:[%s6228 + $0xd0] sm:$0xff]
    %v6256 = vld [vmem:[%s6228 + $0xd8] sm:$0xff]
    %v6257 = vld [vmem:[%s6228 + $0xe0] sm:$0xff]
    %v6258 = vld [vmem:[%s6228 + $0xe8] sm:$0xff]
    %v6259 = vld [vmem:[%s6228 + $0xf0] sm:$0xff]
    %v6260 = vld [vmem:[%s6228 + $0xf8] sm:$0xff]
    %v6261 = vld [vmem:[%s6228 + $0x100] sm:$0xff]
    %v6262 = vld [vmem:[%s6228 + $0x108] sm:$0xff]
    %v6263 = vld [vmem:[%s6228 + $0x110] sm:$0xff]
    %v6264 = vld [vmem:[%s6228 + $0x118] sm:$0xff]
    %v6265 = vld [vmem:[%s6228 + $0x120] sm:$0xff]
    %v6266 = vld [vmem:[%s6228 + $0x128] sm:$0xff]
    %v6267 = vld [vmem:[%s6228 + $0x130] sm:$0xff]
    %v6268 = vld [vmem:[%s6228 + $0x138] sm:$0xff]
    %v6269 = vld [vmem:[%s6228 + $0x140] sm:$0xff]
    %v6270 = vld [vmem:[%s6228 + $0x148] sm:$0xff]
    %v6271 = vld [vmem:[%s6228 + $0x150] sm:$0xff]
    %v6272 = vld [vmem:[%s6228 + $0x158] sm:$0xff]
    %v6273 = vld [vmem:[%s6228 + $0x160] sm:$0xff]
    %v6274 = vld [vmem:[%s6228 + $0x168] sm:$0xff]
    %v6275 = vld [vmem:[%s6228 + $0x170] sm:$0xff]
    %v6276 = vld [vmem:[%s6228 + $0x178] sm:$0xff]
    %6277 = vst [vmem:[#allocation1] ss:$2 sm:$0xff] %v6224
    %s6278 = scalar_lea.vmem [#allocation1], 1
    %6279 = vst [vmem:[%s6278] ss:$2 sm:$0xff] %v6225
    %s6280 = scalar_lea.vmem [#allocation1], 16
    %6281 = vst [vmem:[%s6280] ss:$2 sm:$0xff] %v6208
    %s6282 = scalar_lea.vmem [#allocation1], 17
    %6283 = vst [vmem:[%s6282] ss:$2 sm:$0xff] %v6213
    %s6284 = scalar_lea.vmem [#allocation1], 32
    %6285 = vst [vmem:[%s6284] ss:$2 sm:$0xff] %v6226
    %s6286 = scalar_lea.vmem [#allocation1], 33
    %6287 = vst [vmem:[%s6286] ss:$2 sm:$0xff] %v6227
    %s6288 = scalar_lea.vmem [#allocation1], 48
    %6289 = vst [vmem:[%s6288] ss:$2 sm:$0xff] %v6216
    %s6290 = scalar_lea.vmem [#allocation1], 49
    %6291 = vst [vmem:[%s6290] ss:$2 sm:$0xff] %v6219
    %v6292 = vld.sshfl [vmem:[#allocation1] sm:$0xff pattern:$0x75316420]
    %v6293 = vld.sshfl [vmem:[#allocation1 + $0x8] sm:$0xff pattern:$0x75316420]
    %v6294 = vld.sshfl [vmem:[#allocation1 + $0x10] sm:$0xff pattern:$0x75316420]
    %v6295 = vld.sshfl [vmem:[#allocation1 + $0x20] sm:$0xff pattern:$0x75316420]
    %v6296 = vld.sshfl [vmem:[#allocation1 + $0x28] sm:$0xff pattern:$0x75316420]
    %v6297 = vld.sshfl [vmem:[#allocation1 + $0x30] sm:$0xff pattern:$0x75316420]
    %6304 = vmatpush.msra.mxu0 %v6244
    %6305 = vmatpush.msra.mxu0 %v6243
    %6306 = vmatpush.msra.mxu0 %v6242
    %6307 = vmatpush.msra.mxu0 %v6241
    %6308 = vmatpush.msra.mxu0 %v6240
    %6309 = vmatpush.msra.mxu0 %v6239
    %6310 = vmatpush.msra.mxu0 %v6238
    %6311 = vmatpush.msra.mxu0 %v6237
    %6312 = vmatpush.msra.mxu0 %v6236
    %6313 = vmatpush.msra.mxu0 %v6235
    %6314 = vmatpush.msra.mxu0 %v6234
    %6315 = vmatpush.msra.mxu0 %v6233
    %6316 = vmatpush.msra.mxu0 %v6232
    %6317 = vmatpush.msra.mxu0 %v6231
    %6318 = vmatpush.msra.mxu0 %v6230
    %6319 = vmatpush.msra.mxu0 %v6229
    %6320 = vmatmul.f32.gmra.mxu0 %v6292
    %v6321 = vpop.f32.mrf.mxu0
    %v6322 = vadd.f32 0.0, %v6321
    %6323 = vmatmul.f32.gmra.mxu0 %v6295
    %v6324 = vpop.f32.mrf.mxu0
    %v6325 = vadd.f32 0.0, %v6324
    %6326 = vdwg.mxu0
    %6327 = vmatpush.msra.mxu0 %v6260
    %6328 = vmatpush.msra.mxu0 %v6259
    %6329 = vmatpush.msra.mxu0 %v6258
    %6330 = vmatpush.msra.mxu0 %v6257
    %6331 = vmatpush.msra.mxu0 %v6256
    %6332 = vmatpush.msra.mxu0 %v6255
    %6333 = vmatpush.msra.mxu0 %v6254
    %6334 = vmatpush.msra.mxu0 %v6253
    %6335 = vmatpush.msra.mxu0 %v6252
    %6336 = vmatpush.msra.mxu0 %v6251
    %6337 = vmatpush.msra.mxu0 %v6250
    %6338 = vmatpush.msra.mxu0 %v6249
    %6339 = vmatpush.msra.mxu0 %v6248
    %6340 = vmatpush.msra.mxu0 %v6247
    %6341 = vmatpush.msra.mxu0 %v6246
    %6342 = vmatpush.msra.mxu0 %v6245
    %6343 = vmatmul.f32.gmra.mxu0 %v6293
    %v6344 = vpop.f32.mrf.mxu0
    %v6345 = vadd.f32 %v6322, %v6344
    %6346 = vmatmul.f32.gmra.mxu0 %v6296
    %v6347 = vpop.f32.mrf.mxu0
    %v6348 = vadd.f32 %v6325, %v6347
    %6349 = vdwg.mxu0
    %6350 = vmatpush.msra.mxu0 %v6276
    %6351 = vmatpush.msra.mxu0 %v6275
    %6352 = vmatpush.msra.mxu0 %v6274
    %6353 = vmatpush.msra.mxu0 %v6273
    %6354 = vmatpush.msra.mxu0 %v6272
    %6355 = vmatpush.msra.mxu0 %v6271
    %6356 = vmatpush.msra.mxu0 %v6270
    %6357 = vmatpush.msra.mxu0 %v6269
    %6358 = vmatpush.msra.mxu0 %v6268
    %6359 = vmatpush.msra.mxu0 %v6267
    %6360 = vmatpush.msra.mxu0 %v6266
    %6361 = vmatpush.msra.mxu0 %v6265
    %6362 = vmatpush.msra.mxu0 %v6264
    %6363 = vmatpush.msra.mxu0 %v6263
    %6364 = vmatpush.msra.mxu0 %v6262
    %6365 = vmatpush.msra.mxu0 %v6261
    %6366 = vmatmul.f32.gmra.mxu0 %v6294
    %v6367 = vpop.f32.mrf.mxu0
    %v6368 = vadd.f32 %v6345, %v6367
    %6369 = vmatmul.f32.gmra.mxu0 %v6297
    %v6370 = vpop.f32.mrf.mxu0
    %v6371 = vadd.f32 %v6348, %v6370
    %6372 = vdwg.mxu0
    %6373 = vst [vmem:[#allocation1] ss:$2 sm:$0xff] %v6113
    %s6374 = scalar_lea.vmem [#allocation1], 1
    %6375 = vst [vmem:[%s6374] ss:$2 sm:$0xff] %v6114
    %s6376 = scalar_lea.vmem [#allocation1], 16
    %6377 = vst [vmem:[%s6376] ss:$2 sm:$0xff] %v6097
    %s6378 = scalar_lea.vmem [#allocation1], 17
    %6379 = vst [vmem:[%s6378] ss:$2 sm:$0xff] %v6102
    %s6380 = scalar_lea.vmem [#allocation1], 32
    %6381 = vst [vmem:[%s6380] ss:$2 sm:$0xff] %v6115
    %s6382 = scalar_lea.vmem [#allocation1], 33
    %6383 = vst [vmem:[%s6382] ss:$2 sm:$0xff] %v6116
    %s6384 = scalar_lea.vmem [#allocation1], 48
    %6385 = vst [vmem:[%s6384] ss:$2 sm:$0xff] %v6105
    %s6386 = scalar_lea.vmem [#allocation1], 49
    %6387 = vst [vmem:[%s6386] ss:$2 sm:$0xff] %v6108
    %v6388 = vld.sshfl [vmem:[#allocation1] sm:$0xff pattern:$0x75316420]
    %v6389 = vld.sshfl [vmem:[#allocation1 + $0x8] sm:$0xff pattern:$0x75316420]
    %v6390 = vld.sshfl [vmem:[#allocation1 + $0x10] sm:$0xff pattern:$0x75316420]
    %v6391 = vld.sshfl [vmem:[#allocation1 + $0x20] sm:$0xff pattern:$0x75316420]
    %v6392 = vld.sshfl [vmem:[#allocation1 + $0x28] sm:$0xff pattern:$0x75316420]
    %v6393 = vld.sshfl [vmem:[#allocation1 + $0x30] sm:$0xff pattern:$0x75316420]
    %6400 = vmatpush.msra.mxu0 %v6132
    %6401 = vmatpush.msra.mxu0 %v6131
    %6402 = vmatpush.msra.mxu0 %v6130
    %6403 = vmatpush.msra.mxu0 %v6129
    %6404 = vmatpush.msra.mxu0 %v6128
    %6405 = vmatpush.msra.mxu0 %v6127
    %6406 = vmatpush.msra.mxu0 %v6126
    %6407 = vmatpush.msra.mxu0 %v6125
    %6408 = vmatpush.msra.mxu0 %v6124
    %6409 = vmatpush.msra.mxu0 %v6123
    %6410 = vmatpush.msra.mxu0 %v6122
    %6411 = vmatpush.msra.mxu0 %v6121
    %6412 = vmatpush.msra.mxu0 %v6120
    %6413 = vmatpush.msra.mxu0 %v6119
    %6414 = vmatpush.msra.mxu0 %v6118
    %6415 = vmatpush.msra.mxu0 %v6117
    %6416 = vmatmul.f32.gmra.mxu0 %v6388
    %v6417 = vpop.f32.mrf.mxu0
    %v6418 = vadd.f32 %v6368, %v6417
    %6419 = vmatmul.f32.gmra.mxu0 %v6391
    %v6420 = vpop.f32.mrf.mxu0
    %v6421 = vadd.f32 %v6371, %v6420
    %6422 = vdwg.mxu0
    %6423 = vmatpush.msra.mxu0 %v6148
    %6424 = vmatpush.msra.mxu0 %v6147
    %6425 = vmatpush.msra.mxu0 %v6146
    %6426 = vmatpush.msra.mxu0 %v6145
    %6427 = vmatpush.msra.mxu0 %v6144
    %6428 = vmatpush.msra.mxu0 %v6143
    %6429 = vmatpush.msra.mxu0 %v6142
    %6430 = vmatpush.msra.mxu0 %v6141
    %6431 = vmatpush.msra.mxu0 %v6140
    %6432 = vmatpush.msra.mxu0 %v6139
    %6433 = vmatpush.msra.mxu0 %v6138
    %6434 = vmatpush.msra.mxu0 %v6137
    %6435 = vmatpush.msra.mxu0 %v6136
    %6436 = vmatpush.msra.mxu0 %v6135
    %6437 = vmatpush.msra.mxu0 %v6134
    %6438 = vmatpush.msra.mxu0 %v6133
    %6439 = vmatmul.f32.gmra.mxu0 %v6389
    %v6440 = vpop.f32.mrf.mxu0
    %v6441 = vadd.f32 %v6418, %v6440
    %6442 = vmatmul.f32.gmra.mxu0 %v6392
    %v6443 = vpop.f32.mrf.mxu0
    %v6444 = vadd.f32 %v6421, %v6443
    %6445 = vdwg.mxu0
    %6446 = vmatpush.msra.mxu0 %v6164
    %6447 = vmatpush.msra.mxu0 %v6163
    %6448 = vmatpush.msra.mxu0 %v6162
    %6449 = vmatpush.msra.mxu0 %v6161
    %6450 = vmatpush.msra.mxu0 %v6160
    %6451 = vmatpush.msra.mxu0 %v6159
    %6452 = vmatpush.msra.mxu0 %v6158
    %6453 = vmatpush.msra.mxu0 %v6157
    %6454 = vmatpush.msra.mxu0 %v6156
    %6455 = vmatpush.msra.mxu0 %v6155
    %6456 = vmatpush.msra.mxu0 %v6154
    %6457 = vmatpush.msra.mxu0 %v6153
    %6458 = vmatpush.msra.mxu0 %v6152
    %6459 = vmatpush.msra.mxu0 %v6151
    %6460 = vmatpush.msra.mxu0 %v6150
    %6461 = vmatpush.msra.mxu0 %v6149
    %6462 = vmatmul.f32.gmra.mxu0 %v6390
    %v6463 = vpop.f32.mrf.mxu0
    %v6464 = vadd.f32 %v6441, %v6463
    %6465 = vmatmul.f32.gmra.mxu0 %v6393
    %v6466 = vpop.f32.mrf.mxu0
    %v6467 = vadd.f32 %v6444, %v6466
    %6468 = vdwg.mxu0
    %6469 = vst [vmem:[#allocation1] ss:$4 sm:$0xff] %v6045
    %s6470 = scalar_lea.vmem [#allocation1], 1
    %6471 = vst [vmem:[%s6470] ss:$4 sm:$0xff] %v6046
    %v6472 = vld.sshfl [vmem:[#allocation1] sm:$0xff pattern:$0x73625140]
    %s6473 = scalar_lea.vmem [#allocation1], 32
    %6474 = vst [vmem:[%s6473] ss:$4 sm:$0xff] %v6047
    %s6475 = scalar_lea.vmem [#allocation1], 33
    %6476 = vst [vmem:[%s6475] ss:$4 sm:$0xff] %v6048
    %v6477 = vld.sshfl [vmem:[#allocation1 + $0x20] sm:$0xff pattern:$0x73625140]
    %6478 = vst [vmem:[#allocation1] ss:$4 sm:$0xff] %v6034
    %6479 = vst [vmem:[%s6470] ss:$4 sm:$0xff] %v6050
    %v6480 = vld.sshfl [vmem:[#allocation1] sm:$0xff pattern:$0x73625140]
    %6481 = vst [vmem:[%s6473] ss:$4 sm:$0xff] %v6052
    %6482 = vst [vmem:[%s6475] ss:$4 sm:$0xff] %v6035
    %v6483 = vld.sshfl [vmem:[#allocation1 + $0x20] sm:$0xff pattern:$0x73625140]
    %6484 = vst [vmem:[#allocation1] ss:$4 sm:$0xff] %v6045
    %s6485 = scalar_lea.vmem [#allocation1], 1
    %6486 = vst [vmem:[%s6485] ss:$4 sm:$0xff] %v6046
    %s6487 = scalar_lea.vmem [#allocation1], 2
    %6488 = vst [vmem:[%s6487] ss:$4 sm:$0xff] %v6033
    %v6489 = vld.sshfl [vmem:[#allocation1] sm:$0xff pattern:$0x73625140]
    %s6490 = scalar_lea.vmem [#allocation1], 32
    %6491 = vst [vmem:[%s6490] ss:$4 sm:$0xff] %v6047
    %s6492 = scalar_lea.vmem [#allocation1], 33
    %6493 = vst [vmem:[%s6492] ss:$4 sm:$0xff] %v6048
    %s6494 = scalar_lea.vmem [#allocation1], 34
    %6495 = vst [vmem:[%s6494] ss:$4 sm:$0xff] %v6049
    %v6496 = vld.sshfl [vmem:[#allocation1 + $0x20] sm:$0xff pattern:$0x73625140]
    %6497 = vst [vmem:[#allocation1] ss:$4 sm:$0xff] %v6034
    %6498 = vst [vmem:[%s6485] ss:$4 sm:$0xff] %v6050
    %6499 = vst [vmem:[%s6487] ss:$4 sm:$0xff] %v6051
    %v6500 = vld.sshfl [vmem:[#allocation1] sm:$0xff pattern:$0x73625140]
    %6501 = vst [vmem:[%s6490] ss:$4 sm:$0xff] %v6052
    %6502 = vst [vmem:[%s6492] ss:$4 sm:$0xff] %v6035
    %6503 = vst [vmem:[%s6494] ss:$4 sm:$0xff] %v6053
    %v6504 = vld.sshfl [vmem:[#allocation1 + $0x20] sm:$0xff pattern:$0x73625140]
    %v6505 = vrot.slane %v6489, 1
    %v6506 = vrot.slane %v6496, 1
    %v6507 = vrot.slane %v6500, 1
    %v6508 = vrot.slane %v6504, 1
    %6509 = vst [vmem:[#allocation1] ss:$4 sm:$0xff] %v6046
    %s6510 = scalar_lea.vmem [#allocation1], 1
    %6511 = vst [vmem:[%s6510] ss:$4 sm:$0xff] %v6033
    %v6512 = vld.sshfl [vmem:[#allocation1] sm:$0xff pattern:$0x73625140]
    %s6513 = scalar_lea.vmem [#allocation1], 32
    %6514 = vst [vmem:[%s6513] ss:$4 sm:$0xff] %v6048
    %s6515 = scalar_lea.vmem [#allocation1], 33
    %6516 = vst [vmem:[%s6515] ss:$4 sm:$0xff] %v6049
    %v6517 = vld.sshfl [vmem:[#allocation1 + $0x20] sm:$0xff pattern:$0x73625140]
    %6518 = vst [vmem:[#allocation1] ss:$4 sm:$0xff] %v6050
    %6519 = vst [vmem:[%s6510] ss:$4 sm:$0xff] %v6051
    %v6520 = vld.sshfl [vmem:[#allocation1] sm:$0xff pattern:$0x73625140]
    %6521 = vst [vmem:[%s6513] ss:$4 sm:$0xff] %v6035
    %6522 = vst [vmem:[%s6515] ss:$4 sm:$0xff] %v6053
    %v6523 = vld.sshfl [vmem:[#allocation1 + $0x20] sm:$0xff pattern:$0x73625140]
    %v6524 = vrot.slane %v6505, 4
    %v6525 = vrot.slane %v6506, 4
    %v6526 = vrot.slane %v6507, 4
    %v6527 = vrot.slane %v6508, 4
    %v6528 = vsel %vm3196, %v6472, %v6524
    %v6529 = vsel %vm3196, %v6477, %v6525
    %v6530 = vsel %vm3196, %v6480, %v6526
    %v6531 = vsel %vm3196, %v6483, %v6527
    %s6532 = scalar_lea.vmem %s3, 768
    %v6533 = vld [vmem:[%s6532] sm:$0xff]
    %v6534 = vld [vmem:[%s6532 + $0x8] sm:$0xff]
    %v6535 = vld [vmem:[%s6532 + $0x10] sm:$0xff]
    %v6536 = vld [vmem:[%s6532 + $0x18] sm:$0xff]
    %v6537 = vld [vmem:[%s6532 + $0x20] sm:$0xff]
    %v6538 = vld [vmem:[%s6532 + $0x28] sm:$0xff]
    %v6539 = vld [vmem:[%s6532 + $0x30] sm:$0xff]
    %v6540 = vld [vmem:[%s6532 + $0x38] sm:$0xff]
    %v6541 = vld [vmem:[%s6532 + $0x40] sm:$0xff]
    %v6542 = vld [vmem:[%s6532 + $0x48] sm:$0xff]
    %v6543 = vld [vmem:[%s6532 + $0x50] sm:$0xff]
    %v6544 = vld [vmem:[%s6532 + $0x58] sm:$0xff]
    %v6545 = vld [vmem:[%s6532 + $0x60] sm:$0xff]
    %v6546 = vld [vmem:[%s6532 + $0x68] sm:$0xff]
    %v6547 = vld [vmem:[%s6532 + $0x70] sm:$0xff]
    %v6548 = vld [vmem:[%s6532 + $0x78] sm:$0xff]
    %v6549 = vld [vmem:[%s6532 + $0x80] sm:$0xff]
    %v6550 = vld [vmem:[%s6532 + $0x88] sm:$0xff]
    %v6551 = vld [vmem:[%s6532 + $0x90] sm:$0xff]
    %v6552 = vld [vmem:[%s6532 + $0x98] sm:$0xff]
    %v6553 = vld [vmem:[%s6532 + $0xa0] sm:$0xff]
    %v6554 = vld [vmem:[%s6532 + $0xa8] sm:$0xff]
    %v6555 = vld [vmem:[%s6532 + $0xb0] sm:$0xff]
    %v6556 = vld [vmem:[%s6532 + $0xb8] sm:$0xff]
    %v6557 = vld [vmem:[%s6532 + $0xc0] sm:$0xff]
    %v6558 = vld [vmem:[%s6532 + $0xc8] sm:$0xff]
    %v6559 = vld [vmem:[%s6532 + $0xd0] sm:$0xff]
    %v6560 = vld [vmem:[%s6532 + $0xd8] sm:$0xff]
    %v6561 = vld [vmem:[%s6532 + $0xe0] sm:$0xff]
    %v6562 = vld [vmem:[%s6532 + $0xe8] sm:$0xff]
    %v6563 = vld [vmem:[%s6532 + $0xf0] sm:$0xff]
    %v6564 = vld [vmem:[%s6532 + $0xf8] sm:$0xff]
    %v6565 = vld [vmem:[%s6532 + $0x100] sm:$0xff]
    %v6566 = vld [vmem:[%s6532 + $0x108] sm:$0xff]
    %v6567 = vld [vmem:[%s6532 + $0x110] sm:$0xff]
    %v6568 = vld [vmem:[%s6532 + $0x118] sm:$0xff]
    %v6569 = vld [vmem:[%s6532 + $0x120] sm:$0xff]
    %v6570 = vld [vmem:[%s6532 + $0x128] sm:$0xff]
    %v6571 = vld [vmem:[%s6532 + $0x130] sm:$0xff]
    %v6572 = vld [vmem:[%s6532 + $0x138] sm:$0xff]
    %v6573 = vld [vmem:[%s6532 + $0x140] sm:$0xff]
    %v6574 = vld [vmem:[%s6532 + $0x148] sm:$0xff]
    %v6575 = vld [vmem:[%s6532 + $0x150] sm:$0xff]
    %v6576 = vld [vmem:[%s6532 + $0x158] sm:$0xff]
    %v6577 = vld [vmem:[%s6532 + $0x160] sm:$0xff]
    %v6578 = vld [vmem:[%s6532 + $0x168] sm:$0xff]
    %v6579 = vld [vmem:[%s6532 + $0x170] sm:$0xff]
    %v6580 = vld [vmem:[%s6532 + $0x178] sm:$0xff]
    %6581 = vst [vmem:[#allocation1] ss:$2 sm:$0xff] %v6528
    %s6582 = scalar_lea.vmem [#allocation1], 1
    %6583 = vst [vmem:[%s6582] ss:$2 sm:$0xff] %v6529
    %s6584 = scalar_lea.vmem [#allocation1], 16
    %6585 = vst [vmem:[%s6584] ss:$2 sm:$0xff] %v6512
    %s6586 = scalar_lea.vmem [#allocation1], 17
    %6587 = vst [vmem:[%s6586] ss:$2 sm:$0xff] %v6517
    %s6588 = scalar_lea.vmem [#allocation1], 32
    %6589 = vst [vmem:[%s6588] ss:$2 sm:$0xff] %v6530
    %s6590 = scalar_lea.vmem [#allocation1], 33
    %6591 = vst [vmem:[%s6590] ss:$2 sm:$0xff] %v6531
    %s6592 = scalar_lea.vmem [#allocation1], 48
    %6593 = vst [vmem:[%s6592] ss:$2 sm:$0xff] %v6520
    %s6594 = scalar_lea.vmem [#allocation1], 49
    %6595 = vst [vmem:[%s6594] ss:$2 sm:$0xff] %v6523
    %v6596 = vld.sshfl [vmem:[#allocation1] sm:$0xff pattern:$0x75316420]
    %v6597 = vld.sshfl [vmem:[#allocation1 + $0x8] sm:$0xff pattern:$0x75316420]
    %v6598 = vld.sshfl [vmem:[#allocation1 + $0x10] sm:$0xff pattern:$0x75316420]
    %v6599 = vld.sshfl [vmem:[#allocation1 + $0x20] sm:$0xff pattern:$0x75316420]
    %v6600 = vld.sshfl [vmem:[#allocation1 + $0x28] sm:$0xff pattern:$0x75316420]
    %v6601 = vld.sshfl [vmem:[#allocation1 + $0x30] sm:$0xff pattern:$0x75316420]
    %6608 = vmatpush.msra.mxu0 %v6548
    %6609 = vmatpush.msra.mxu0 %v6547
    %6610 = vmatpush.msra.mxu0 %v6546
    %6611 = vmatpush.msra.mxu0 %v6545
    %6612 = vmatpush.msra.mxu0 %v6544
    %6613 = vmatpush.msra.mxu0 %v6543
    %6614 = vmatpush.msra.mxu0 %v6542
    %6615 = vmatpush.msra.mxu0 %v6541
    %6616 = vmatpush.msra.mxu0 %v6540
    %6617 = vmatpush.msra.mxu0 %v6539
    %6618 = vmatpush.msra.mxu0 %v6538
    %6619 = vmatpush.msra.mxu0 %v6537
    %6620 = vmatpush.msra.mxu0 %v6536
    %6621 = vmatpush.msra.mxu0 %v6535
    %6622 = vmatpush.msra.mxu0 %v6534
    %6623 = vmatpush.msra.mxu0 %v6533
    %6624 = vmatmul.f32.gmra.mxu0 %v6596
    %v6625 = vpop.f32.mrf.mxu0
    %v6626 = vadd.f32 0.0, %v6625
    %6627 = vmatmul.f32.gmra.mxu0 %v6599
    %v6628 = vpop.f32.mrf.mxu0
    %v6629 = vadd.f32 0.0, %v6628
    %6630 = vdwg.mxu0
    %6631 = vmatpush.msra.mxu0 %v6564
    %6632 = vmatpush.msra.mxu0 %v6563
    %6633 = vmatpush.msra.mxu0 %v6562
    %6634 = vmatpush.msra.mxu0 %v6561
    %6635 = vmatpush.msra.mxu0 %v6560
    %6636 = vmatpush.msra.mxu0 %v6559
    %6637 = vmatpush.msra.mxu0 %v6558
    %6638 = vmatpush.msra.mxu0 %v6557
    %6639 = vmatpush.msra.mxu0 %v6556
    %6640 = vmatpush.msra.mxu0 %v6555
    %6641 = vmatpush.msra.mxu0 %v6554
    %6642 = vmatpush.msra.mxu0 %v6553
    %6643 = vmatpush.msra.mxu0 %v6552
    %6644 = vmatpush.msra.mxu0 %v6551
    %6645 = vmatpush.msra.mxu0 %v6550
    %6646 = vmatpush.msra.mxu0 %v6549
    %6647 = vmatmul.f32.gmra.mxu0 %v6597
    %v6648 = vpop.f32.mrf.mxu0
    %v6649 = vadd.f32 %v6626, %v6648
    %6650 = vmatmul.f32.gmra.mxu0 %v6600
    %v6651 = vpop.f32.mrf.mxu0
    %v6652 = vadd.f32 %v6629, %v6651
    %6653 = vdwg.mxu0
    %6654 = vmatpush.msra.mxu0 %v6580
    %6655 = vmatpush.msra.mxu0 %v6579
    %6656 = vmatpush.msra.mxu0 %v6578
    %6657 = vmatpush.msra.mxu0 %v6577
    %6658 = vmatpush.msra.mxu0 %v6576
    %6659 = vmatpush.msra.mxu0 %v6575
    %6660 = vmatpush.msra.mxu0 %v6574
    %6661 = vmatpush.msra.mxu0 %v6573
    %6662 = vmatpush.msra.mxu0 %v6572
    %6663 = vmatpush.msra.mxu0 %v6571
    %6664 = vmatpush.msra.mxu0 %v6570
    %6665 = vmatpush.msra.mxu0 %v6569
    %6666 = vmatpush.msra.mxu0 %v6568
    %6667 = vmatpush.msra.mxu0 %v6567
    %6668 = vmatpush.msra.mxu0 %v6566
    %6669 = vmatpush.msra.mxu0 %v6565
    %6670 = vmatmul.f32.gmra.mxu0 %v6598
    %v6671 = vpop.f32.mrf.mxu0
    %v6672 = vadd.f32 %v6649, %v6671
    %6673 = vmatmul.f32.gmra.mxu0 %v6601
    %v6674 = vpop.f32.mrf.mxu0
    %v6675 = vadd.f32 %v6652, %v6674
    %6676 = vdwg.mxu0
    %v6677 = vadd.f32 %v6464, %v6672
    %v6678 = vadd.f32 %v6467, %v6675
    %v6679 = vld [vmem:[%s4] sm:$0x1]
    %v6681 = vperm.slane %v6679, 0
    %v6683 = vmul.f32 %v6677, %v6681
    %v6684 = vmul.f32 %v6678, %v6681
    %v6685 = vsel %vm3196, %v6683, 0.0
    %6686 = vadd.xlane.f32.xlu0 %v6685
    %v6687 = vpop.xlane.xlu0 %6686
    %v6688 = vsel %vm3196, %v6684, 0.0
    %6689 = vadd.xlane.f32.xlu0 %v6688
    %v6690 = vpop.xlane.xlu0 %6689
    %v6692 = vlaneseq
    %v6693 = vand.u32 %v6692, 127
    %v6694 = vperm.slane %v6687, %v6693
    %v6697 = vperm.slane %v6690, %v6693
    %vm6699 = vcmask 1040384
    %v6700 = vsel %vm6699, %v6694, %v6697
    %6702 = vrot.lane.b32.xlu0 %v6700, 127
    %v6703 = vpop.permute.xlu0 %6702
    %v6705 = vsel %vm1383, %v6700, %v6703
    %vm6706 = vcmask 9216
    %6707 = vst.msk [vmem:[#allocation2] sm:$0x3] %vm6706, %v6705
    // Predicated region
    $region22: #{generator_forward.1} parent=1 // pred_check
      _
    $region23: #{generator_forward.1} parent=1 // pred_check_branch
      %6709 = sbr.rel (0) target = $region25
    $region24: #{generator_forward.1} parent=1 // pred_region
      %6711 = vsyncadd [#allocation3], 0
      %s6713 = sshll.u32 [#allocation2], 4
      %s6714 = int_to_ptr.vmem [resolvable:$true] %s6713
      %s6715 = sshll.u32 %s5, 4
      %s6716 = int_to_ptr.hbm [resolvable:$true] %s6715
      %6718 = dma.vmem_to_hbm [thread:$0]  %s6714, 32, %s6716, [#allocation3]
    $region25: #{generator_forward.1} parent=1 // pred_fallthru
      _
    // Predicated region
    $region26: #{generator_forward.1} parent=1 // pred_check
      _
    $region27: #{generator_forward.1} parent=1 // pred_check_branch
      %6720 = sbr.rel (0) target = $region29
    $region28: #{generator_forward.1} parent=1 // pred_region
      %6722 = dma.done [#allocation3], 32
    $region29: #{generator_forward.1} parent=1 // pred_fallthru
      _
    %6723 = vsyncpa [#allocation3], 1

</llo_original>
